<compile_context>
chip_gen: v6e
topology: v6e:2x2x1
jax: 0.10.0
libtpu: 0.0.40
codegen_flags: <defaults>
</compile_context>

<pallas_src>
import functools

import jax
import jax.numpy as jnp
from jax.experimental import pallas as pl
from jax.experimental.pallas import tpu as pltpu

LATENT_DIM = 32
DIMS = [LATENT_DIM, 529, 529, 529, 257 + 529, 786, 786]  # 6 linear layers


def _round_up(x, m):
    return ((x + m - 1) // m) * m


def _mlp_kernel(x_ref,
                w1, b1, w2, b2, w3, b3, w4, b4, w5, b5, w6, b6,
                o_ref):
    """Fused forward pass. Weights bf16, f32 accumulation, ReLU after layers 1-5."""
    h = x_ref[...].astype(jnp.bfloat16)

    def lin(h, w_ref, b_ref):
        y = jnp.dot(h, w_ref[...], preferred_element_type=jnp.float32)
        return y + b_ref[...]

    h = jnp.maximum(lin(h, w1, b1), 0.0).astype(jnp.bfloat16)
    h = jnp.maximum(lin(h, w2, b2), 0.0).astype(jnp.bfloat16)
    h = jnp.maximum(lin(h, w3, b3), 0.0).astype(jnp.bfloat16)
    h = jnp.maximum(lin(h, w4, b4), 0.0).astype(jnp.bfloat16)
    h = jnp.maximum(lin(h, w5, b5), 0.0).astype(jnp.bfloat16)
    o_ref[...] = lin(h, w6, b6).astype(o_ref.dtype)   # last layer: no ReLU


def init_params(key, dims=DIMS):
    """PyTorch-like uniform(+/-1/sqrt(fan_in)) init.

    Returns list of (W bf16 [in, out], b f32 [1, out]) — the *logical*
    (unpadded) parameters.
    """
    params = []
    for i in range(len(dims) - 1):
        fan_in, fan_out = dims[i], dims[i + 1]
        key, kw, kb = jax.random.split(key, 3)
        bound = 1.0 / jnp.sqrt(jnp.asarray(fan_in, dtype=jnp.float32))
        w = jax.random.uniform(kw, (fan_in, fan_out), jnp.float32, -bound, bound)
        b = jax.random.uniform(kb, (1, fan_out), jnp.float32, -bound, bound)
        params.append((w.astype(jnp.bfloat16), b))
    return params


def _pad_params(params):
    """Zero-pad every layer's in/out feature dims up to multiples of 128
    (except the tiny latent input dim, which stays as-is). Zero padding keeps
    the math exact: padded activation columns are exactly 0 through the net."""
    padded = []
    for li, (w, b) in enumerate(params):
        fin, fout = w.shape
        fin_p = fin if li == 0 else _round_up(fin, 128)
        fout_p = _round_up(fout, 128)
        w_p = jnp.zeros((fin_p, fout_p), w.dtype).at[:fin, :fout].set(w)
        b_p = jnp.zeros((1, fout_p), b.dtype).at[:, :fout].set(b)
        padded.append((w_p, b_p))
    return padded


@functools.partial(jax.jit, static_argnames=("batch_tile",))
def general_decoder_pallas(x, params, *, batch_tile=128):
    """x: [B, latent_dim] float32 -> [B, 786] float32."""
    B, latent = x.shape
    out_dim = params[-1][0].shape[1]          # 786 (logical)
    padded = _pad_params(params)
    out_pad = padded[-1][0].shape[1]          # 896 (padded)

    # Batch tiling: sublane-aligned tile, pad B up to a multiple of it.
    tb = min(batch_tile, _round_up(B, 8))
    b_pad = _round_up(B, tb)
    if b_pad != B:
        x = jnp.pad(x, ((0, b_pad - B), (0, 0)))
    grid = (b_pad // tb,)

    flat_params = []
    in_specs = [pl.BlockSpec((tb, latent), lambda i: (i, 0))]   # x tile streams
    for w, b in padded:
        flat_params.extend([w, b])
        # Constant index_map: weights/biases fetched once, stay VMEM-resident.
        in_specs.append(pl.BlockSpec(w.shape, lambda i: (0, 0)))
        in_specs.append(pl.BlockSpec(b.shape, lambda i: (0, 0)))
    out_specs = pl.BlockSpec((tb, out_pad), lambda i: (i, 0))

    # Advisory cost estimate: the call is weight-DMA dominated at small B.
    flops = 2 * b_pad * sum(w.shape[0] * w.shape[1] for w, _ in padded)
    weight_bytes = sum(w.size * w.dtype.itemsize + b.size * b.dtype.itemsize
                       for w, b in padded)
    io_bytes = x.size * x.dtype.itemsize + b_pad * out_pad * 4
    cost = pl.CostEstimate(flops=flops, transcendentals=0,
                           bytes_accessed=weight_bytes + io_bytes)

    out = pl.pallas_call(
        _mlp_kernel,
        out_shape=jax.ShapeDtypeStruct((b_pad, out_pad), jnp.float32),
        grid=grid,
        in_specs=in_specs,
        out_specs=out_specs,
        compiler_params=pltpu.CompilerParams(
            dimension_semantics=("parallel",),        # v7x: 2 TCs split the batch
            vmem_limit_bytes=32 * 1024 * 1024,        # legal on v5e/v6e/v7x
        ),
        cost_estimate=cost,
    )(x, *flat_params)

    return out[:B, :out_dim]


def general_decoder_ref(x, params):
    """Plain-JAX reference (f32 activations, same bf16 weights upcast)."""
    h = x
    n = len(params)
    for i, (w, b) in enumerate(params):
        h = h @ w.astype(jnp.float32) + b
        if i < n - 1:
            h = jnp.maximum(h, 0.0)
    return h


if __name__ == "__main__":
    key = jax.random.PRNGKey(0)
    k_params, k_x = jax.random.split(key)

    params = init_params(k_params)

    batch = 2
    x = jax.random.normal(k_x, (batch, LATENT_DIM), dtype=jnp.float32)

    out = general_decoder_pallas(x, params)
    out = jax.block_until_ready(out)

    ref = general_decoder_ref(x, params)
    assert out.shape == (batch, 786), out.shape
    # bf16 activations in the kernel vs f32 activations in the reference:
    # error stays well under 5e-2 with f32 accumulation.
    assert jnp.allclose(out, ref, atol=5e-2, rtol=5e-2), float(
        jnp.max(jnp.abs(out - ref)))

    print("KERNEL_OK")
</pallas_src>

<mosaic_0001>
module attributes {stable_mosaic.version = 11 : i64} {
  func.func @_mlp_kernel(%arg0: i32, %arg1: memref<8x32xf32, #tpu.memory_space<vmem>>, %arg2: memref<32x640xbf16, #tpu.memory_space<vmem>>, %arg3: memref<1x640xf32, #tpu.memory_space<vmem>>, %arg4: memref<640x640xbf16, #tpu.memory_space<vmem>>, %arg5: memref<1x640xf32, #tpu.memory_space<vmem>>, %arg6: memref<640x640xbf16, #tpu.memory_space<vmem>>, %arg7: memref<1x640xf32, #tpu.memory_space<vmem>>, %arg8: memref<640x896xbf16, #tpu.memory_space<vmem>>, %arg9: memref<1x896xf32, #tpu.memory_space<vmem>>, %arg10: memref<896x896xbf16, #tpu.memory_space<vmem>>, %arg11: memref<1x896xf32, #tpu.memory_space<vmem>>, %arg12: memref<896x896xbf16, #tpu.memory_space<vmem>>, %arg13: memref<1x896xf32, #tpu.memory_space<vmem>>, %arg14: memref<8x896xf32, #tpu.memory_space<vmem>>) attributes {dimension_semantics = [#tpu.dimension_semantics<parallel>], iteration_bounds = array<i64: 1>, scalar_prefetch = 0 : i64, scratch_operands = 0 : i64, tpu.core_type = #tpu.core_type<tc>, window_params = [{transform_indices = @transform_0, window_bounds = array<i64: 8, 32>}, {pipeline_mode = #tpu.pipeline_mode<synchronous>, transform_indices = @transform_1, window_bounds = array<i64: 32, 640>}, {pipeline_mode = #tpu.pipeline_mode<synchronous>, transform_indices = @transform_2, window_bounds = array<i64: 1, 640>}, {pipeline_mode = #tpu.pipeline_mode<synchronous>, transform_indices = @transform_3, window_bounds = array<i64: 640, 640>}, {pipeline_mode = #tpu.pipeline_mode<synchronous>, transform_indices = @transform_4, window_bounds = array<i64: 1, 640>}, {pipeline_mode = #tpu.pipeline_mode<synchronous>, transform_indices = @transform_5, window_bounds = array<i64: 640, 640>}, {pipeline_mode = #tpu.pipeline_mode<synchronous>, transform_indices = @transform_6, window_bounds = array<i64: 1, 640>}, {pipeline_mode = #tpu.pipeline_mode<synchronous>, transform_indices = @transform_7, window_bounds = array<i64: 640, 896>}, {pipeline_mode = #tpu.pipeline_mode<synchronous>, transform_indices = @transform_8, window_bounds = array<i64: 1, 896>}, {pipeline_mode = #tpu.pipeline_mode<synchronous>, transform_indices = @transform_9, window_bounds = array<i64: 896, 896>}, {pipeline_mode = #tpu.pipeline_mode<synchronous>, transform_indices = @transform_10, window_bounds = array<i64: 1, 896>}, {pipeline_mode = #tpu.pipeline_mode<synchronous>, transform_indices = @transform_11, window_bounds = array<i64: 896, 896>}, {pipeline_mode = #tpu.pipeline_mode<synchronous>, transform_indices = @transform_12, window_bounds = array<i64: 1, 896>}, {transform_indices = @transform_13, window_bounds = array<i64: 8, 896>}]} {
    %c0 = arith.constant 0 : index
    %c0_0 = arith.constant 0 : index
    %0 = vector.load %arg1[%c0, %c0_0] : memref<8x32xf32, #tpu.memory_space<vmem>>, vector<8x32xf32>
    %1 = arith.truncf %0 : vector<8x32xf32> to vector<8x32xbf16>
    %c0_1 = arith.constant 0 : index
    %c0_2 = arith.constant 0 : index
    %2 = vector.load %arg2[%c0_1, %c0_2] : memref<32x640xbf16, #tpu.memory_space<vmem>>, vector<32x640xbf16>
    %cst = arith.constant dense<0.000000e+00> : vector<8x640xf32>
    %3 = tpu.matmul %1, %2, %cst {dimension_numbers = #tpu.dot_dimension_numbers<[1], [0], [0], [1], [0, 0, 1, 1], [], []>} : vector<8x32xbf16>, vector<32x640xbf16>, vector<8x640xf32> -> vector<8x640xf32>
    %c0_3 = arith.constant 0 : index
    %c0_4 = arith.constant 0 : index
    %4 = vector.load %arg3[%c0_3, %c0_4] : memref<1x640xf32, #tpu.memory_space<vmem>>, vector<1x640xf32>
    %5 = vector.broadcast %4 : vector<1x640xf32> to vector<8x640xf32>
    %6 = arith.addf %3, %5 : vector<8x640xf32>
    %cst_5 = arith.constant 0.000000e+00 : f32
    %7 = vector.broadcast %cst_5 : f32 to vector<8x640xf32>
    %8 = arith.maximumf %6, %7 : vector<8x640xf32>
    %9 = arith.truncf %8 : vector<8x640xf32> to vector<8x640xbf16>
    %c0_6 = arith.constant 0 : index
    %c0_7 = arith.constant 0 : index
    %10 = vector.load %arg4[%c0_6, %c0_7] : memref<640x640xbf16, #tpu.memory_space<vmem>>, vector<640x640xbf16>
    %cst_8 = arith.constant dense<0.000000e+00> : vector<8x640xf32>
    %11 = tpu.matmul %9, %10, %cst_8 {dimension_numbers = #tpu.dot_dimension_numbers<[1], [0], [0], [1], [0, 0, 1, 1], [], []>} : vector<8x640xbf16>, vector<640x640xbf16>, vector<8x640xf32> -> vector<8x640xf32>
    %c0_9 = arith.constant 0 : index
    %c0_10 = arith.constant 0 : index
    %12 = vector.load %arg5[%c0_9, %c0_10] : memref<1x640xf32, #tpu.memory_space<vmem>>, vector<1x640xf32>
    %13 = vector.broadcast %12 : vector<1x640xf32> to vector<8x640xf32>
    %14 = arith.addf %11, %13 : vector<8x640xf32>
    %cst_11 = arith.constant 0.000000e+00 : f32
    %15 = vector.broadcast %cst_11 : f32 to vector<8x640xf32>
    %16 = arith.maximumf %14, %15 : vector<8x640xf32>
    %17 = arith.truncf %16 : vector<8x640xf32> to vector<8x640xbf16>
    %c0_12 = arith.constant 0 : index
    %c0_13 = arith.constant 0 : index
    %18 = vector.load %arg6[%c0_12, %c0_13] : memref<640x640xbf16, #tpu.memory_space<vmem>>, vector<640x640xbf16>
    %cst_14 = arith.constant dense<0.000000e+00> : vector<8x640xf32>
    %19 = tpu.matmul %17, %18, %cst_14 {dimension_numbers = #tpu.dot_dimension_numbers<[1], [0], [0], [1], [0, 0, 1, 1], [], []>} : vector<8x640xbf16>, vector<640x640xbf16>, vector<8x640xf32> -> vector<8x640xf32>
    %c0_15 = arith.constant 0 : index
    %c0_16 = arith.constant 0 : index
    %20 = vector.load %arg7[%c0_15, %c0_16] : memref<1x640xf32, #tpu.memory_space<vmem>>, vector<1x640xf32>
    %21 = vector.broadcast %20 : vector<1x640xf32> to vector<8x640xf32>
    %22 = arith.addf %19, %21 : vector<8x640xf32>
    %cst_17 = arith.constant 0.000000e+00 : f32
    %23 = vector.broadcast %cst_17 : f32 to vector<8x640xf32>
    %24 = arith.maximumf %22, %23 : vector<8x640xf32>
    %25 = arith.truncf %24 : vector<8x640xf32> to vector<8x640xbf16>
    %c0_18 = arith.constant 0 : index
    %c0_19 = arith.constant 0 : index
    %26 = vector.load %arg8[%c0_18, %c0_19] : memref<640x896xbf16, #tpu.memory_space<vmem>>, vector<640x896xbf16>
    %cst_20 = arith.constant dense<0.000000e+00> : vector<8x896xf32>
    %27 = tpu.matmul %25, %26, %cst_20 {dimension_numbers = #tpu.dot_dimension_numbers<[1], [0], [0], [1], [0, 0, 1, 1], [], []>} : vector<8x640xbf16>, vector<640x896xbf16>, vector<8x896xf32> -> vector<8x896xf32>
    %c0_21 = arith.constant 0 : index
    %c0_22 = arith.constant 0 : index
    %28 = vector.load %arg9[%c0_21, %c0_22] : memref<1x896xf32, #tpu.memory_space<vmem>>, vector<1x896xf32>
    %29 = vector.broadcast %28 : vector<1x896xf32> to vector<8x896xf32>
    %30 = arith.addf %27, %29 : vector<8x896xf32>
    %cst_23 = arith.constant 0.000000e+00 : f32
    %31 = vector.broadcast %cst_23 : f32 to vector<8x896xf32>
    %32 = arith.maximumf %30, %31 : vector<8x896xf32>
    %33 = arith.truncf %32 : vector<8x896xf32> to vector<8x896xbf16>
    %c0_24 = arith.constant 0 : index
    %c0_25 = arith.constant 0 : index
    %34 = vector.load %arg10[%c0_24, %c0_25] : memref<896x896xbf16, #tpu.memory_space<vmem>>, vector<896x896xbf16>
    %cst_26 = arith.constant dense<0.000000e+00> : vector<8x896xf32>
    %35 = tpu.matmul %33, %34, %cst_26 {dimension_numbers = #tpu.dot_dimension_numbers<[1], [0], [0], [1], [0, 0, 1, 1], [], []>} : vector<8x896xbf16>, vector<896x896xbf16>, vector<8x896xf32> -> vector<8x896xf32>
    %c0_27 = arith.constant 0 : index
    %c0_28 = arith.constant 0 : index
    %36 = vector.load %arg11[%c0_27, %c0_28] : memref<1x896xf32, #tpu.memory_space<vmem>>, vector<1x896xf32>
    %37 = vector.broadcast %36 : vector<1x896xf32> to vector<8x896xf32>
    %38 = arith.addf %35, %37 : vector<8x896xf32>
    %cst_29 = arith.constant 0.000000e+00 : f32
    %39 = vector.broadcast %cst_29 : f32 to vector<8x896xf32>
    %40 = arith.maximumf %38, %39 : vector<8x896xf32>
    %41 = arith.truncf %40 : vector<8x896xf32> to vector<8x896xbf16>
    %c0_30 = arith.constant 0 : index
    %c0_31 = arith.constant 0 : index
    %42 = vector.load %arg12[%c0_30, %c0_31] : memref<896x896xbf16, #tpu.memory_space<vmem>>, vector<896x896xbf16>
    %cst_32 = arith.constant dense<0.000000e+00> : vector<8x896xf32>
    %43 = tpu.matmul %41, %42, %cst_32 {dimension_numbers = #tpu.dot_dimension_numbers<[1], [0], [0], [1], [0, 0, 1, 1], [], []>} : vector<8x896xbf16>, vector<896x896xbf16>, vector<8x896xf32> -> vector<8x896xf32>
    %c0_33 = arith.constant 0 : index
    %c0_34 = arith.constant 0 : index
    %44 = vector.load %arg13[%c0_33, %c0_34] : memref<1x896xf32, #tpu.memory_space<vmem>>, vector<1x896xf32>
    %45 = vector.broadcast %44 : vector<1x896xf32> to vector<8x896xf32>
    %46 = arith.addf %43, %45 : vector<8x896xf32>
    %c0_35 = arith.constant 0 : index
    %c0_36 = arith.constant 0 : index
    %47 = vector.load %arg14[%c0_35, %c0_36] : memref<8x896xf32, #tpu.memory_space<vmem>>, vector<8x896xf32>
    tpu.vector_store %arg14[%c0_35, %c0_36], %46 {strides = array<i32>} : memref<8x896xf32, #tpu.memory_space<vmem>>, vector<8x896xf32>,
    return
  }
  func.func @transform_0(%arg0: i32) -> (i32, i32) {
    %c0_i32 = arith.constant 0 : i32
    %c0_i32_0 = arith.constant 0 : i32
    return %arg0, %c0_i32 : i32, i32
  }
  func.func @transform_1(%arg0: i32) -> (i32, i32) {
    %c0_i32 = arith.constant 0 : i32
    %c0_i32_0 = arith.constant 0 : i32
    %c0_i32_1 = arith.constant 0 : i32
    return %c0_i32, %c0_i32_0 : i32, i32
  }
  func.func @transform_2(%arg0: i32) -> (i32, i32) {
    %c0_i32 = arith.constant 0 : i32
    %c0_i32_0 = arith.constant 0 : i32
    %c0_i32_1 = arith.constant 0 : i32
    return %c0_i32, %c0_i32_0 : i32, i32
  }
  func.func @transform_3(%arg0: i32) -> (i32, i32) {
    %c0_i32 = arith.constant 0 : i32
    %c0_i32_0 = arith.constant 0 : i32
    %c0_i32_1 = arith.constant 0 : i32
    return %c0_i32, %c0_i32_0 : i32, i32
  }
  func.func @transform_4(%arg0: i32) -> (i32, i32) {
    %c0_i32 = arith.constant 0 : i32
    %c0_i32_0 = arith.constant 0 : i32
    %c0_i32_1 = arith.constant 0 : i32
    return %c0_i32, %c0_i32_0 : i32, i32
  }
  func.func @transform_5(%arg0: i32) -> (i32, i32) {
    %c0_i32 = arith.constant 0 : i32
    %c0_i32_0 = arith.constant 0 : i32
    %c0_i32_1 = arith.constant 0 : i32
    return %c0_i32, %c0_i32_0 : i32, i32
  }
  func.func @transform_6(%arg0: i32) -> (i32, i32) {
    %c0_i32 = arith.constant 0 : i32
    %c0_i32_0 = arith.constant 0 : i32
    %c0_i32_1 = arith.constant 0 : i32
    return %c0_i32, %c0_i32_0 : i32, i32
  }
  func.func @transform_7(%arg0: i32) -> (i32, i32) {
    %c0_i32 = arith.constant 0 : i32
    %c0_i32_0 = arith.constant 0 : i32
    %c0_i32_1 = arith.constant 0 : i32
    return %c0_i32, %c0_i32_0 : i32, i32
  }
  func.func @transform_8(%arg0: i32) -> (i32, i32) {
    %c0_i32 = arith.constant 0 : i32
    %c0_i32_0 = arith.constant 0 : i32
    %c0_i32_1 = arith.constant 0 : i32
    return %c0_i32, %c0_i32_0 : i32, i32
  }
  func.func @transform_9(%arg0: i32) -> (i32, i32) {
    %c0_i32 = arith.constant 0 : i32
    %c0_i32_0 = arith.constant 0 : i32
    %c0_i32_1 = arith.constant 0 : i32
    return %c0_i32, %c0_i32_0 : i32, i32
  }
  func.func @transform_10(%arg0: i32) -> (i32, i32) {
    %c0_i32 = arith.constant 0 : i32
    %c0_i32_0 = arith.constant 0 : i32
    %c0_i32_1 = arith.constant 0 : i32
    return %c0_i32, %c0_i32_0 : i32, i32
  }
  func.func @transform_11(%arg0: i32) -> (i32, i32) {
    %c0_i32 = arith.constant 0 : i32
    %c0_i32_0 = arith.constant 0 : i32
    %c0_i32_1 = arith.constant 0 : i32
    return %c0_i32, %c0_i32_0 : i32, i32
  }
  func.func @transform_12(%arg0: i32) -> (i32, i32) {
    %c0_i32 = arith.constant 0 : i32
    %c0_i32_0 = arith.constant 0 : i32
    %c0_i32_1 = arith.constant 0 : i32
    return %c0_i32, %c0_i32_0 : i32, i32
  }
  func.func @transform_13(%arg0: i32) -> (i32, i32) {
    %c0_i32 = arith.constant 0 : i32
    %c0_i32_0 = arith.constant 0 : i32
    return %arg0, %c0_i32 : i32, i32
  }
}

</mosaic_0001>

<llo_original>
// kernel: general_decoder_pallas.1
$region0: #{general_decoder_pallas.1}
  #allocation0 [shape = 'u32[]', space=smem, size = 0x4, offset = 0x4, fixed_abs, tag = 'smem constant byte address 0x4 - core index']
  #allocation1 [shape = 'u32[144,128]{1,0:T(1,128)}', space=vmem, size = 0x12000, scoped, tag = 'internal scratch']
  %s0 = inlined_call_operand.vmem [shape: f32[8,32], index: 0, kind: input, shape index: {}]
  %s1 = inlined_call_operand.vmem [shape: bf16[32,640], index: 1, kind: input, shape index: {}]
  %s2 = inlined_call_operand.vmem [shape: f32[1,640], index: 2, kind: input, shape index: {}]
  %s3 = inlined_call_operand.vmem [shape: bf16[640,640], index: 3, kind: input, shape index: {}]
  %s4 = inlined_call_operand.vmem [shape: f32[1,640], index: 4, kind: input, shape index: {}]
  %s5 = inlined_call_operand.vmem [shape: bf16[640,640], index: 5, kind: input, shape index: {}]
  %s6 = inlined_call_operand.vmem [shape: f32[1,640], index: 6, kind: input, shape index: {}]
  %s7 = inlined_call_operand.vmem [shape: bf16[640,896], index: 7, kind: input, shape index: {}]
  %s8 = inlined_call_operand.vmem [shape: f32[1,896], index: 8, kind: input, shape index: {}]
  %s9 = inlined_call_operand.vmem [shape: bf16[896,896], index: 9, kind: input, shape index: {}]
  %s10 = inlined_call_operand.vmem [shape: f32[1,896], index: 10, kind: input, shape index: {}]
  %s11 = inlined_call_operand.vmem [shape: bf16[896,896], index: 11, kind: input, shape index: {}]
  %s12 = inlined_call_operand.vmem [shape: f32[1,896], index: 12, kind: input, shape index: {}]
  %s13 = inlined_call_operand.vmem [shape: f32[8,896], index: 13, kind: output, shape index: {}]
  %s14 = sld [smem:[#allocation0]]
  $region62: #{general_decoder_pallas.1} parent=0
    _
  %s16 = ssub.s32 1, %s14
  %s17 = scalar_select 0, %s16, %s14
  // Predicated region
  $region2: #{general_decoder_pallas.1} parent=0 // pred_check
    _
  $region3: #{general_decoder_pallas.1} parent=0 // pred_check_branch
    %19 = sbr.rel (0) target = $region5
  $region4: #{general_decoder_pallas.1} parent=0 // pred_region
    _
  $region5: #{general_decoder_pallas.1} parent=0 // pred_fallthru
    _
  // Predicated region
  $region6: #{general_decoder_pallas.1} parent=0 // pred_check
    _
  $region7: #{general_decoder_pallas.1} parent=0 // pred_check_branch
    %21 = sbr.rel (0) target = $region9
  $region8: #{general_decoder_pallas.1} parent=0 // pred_region
    _
  $region9: #{general_decoder_pallas.1} parent=0 // pred_fallthru
    _
  // Predicated region
  $region10: #{general_decoder_pallas.1} parent=0 // pred_check
    _
  $region11: #{general_decoder_pallas.1} parent=0 // pred_check_branch
    %23 = sbr.rel (0) target = $region13
  $region12: #{general_decoder_pallas.1} parent=0 // pred_region
    _
  $region13: #{general_decoder_pallas.1} parent=0 // pred_fallthru
    _
  // Predicated region
  $region14: #{general_decoder_pallas.1} parent=0 // pred_check
    _
  $region15: #{general_decoder_pallas.1} parent=0 // pred_check_branch
    %25 = sbr.rel (0) target = $region17
  $region16: #{general_decoder_pallas.1} parent=0 // pred_region
    _
  $region17: #{general_decoder_pallas.1} parent=0 // pred_fallthru
    _
  // Predicated region
  $region18: #{general_decoder_pallas.1} parent=0 // pred_check
    _
  $region19: #{general_decoder_pallas.1} parent=0 // pred_check_branch
    %27 = sbr.rel (0) target = $region21
  $region20: #{general_decoder_pallas.1} parent=0 // pred_region
    _
  $region21: #{general_decoder_pallas.1} parent=0 // pred_fallthru
    _
  // Predicated region
  $region22: #{general_decoder_pallas.1} parent=0 // pred_check
    _
  $region23: #{general_decoder_pallas.1} parent=0 // pred_check_branch
    %29 = sbr.rel (0) target = $region25
  $region24: #{general_decoder_pallas.1} parent=0 // pred_region
    _
  $region25: #{general_decoder_pallas.1} parent=0 // pred_fallthru
    _
  // Predicated region
  $region26: #{general_decoder_pallas.1} parent=0 // pred_check
    _
  $region27: #{general_decoder_pallas.1} parent=0 // pred_check_branch
    %31 = sbr.rel (0) target = $region29
  $region28: #{general_decoder_pallas.1} parent=0 // pred_region
    _
  $region29: #{general_decoder_pallas.1} parent=0 // pred_fallthru
    _
  // Predicated region
  $region30: #{general_decoder_pallas.1} parent=0 // pred_check
    _
  $region31: #{general_decoder_pallas.1} parent=0 // pred_check_branch
    %33 = sbr.rel (0) target = $region33
  $region32: #{general_decoder_pallas.1} parent=0 // pred_region
    _
  $region33: #{general_decoder_pallas.1} parent=0 // pred_fallthru
    _
  // Predicated region
  $region34: #{general_decoder_pallas.1} parent=0 // pred_check
    _
  $region35: #{general_decoder_pallas.1} parent=0 // pred_check_branch
    %35 = sbr.rel (0) target = $region37
  $region36: #{general_decoder_pallas.1} parent=0 // pred_region
    _
  $region37: #{general_decoder_pallas.1} parent=0 // pred_fallthru
    _
  // Predicated region
  $region38: #{general_decoder_pallas.1} parent=0 // pred_check
    _
  $region39: #{general_decoder_pallas.1} parent=0 // pred_check_branch
    %37 = sbr.rel (0) target = $region41
  $region40: #{general_decoder_pallas.1} parent=0 // pred_region
    _
  $region41: #{general_decoder_pallas.1} parent=0 // pred_fallthru
    _
  // Predicated region
  $region42: #{general_decoder_pallas.1} parent=0 // pred_check
    _
  $region43: #{general_decoder_pallas.1} parent=0 // pred_check_branch
    %39 = sbr.rel (0) target = $region45
  $region44: #{general_decoder_pallas.1} parent=0 // pred_region
    _
  $region45: #{general_decoder_pallas.1} parent=0 // pred_fallthru
    _
  // Predicated region
  $region46: #{general_decoder_pallas.1} parent=0 // pred_check
    _
  $region47: #{general_decoder_pallas.1} parent=0 // pred_check_branch
    %41 = sbr.rel (0) target = $region49
  $region48: #{general_decoder_pallas.1} parent=0 // pred_region
    _
  $region49: #{general_decoder_pallas.1} parent=0 // pred_fallthru
    _
  // Predicated region
  $region50: #{general_decoder_pallas.1} parent=0 // pred_check
    _
  $region51: #{general_decoder_pallas.1} parent=0 // pred_check_branch
    %43 = sbr.rel (0) target = $region53
  $region52: #{general_decoder_pallas.1} parent=0 // pred_region
    _
  $region53: #{general_decoder_pallas.1} parent=0 // pred_fallthru
    _
  %v45 = vld [vmem:[%s0] sm:$0xff]
  %v46 = vpack.c.bf16 %v45, %v45
  %v47 = vld [vmem:[%s1] sm:$0xff]
  %v48 = vld [vmem:[%s1 + $0x8] sm:$0xff]
  %v49 = vld [vmem:[%s1 + $0x10] sm:$0xf]
  %v50 = vld [vmem:[%s1 + $0x14] sm:$0xff]
  %v51 = vld [vmem:[%s1 + $0x1c] sm:$0xff]
  %v52 = vld [vmem:[%s1 + $0x24] sm:$0xf]
  %v53 = vld [vmem:[%s1 + $0x28] sm:$0xff]
  %v54 = vld [vmem:[%s1 + $0x30] sm:$0xff]
  %v55 = vld [vmem:[%s1 + $0x38] sm:$0xf]
  %v56 = vld [vmem:[%s1 + $0x3c] sm:$0xff]
  %v57 = vld [vmem:[%s1 + $0x44] sm:$0xff]
  %v58 = vld [vmem:[%s1 + $0x4c] sm:$0xf]
  %v59 = vld [vmem:[%s2] sm:$0x1f]
  %v61 = vlaneseq
  %v62 = vshrl.u32 %v61, 7
  %v63 = vsub.s32 0, %v62
  %v64 = vrot.slane %v59, %v63
  %v65 = vlaneseq
  %v66 = vshrl.u32 %v65, 7
  %v67 = vsub.s32 1, %v66
  %v68 = vrot.slane %v59, %v67
  %v69 = vlaneseq
  %v70 = vshrl.u32 %v69, 7
  %v71 = vsub.s32 2, %v70
  %v72 = vrot.slane %v59, %v71
  %v73 = vlaneseq
  %v74 = vshrl.u32 %v73, 7
  %v75 = vsub.s32 3, %v74
  %v76 = vrot.slane %v59, %v75
  %v77 = vlaneseq
  %v78 = vshrl.u32 %v77, 7
  %v79 = vsub.s32 4, %v78
  %v80 = vrot.slane %v59, %v79
  %v98 = vunpack.c.l.b16 %v47
  %v99 = vunpack.c.h.b16 %v47
  %v100 = vunpack.c.l.b16 %v48
  %v101 = vunpack.c.h.b16 %v48
  %v102 = vunpack.c.l.b16 %v49
  %v103 = vunpack.c.l.b16 %v50
  %v104 = vunpack.c.h.b16 %v50
  %v105 = vunpack.c.l.b16 %v51
  %v106 = vunpack.c.h.b16 %v51
  %v107 = vunpack.c.l.b16 %v52
  %v108 = vunpack.c.l.b16 %v53
  %v109 = vunpack.c.h.b16 %v53
  %v110 = vunpack.c.l.b16 %v54
  %v111 = vunpack.c.h.b16 %v54
  %v112 = vunpack.c.l.b16 %v55
  %v113 = vunpack.c.l.b16 %v56
  %v114 = vunpack.c.h.b16 %v56
  %v115 = vunpack.c.l.b16 %v57
  %v116 = vunpack.c.h.b16 %v57
  %v117 = vunpack.c.l.b16 %v58
  %v118 = vpack.c.b16 %v103, %v98
  %v119 = vpack.c.b16 %v104, %v99
  %v120 = vpack.c.b16 %v105, %v100
  %v121 = vpack.c.b16 %v106, %v101
  %v122 = vpack.c.b16 %v107, %v102
  %v123 = vpack.c.b16 %v113, %v108
  %v124 = vpack.c.b16 %v114, %v109
  %v125 = vpack.c.b16 %v115, %v110
  %v126 = vpack.c.b16 %v116, %v111
  %v127 = vpack.c.b16 %v117, %v112
  %vm138 = vcmask 261120
  %v140 = vsel %vm138, %v46, 0
  %142 = vmatprep.subr.bf16.mxu0 0
  %143 = vmatpush1.bf16.msra.mxu0 0
  %144 = vmatprep.subr.bf16.mxu0 0
  %145 = vmatpush1.bf16.msra.mxu0 0
  %146 = vmatprep.subr.bf16.mxu0 0
  %147 = vmatpush1.bf16.msra.mxu0 0
  %148 = vmatprep.subr.bf16.mxu0 0
  %149 = vmatpush1.bf16.msra.mxu0 0
  %150 = vmatprep.subr.bf16.mxu0 0
  %151 = vmatpush1.bf16.msra.mxu0 0
  %152 = vmatprep.subr.bf16.mxu0 0
  %153 = vmatpush1.bf16.msra.mxu0 0
  %154 = vmatprep.subr.bf16.mxu0 %v124
  %155 = vmatpush1.bf16.msra.mxu0 %v123
  %156 = vmatprep.subr.bf16.mxu0 %v119
  %157 = vmatpush1.bf16.msra.mxu0 %v118
  %158 = vmatprep.subr.bf16.mxu0 0
  %159 = vmatpush2.bf16.msra.mxu0 0
  %160 = vmatprep.subr.bf16.mxu0 0
  %161 = vmatpush2.bf16.msra.mxu0 0
  %162 = vmatprep.subr.bf16.mxu0 0
  %163 = vmatpush2.bf16.msra.mxu0 0
  %164 = vmatprep.subr.bf16.mxu0 0
  %165 = vmatpush2.bf16.msra.mxu0 0
  %166 = vmatprep.subr.bf16.mxu0 0
  %167 = vmatpush2.bf16.msra.mxu0 0
  %168 = vmatprep.subr.bf16.mxu0 0
  %169 = vmatpush2.bf16.msra.mxu0 0
  %170 = vmatprep.subr.bf16.mxu0 0
  %171 = vmatpush2.bf16.msra.mxu0 0
  %172 = vmatprep.subr.bf16.mxu0 0
  %173 = vmatpush2.bf16.msra.mxu0 0
  %174 = vmatprep.mubr.bf16.mxu0 0
  %175 = vmatmul.mubr.bf16.gmra.mxu0 %v140
  %v176 = vpop.f32.mrf.mxu0
  %v177 = vadd.f32 %v64, %v176
  %v178 = vpop.f32.mrf.mxu0
  %v179 = vadd.f32 %v68, %v178
  %v180 = vpop.f32.mrf.mxu0
  %v181 = vpop.f32.mrf.mxu0
  %182 = vdwg.mxu0
  %183 = vmatprep.subr.bf16.mxu0 0
  %184 = vmatpush1.bf16.msra.mxu0 0
  %185 = vmatprep.subr.bf16.mxu0 0
  %186 = vmatpush1.bf16.msra.mxu0 0
  %187 = vmatprep.subr.bf16.mxu0 0
  %188 = vmatpush1.bf16.msra.mxu0 0
  %189 = vmatprep.subr.bf16.mxu0 0
  %190 = vmatpush1.bf16.msra.mxu0 0
  %191 = vmatprep.subr.bf16.mxu0 0
  %192 = vmatpush1.bf16.msra.mxu0 0
  %193 = vmatprep.subr.bf16.mxu0 0
  %194 = vmatpush1.bf16.msra.mxu0 0
  %195 = vmatprep.subr.bf16.mxu0 %v126
  %196 = vmatpush1.bf16.msra.mxu0 %v125
  %197 = vmatprep.subr.bf16.mxu0 %v121
  %198 = vmatpush1.bf16.msra.mxu0 %v120
  %199 = vmatprep.subr.bf16.mxu0 0
  %200 = vmatpush2.bf16.msra.mxu0 0
  %201 = vmatprep.subr.bf16.mxu0 0
  %202 = vmatpush2.bf16.msra.mxu0 0
  %203 = vmatprep.subr.bf16.mxu0 0
  %204 = vmatpush2.bf16.msra.mxu0 0
  %205 = vmatprep.subr.bf16.mxu0 0
  %206 = vmatpush2.bf16.msra.mxu0 0
  %207 = vmatprep.subr.bf16.mxu0 0
  %208 = vmatpush2.bf16.msra.mxu0 0
  %209 = vmatprep.subr.bf16.mxu0 0
  %210 = vmatpush2.bf16.msra.mxu0 0
  %211 = vmatprep.subr.bf16.mxu0 0
  %212 = vmatpush2.bf16.msra.mxu0 0
  %213 = vmatprep.subr.bf16.mxu0 0
  %214 = vmatpush2.bf16.msra.mxu0 0
  %215 = vmatprep.mubr.bf16.mxu0 0
  %216 = vmatmul.mubr.bf16.gmra.mxu0 %v140
  %v217 = vpop.f32.mrf.mxu0
  %v218 = vadd.f32 %v72, %v217
  %v219 = vpop.f32.mrf.mxu0
  %v220 = vadd.f32 %v76, %v219
  %v221 = vpop.f32.mrf.mxu0
  %v222 = vpop.f32.mrf.mxu0
  %223 = vdwg.mxu0
  %224 = vmatprep.subr.bf16.mxu0 0
  %225 = vmatpush1.bf16.msra.mxu0 0
  %226 = vmatprep.subr.bf16.mxu0 0
  %227 = vmatpush1.bf16.msra.mxu0 0
  %228 = vmatprep.subr.bf16.mxu0 0
  %229 = vmatpush1.bf16.msra.mxu0 0
  %230 = vmatprep.subr.bf16.mxu0 0
  %231 = vmatpush1.bf16.msra.mxu0 0
  %232 = vmatprep.subr.bf16.mxu0 0
  %233 = vmatpush1.bf16.msra.mxu0 0
  %234 = vmatprep.subr.bf16.mxu0 0
  %235 = vmatpush1.bf16.msra.mxu0 0
  %236 = vmatprep.subr.bf16.mxu0 0
  %237 = vmatpush1.bf16.msra.mxu0 %v127
  %238 = vmatprep.subr.bf16.mxu0 0
  %239 = vmatpush1.bf16.msra.mxu0 %v122
  %240 = vmatprep.subr.bf16.mxu0 0
  %241 = vmatpush2.bf16.msra.mxu0 0
  %242 = vmatprep.subr.bf16.mxu0 0
  %243 = vmatpush2.bf16.msra.mxu0 0
  %244 = vmatprep.subr.bf16.mxu0 0
  %245 = vmatpush2.bf16.msra.mxu0 0
  %246 = vmatprep.subr.bf16.mxu0 0
  %247 = vmatpush2.bf16.msra.mxu0 0
  %248 = vmatprep.subr.bf16.mxu0 0
  %249 = vmatpush2.bf16.msra.mxu0 0
  %250 = vmatprep.subr.bf16.mxu0 0
  %251 = vmatpush2.bf16.msra.mxu0 0
  %252 = vmatprep.subr.bf16.mxu0 0
  %253 = vmatpush2.bf16.msra.mxu0 0
  %254 = vmatprep.subr.bf16.mxu0 0
  %255 = vmatpush2.bf16.msra.mxu0 0
  %256 = vmatprep.mubr.bf16.mxu0 0
  %257 = vmatmul.mubr.bf16.gmra.mxu0 %v140
  %v258 = vpop.f32.mrf.mxu0
  %v259 = vadd.f32 %v80, %v258
  %v260 = vpop.f32.mrf.mxu0
  %v261 = vpop.f32.mrf.mxu0
  %v262 = vpop.f32.mrf.mxu0
  %263 = vdwg.mxu0
  %v264 = vmax.f32 %v177, 0.0
  %v265 = vmax.f32 %v179, 0.0
  %v266 = vmax.f32 %v218, 0.0
  %v267 = vmax.f32 %v220, 0.0
  %v268 = vmax.f32 %v259, 0.0
  %v269 = vpack.c.bf16 %v264, %v264
  %v270 = vpack.c.bf16 %v265, %v265
  %v271 = vpack.c.bf16 %v266, %v266
  %v272 = vpack.c.bf16 %v267, %v267
  %v273 = vpack.c.bf16 %v268, %v268
  %v274 = vld [vmem:[%s3] sm:$0xff]
  %v275 = vld [vmem:[%s3 + $0x8] sm:$0xff]
  %v276 = vld [vmem:[%s3 + $0x10] sm:$0xf]
  %v277 = vld [vmem:[%s3 + $0x14] sm:$0xff]
  %v278 = vld [vmem:[%s3 + $0x1c] sm:$0xff]
  %v279 = vld [vmem:[%s3 + $0x24] sm:$0xf]
  %v280 = vld [vmem:[%s3 + $0x28] sm:$0xff]
  %v281 = vld [vmem:[%s3 + $0x30] sm:$0xff]
  %v282 = vld [vmem:[%s3 + $0x38] sm:$0xf]
  %v283 = vld [vmem:[%s3 + $0x3c] sm:$0xff]
  %v284 = vld [vmem:[%s3 + $0x44] sm:$0xff]
  %v285 = vld [vmem:[%s3 + $0x4c] sm:$0xf]
  %v286 = vld [vmem:[%s3 + $0x50] sm:$0xff]
  %v287 = vld [vmem:[%s3 + $0x58] sm:$0xff]
  %v288 = vld [vmem:[%s3 + $0x60] sm:$0xf]
  %v289 = vld [vmem:[%s3 + $0x64] sm:$0xff]
  %v290 = vld [vmem:[%s3 + $0x6c] sm:$0xff]
  %v291 = vld [vmem:[%s3 + $0x74] sm:$0xf]
  %v292 = vld [vmem:[%s3 + $0x78] sm:$0xff]
  %v293 = vld [vmem:[%s3 + $0x80] sm:$0xff]
  %v294 = vld [vmem:[%s3 + $0x88] sm:$0xf]
  %v295 = vld [vmem:[%s3 + $0x8c] sm:$0xff]
  %v296 = vld [vmem:[%s3 + $0x94] sm:$0xff]
  %v297 = vld [vmem:[%s3 + $0x9c] sm:$0xf]
  %v298 = vld [vmem:[%s3 + $0xa0] sm:$0xff]
  %v299 = vld [vmem:[%s3 + $0xa8] sm:$0xff]
  %v300 = vld [vmem:[%s3 + $0xb0] sm:$0xf]
  %v301 = vld [vmem:[%s3 + $0xb4] sm:$0xff]
  %v302 = vld [vmem:[%s3 + $0xbc] sm:$0xff]
  %v303 = vld [vmem:[%s3 + $0xc4] sm:$0xf]
  %v304 = vld [vmem:[%s3 + $0xc8] sm:$0xff]
  %v305 = vld [vmem:[%s3 + $0xd0] sm:$0xff]
  %v306 = vld [vmem:[%s3 + $0xd8] sm:$0xf]
  %v307 = vld [vmem:[%s3 + $0xdc] sm:$0xff]
  %v308 = vld [vmem:[%s3 + $0xe4] sm:$0xff]
  %v309 = vld [vmem:[%s3 + $0xec] sm:$0xf]
  %v310 = vld [vmem:[%s3 + $0xf0] sm:$0xff]
  %v311 = vld [vmem:[%s3 + $0xf8] sm:$0xff]
  %v312 = vld [vmem:[%s3 + $0x100] sm:$0xf]
  %v313 = vld [vmem:[%s3 + $0x104] sm:$0xff]
  %v314 = vld [vmem:[%s3 + $0x10c] sm:$0xff]
  %v315 = vld [vmem:[%s3 + $0x114] sm:$0xf]
  %v316 = vld [vmem:[%s3 + $0x118] sm:$0xff]
  %v317 = vld [vmem:[%s3 + $0x120] sm:$0xff]
  %v318 = vld [vmem:[%s3 + $0x128] sm:$0xf]
  %v319 = vld [vmem:[%s3 + $0x12c] sm:$0xff]
  %v320 = vld [vmem:[%s3 + $0x134] sm:$0xff]
  %v321 = vld [vmem:[%s3 + $0x13c] sm:$0xf]
  %v322 = vld [vmem:[%s3 + $0x140] sm:$0xff]
  %v323 = vld [vmem:[%s3 + $0x148] sm:$0xff]
  %v324 = vld [vmem:[%s3 + $0x150] sm:$0xf]
  %v325 = vld [vmem:[%s3 + $0x154] sm:$0xff]
  %v326 = vld [vmem:[%s3 + $0x15c] sm:$0xff]
  %v327 = vld [vmem:[%s3 + $0x164] sm:$0xf]
  %v328 = vld [vmem:[%s3 + $0x168] sm:$0xff]
  %v329 = vld [vmem:[%s3 + $0x170] sm:$0xff]
  %v330 = vld [vmem:[%s3 + $0x178] sm:$0xf]
  %v331 = vld [vmem:[%s3 + $0x17c] sm:$0xff]
  %v332 = vld [vmem:[%s3 + $0x184] sm:$0xff]
  %v333 = vld [vmem:[%s3 + $0x18c] sm:$0xf]
  %v334 = vld [vmem:[%s3 + $0x190] sm:$0xff]
  %v335 = vld [vmem:[%s3 + $0x198] sm:$0xff]
  %v336 = vld [vmem:[%s3 + $0x1a0] sm:$0xf]
  %v337 = vld [vmem:[%s3 + $0x1a4] sm:$0xff]
  %v338 = vld [vmem:[%s3 + $0x1ac] sm:$0xff]
  %v339 = vld [vmem:[%s3 + $0x1b4] sm:$0xf]
  %v340 = vld [vmem:[%s3 + $0x1b8] sm:$0xff]
  %v341 = vld [vmem:[%s3 + $0x1c0] sm:$0xff]
  %v342 = vld [vmem:[%s3 + $0x1c8] sm:$0xf]
  %v343 = vld [vmem:[%s3 + $0x1cc] sm:$0xff]
  %v344 = vld [vmem:[%s3 + $0x1d4] sm:$0xff]
  %v345 = vld [vmem:[%s3 + $0x1dc] sm:$0xf]
  %v346 = vld [vmem:[%s3 + $0x1e0] sm:$0xff]
  %v347 = vld [vmem:[%s3 + $0x1e8] sm:$0xff]
  %v348 = vld [vmem:[%s3 + $0x1f0] sm:$0xf]
  %v349 = vld [vmem:[%s3 + $0x1f4] sm:$0xff]
  %v350 = vld [vmem:[%s3 + $0x1fc] sm:$0xff]
  %v351 = vld [vmem:[%s3 + $0x204] sm:$0xf]
  %v352 = vld [vmem:[%s3 + $0x208] sm:$0xff]
  %v353 = vld [vmem:[%s3 + $0x210] sm:$0xff]
  %v354 = vld [vmem:[%s3 + $0x218] sm:$0xf]
  %v355 = vld [vmem:[%s3 + $0x21c] sm:$0xff]
  %v356 = vld [vmem:[%s3 + $0x224] sm:$0xff]
  %v357 = vld [vmem:[%s3 + $0x22c] sm:$0xf]
  %v358 = vld [vmem:[%s3 + $0x230] sm:$0xff]
  %v359 = vld [vmem:[%s3 + $0x238] sm:$0xff]
  %v360 = vld [vmem:[%s3 + $0x240] sm:$0xf]
  %v361 = vld [vmem:[%s3 + $0x244] sm:$0xff]
  %v362 = vld [vmem:[%s3 + $0x24c] sm:$0xff]
  %v363 = vld [vmem:[%s3 + $0x254] sm:$0xf]
  %v364 = vld [vmem:[%s3 + $0x258] sm:$0xff]
  %v365 = vld [vmem:[%s3 + $0x260] sm:$0xff]
  %v366 = vld [vmem:[%s3 + $0x268] sm:$0xf]
  %v367 = vld [vmem:[%s3 + $0x26c] sm:$0xff]
  %v368 = vld [vmem:[%s3 + $0x274] sm:$0xff]
  %v369 = vld [vmem:[%s3 + $0x27c] sm:$0xf]
  %v370 = vld [vmem:[%s3 + $0x280] sm:$0xff]
  %v371 = vld [vmem:[%s3 + $0x288] sm:$0xff]
  %v372 = vld [vmem:[%s3 + $0x290] sm:$0xf]
  %v373 = vld [vmem:[%s3 + $0x294] sm:$0xff]
  %v374 = vld [vmem:[%s3 + $0x29c] sm:$0xff]
  %v375 = vld [vmem:[%s3 + $0x2a4] sm:$0xf]
  %v376 = vld [vmem:[%s3 + $0x2a8] sm:$0xff]
  %v377 = vld [vmem:[%s3 + $0x2b0] sm:$0xff]
  %v378 = vld [vmem:[%s3 + $0x2b8] sm:$0xf]
  %v379 = vld [vmem:[%s3 + $0x2bc] sm:$0xff]
  %v380 = vld [vmem:[%s3 + $0x2c4] sm:$0xff]
  %v381 = vld [vmem:[%s3 + $0x2cc] sm:$0xf]
  %v382 = vld [vmem:[%s3 + $0x2d0] sm:$0xff]
  %v383 = vld [vmem:[%s3 + $0x2d8] sm:$0xff]
  %v384 = vld [vmem:[%s3 + $0x2e0] sm:$0xf]
  %v385 = vld [vmem:[%s3 + $0x2e4] sm:$0xff]
  %v386 = vld [vmem:[%s3 + $0x2ec] sm:$0xff]
  %v387 = vld [vmem:[%s3 + $0x2f4] sm:$0xf]
  %v388 = vld [vmem:[%s3 + $0x2f8] sm:$0xff]
  %v389 = vld [vmem:[%s3 + $0x300] sm:$0xff]
  %v390 = vld [vmem:[%s3 + $0x308] sm:$0xf]
  %v391 = vld [vmem:[%s3 + $0x30c] sm:$0xff]
  %v392 = vld [vmem:[%s3 + $0x314] sm:$0xff]
  %v393 = vld [vmem:[%s3 + $0x31c] sm:$0xf]
  %v394 = vld [vmem:[%s3 + $0x320] sm:$0xff]
  %v395 = vld [vmem:[%s3 + $0x328] sm:$0xff]
  %v396 = vld [vmem:[%s3 + $0x330] sm:$0xf]
  %v397 = vld [vmem:[%s3 + $0x334] sm:$0xff]
  %v398 = vld [vmem:[%s3 + $0x33c] sm:$0xff]
  %v399 = vld [vmem:[%s3 + $0x344] sm:$0xf]
  %v400 = vld [vmem:[%s3 + $0x348] sm:$0xff]
  %v401 = vld [vmem:[%s3 + $0x350] sm:$0xff]
  %v402 = vld [vmem:[%s3 + $0x358] sm:$0xf]
  %v403 = vld [vmem:[%s3 + $0x35c] sm:$0xff]
  %v404 = vld [vmem:[%s3 + $0x364] sm:$0xff]
  %v405 = vld [vmem:[%s3 + $0x36c] sm:$0xf]
  %v406 = vld [vmem:[%s3 + $0x370] sm:$0xff]
  %v407 = vld [vmem:[%s3 + $0x378] sm:$0xff]
  %v408 = vld [vmem:[%s3 + $0x380] sm:$0xf]
  %v409 = vld [vmem:[%s3 + $0x384] sm:$0xff]
  %v410 = vld [vmem:[%s3 + $0x38c] sm:$0xff]
  %v411 = vld [vmem:[%s3 + $0x394] sm:$0xf]
  %v412 = vld [vmem:[%s3 + $0x398] sm:$0xff]
  %v413 = vld [vmem:[%s3 + $0x3a0] sm:$0xff]
  %v414 = vld [vmem:[%s3 + $0x3a8] sm:$0xf]
  %v415 = vld [vmem:[%s3 + $0x3ac] sm:$0xff]
  %v416 = vld [vmem:[%s3 + $0x3b4] sm:$0xff]
  %v417 = vld [vmem:[%s3 + $0x3bc] sm:$0xf]
  %v418 = vld [vmem:[%s3 + $0x3c0] sm:$0xff]
  %v419 = vld [vmem:[%s3 + $0x3c8] sm:$0xff]
  %v420 = vld [vmem:[%s3 + $0x3d0] sm:$0xf]
  %v421 = vld [vmem:[%s3 + $0x3d4] sm:$0xff]
  %v422 = vld [vmem:[%s3 + $0x3dc] sm:$0xff]
  %v423 = vld [vmem:[%s3 + $0x3e4] sm:$0xf]
  %v424 = vld [vmem:[%s3 + $0x3e8] sm:$0xff]
  %v425 = vld [vmem:[%s3 + $0x3f0] sm:$0xff]
  %v426 = vld [vmem:[%s3 + $0x3f8] sm:$0xf]
  %v427 = vld [vmem:[%s3 + $0x3fc] sm:$0xff]
  %v428 = vld [vmem:[%s3 + $0x404] sm:$0xff]
  %v429 = vld [vmem:[%s3 + $0x40c] sm:$0xf]
  %v430 = vld [vmem:[%s3 + $0x410] sm:$0xff]
  %v431 = vld [vmem:[%s3 + $0x418] sm:$0xff]
  %v432 = vld [vmem:[%s3 + $0x420] sm:$0xf]
  %v433 = vld [vmem:[%s3 + $0x424] sm:$0xff]
  %v434 = vld [vmem:[%s3 + $0x42c] sm:$0xff]
  %v435 = vld [vmem:[%s3 + $0x434] sm:$0xf]
  %v436 = vld [vmem:[%s3 + $0x438] sm:$0xff]
  %v437 = vld [vmem:[%s3 + $0x440] sm:$0xff]
  %v438 = vld [vmem:[%s3 + $0x448] sm:$0xf]
  %v439 = vld [vmem:[%s3 + $0x44c] sm:$0xff]
  %v440 = vld [vmem:[%s3 + $0x454] sm:$0xff]
  %v441 = vld [vmem:[%s3 + $0x45c] sm:$0xf]
  %v442 = vld [vmem:[%s3 + $0x460] sm:$0xff]
  %v443 = vld [vmem:[%s3 + $0x468] sm:$0xff]
  %v444 = vld [vmem:[%s3 + $0x470] sm:$0xf]
  %v445 = vld [vmem:[%s3 + $0x474] sm:$0xff]
  %v446 = vld [vmem:[%s3 + $0x47c] sm:$0xff]
  %v447 = vld [vmem:[%s3 + $0x484] sm:$0xf]
  %v448 = vld [vmem:[%s3 + $0x488] sm:$0xff]
  %v449 = vld [vmem:[%s3 + $0x490] sm:$0xff]
  %v450 = vld [vmem:[%s3 + $0x498] sm:$0xf]
  %v451 = vld [vmem:[%s3 + $0x49c] sm:$0xff]
  %v452 = vld [vmem:[%s3 + $0x4a4] sm:$0xff]
  %v453 = vld [vmem:[%s3 + $0x4ac] sm:$0xf]
  %v454 = vld [vmem:[%s3 + $0x4b0] sm:$0xff]
  %v455 = vld [vmem:[%s3 + $0x4b8] sm:$0xff]
  %v456 = vld [vmem:[%s3 + $0x4c0] sm:$0xf]
  %v457 = vld [vmem:[%s3 + $0x4c4] sm:$0xff]
  %v458 = vld [vmem:[%s3 + $0x4cc] sm:$0xff]
  %v459 = vld [vmem:[%s3 + $0x4d4] sm:$0xf]
  %v460 = vld [vmem:[%s3 + $0x4d8] sm:$0xff]
  %v461 = vld [vmem:[%s3 + $0x4e0] sm:$0xff]
  %v462 = vld [vmem:[%s3 + $0x4e8] sm:$0xf]
  %v463 = vld [vmem:[%s3 + $0x4ec] sm:$0xff]
  %v464 = vld [vmem:[%s3 + $0x4f4] sm:$0xff]
  %v465 = vld [vmem:[%s3 + $0x4fc] sm:$0xf]
  %v466 = vld [vmem:[%s3 + $0x500] sm:$0xff]
  %v467 = vld [vmem:[%s3 + $0x508] sm:$0xff]
  %v468 = vld [vmem:[%s3 + $0x510] sm:$0xf]
  %v469 = vld [vmem:[%s3 + $0x514] sm:$0xff]
  %v470 = vld [vmem:[%s3 + $0x51c] sm:$0xff]
  %v471 = vld [vmem:[%s3 + $0x524] sm:$0xf]
  %v472 = vld [vmem:[%s3 + $0x528] sm:$0xff]
  %v473 = vld [vmem:[%s3 + $0x530] sm:$0xff]
  %v474 = vld [vmem:[%s3 + $0x538] sm:$0xf]
  %v475 = vld [vmem:[%s3 + $0x53c] sm:$0xff]
  %v476 = vld [vmem:[%s3 + $0x544] sm:$0xff]
  %v477 = vld [vmem:[%s3 + $0x54c] sm:$0xf]
  %v478 = vld [vmem:[%s3 + $0x550] sm:$0xff]
  %v479 = vld [vmem:[%s3 + $0x558] sm:$0xff]
  %v480 = vld [vmem:[%s3 + $0x560] sm:$0xf]
  %v481 = vld [vmem:[%s3 + $0x564] sm:$0xff]
  %v482 = vld [vmem:[%s3 + $0x56c] sm:$0xff]
  %v483 = vld [vmem:[%s3 + $0x574] sm:$0xf]
  %v484 = vld [vmem:[%s3 + $0x578] sm:$0xff]
  %v485 = vld [vmem:[%s3 + $0x580] sm:$0xff]
  %v486 = vld [vmem:[%s3 + $0x588] sm:$0xf]
  %v487 = vld [vmem:[%s3 + $0x58c] sm:$0xff]
  %v488 = vld [vmem:[%s3 + $0x594] sm:$0xff]
  %v489 = vld [vmem:[%s3 + $0x59c] sm:$0xf]
  %v490 = vld [vmem:[%s3 + $0x5a0] sm:$0xff]
  %v491 = vld [vmem:[%s3 + $0x5a8] sm:$0xff]
  %v492 = vld [vmem:[%s3 + $0x5b0] sm:$0xf]
  %v493 = vld [vmem:[%s3 + $0x5b4] sm:$0xff]
  %v494 = vld [vmem:[%s3 + $0x5bc] sm:$0xff]
  %v495 = vld [vmem:[%s3 + $0x5c4] sm:$0xf]
  %v496 = vld [vmem:[%s3 + $0x5c8] sm:$0xff]
  %v497 = vld [vmem:[%s3 + $0x5d0] sm:$0xff]
  %v498 = vld [vmem:[%s3 + $0x5d8] sm:$0xf]
  %v499 = vld [vmem:[%s3 + $0x5dc] sm:$0xff]
  %v500 = vld [vmem:[%s3 + $0x5e4] sm:$0xff]
  %v501 = vld [vmem:[%s3 + $0x5ec] sm:$0xf]
  %v502 = vld [vmem:[%s3 + $0x5f0] sm:$0xff]
  %v503 = vld [vmem:[%s3 + $0x5f8] sm:$0xff]
  %v504 = vld [vmem:[%s3 + $0x600] sm:$0xf]
  %v505 = vld [vmem:[%s3 + $0x604] sm:$0xff]
  %v506 = vld [vmem:[%s3 + $0x60c] sm:$0xff]
  %v507 = vld [vmem:[%s3 + $0x614] sm:$0xf]
  %v508 = vld [vmem:[%s3 + $0x618] sm:$0xff]
  %v509 = vld [vmem:[%s3 + $0x620] sm:$0xff]
  %v510 = vld [vmem:[%s3 + $0x628] sm:$0xf]
  %v511 = vld [vmem:[%s3 + $0x62c] sm:$0xff]
  %v512 = vld [vmem:[%s3 + $0x634] sm:$0xff]
  %v513 = vld [vmem:[%s3 + $0x63c] sm:$0xf]
  %v514 = vld [vmem:[%s4] sm:$0x1f]
  %v516 = vlaneseq
  %v517 = vshrl.u32 %v516, 7
  %v518 = vsub.s32 0, %v517
  %v519 = vrot.slane %v514, %v518
  %v520 = vlaneseq
  %v521 = vshrl.u32 %v520, 7
  %v522 = vsub.s32 1, %v521
  %v523 = vrot.slane %v514, %v522
  %v524 = vlaneseq
  %v525 = vshrl.u32 %v524, 7
  %v526 = vsub.s32 2, %v525
  %v527 = vrot.slane %v514, %v526
  %v528 = vlaneseq
  %v529 = vshrl.u32 %v528, 7
  %v530 = vsub.s32 3, %v529
  %v531 = vrot.slane %v514, %v530
  %v532 = vlaneseq
  %v533 = vshrl.u32 %v532, 7
  %v534 = vsub.s32 4, %v533
  %v535 = vrot.slane %v514, %v534
  %v781 = vunpack.c.l.b16 %v274
  %v782 = vunpack.c.h.b16 %v274
  %v783 = vunpack.c.l.b16 %v275
  %v784 = vunpack.c.h.b16 %v275
  %v785 = vunpack.c.l.b16 %v276
  %v786 = vunpack.c.l.b16 %v277
  %v787 = vunpack.c.h.b16 %v277
  %v788 = vunpack.c.l.b16 %v278
  %v789 = vunpack.c.h.b16 %v278
  %v790 = vunpack.c.l.b16 %v279
  %v791 = vunpack.c.l.b16 %v280
  %v792 = vunpack.c.h.b16 %v280
  %v793 = vunpack.c.l.b16 %v281
  %v794 = vunpack.c.h.b16 %v281
  %v795 = vunpack.c.l.b16 %v282
  %v796 = vunpack.c.l.b16 %v283
  %v797 = vunpack.c.h.b16 %v283
  %v798 = vunpack.c.l.b16 %v284
  %v799 = vunpack.c.h.b16 %v284
  %v800 = vunpack.c.l.b16 %v285
  %v801 = vunpack.c.l.b16 %v286
  %v802 = vunpack.c.h.b16 %v286
  %v803 = vunpack.c.l.b16 %v287
  %v804 = vunpack.c.h.b16 %v287
  %v805 = vunpack.c.l.b16 %v288
  %v806 = vunpack.c.l.b16 %v289
  %v807 = vunpack.c.h.b16 %v289
  %v808 = vunpack.c.l.b16 %v290
  %v809 = vunpack.c.h.b16 %v290
  %v810 = vunpack.c.l.b16 %v291
  %v811 = vunpack.c.l.b16 %v292
  %v812 = vunpack.c.h.b16 %v292
  %v813 = vunpack.c.l.b16 %v293
  %v814 = vunpack.c.h.b16 %v293
  %v815 = vunpack.c.l.b16 %v294
  %v816 = vunpack.c.l.b16 %v295
  %v817 = vunpack.c.h.b16 %v295
  %v818 = vunpack.c.l.b16 %v296
  %v819 = vunpack.c.h.b16 %v296
  %v820 = vunpack.c.l.b16 %v297
  %v821 = vunpack.c.l.b16 %v298
  %v822 = vunpack.c.h.b16 %v298
  %v823 = vunpack.c.l.b16 %v299
  %v824 = vunpack.c.h.b16 %v299
  %v825 = vunpack.c.l.b16 %v300
  %v826 = vunpack.c.l.b16 %v301
  %v827 = vunpack.c.h.b16 %v301
  %v828 = vunpack.c.l.b16 %v302
  %v829 = vunpack.c.h.b16 %v302
  %v830 = vunpack.c.l.b16 %v303
  %v831 = vunpack.c.l.b16 %v304
  %v832 = vunpack.c.h.b16 %v304
  %v833 = vunpack.c.l.b16 %v305
  %v834 = vunpack.c.h.b16 %v305
  %v835 = vunpack.c.l.b16 %v306
  %v836 = vunpack.c.l.b16 %v307
  %v837 = vunpack.c.h.b16 %v307
  %v838 = vunpack.c.l.b16 %v308
  %v839 = vunpack.c.h.b16 %v308
  %v840 = vunpack.c.l.b16 %v309
  %v841 = vunpack.c.l.b16 %v310
  %v842 = vunpack.c.h.b16 %v310
  %v843 = vunpack.c.l.b16 %v311
  %v844 = vunpack.c.h.b16 %v311
  %v845 = vunpack.c.l.b16 %v312
  %v846 = vunpack.c.l.b16 %v313
  %v847 = vunpack.c.h.b16 %v313
  %v848 = vunpack.c.l.b16 %v314
  %v849 = vunpack.c.h.b16 %v314
  %v850 = vunpack.c.l.b16 %v315
  %v851 = vunpack.c.l.b16 %v316
  %v852 = vunpack.c.h.b16 %v316
  %v853 = vunpack.c.l.b16 %v317
  %v854 = vunpack.c.h.b16 %v317
  %v855 = vunpack.c.l.b16 %v318
  %v856 = vunpack.c.l.b16 %v319
  %v857 = vunpack.c.h.b16 %v319
  %v858 = vunpack.c.l.b16 %v320
  %v859 = vunpack.c.h.b16 %v320
  %v860 = vunpack.c.l.b16 %v321
  %v861 = vunpack.c.l.b16 %v322
  %v862 = vunpack.c.h.b16 %v322
  %v863 = vunpack.c.l.b16 %v323
  %v864 = vunpack.c.h.b16 %v323
  %v865 = vunpack.c.l.b16 %v324
  %v866 = vunpack.c.l.b16 %v325
  %v867 = vunpack.c.h.b16 %v325
  %v868 = vunpack.c.l.b16 %v326
  %v869 = vunpack.c.h.b16 %v326
  %v870 = vunpack.c.l.b16 %v327
  %v871 = vunpack.c.l.b16 %v328
  %v872 = vunpack.c.h.b16 %v328
  %v873 = vunpack.c.l.b16 %v329
  %v874 = vunpack.c.h.b16 %v329
  %v875 = vunpack.c.l.b16 %v330
  %v876 = vunpack.c.l.b16 %v331
  %v877 = vunpack.c.h.b16 %v331
  %v878 = vunpack.c.l.b16 %v332
  %v879 = vunpack.c.h.b16 %v332
  %v880 = vunpack.c.l.b16 %v333
  %v881 = vunpack.c.l.b16 %v334
  %v882 = vunpack.c.h.b16 %v334
  %v883 = vunpack.c.l.b16 %v335
  %v884 = vunpack.c.h.b16 %v335
  %v885 = vunpack.c.l.b16 %v336
  %v886 = vunpack.c.l.b16 %v337
  %v887 = vunpack.c.h.b16 %v337
  %v888 = vunpack.c.l.b16 %v338
  %v889 = vunpack.c.h.b16 %v338
  %v890 = vunpack.c.l.b16 %v339
  %v891 = vunpack.c.l.b16 %v340
  %v892 = vunpack.c.h.b16 %v340
  %v893 = vunpack.c.l.b16 %v341
  %v894 = vunpack.c.h.b16 %v341
  %v895 = vunpack.c.l.b16 %v342
  %v896 = vunpack.c.l.b16 %v343
  %v897 = vunpack.c.h.b16 %v343
  %v898 = vunpack.c.l.b16 %v344
  %v899 = vunpack.c.h.b16 %v344
  %v900 = vunpack.c.l.b16 %v345
  %v901 = vunpack.c.l.b16 %v346
  %v902 = vunpack.c.h.b16 %v346
  %v903 = vunpack.c.l.b16 %v347
  %v904 = vunpack.c.h.b16 %v347
  %v905 = vunpack.c.l.b16 %v348
  %v906 = vunpack.c.l.b16 %v349
  %v907 = vunpack.c.h.b16 %v349
  %v908 = vunpack.c.l.b16 %v350
  %v909 = vunpack.c.h.b16 %v350
  %v910 = vunpack.c.l.b16 %v351
  %v911 = vunpack.c.l.b16 %v352
  %v912 = vunpack.c.h.b16 %v352
  %v913 = vunpack.c.l.b16 %v353
  %v914 = vunpack.c.h.b16 %v353
  %v915 = vunpack.c.l.b16 %v354
  %v916 = vunpack.c.l.b16 %v355
  %v917 = vunpack.c.h.b16 %v355
  %v918 = vunpack.c.l.b16 %v356
  %v919 = vunpack.c.h.b16 %v356
  %v920 = vunpack.c.l.b16 %v357
  %v921 = vunpack.c.l.b16 %v358
  %v922 = vunpack.c.h.b16 %v358
  %v923 = vunpack.c.l.b16 %v359
  %v924 = vunpack.c.h.b16 %v359
  %v925 = vunpack.c.l.b16 %v360
  %v926 = vunpack.c.l.b16 %v361
  %v927 = vunpack.c.h.b16 %v361
  %v928 = vunpack.c.l.b16 %v362
  %v929 = vunpack.c.h.b16 %v362
  %v930 = vunpack.c.l.b16 %v363
  %v931 = vunpack.c.l.b16 %v364
  %v932 = vunpack.c.h.b16 %v364
  %v933 = vunpack.c.l.b16 %v365
  %v934 = vunpack.c.h.b16 %v365
  %v935 = vunpack.c.l.b16 %v366
  %v936 = vunpack.c.l.b16 %v367
  %v937 = vunpack.c.h.b16 %v367
  %v938 = vunpack.c.l.b16 %v368
  %v939 = vunpack.c.h.b16 %v368
  %v940 = vunpack.c.l.b16 %v369
  %v941 = vunpack.c.l.b16 %v370
  %v942 = vunpack.c.h.b16 %v370
  %v943 = vunpack.c.l.b16 %v371
  %v944 = vunpack.c.h.b16 %v371
  %v945 = vunpack.c.l.b16 %v372
  %v946 = vunpack.c.l.b16 %v373
  %v947 = vunpack.c.h.b16 %v373
  %v948 = vunpack.c.l.b16 %v374
  %v949 = vunpack.c.h.b16 %v374
  %v950 = vunpack.c.l.b16 %v375
  %v951 = vunpack.c.l.b16 %v376
  %v952 = vunpack.c.h.b16 %v376
  %v953 = vunpack.c.l.b16 %v377
  %v954 = vunpack.c.h.b16 %v377
  %v955 = vunpack.c.l.b16 %v378
  %v956 = vunpack.c.l.b16 %v379
  %v957 = vunpack.c.h.b16 %v379
  %v958 = vunpack.c.l.b16 %v380
  %v959 = vunpack.c.h.b16 %v380
  %v960 = vunpack.c.l.b16 %v381
  %v961 = vunpack.c.l.b16 %v382
  %v962 = vunpack.c.h.b16 %v382
  %v963 = vunpack.c.l.b16 %v383
  %v964 = vunpack.c.h.b16 %v383
  %v965 = vunpack.c.l.b16 %v384
  %v966 = vunpack.c.l.b16 %v385
  %v967 = vunpack.c.h.b16 %v385
  %v968 = vunpack.c.l.b16 %v386
  %v969 = vunpack.c.h.b16 %v386
  %v970 = vunpack.c.l.b16 %v387
  %v971 = vunpack.c.l.b16 %v388
  %v972 = vunpack.c.h.b16 %v388
  %v973 = vunpack.c.l.b16 %v389
  %v974 = vunpack.c.h.b16 %v389
  %v975 = vunpack.c.l.b16 %v390
  %v976 = vunpack.c.l.b16 %v391
  %v977 = vunpack.c.h.b16 %v391
  %v978 = vunpack.c.l.b16 %v392
  %v979 = vunpack.c.h.b16 %v392
  %v980 = vunpack.c.l.b16 %v393
  %v981 = vunpack.c.l.b16 %v394
  %v982 = vunpack.c.h.b16 %v394
  %v983 = vunpack.c.l.b16 %v395
  %v984 = vunpack.c.h.b16 %v395
  %v985 = vunpack.c.l.b16 %v396
  %v986 = vunpack.c.l.b16 %v397
  %v987 = vunpack.c.h.b16 %v397
  %v988 = vunpack.c.l.b16 %v398
  %v989 = vunpack.c.h.b16 %v398
  %v990 = vunpack.c.l.b16 %v399
  %v991 = vunpack.c.l.b16 %v400
  %v992 = vunpack.c.h.b16 %v400
  %v993 = vunpack.c.l.b16 %v401
  %v994 = vunpack.c.h.b16 %v401
  %v995 = vunpack.c.l.b16 %v402
  %v996 = vunpack.c.l.b16 %v403
  %v997 = vunpack.c.h.b16 %v403
  %v998 = vunpack.c.l.b16 %v404
  %v999 = vunpack.c.h.b16 %v404
  %v1000 = vunpack.c.l.b16 %v405
  %v1001 = vunpack.c.l.b16 %v406
  %v1002 = vunpack.c.h.b16 %v406
  %v1003 = vunpack.c.l.b16 %v407
  %v1004 = vunpack.c.h.b16 %v407
  %v1005 = vunpack.c.l.b16 %v408
  %v1006 = vunpack.c.l.b16 %v409
  %v1007 = vunpack.c.h.b16 %v409
  %v1008 = vunpack.c.l.b16 %v410
  %v1009 = vunpack.c.h.b16 %v410
  %v1010 = vunpack.c.l.b16 %v411
  %v1011 = vunpack.c.l.b16 %v412
  %v1012 = vunpack.c.h.b16 %v412
  %v1013 = vunpack.c.l.b16 %v413
  %v1014 = vunpack.c.h.b16 %v413
  %v1015 = vunpack.c.l.b16 %v414
  %v1016 = vunpack.c.l.b16 %v415
  %v1017 = vunpack.c.h.b16 %v415
  %v1018 = vunpack.c.l.b16 %v416
  %v1019 = vunpack.c.h.b16 %v416
  %v1020 = vunpack.c.l.b16 %v417
  %v1021 = vunpack.c.l.b16 %v418
  %v1022 = vunpack.c.h.b16 %v418
  %v1023 = vunpack.c.l.b16 %v419
  %v1024 = vunpack.c.h.b16 %v419
  %v1025 = vunpack.c.l.b16 %v420
  %v1026 = vunpack.c.l.b16 %v421
  %v1027 = vunpack.c.h.b16 %v421
  %v1028 = vunpack.c.l.b16 %v422
  %v1029 = vunpack.c.h.b16 %v422
  %v1030 = vunpack.c.l.b16 %v423
  %v1031 = vunpack.c.l.b16 %v424
  %v1032 = vunpack.c.h.b16 %v424
  %v1033 = vunpack.c.l.b16 %v425
  %v1034 = vunpack.c.h.b16 %v425
  %v1035 = vunpack.c.l.b16 %v426
  %v1036 = vunpack.c.l.b16 %v427
  %v1037 = vunpack.c.h.b16 %v427
  %v1038 = vunpack.c.l.b16 %v428
  %v1039 = vunpack.c.h.b16 %v428
  %v1040 = vunpack.c.l.b16 %v429
  %v1041 = vunpack.c.l.b16 %v430
  %v1042 = vunpack.c.h.b16 %v430
  %v1043 = vunpack.c.l.b16 %v431
  %v1044 = vunpack.c.h.b16 %v431
  %v1045 = vunpack.c.l.b16 %v432
  %v1046 = vunpack.c.l.b16 %v433
  %v1047 = vunpack.c.h.b16 %v433
  %v1048 = vunpack.c.l.b16 %v434
  %v1049 = vunpack.c.h.b16 %v434
  %v1050 = vunpack.c.l.b16 %v435
  %v1051 = vunpack.c.l.b16 %v436
  %v1052 = vunpack.c.h.b16 %v436
  %v1053 = vunpack.c.l.b16 %v437
  %v1054 = vunpack.c.h.b16 %v437
  %v1055 = vunpack.c.l.b16 %v438
  %v1056 = vunpack.c.l.b16 %v439
  %v1057 = vunpack.c.h.b16 %v439
  %v1058 = vunpack.c.l.b16 %v440
  %v1059 = vunpack.c.h.b16 %v440
  %v1060 = vunpack.c.l.b16 %v441
  %v1061 = vunpack.c.l.b16 %v442
  %v1062 = vunpack.c.h.b16 %v442
  %v1063 = vunpack.c.l.b16 %v443
  %v1064 = vunpack.c.h.b16 %v443
  %v1065 = vunpack.c.l.b16 %v444
  %v1066 = vunpack.c.l.b16 %v445
  %v1067 = vunpack.c.h.b16 %v445
  %v1068 = vunpack.c.l.b16 %v446
  %v1069 = vunpack.c.h.b16 %v446
  %v1070 = vunpack.c.l.b16 %v447
  %v1071 = vunpack.c.l.b16 %v448
  %v1072 = vunpack.c.h.b16 %v448
  %v1073 = vunpack.c.l.b16 %v449
  %v1074 = vunpack.c.h.b16 %v449
  %v1075 = vunpack.c.l.b16 %v450
  %v1076 = vunpack.c.l.b16 %v451
  %v1077 = vunpack.c.h.b16 %v451
  %v1078 = vunpack.c.l.b16 %v452
  %v1079 = vunpack.c.h.b16 %v452
  %v1080 = vunpack.c.l.b16 %v453
  %v1081 = vunpack.c.l.b16 %v454
  %v1082 = vunpack.c.h.b16 %v454
  %v1083 = vunpack.c.l.b16 %v455
  %v1084 = vunpack.c.h.b16 %v455
  %v1085 = vunpack.c.l.b16 %v456
  %v1086 = vunpack.c.l.b16 %v457
  %v1087 = vunpack.c.h.b16 %v457
  %v1088 = vunpack.c.l.b16 %v458
  %v1089 = vunpack.c.h.b16 %v458
  %v1090 = vunpack.c.l.b16 %v459
  %v1091 = vunpack.c.l.b16 %v460
  %v1092 = vunpack.c.h.b16 %v460
  %v1093 = vunpack.c.l.b16 %v461
  %v1094 = vunpack.c.h.b16 %v461
  %v1095 = vunpack.c.l.b16 %v462
  %v1096 = vunpack.c.l.b16 %v463
  %v1097 = vunpack.c.h.b16 %v463
  %v1098 = vunpack.c.l.b16 %v464
  %v1099 = vunpack.c.h.b16 %v464
  %v1100 = vunpack.c.l.b16 %v465
  %v1101 = vunpack.c.l.b16 %v466
  %v1102 = vunpack.c.h.b16 %v466
  %v1103 = vunpack.c.l.b16 %v467
  %v1104 = vunpack.c.h.b16 %v467
  %v1105 = vunpack.c.l.b16 %v468
  %v1106 = vunpack.c.l.b16 %v469
  %v1107 = vunpack.c.h.b16 %v469
  %v1108 = vunpack.c.l.b16 %v470
  %v1109 = vunpack.c.h.b16 %v470
  %v1110 = vunpack.c.l.b16 %v471
  %v1111 = vunpack.c.l.b16 %v472
  %v1112 = vunpack.c.h.b16 %v472
  %v1113 = vunpack.c.l.b16 %v473
  %v1114 = vunpack.c.h.b16 %v473
  %v1115 = vunpack.c.l.b16 %v474
  %v1116 = vunpack.c.l.b16 %v475
  %v1117 = vunpack.c.h.b16 %v475
  %v1118 = vunpack.c.l.b16 %v476
  %v1119 = vunpack.c.h.b16 %v476
  %v1120 = vunpack.c.l.b16 %v477
  %v1121 = vunpack.c.l.b16 %v478
  %v1122 = vunpack.c.h.b16 %v478
  %v1123 = vunpack.c.l.b16 %v479
  %v1124 = vunpack.c.h.b16 %v479
  %v1125 = vunpack.c.l.b16 %v480
  %v1126 = vunpack.c.l.b16 %v481
  %v1127 = vunpack.c.h.b16 %v481
  %v1128 = vunpack.c.l.b16 %v482
  %v1129 = vunpack.c.h.b16 %v482
  %v1130 = vunpack.c.l.b16 %v483
  %v1131 = vunpack.c.l.b16 %v484
  %v1132 = vunpack.c.h.b16 %v484
  %v1133 = vunpack.c.l.b16 %v485
  %v1134 = vunpack.c.h.b16 %v485
  %v1135 = vunpack.c.l.b16 %v486
  %v1136 = vunpack.c.l.b16 %v487
  %v1137 = vunpack.c.h.b16 %v487
  %v1138 = vunpack.c.l.b16 %v488
  %v1139 = vunpack.c.h.b16 %v488
  %v1140 = vunpack.c.l.b16 %v489
  %v1141 = vunpack.c.l.b16 %v490
  %v1142 = vunpack.c.h.b16 %v490
  %v1143 = vunpack.c.l.b16 %v491
  %v1144 = vunpack.c.h.b16 %v491
  %v1145 = vunpack.c.l.b16 %v492
  %v1146 = vunpack.c.l.b16 %v493
  %v1147 = vunpack.c.h.b16 %v493
  %v1148 = vunpack.c.l.b16 %v494
  %v1149 = vunpack.c.h.b16 %v494
  %v1150 = vunpack.c.l.b16 %v495
  %v1151 = vunpack.c.l.b16 %v496
  %v1152 = vunpack.c.h.b16 %v496
  %v1153 = vunpack.c.l.b16 %v497
  %v1154 = vunpack.c.h.b16 %v497
  %v1155 = vunpack.c.l.b16 %v498
  %v1156 = vunpack.c.l.b16 %v499
  %v1157 = vunpack.c.h.b16 %v499
  %v1158 = vunpack.c.l.b16 %v500
  %v1159 = vunpack.c.h.b16 %v500
  %v1160 = vunpack.c.l.b16 %v501
  %v1161 = vunpack.c.l.b16 %v502
  %v1162 = vunpack.c.h.b16 %v502
  %v1163 = vunpack.c.l.b16 %v503
  %v1164 = vunpack.c.h.b16 %v503
  %v1165 = vunpack.c.l.b16 %v504
  %v1166 = vunpack.c.l.b16 %v505
  %v1167 = vunpack.c.h.b16 %v505
  %v1168 = vunpack.c.l.b16 %v506
  %v1169 = vunpack.c.h.b16 %v506
  %v1170 = vunpack.c.l.b16 %v507
  %v1171 = vunpack.c.l.b16 %v508
  %v1172 = vunpack.c.h.b16 %v508
  %v1173 = vunpack.c.l.b16 %v509
  %v1174 = vunpack.c.h.b16 %v509
  %v1175 = vunpack.c.l.b16 %v510
  %v1176 = vunpack.c.l.b16 %v511
  %v1177 = vunpack.c.h.b16 %v511
  %v1178 = vunpack.c.l.b16 %v512
  %v1179 = vunpack.c.h.b16 %v512
  %v1180 = vunpack.c.l.b16 %v513
  %v1181 = vpack.c.b16 %v786, %v781
  %v1182 = vpack.c.b16 %v787, %v782
  %v1183 = vpack.c.b16 %v788, %v783
  %v1184 = vpack.c.b16 %v789, %v784
  %v1185 = vpack.c.b16 %v790, %v785
  %v1186 = vpack.c.b16 %v796, %v791
  %v1187 = vpack.c.b16 %v797, %v792
  %v1188 = vpack.c.b16 %v798, %v793
  %v1189 = vpack.c.b16 %v799, %v794
  %v1190 = vpack.c.b16 %v800, %v795
  %v1191 = vpack.c.b16 %v806, %v801
  %v1192 = vpack.c.b16 %v807, %v802
  %v1193 = vpack.c.b16 %v808, %v803
  %v1194 = vpack.c.b16 %v809, %v804
  %v1195 = vpack.c.b16 %v810, %v805
  %v1196 = vpack.c.b16 %v816, %v811
  %v1197 = vpack.c.b16 %v817, %v812
  %v1198 = vpack.c.b16 %v818, %v813
  %v1199 = vpack.c.b16 %v819, %v814
  %v1200 = vpack.c.b16 %v820, %v815
  %v1201 = vpack.c.b16 %v826, %v821
  %v1202 = vpack.c.b16 %v827, %v822
  %v1203 = vpack.c.b16 %v828, %v823
  %v1204 = vpack.c.b16 %v829, %v824
  %v1205 = vpack.c.b16 %v830, %v825
  %v1206 = vpack.c.b16 %v836, %v831
  %v1207 = vpack.c.b16 %v837, %v832
  %v1208 = vpack.c.b16 %v838, %v833
  %v1209 = vpack.c.b16 %v839, %v834
  %v1210 = vpack.c.b16 %v840, %v835
  %v1211 = vpack.c.b16 %v846, %v841
  %v1212 = vpack.c.b16 %v847, %v842
  %v1213 = vpack.c.b16 %v848, %v843
  %v1214 = vpack.c.b16 %v849, %v844
  %v1215 = vpack.c.b16 %v850, %v845
  %v1216 = vpack.c.b16 %v856, %v851
  %v1217 = vpack.c.b16 %v857, %v852
  %v1218 = vpack.c.b16 %v858, %v853
  %v1219 = vpack.c.b16 %v859, %v854
  %v1220 = vpack.c.b16 %v860, %v855
  %v1221 = vpack.c.b16 %v866, %v861
  %v1222 = vpack.c.b16 %v867, %v862
  %v1223 = vpack.c.b16 %v868, %v863
  %v1224 = vpack.c.b16 %v869, %v864
  %v1225 = vpack.c.b16 %v870, %v865
  %v1226 = vpack.c.b16 %v876, %v871
  %v1227 = vpack.c.b16 %v877, %v872
  %v1228 = vpack.c.b16 %v878, %v873
  %v1229 = vpack.c.b16 %v879, %v874
  %v1230 = vpack.c.b16 %v880, %v875
  %v1231 = vpack.c.b16 %v886, %v881
  %v1232 = vpack.c.b16 %v887, %v882
  %v1233 = vpack.c.b16 %v888, %v883
  %v1234 = vpack.c.b16 %v889, %v884
  %v1235 = vpack.c.b16 %v890, %v885
  %v1236 = vpack.c.b16 %v896, %v891
  %v1237 = vpack.c.b16 %v897, %v892
  %v1238 = vpack.c.b16 %v898, %v893
  %v1239 = vpack.c.b16 %v899, %v894
  %v1240 = vpack.c.b16 %v900, %v895
  %v1241 = vpack.c.b16 %v906, %v901
  %v1242 = vpack.c.b16 %v907, %v902
  %v1243 = vpack.c.b16 %v908, %v903
  %v1244 = vpack.c.b16 %v909, %v904
  %v1245 = vpack.c.b16 %v910, %v905
  %v1246 = vpack.c.b16 %v916, %v911
  %v1247 = vpack.c.b16 %v917, %v912
  %v1248 = vpack.c.b16 %v918, %v913
  %v1249 = vpack.c.b16 %v919, %v914
  %v1250 = vpack.c.b16 %v920, %v915
  %v1251 = vpack.c.b16 %v926, %v921
  %v1252 = vpack.c.b16 %v927, %v922
  %v1253 = vpack.c.b16 %v928, %v923
  %v1254 = vpack.c.b16 %v929, %v924
  %v1255 = vpack.c.b16 %v930, %v925
  %v1256 = vpack.c.b16 %v936, %v931
  %v1257 = vpack.c.b16 %v937, %v932
  %v1258 = vpack.c.b16 %v938, %v933
  %v1259 = vpack.c.b16 %v939, %v934
  %v1260 = vpack.c.b16 %v940, %v935
  %v1261 = vpack.c.b16 %v946, %v941
  %v1262 = vpack.c.b16 %v947, %v942
  %v1263 = vpack.c.b16 %v948, %v943
  %v1264 = vpack.c.b16 %v949, %v944
  %v1265 = vpack.c.b16 %v950, %v945
  %v1266 = vpack.c.b16 %v956, %v951
  %v1267 = vpack.c.b16 %v957, %v952
  %v1268 = vpack.c.b16 %v958, %v953
  %v1269 = vpack.c.b16 %v959, %v954
  %v1270 = vpack.c.b16 %v960, %v955
  %v1271 = vpack.c.b16 %v966, %v961
  %v1272 = vpack.c.b16 %v967, %v962
  %v1273 = vpack.c.b16 %v968, %v963
  %v1274 = vpack.c.b16 %v969, %v964
  %v1275 = vpack.c.b16 %v970, %v965
  %v1276 = vpack.c.b16 %v976, %v971
  %v1277 = vpack.c.b16 %v977, %v972
  %v1278 = vpack.c.b16 %v978, %v973
  %v1279 = vpack.c.b16 %v979, %v974
  %v1280 = vpack.c.b16 %v980, %v975
  %v1281 = vpack.c.b16 %v986, %v981
  %v1282 = vpack.c.b16 %v987, %v982
  %v1283 = vpack.c.b16 %v988, %v983
  %v1284 = vpack.c.b16 %v989, %v984
  %v1285 = vpack.c.b16 %v990, %v985
  %v1286 = vpack.c.b16 %v996, %v991
  %v1287 = vpack.c.b16 %v997, %v992
  %v1288 = vpack.c.b16 %v998, %v993
  %v1289 = vpack.c.b16 %v999, %v994
  %v1290 = vpack.c.b16 %v1000, %v995
  %v1291 = vpack.c.b16 %v1006, %v1001
  %v1292 = vpack.c.b16 %v1007, %v1002
  %v1293 = vpack.c.b16 %v1008, %v1003
  %v1294 = vpack.c.b16 %v1009, %v1004
  %v1295 = vpack.c.b16 %v1010, %v1005
  %v1296 = vpack.c.b16 %v1016, %v1011
  %v1297 = vpack.c.b16 %v1017, %v1012
  %v1298 = vpack.c.b16 %v1018, %v1013
  %v1299 = vpack.c.b16 %v1019, %v1014
  %v1300 = vpack.c.b16 %v1020, %v1015
  %v1301 = vpack.c.b16 %v1026, %v1021
  %v1302 = vpack.c.b16 %v1027, %v1022
  %v1303 = vpack.c.b16 %v1028, %v1023
  %v1304 = vpack.c.b16 %v1029, %v1024
  %v1305 = vpack.c.b16 %v1030, %v1025
  %v1306 = vpack.c.b16 %v1036, %v1031
  %v1307 = vpack.c.b16 %v1037, %v1032
  %v1308 = vpack.c.b16 %v1038, %v1033
  %v1309 = vpack.c.b16 %v1039, %v1034
  %v1310 = vpack.c.b16 %v1040, %v1035
  %v1311 = vpack.c.b16 %v1046, %v1041
  %v1312 = vpack.c.b16 %v1047, %v1042
  %v1313 = vpack.c.b16 %v1048, %v1043
  %v1314 = vpack.c.b16 %v1049, %v1044
  %v1315 = vpack.c.b16 %v1050, %v1045
  %v1316 = vpack.c.b16 %v1056, %v1051
  %v1317 = vpack.c.b16 %v1057, %v1052
  %v1318 = vpack.c.b16 %v1058, %v1053
  %v1319 = vpack.c.b16 %v1059, %v1054
  %v1320 = vpack.c.b16 %v1060, %v1055
  %v1321 = vpack.c.b16 %v1066, %v1061
  %v1322 = vpack.c.b16 %v1067, %v1062
  %v1323 = vpack.c.b16 %v1068, %v1063
  %v1324 = vpack.c.b16 %v1069, %v1064
  %v1325 = vpack.c.b16 %v1070, %v1065
  %v1326 = vpack.c.b16 %v1076, %v1071
  %v1327 = vpack.c.b16 %v1077, %v1072
  %v1328 = vpack.c.b16 %v1078, %v1073
  %v1329 = vpack.c.b16 %v1079, %v1074
  %v1330 = vpack.c.b16 %v1080, %v1075
  %v1331 = vpack.c.b16 %v1086, %v1081
  %v1332 = vpack.c.b16 %v1087, %v1082
  %v1333 = vpack.c.b16 %v1088, %v1083
  %v1334 = vpack.c.b16 %v1089, %v1084
  %v1335 = vpack.c.b16 %v1090, %v1085
  %v1336 = vpack.c.b16 %v1096, %v1091
  %v1337 = vpack.c.b16 %v1097, %v1092
  %v1338 = vpack.c.b16 %v1098, %v1093
  %v1339 = vpack.c.b16 %v1099, %v1094
  %v1340 = vpack.c.b16 %v1100, %v1095
  %v1341 = vpack.c.b16 %v1106, %v1101
  %v1342 = vpack.c.b16 %v1107, %v1102
  %v1343 = vpack.c.b16 %v1108, %v1103
  %v1344 = vpack.c.b16 %v1109, %v1104
  %v1345 = vpack.c.b16 %v1110, %v1105
  %v1346 = vpack.c.b16 %v1116, %v1111
  %v1347 = vpack.c.b16 %v1117, %v1112
  %v1348 = vpack.c.b16 %v1118, %v1113
  %v1349 = vpack.c.b16 %v1119, %v1114
  %v1350 = vpack.c.b16 %v1120, %v1115
  %v1351 = vpack.c.b16 %v1126, %v1121
  %v1352 = vpack.c.b16 %v1127, %v1122
  %v1353 = vpack.c.b16 %v1128, %v1123
  %v1354 = vpack.c.b16 %v1129, %v1124
  %v1355 = vpack.c.b16 %v1130, %v1125
  %v1356 = vpack.c.b16 %v1136, %v1131
  %v1357 = vpack.c.b16 %v1137, %v1132
  %v1358 = vpack.c.b16 %v1138, %v1133
  %v1359 = vpack.c.b16 %v1139, %v1134
  %v1360 = vpack.c.b16 %v1140, %v1135
  %v1361 = vpack.c.b16 %v1146, %v1141
  %v1362 = vpack.c.b16 %v1147, %v1142
  %v1363 = vpack.c.b16 %v1148, %v1143
  %v1364 = vpack.c.b16 %v1149, %v1144
  %v1365 = vpack.c.b16 %v1150, %v1145
  %v1366 = vpack.c.b16 %v1156, %v1151
  %v1367 = vpack.c.b16 %v1157, %v1152
  %v1368 = vpack.c.b16 %v1158, %v1153
  %v1369 = vpack.c.b16 %v1159, %v1154
  %v1370 = vpack.c.b16 %v1160, %v1155
  %v1371 = vpack.c.b16 %v1166, %v1161
  %v1372 = vpack.c.b16 %v1167, %v1162
  %v1373 = vpack.c.b16 %v1168, %v1163
  %v1374 = vpack.c.b16 %v1169, %v1164
  %v1375 = vpack.c.b16 %v1170, %v1165
  %v1376 = vpack.c.b16 %v1176, %v1171
  %v1377 = vpack.c.b16 %v1177, %v1172
  %v1378 = vpack.c.b16 %v1178, %v1173
  %v1379 = vpack.c.b16 %v1179, %v1174
  %v1380 = vpack.c.b16 %v1180, %v1175
  %1581 = vmatprep.subr.bf16.mxu0 %v1217
  %1582 = vmatpush1.bf16.msra.mxu0 %v1216
  %1583 = vmatprep.subr.bf16.mxu0 %v1212
  %1584 = vmatpush1.bf16.msra.mxu0 %v1211
  %1585 = vmatprep.subr.bf16.mxu0 %v1207
  %1586 = vmatpush1.bf16.msra.mxu0 %v1206
  %1587 = vmatprep.subr.bf16.mxu0 %v1202
  %1588 = vmatpush1.bf16.msra.mxu0 %v1201
  %1589 = vmatprep.subr.bf16.mxu0 %v1197
  %1590 = vmatpush1.bf16.msra.mxu0 %v1196
  %1591 = vmatprep.subr.bf16.mxu0 %v1192
  %1592 = vmatpush1.bf16.msra.mxu0 %v1191
  %1593 = vmatprep.subr.bf16.mxu0 %v1187
  %1594 = vmatpush1.bf16.msra.mxu0 %v1186
  %1595 = vmatprep.subr.bf16.mxu0 %v1182
  %1596 = vmatpush1.bf16.msra.mxu0 %v1181
  %1597 = vmatprep.subr.bf16.mxu0 %v1257
  %1598 = vmatpush2.bf16.msra.mxu0 %v1256
  %1599 = vmatprep.subr.bf16.mxu0 %v1252
  %1600 = vmatpush2.bf16.msra.mxu0 %v1251
  %1601 = vmatprep.subr.bf16.mxu0 %v1247
  %1602 = vmatpush2.bf16.msra.mxu0 %v1246
  %1603 = vmatprep.subr.bf16.mxu0 %v1242
  %1604 = vmatpush2.bf16.msra.mxu0 %v1241
  %1605 = vmatprep.subr.bf16.mxu0 %v1237
  %1606 = vmatpush2.bf16.msra.mxu0 %v1236
  %1607 = vmatprep.subr.bf16.mxu0 %v1232
  %1608 = vmatpush2.bf16.msra.mxu0 %v1231
  %1609 = vmatprep.subr.bf16.mxu0 %v1227
  %1610 = vmatpush2.bf16.msra.mxu0 %v1226
  %1611 = vmatprep.subr.bf16.mxu0 %v1222
  %1612 = vmatpush2.bf16.msra.mxu0 %v1221
  %1613 = vmatprep.mubr.bf16.mxu0 %v270
  %1614 = vmatmul.mubr.bf16.gmra.mxu0 %v269
  %v1615 = vpop.f32.mrf.mxu0
  %v1616 = vadd.f32 %v519, %v1615
  %v1617 = vpop.f32.mrf.mxu0
  %v1618 = vadd.f32 %v523, %v1617
  %v1619 = vpop.f32.mrf.mxu0
  %v1620 = vpop.f32.mrf.mxu0
  %1621 = vdwg.mxu0
  %1622 = vmatprep.subr.bf16.mxu0 %v1297
  %1623 = vmatpush1.bf16.msra.mxu0 %v1296
  %1624 = vmatprep.subr.bf16.mxu0 %v1292
  %1625 = vmatpush1.bf16.msra.mxu0 %v1291
  %1626 = vmatprep.subr.bf16.mxu0 %v1287
  %1627 = vmatpush1.bf16.msra.mxu0 %v1286
  %1628 = vmatprep.subr.bf16.mxu0 %v1282
  %1629 = vmatpush1.bf16.msra.mxu0 %v1281
  %1630 = vmatprep.subr.bf16.mxu0 %v1277
  %1631 = vmatpush1.bf16.msra.mxu0 %v1276
  %1632 = vmatprep.subr.bf16.mxu0 %v1272
  %1633 = vmatpush1.bf16.msra.mxu0 %v1271
  %1634 = vmatprep.subr.bf16.mxu0 %v1267
  %1635 = vmatpush1.bf16.msra.mxu0 %v1266
  %1636 = vmatprep.subr.bf16.mxu0 %v1262
  %1637 = vmatpush1.bf16.msra.mxu0 %v1261
  %1638 = vmatprep.subr.bf16.mxu0 %v1337
  %1639 = vmatpush2.bf16.msra.mxu0 %v1336
  %1640 = vmatprep.subr.bf16.mxu0 %v1332
  %1641 = vmatpush2.bf16.msra.mxu0 %v1331
  %1642 = vmatprep.subr.bf16.mxu0 %v1327
  %1643 = vmatpush2.bf16.msra.mxu0 %v1326
  %1644 = vmatprep.subr.bf16.mxu0 %v1322
  %1645 = vmatpush2.bf16.msra.mxu0 %v1321
  %1646 = vmatprep.subr.bf16.mxu0 %v1317
  %1647 = vmatpush2.bf16.msra.mxu0 %v1316
  %1648 = vmatprep.subr.bf16.mxu0 %v1312
  %1649 = vmatpush2.bf16.msra.mxu0 %v1311
  %1650 = vmatprep.subr.bf16.mxu0 %v1307
  %1651 = vmatpush2.bf16.msra.mxu0 %v1306
  %1652 = vmatprep.subr.bf16.mxu0 %v1302
  %1653 = vmatpush2.bf16.msra.mxu0 %v1301
  %1654 = vmatprep.mubr.bf16.mxu0 %v272
  %1655 = vmatmul.mubr.bf16.gmra.mxu0 %v271
  %v1656 = vpop.f32.mrf.mxu0
  %v1657 = vadd.f32 %v1616, %v1656
  %v1658 = vpop.f32.mrf.mxu0
  %v1659 = vadd.f32 %v1618, %v1658
  %v1660 = vpop.f32.mrf.mxu0
  %v1661 = vpop.f32.mrf.mxu0
  %1662 = vdwg.mxu0
  %1663 = vmatprep.subr.bf16.mxu0 %v1377
  %1664 = vmatpush1.bf16.msra.mxu0 %v1376
  %1665 = vmatprep.subr.bf16.mxu0 %v1372
  %1666 = vmatpush1.bf16.msra.mxu0 %v1371
  %1667 = vmatprep.subr.bf16.mxu0 %v1367
  %1668 = vmatpush1.bf16.msra.mxu0 %v1366
  %1669 = vmatprep.subr.bf16.mxu0 %v1362
  %1670 = vmatpush1.bf16.msra.mxu0 %v1361
  %1671 = vmatprep.subr.bf16.mxu0 %v1357
  %1672 = vmatpush1.bf16.msra.mxu0 %v1356
  %1673 = vmatprep.subr.bf16.mxu0 %v1352
  %1674 = vmatpush1.bf16.msra.mxu0 %v1351
  %1675 = vmatprep.subr.bf16.mxu0 %v1347
  %1676 = vmatpush1.bf16.msra.mxu0 %v1346
  %1677 = vmatprep.subr.bf16.mxu0 %v1342
  %1678 = vmatpush1.bf16.msra.mxu0 %v1341
  %1679 = vmatprep.subr.bf16.mxu0 0
  %1680 = vmatpush2.bf16.msra.mxu0 0
  %1681 = vmatprep.subr.bf16.mxu0 0
  %1682 = vmatpush2.bf16.msra.mxu0 0
  %1683 = vmatprep.subr.bf16.mxu0 0
  %1684 = vmatpush2.bf16.msra.mxu0 0
  %1685 = vmatprep.subr.bf16.mxu0 0
  %1686 = vmatpush2.bf16.msra.mxu0 0
  %1687 = vmatprep.subr.bf16.mxu0 0
  %1688 = vmatpush2.bf16.msra.mxu0 0
  %1689 = vmatprep.subr.bf16.mxu0 0
  %1690 = vmatpush2.bf16.msra.mxu0 0
  %1691 = vmatprep.subr.bf16.mxu0 0
  %1692 = vmatpush2.bf16.msra.mxu0 0
  %1693 = vmatprep.subr.bf16.mxu0 0
  %1694 = vmatpush2.bf16.msra.mxu0 0
  %1695 = vmatprep.mubr.bf16.mxu0 0
  %1696 = vmatmul.mubr.bf16.gmra.mxu0 %v273
  %v1697 = vpop.f32.mrf.mxu0
  %v1698 = vadd.f32 %v1657, %v1697
  %v1699 = vpop.f32.mrf.mxu0
  %v1700 = vadd.f32 %v1659, %v1699
  %v1701 = vpop.f32.mrf.mxu0
  %v1702 = vpop.f32.mrf.mxu0
  %1703 = vdwg.mxu0
  %1704 = vmatprep.subr.bf16.mxu0 %v1219
  %1705 = vmatpush1.bf16.msra.mxu0 %v1218
  %1706 = vmatprep.subr.bf16.mxu0 %v1214
  %1707 = vmatpush1.bf16.msra.mxu0 %v1213
  %1708 = vmatprep.subr.bf16.mxu0 %v1209
  %1709 = vmatpush1.bf16.msra.mxu0 %v1208
  %1710 = vmatprep.subr.bf16.mxu0 %v1204
  %1711 = vmatpush1.bf16.msra.mxu0 %v1203
  %1712 = vmatprep.subr.bf16.mxu0 %v1199
  %1713 = vmatpush1.bf16.msra.mxu0 %v1198
  %1714 = vmatprep.subr.bf16.mxu0 %v1194
  %1715 = vmatpush1.bf16.msra.mxu0 %v1193
  %1716 = vmatprep.subr.bf16.mxu0 %v1189
  %1717 = vmatpush1.bf16.msra.mxu0 %v1188
  %1718 = vmatprep.subr.bf16.mxu0 %v1184
  %1719 = vmatpush1.bf16.msra.mxu0 %v1183
  %1720 = vmatprep.subr.bf16.mxu0 %v1259
  %1721 = vmatpush2.bf16.msra.mxu0 %v1258
  %1722 = vmatprep.subr.bf16.mxu0 %v1254
  %1723 = vmatpush2.bf16.msra.mxu0 %v1253
  %1724 = vmatprep.subr.bf16.mxu0 %v1249
  %1725 = vmatpush2.bf16.msra.mxu0 %v1248
  %1726 = vmatprep.subr.bf16.mxu0 %v1244
  %1727 = vmatpush2.bf16.msra.mxu0 %v1243
  %1728 = vmatprep.subr.bf16.mxu0 %v1239
  %1729 = vmatpush2.bf16.msra.mxu0 %v1238
  %1730 = vmatprep.subr.bf16.mxu0 %v1234
  %1731 = vmatpush2.bf16.msra.mxu0 %v1233
  %1732 = vmatprep.subr.bf16.mxu0 %v1229
  %1733 = vmatpush2.bf16.msra.mxu0 %v1228
  %1734 = vmatprep.subr.bf16.mxu0 %v1224
  %1735 = vmatpush2.bf16.msra.mxu0 %v1223
  %1736 = vmatprep.mubr.bf16.mxu0 %v270
  %1737 = vmatmul.mubr.bf16.gmra.mxu0 %v269
  %v1738 = vpop.f32.mrf.mxu0
  %v1739 = vadd.f32 %v527, %v1738
  %v1740 = vpop.f32.mrf.mxu0
  %v1741 = vadd.f32 %v531, %v1740
  %v1742 = vpop.f32.mrf.mxu0
  %v1743 = vpop.f32.mrf.mxu0
  %1744 = vdwg.mxu0
  %1745 = vmatprep.subr.bf16.mxu0 %v1299
  %1746 = vmatpush1.bf16.msra.mxu0 %v1298
  %1747 = vmatprep.subr.bf16.mxu0 %v1294
  %1748 = vmatpush1.bf16.msra.mxu0 %v1293
  %1749 = vmatprep.subr.bf16.mxu0 %v1289
  %1750 = vmatpush1.bf16.msra.mxu0 %v1288
  %1751 = vmatprep.subr.bf16.mxu0 %v1284
  %1752 = vmatpush1.bf16.msra.mxu0 %v1283
  %1753 = vmatprep.subr.bf16.mxu0 %v1279
  %1754 = vmatpush1.bf16.msra.mxu0 %v1278
  %1755 = vmatprep.subr.bf16.mxu0 %v1274
  %1756 = vmatpush1.bf16.msra.mxu0 %v1273
  %1757 = vmatprep.subr.bf16.mxu0 %v1269
  %1758 = vmatpush1.bf16.msra.mxu0 %v1268
  %1759 = vmatprep.subr.bf16.mxu0 %v1264
  %1760 = vmatpush1.bf16.msra.mxu0 %v1263
  %1761 = vmatprep.subr.bf16.mxu0 %v1339
  %1762 = vmatpush2.bf16.msra.mxu0 %v1338
  %1763 = vmatprep.subr.bf16.mxu0 %v1334
  %1764 = vmatpush2.bf16.msra.mxu0 %v1333
  %1765 = vmatprep.subr.bf16.mxu0 %v1329
  %1766 = vmatpush2.bf16.msra.mxu0 %v1328
  %1767 = vmatprep.subr.bf16.mxu0 %v1324
  %1768 = vmatpush2.bf16.msra.mxu0 %v1323
  %1769 = vmatprep.subr.bf16.mxu0 %v1319
  %1770 = vmatpush2.bf16.msra.mxu0 %v1318
  %1771 = vmatprep.subr.bf16.mxu0 %v1314
  %1772 = vmatpush2.bf16.msra.mxu0 %v1313
  %1773 = vmatprep.subr.bf16.mxu0 %v1309
  %1774 = vmatpush2.bf16.msra.mxu0 %v1308
  %1775 = vmatprep.subr.bf16.mxu0 %v1304
  %1776 = vmatpush2.bf16.msra.mxu0 %v1303
  %1777 = vmatprep.mubr.bf16.mxu0 %v272
  %1778 = vmatmul.mubr.bf16.gmra.mxu0 %v271
  %v1779 = vpop.f32.mrf.mxu0
  %v1780 = vadd.f32 %v1739, %v1779
  %v1781 = vpop.f32.mrf.mxu0
  %v1782 = vadd.f32 %v1741, %v1781
  %v1783 = vpop.f32.mrf.mxu0
  %v1784 = vpop.f32.mrf.mxu0
  %1785 = vdwg.mxu0
  %1786 = vmatprep.subr.bf16.mxu0 %v1379
  %1787 = vmatpush1.bf16.msra.mxu0 %v1378
  %1788 = vmatprep.subr.bf16.mxu0 %v1374
  %1789 = vmatpush1.bf16.msra.mxu0 %v1373
  %1790 = vmatprep.subr.bf16.mxu0 %v1369
  %1791 = vmatpush1.bf16.msra.mxu0 %v1368
  %1792 = vmatprep.subr.bf16.mxu0 %v1364
  %1793 = vmatpush1.bf16.msra.mxu0 %v1363
  %1794 = vmatprep.subr.bf16.mxu0 %v1359
  %1795 = vmatpush1.bf16.msra.mxu0 %v1358
  %1796 = vmatprep.subr.bf16.mxu0 %v1354
  %1797 = vmatpush1.bf16.msra.mxu0 %v1353
  %1798 = vmatprep.subr.bf16.mxu0 %v1349
  %1799 = vmatpush1.bf16.msra.mxu0 %v1348
  %1800 = vmatprep.subr.bf16.mxu0 %v1344
  %1801 = vmatpush1.bf16.msra.mxu0 %v1343
  %1802 = vmatprep.subr.bf16.mxu0 0
  %1803 = vmatpush2.bf16.msra.mxu0 0
  %1804 = vmatprep.subr.bf16.mxu0 0
  %1805 = vmatpush2.bf16.msra.mxu0 0
  %1806 = vmatprep.subr.bf16.mxu0 0
  %1807 = vmatpush2.bf16.msra.mxu0 0
  %1808 = vmatprep.subr.bf16.mxu0 0
  %1809 = vmatpush2.bf16.msra.mxu0 0
  %1810 = vmatprep.subr.bf16.mxu0 0
  %1811 = vmatpush2.bf16.msra.mxu0 0
  %1812 = vmatprep.subr.bf16.mxu0 0
  %1813 = vmatpush2.bf16.msra.mxu0 0
  %1814 = vmatprep.subr.bf16.mxu0 0
  %1815 = vmatpush2.bf16.msra.mxu0 0
  %1816 = vmatprep.subr.bf16.mxu0 0
  %1817 = vmatpush2.bf16.msra.mxu0 0
  %1818 = vmatprep.mubr.bf16.mxu0 0
  %1819 = vmatmul.mubr.bf16.gmra.mxu0 %v273
  %v1820 = vpop.f32.mrf.mxu0
  %v1821 = vadd.f32 %v1780, %v1820
  %v1822 = vpop.f32.mrf.mxu0
  %v1823 = vadd.f32 %v1782, %v1822
  %v1824 = vpop.f32.mrf.mxu0
  %v1825 = vpop.f32.mrf.mxu0
  %1826 = vdwg.mxu0
  %1827 = vmatprep.subr.bf16.mxu0 0
  %1828 = vmatpush1.bf16.msra.mxu0 %v1220
  %1829 = vmatprep.subr.bf16.mxu0 0
  %1830 = vmatpush1.bf16.msra.mxu0 %v1215
  %1831 = vmatprep.subr.bf16.mxu0 0
  %1832 = vmatpush1.bf16.msra.mxu0 %v1210
  %1833 = vmatprep.subr.bf16.mxu0 0
  %1834 = vmatpush1.bf16.msra.mxu0 %v1205
  %1835 = vmatprep.subr.bf16.mxu0 0
  %1836 = vmatpush1.bf16.msra.mxu0 %v1200
  %1837 = vmatprep.subr.bf16.mxu0 0
  %1838 = vmatpush1.bf16.msra.mxu0 %v1195
  %1839 = vmatprep.subr.bf16.mxu0 0
  %1840 = vmatpush1.bf16.msra.mxu0 %v1190
  %1841 = vmatprep.subr.bf16.mxu0 0
  %1842 = vmatpush1.bf16.msra.mxu0 %v1185
  %1843 = vmatprep.subr.bf16.mxu0 0
  %1844 = vmatpush2.bf16.msra.mxu0 %v1260
  %1845 = vmatprep.subr.bf16.mxu0 0
  %1846 = vmatpush2.bf16.msra.mxu0 %v1255
  %1847 = vmatprep.subr.bf16.mxu0 0
  %1848 = vmatpush2.bf16.msra.mxu0 %v1250
  %1849 = vmatprep.subr.bf16.mxu0 0
  %1850 = vmatpush2.bf16.msra.mxu0 %v1245
  %1851 = vmatprep.subr.bf16.mxu0 0
  %1852 = vmatpush2.bf16.msra.mxu0 %v1240
  %1853 = vmatprep.subr.bf16.mxu0 0
  %1854 = vmatpush2.bf16.msra.mxu0 %v1235
  %1855 = vmatprep.subr.bf16.mxu0 0
  %1856 = vmatpush2.bf16.msra.mxu0 %v1230
  %1857 = vmatprep.subr.bf16.mxu0 0
  %1858 = vmatpush2.bf16.msra.mxu0 %v1225
  %1859 = vmatprep.mubr.bf16.mxu0 %v270
  %1860 = vmatmul.mubr.bf16.gmra.mxu0 %v269
  %v1861 = vpop.f32.mrf.mxu0
  %v1862 = vadd.f32 %v535, %v1861
  %v1863 = vpop.f32.mrf.mxu0
  %v1864 = vpop.f32.mrf.mxu0
  %v1865 = vpop.f32.mrf.mxu0
  %1866 = vdwg.mxu0
  %1867 = vmatprep.subr.bf16.mxu0 0
  %1868 = vmatpush1.bf16.msra.mxu0 %v1300
  %1869 = vmatprep.subr.bf16.mxu0 0
  %1870 = vmatpush1.bf16.msra.mxu0 %v1295
  %1871 = vmatprep.subr.bf16.mxu0 0
  %1872 = vmatpush1.bf16.msra.mxu0 %v1290
  %1873 = vmatprep.subr.bf16.mxu0 0
  %1874 = vmatpush1.bf16.msra.mxu0 %v1285
  %1875 = vmatprep.subr.bf16.mxu0 0
  %1876 = vmatpush1.bf16.msra.mxu0 %v1280
  %1877 = vmatprep.subr.bf16.mxu0 0
  %1878 = vmatpush1.bf16.msra.mxu0 %v1275
  %1879 = vmatprep.subr.bf16.mxu0 0
  %1880 = vmatpush1.bf16.msra.mxu0 %v1270
  %1881 = vmatprep.subr.bf16.mxu0 0
  %1882 = vmatpush1.bf16.msra.mxu0 %v1265
  %1883 = vmatprep.subr.bf16.mxu0 0
  %1884 = vmatpush2.bf16.msra.mxu0 %v1340
  %1885 = vmatprep.subr.bf16.mxu0 0
  %1886 = vmatpush2.bf16.msra.mxu0 %v1335
  %1887 = vmatprep.subr.bf16.mxu0 0
  %1888 = vmatpush2.bf16.msra.mxu0 %v1330
  %1889 = vmatprep.subr.bf16.mxu0 0
  %1890 = vmatpush2.bf16.msra.mxu0 %v1325
  %1891 = vmatprep.subr.bf16.mxu0 0
  %1892 = vmatpush2.bf16.msra.mxu0 %v1320
  %1893 = vmatprep.subr.bf16.mxu0 0
  %1894 = vmatpush2.bf16.msra.mxu0 %v1315
  %1895 = vmatprep.subr.bf16.mxu0 0
  %1896 = vmatpush2.bf16.msra.mxu0 %v1310
  %1897 = vmatprep.subr.bf16.mxu0 0
  %1898 = vmatpush2.bf16.msra.mxu0 %v1305
  %1899 = vmatprep.mubr.bf16.mxu0 %v272
  %1900 = vmatmul.mubr.bf16.gmra.mxu0 %v271
  %v1901 = vpop.f32.mrf.mxu0
  %v1902 = vadd.f32 %v1862, %v1901
  %v1903 = vpop.f32.mrf.mxu0
  %v1904 = vpop.f32.mrf.mxu0
  %v1905 = vpop.f32.mrf.mxu0
  %1906 = vdwg.mxu0
  %1907 = vmatprep.subr.bf16.mxu0 0
  %1908 = vmatpush1.bf16.msra.mxu0 %v1380
  %1909 = vmatprep.subr.bf16.mxu0 0
  %1910 = vmatpush1.bf16.msra.mxu0 %v1375
  %1911 = vmatprep.subr.bf16.mxu0 0
  %1912 = vmatpush1.bf16.msra.mxu0 %v1370
  %1913 = vmatprep.subr.bf16.mxu0 0
  %1914 = vmatpush1.bf16.msra.mxu0 %v1365
  %1915 = vmatprep.subr.bf16.mxu0 0
  %1916 = vmatpush1.bf16.msra.mxu0 %v1360
  %1917 = vmatprep.subr.bf16.mxu0 0
  %1918 = vmatpush1.bf16.msra.mxu0 %v1355
  %1919 = vmatprep.subr.bf16.mxu0 0
  %1920 = vmatpush1.bf16.msra.mxu0 %v1350
  %1921 = vmatprep.subr.bf16.mxu0 0
  %1922 = vmatpush1.bf16.msra.mxu0 %v1345
  %1923 = vmatprep.subr.bf16.mxu0 0
  %1924 = vmatpush2.bf16.msra.mxu0 0
  %1925 = vmatprep.subr.bf16.mxu0 0
  %1926 = vmatpush2.bf16.msra.mxu0 0
  %1927 = vmatprep.subr.bf16.mxu0 0
  %1928 = vmatpush2.bf16.msra.mxu0 0
  %1929 = vmatprep.subr.bf16.mxu0 0
  %1930 = vmatpush2.bf16.msra.mxu0 0
  %1931 = vmatprep.subr.bf16.mxu0 0
  %1932 = vmatpush2.bf16.msra.mxu0 0
  %1933 = vmatprep.subr.bf16.mxu0 0
  %1934 = vmatpush2.bf16.msra.mxu0 0
  %1935 = vmatprep.subr.bf16.mxu0 0
  %1936 = vmatpush2.bf16.msra.mxu0 0
  %1937 = vmatprep.subr.bf16.mxu0 0
  %1938 = vmatpush2.bf16.msra.mxu0 0
  %1939 = vmatprep.mubr.bf16.mxu0 0
  %1940 = vmatmul.mubr.bf16.gmra.mxu0 %v273
  %v1941 = vpop.f32.mrf.mxu0
  %v1942 = vadd.f32 %v1902, %v1941
  %v1943 = vpop.f32.mrf.mxu0
  %v1944 = vpop.f32.mrf.mxu0
  %v1945 = vpop.f32.mrf.mxu0
  %1946 = vdwg.mxu0
  %v1947 = vmax.f32 %v1698, 0.0
  %v1948 = vmax.f32 %v1700, 0.0
  %v1949 = vmax.f32 %v1821, 0.0
  %v1950 = vmax.f32 %v1823, 0.0
  %v1951 = vmax.f32 %v1942, 0.0
  %v1952 = vpack.c.bf16 %v1947, %v1947
  %v1953 = vpack.c.bf16 %v1948, %v1948
  %v1954 = vpack.c.bf16 %v1949, %v1949
  %v1955 = vpack.c.bf16 %v1950, %v1950
  %v1956 = vpack.c.bf16 %v1951, %v1951
  %v1957 = vld [vmem:[%s5] sm:$0xff]
  %v1958 = vld [vmem:[%s5 + $0x8] sm:$0xff]
  %v1959 = vld [vmem:[%s5 + $0x10] sm:$0xf]
  %v1960 = vld [vmem:[%s5 + $0x14] sm:$0xff]
  %v1961 = vld [vmem:[%s5 + $0x1c] sm:$0xff]
  %v1962 = vld [vmem:[%s5 + $0x24] sm:$0xf]
  %v1963 = vld [vmem:[%s5 + $0x28] sm:$0xff]
  %v1964 = vld [vmem:[%s5 + $0x30] sm:$0xff]
  %v1965 = vld [vmem:[%s5 + $0x38] sm:$0xf]
  %v1966 = vld [vmem:[%s5 + $0x3c] sm:$0xff]
  %v1967 = vld [vmem:[%s5 + $0x44] sm:$0xff]
  %v1968 = vld [vmem:[%s5 + $0x4c] sm:$0xf]
  %v1969 = vld [vmem:[%s5 + $0x50] sm:$0xff]
  %v1970 = vld [vmem:[%s5 + $0x58] sm:$0xff]
  %v1971 = vld [vmem:[%s5 + $0x60] sm:$0xf]
  %v1972 = vld [vmem:[%s5 + $0x64] sm:$0xff]
  %v1973 = vld [vmem:[%s5 + $0x6c] sm:$0xff]
  %v1974 = vld [vmem:[%s5 + $0x74] sm:$0xf]
  %v1975 = vld [vmem:[%s5 + $0x78] sm:$0xff]
  %v1976 = vld [vmem:[%s5 + $0x80] sm:$0xff]
  %v1977 = vld [vmem:[%s5 + $0x88] sm:$0xf]
  %v1978 = vld [vmem:[%s5 + $0x8c] sm:$0xff]
  %v1979 = vld [vmem:[%s5 + $0x94] sm:$0xff]
  %v1980 = vld [vmem:[%s5 + $0x9c] sm:$0xf]
  %v1981 = vld [vmem:[%s5 + $0xa0] sm:$0xff]
  %v1982 = vld [vmem:[%s5 + $0xa8] sm:$0xff]
  %v1983 = vld [vmem:[%s5 + $0xb0] sm:$0xf]
  %v1984 = vld [vmem:[%s5 + $0xb4] sm:$0xff]
  %v1985 = vld [vmem:[%s5 + $0xbc] sm:$0xff]
  %v1986 = vld [vmem:[%s5 + $0xc4] sm:$0xf]
  %v1987 = vld [vmem:[%s5 + $0xc8] sm:$0xff]
  %v1988 = vld [vmem:[%s5 + $0xd0] sm:$0xff]
  %v1989 = vld [vmem:[%s5 + $0xd8] sm:$0xf]
  %v1990 = vld [vmem:[%s5 + $0xdc] sm:$0xff]
  %v1991 = vld [vmem:[%s5 + $0xe4] sm:$0xff]
  %v1992 = vld [vmem:[%s5 + $0xec] sm:$0xf]
  %v1993 = vld [vmem:[%s5 + $0xf0] sm:$0xff]
  %v1994 = vld [vmem:[%s5 + $0xf8] sm:$0xff]
  %v1995 = vld [vmem:[%s5 + $0x100] sm:$0xf]
  %v1996 = vld [vmem:[%s5 + $0x104] sm:$0xff]
  %v1997 = vld [vmem:[%s5 + $0x10c] sm:$0xff]
  %v1998 = vld [vmem:[%s5 + $0x114] sm:$0xf]
  %v1999 = vld [vmem:[%s5 + $0x118] sm:$0xff]
  %v2000 = vld [vmem:[%s5 + $0x120] sm:$0xff]
  %v2001 = vld [vmem:[%s5 + $0x128] sm:$0xf]
  %v2002 = vld [vmem:[%s5 + $0x12c] sm:$0xff]
  %v2003 = vld [vmem:[%s5 + $0x134] sm:$0xff]
  %v2004 = vld [vmem:[%s5 + $0x13c] sm:$0xf]
  %v2005 = vld [vmem:[%s5 + $0x140] sm:$0xff]
  %v2006 = vld [vmem:[%s5 + $0x148] sm:$0xff]
  %v2007 = vld [vmem:[%s5 + $0x150] sm:$0xf]
  %v2008 = vld [vmem:[%s5 + $0x154] sm:$0xff]
  %v2009 = vld [vmem:[%s5 + $0x15c] sm:$0xff]
  %v2010 = vld [vmem:[%s5 + $0x164] sm:$0xf]
  %v2011 = vld [vmem:[%s5 + $0x168] sm:$0xff]
  %v2012 = vld [vmem:[%s5 + $0x170] sm:$0xff]
  %v2013 = vld [vmem:[%s5 + $0x178] sm:$0xf]
  %v2014 = vld [vmem:[%s5 + $0x17c] sm:$0xff]
  %v2015 = vld [vmem:[%s5 + $0x184] sm:$0xff]
  %v2016 = vld [vmem:[%s5 + $0x18c] sm:$0xf]
  %v2017 = vld [vmem:[%s5 + $0x190] sm:$0xff]
  %v2018 = vld [vmem:[%s5 + $0x198] sm:$0xff]
  %v2019 = vld [vmem:[%s5 + $0x1a0] sm:$0xf]
  %v2020 = vld [vmem:[%s5 + $0x1a4] sm:$0xff]
  %v2021 = vld [vmem:[%s5 + $0x1ac] sm:$0xff]
  %v2022 = vld [vmem:[%s5 + $0x1b4] sm:$0xf]
  %v2023 = vld [vmem:[%s5 + $0x1b8] sm:$0xff]
  %v2024 = vld [vmem:[%s5 + $0x1c0] sm:$0xff]
  %v2025 = vld [vmem:[%s5 + $0x1c8] sm:$0xf]
  %v2026 = vld [vmem:[%s5 + $0x1cc] sm:$0xff]
  %v2027 = vld [vmem:[%s5 + $0x1d4] sm:$0xff]
  %v2028 = vld [vmem:[%s5 + $0x1dc] sm:$0xf]
  %v2029 = vld [vmem:[%s5 + $0x1e0] sm:$0xff]
  %v2030 = vld [vmem:[%s5 + $0x1e8] sm:$0xff]
  %v2031 = vld [vmem:[%s5 + $0x1f0] sm:$0xf]
  %v2032 = vld [vmem:[%s5 + $0x1f4] sm:$0xff]
  %v2033 = vld [vmem:[%s5 + $0x1fc] sm:$0xff]
  %v2034 = vld [vmem:[%s5 + $0x204] sm:$0xf]
  %v2035 = vld [vmem:[%s5 + $0x208] sm:$0xff]
  %v2036 = vld [vmem:[%s5 + $0x210] sm:$0xff]
  %v2037 = vld [vmem:[%s5 + $0x218] sm:$0xf]
  %v2038 = vld [vmem:[%s5 + $0x21c] sm:$0xff]
  %v2039 = vld [vmem:[%s5 + $0x224] sm:$0xff]
  %v2040 = vld [vmem:[%s5 + $0x22c] sm:$0xf]
  %v2041 = vld [vmem:[%s5 + $0x230] sm:$0xff]
  %v2042 = vld [vmem:[%s5 + $0x238] sm:$0xff]
  %v2043 = vld [vmem:[%s5 + $0x240] sm:$0xf]
  %v2044 = vld [vmem:[%s5 + $0x244] sm:$0xff]
  %v2045 = vld [vmem:[%s5 + $0x24c] sm:$0xff]
  %v2046 = vld [vmem:[%s5 + $0x254] sm:$0xf]
  %v2047 = vld [vmem:[%s5 + $0x258] sm:$0xff]
  %v2048 = vld [vmem:[%s5 + $0x260] sm:$0xff]
  %v2049 = vld [vmem:[%s5 + $0x268] sm:$0xf]
  %v2050 = vld [vmem:[%s5 + $0x26c] sm:$0xff]
  %v2051 = vld [vmem:[%s5 + $0x274] sm:$0xff]
  %v2052 = vld [vmem:[%s5 + $0x27c] sm:$0xf]
  %v2053 = vld [vmem:[%s5 + $0x280] sm:$0xff]
  %v2054 = vld [vmem:[%s5 + $0x288] sm:$0xff]
  %v2055 = vld [vmem:[%s5 + $0x290] sm:$0xf]
  %v2056 = vld [vmem:[%s5 + $0x294] sm:$0xff]
  %v2057 = vld [vmem:[%s5 + $0x29c] sm:$0xff]
  %v2058 = vld [vmem:[%s5 + $0x2a4] sm:$0xf]
  %v2059 = vld [vmem:[%s5 + $0x2a8] sm:$0xff]
  %v2060 = vld [vmem:[%s5 + $0x2b0] sm:$0xff]
  %v2061 = vld [vmem:[%s5 + $0x2b8] sm:$0xf]
  %v2062 = vld [vmem:[%s5 + $0x2bc] sm:$0xff]
  %v2063 = vld [vmem:[%s5 + $0x2c4] sm:$0xff]
  %v2064 = vld [vmem:[%s5 + $0x2cc] sm:$0xf]
  %v2065 = vld [vmem:[%s5 + $0x2d0] sm:$0xff]
  %v2066 = vld [vmem:[%s5 + $0x2d8] sm:$0xff]
  %v2067 = vld [vmem:[%s5 + $0x2e0] sm:$0xf]
  %v2068 = vld [vmem:[%s5 + $0x2e4] sm:$0xff]
  %v2069 = vld [vmem:[%s5 + $0x2ec] sm:$0xff]
  %v2070 = vld [vmem:[%s5 + $0x2f4] sm:$0xf]
  %v2071 = vld [vmem:[%s5 + $0x2f8] sm:$0xff]
  %v2072 = vld [vmem:[%s5 + $0x300] sm:$0xff]
  %v2073 = vld [vmem:[%s5 + $0x308] sm:$0xf]
  %v2074 = vld [vmem:[%s5 + $0x30c] sm:$0xff]
  %v2075 = vld [vmem:[%s5 + $0x314] sm:$0xff]
  %v2076 = vld [vmem:[%s5 + $0x31c] sm:$0xf]
  %v2077 = vld [vmem:[%s5 + $0x320] sm:$0xff]
  %v2078 = vld [vmem:[%s5 + $0x328] sm:$0xff]
  %v2079 = vld [vmem:[%s5 + $0x330] sm:$0xf]
  %v2080 = vld [vmem:[%s5 + $0x334] sm:$0xff]
  %v2081 = vld [vmem:[%s5 + $0x33c] sm:$0xff]
  %v2082 = vld [vmem:[%s5 + $0x344] sm:$0xf]
  %v2083 = vld [vmem:[%s5 + $0x348] sm:$0xff]
  %v2084 = vld [vmem:[%s5 + $0x350] sm:$0xff]
  %v2085 = vld [vmem:[%s5 + $0x358] sm:$0xf]
  %v2086 = vld [vmem:[%s5 + $0x35c] sm:$0xff]
  %v2087 = vld [vmem:[%s5 + $0x364] sm:$0xff]
  %v2088 = vld [vmem:[%s5 + $0x36c] sm:$0xf]
  %v2089 = vld [vmem:[%s5 + $0x370] sm:$0xff]
  %v2090 = vld [vmem:[%s5 + $0x378] sm:$0xff]
  %v2091 = vld [vmem:[%s5 + $0x380] sm:$0xf]
  %v2092 = vld [vmem:[%s5 + $0x384] sm:$0xff]
  %v2093 = vld [vmem:[%s5 + $0x38c] sm:$0xff]
  %v2094 = vld [vmem:[%s5 + $0x394] sm:$0xf]
  %v2095 = vld [vmem:[%s5 + $0x398] sm:$0xff]
  %v2096 = vld [vmem:[%s5 + $0x3a0] sm:$0xff]
  %v2097 = vld [vmem:[%s5 + $0x3a8] sm:$0xf]
  %v2098 = vld [vmem:[%s5 + $0x3ac] sm:$0xff]
  %v2099 = vld [vmem:[%s5 + $0x3b4] sm:$0xff]
  %v2100 = vld [vmem:[%s5 + $0x3bc] sm:$0xf]
  %v2101 = vld [vmem:[%s5 + $0x3c0] sm:$0xff]
  %v2102 = vld [vmem:[%s5 + $0x3c8] sm:$0xff]
  %v2103 = vld [vmem:[%s5 + $0x3d0] sm:$0xf]
  %v2104 = vld [vmem:[%s5 + $0x3d4] sm:$0xff]
  %v2105 = vld [vmem:[%s5 + $0x3dc] sm:$0xff]
  %v2106 = vld [vmem:[%s5 + $0x3e4] sm:$0xf]
  %v2107 = vld [vmem:[%s5 + $0x3e8] sm:$0xff]
  %v2108 = vld [vmem:[%s5 + $0x3f0] sm:$0xff]
  %v2109 = vld [vmem:[%s5 + $0x3f8] sm:$0xf]
  %v2110 = vld [vmem:[%s5 + $0x3fc] sm:$0xff]
  %v2111 = vld [vmem:[%s5 + $0x404] sm:$0xff]
  %v2112 = vld [vmem:[%s5 + $0x40c] sm:$0xf]
  %v2113 = vld [vmem:[%s5 + $0x410] sm:$0xff]
  %v2114 = vld [vmem:[%s5 + $0x418] sm:$0xff]
  %v2115 = vld [vmem:[%s5 + $0x420] sm:$0xf]
  %v2116 = vld [vmem:[%s5 + $0x424] sm:$0xff]
  %v2117 = vld [vmem:[%s5 + $0x42c] sm:$0xff]
  %v2118 = vld [vmem:[%s5 + $0x434] sm:$0xf]
  %v2119 = vld [vmem:[%s5 + $0x438] sm:$0xff]
  %v2120 = vld [vmem:[%s5 + $0x440] sm:$0xff]
  %v2121 = vld [vmem:[%s5 + $0x448] sm:$0xf]
  %v2122 = vld [vmem:[%s5 + $0x44c] sm:$0xff]
  %v2123 = vld [vmem:[%s5 + $0x454] sm:$0xff]
  %v2124 = vld [vmem:[%s5 + $0x45c] sm:$0xf]
  %v2125 = vld [vmem:[%s5 + $0x460] sm:$0xff]
  %v2126 = vld [vmem:[%s5 + $0x468] sm:$0xff]
  %v2127 = vld [vmem:[%s5 + $0x470] sm:$0xf]
  %v2128 = vld [vmem:[%s5 + $0x474] sm:$0xff]
  %v2129 = vld [vmem:[%s5 + $0x47c] sm:$0xff]
  %v2130 = vld [vmem:[%s5 + $0x484] sm:$0xf]
  %v2131 = vld [vmem:[%s5 + $0x488] sm:$0xff]
  %v2132 = vld [vmem:[%s5 + $0x490] sm:$0xff]
  %v2133 = vld [vmem:[%s5 + $0x498] sm:$0xf]
  %v2134 = vld [vmem:[%s5 + $0x49c] sm:$0xff]
  %v2135 = vld [vmem:[%s5 + $0x4a4] sm:$0xff]
  %v2136 = vld [vmem:[%s5 + $0x4ac] sm:$0xf]
  %v2137 = vld [vmem:[%s5 + $0x4b0] sm:$0xff]
  %v2138 = vld [vmem:[%s5 + $0x4b8] sm:$0xff]
  %v2139 = vld [vmem:[%s5 + $0x4c0] sm:$0xf]
  %v2140 = vld [vmem:[%s5 + $0x4c4] sm:$0xff]
  %v2141 = vld [vmem:[%s5 + $0x4cc] sm:$0xff]
  %v2142 = vld [vmem:[%s5 + $0x4d4] sm:$0xf]
  %v2143 = vld [vmem:[%s5 + $0x4d8] sm:$0xff]
  %v2144 = vld [vmem:[%s5 + $0x4e0] sm:$0xff]
  %v2145 = vld [vmem:[%s5 + $0x4e8] sm:$0xf]
  %v2146 = vld [vmem:[%s5 + $0x4ec] sm:$0xff]
  %v2147 = vld [vmem:[%s5 + $0x4f4] sm:$0xff]
  %v2148 = vld [vmem:[%s5 + $0x4fc] sm:$0xf]
  %v2149 = vld [vmem:[%s5 + $0x500] sm:$0xff]
  %v2150 = vld [vmem:[%s5 + $0x508] sm:$0xff]
  %v2151 = vld [vmem:[%s5 + $0x510] sm:$0xf]
  %v2152 = vld [vmem:[%s5 + $0x514] sm:$0xff]
  %v2153 = vld [vmem:[%s5 + $0x51c] sm:$0xff]
  %v2154 = vld [vmem:[%s5 + $0x524] sm:$0xf]
  %v2155 = vld [vmem:[%s5 + $0x528] sm:$0xff]
  %v2156 = vld [vmem:[%s5 + $0x530] sm:$0xff]
  %v2157 = vld [vmem:[%s5 + $0x538] sm:$0xf]
  %v2158 = vld [vmem:[%s5 + $0x53c] sm:$0xff]
  %v2159 = vld [vmem:[%s5 + $0x544] sm:$0xff]
  %v2160 = vld [vmem:[%s5 + $0x54c] sm:$0xf]
  %v2161 = vld [vmem:[%s5 + $0x550] sm:$0xff]
  %v2162 = vld [vmem:[%s5 + $0x558] sm:$0xff]
  %v2163 = vld [vmem:[%s5 + $0x560] sm:$0xf]
  %v2164 = vld [vmem:[%s5 + $0x564] sm:$0xff]
  %v2165 = vld [vmem:[%s5 + $0x56c] sm:$0xff]
  %v2166 = vld [vmem:[%s5 + $0x574] sm:$0xf]
  %v2167 = vld [vmem:[%s5 + $0x578] sm:$0xff]
  %v2168 = vld [vmem:[%s5 + $0x580] sm:$0xff]
  %v2169 = vld [vmem:[%s5 + $0x588] sm:$0xf]
  %v2170 = vld [vmem:[%s5 + $0x58c] sm:$0xff]
  %v2171 = vld [vmem:[%s5 + $0x594] sm:$0xff]
  %v2172 = vld [vmem:[%s5 + $0x59c] sm:$0xf]
  %v2173 = vld [vmem:[%s5 + $0x5a0] sm:$0xff]
  %v2174 = vld [vmem:[%s5 + $0x5a8] sm:$0xff]
  %v2175 = vld [vmem:[%s5 + $0x5b0] sm:$0xf]
  %v2176 = vld [vmem:[%s5 + $0x5b4] sm:$0xff]
  %v2177 = vld [vmem:[%s5 + $0x5bc] sm:$0xff]
  %v2178 = vld [vmem:[%s5 + $0x5c4] sm:$0xf]
  %v2179 = vld [vmem:[%s5 + $0x5c8] sm:$0xff]
  %v2180 = vld [vmem:[%s5 + $0x5d0] sm:$0xff]
  %v2181 = vld [vmem:[%s5 + $0x5d8] sm:$0xf]
  %v2182 = vld [vmem:[%s5 + $0x5dc] sm:$0xff]
  %v2183 = vld [vmem:[%s5 + $0x5e4] sm:$0xff]
  %v2184 = vld [vmem:[%s5 + $0x5ec] sm:$0xf]
  %v2185 = vld [vmem:[%s5 + $0x5f0] sm:$0xff]
  %v2186 = vld [vmem:[%s5 + $0x5f8] sm:$0xff]
  %v2187 = vld [vmem:[%s5 + $0x600] sm:$0xf]
  %v2188 = vld [vmem:[%s5 + $0x604] sm:$0xff]
  %v2189 = vld [vmem:[%s5 + $0x60c] sm:$0xff]
  %v2190 = vld [vmem:[%s5 + $0x614] sm:$0xf]
  %v2191 = vld [vmem:[%s5 + $0x618] sm:$0xff]
  %v2192 = vld [vmem:[%s5 + $0x620] sm:$0xff]
  %v2193 = vld [vmem:[%s5 + $0x628] sm:$0xf]
  %v2194 = vld [vmem:[%s5 + $0x62c] sm:$0xff]
  %v2195 = vld [vmem:[%s5 + $0x634] sm:$0xff]
  %v2196 = vld [vmem:[%s5 + $0x63c] sm:$0xf]
  %v2197 = vld [vmem:[%s6] sm:$0x1f]
  %v2199 = vlaneseq
  %v2200 = vshrl.u32 %v2199, 7
  %v2201 = vsub.s32 0, %v2200
  %v2202 = vrot.slane %v2197, %v2201
  %v2203 = vlaneseq
  %v2204 = vshrl.u32 %v2203, 7
  %v2205 = vsub.s32 1, %v2204
  %v2206 = vrot.slane %v2197, %v2205
  %v2207 = vlaneseq
  %v2208 = vshrl.u32 %v2207, 7
  %v2209 = vsub.s32 2, %v2208
  %v2210 = vrot.slane %v2197, %v2209
  %v2211 = vlaneseq
  %v2212 = vshrl.u32 %v2211, 7
  %v2213 = vsub.s32 3, %v2212
  %v2214 = vrot.slane %v2197, %v2213
  %v2215 = vlaneseq
  %v2216 = vshrl.u32 %v2215, 7
  %v2217 = vsub.s32 4, %v2216
  %v2218 = vrot.slane %v2197, %v2217
  %v2464 = vunpack.c.l.b16 %v1957
  %v2465 = vunpack.c.h.b16 %v1957
  %v2466 = vunpack.c.l.b16 %v1958
  %v2467 = vunpack.c.h.b16 %v1958
  %v2468 = vunpack.c.l.b16 %v1959
  %v2469 = vunpack.c.l.b16 %v1960
  %v2470 = vunpack.c.h.b16 %v1960
  %v2471 = vunpack.c.l.b16 %v1961
  %v2472 = vunpack.c.h.b16 %v1961
  %v2473 = vunpack.c.l.b16 %v1962
  %v2474 = vunpack.c.l.b16 %v1963
  %v2475 = vunpack.c.h.b16 %v1963
  %v2476 = vunpack.c.l.b16 %v1964
  %v2477 = vunpack.c.h.b16 %v1964
  %v2478 = vunpack.c.l.b16 %v1965
  %v2479 = vunpack.c.l.b16 %v1966
  %v2480 = vunpack.c.h.b16 %v1966
  %v2481 = vunpack.c.l.b16 %v1967
  %v2482 = vunpack.c.h.b16 %v1967
  %v2483 = vunpack.c.l.b16 %v1968
  %v2484 = vunpack.c.l.b16 %v1969
  %v2485 = vunpack.c.h.b16 %v1969
  %v2486 = vunpack.c.l.b16 %v1970
  %v2487 = vunpack.c.h.b16 %v1970
  %v2488 = vunpack.c.l.b16 %v1971
  %v2489 = vunpack.c.l.b16 %v1972
  %v2490 = vunpack.c.h.b16 %v1972
  %v2491 = vunpack.c.l.b16 %v1973
  %v2492 = vunpack.c.h.b16 %v1973
  %v2493 = vunpack.c.l.b16 %v1974
  %v2494 = vunpack.c.l.b16 %v1975
  %v2495 = vunpack.c.h.b16 %v1975
  %v2496 = vunpack.c.l.b16 %v1976
  %v2497 = vunpack.c.h.b16 %v1976
  %v2498 = vunpack.c.l.b16 %v1977
  %v2499 = vunpack.c.l.b16 %v1978
  %v2500 = vunpack.c.h.b16 %v1978
  %v2501 = vunpack.c.l.b16 %v1979
  %v2502 = vunpack.c.h.b16 %v1979
  %v2503 = vunpack.c.l.b16 %v1980
  %v2504 = vunpack.c.l.b16 %v1981
  %v2505 = vunpack.c.h.b16 %v1981
  %v2506 = vunpack.c.l.b16 %v1982
  %v2507 = vunpack.c.h.b16 %v1982
  %v2508 = vunpack.c.l.b16 %v1983
  %v2509 = vunpack.c.l.b16 %v1984
  %v2510 = vunpack.c.h.b16 %v1984
  %v2511 = vunpack.c.l.b16 %v1985
  %v2512 = vunpack.c.h.b16 %v1985
  %v2513 = vunpack.c.l.b16 %v1986
  %v2514 = vunpack.c.l.b16 %v1987
  %v2515 = vunpack.c.h.b16 %v1987
  %v2516 = vunpack.c.l.b16 %v1988
  %v2517 = vunpack.c.h.b16 %v1988
  %v2518 = vunpack.c.l.b16 %v1989
  %v2519 = vunpack.c.l.b16 %v1990
  %v2520 = vunpack.c.h.b16 %v1990
  %v2521 = vunpack.c.l.b16 %v1991
  %v2522 = vunpack.c.h.b16 %v1991
  %v2523 = vunpack.c.l.b16 %v1992
  %v2524 = vunpack.c.l.b16 %v1993
  %v2525 = vunpack.c.h.b16 %v1993
  %v2526 = vunpack.c.l.b16 %v1994
  %v2527 = vunpack.c.h.b16 %v1994
  %v2528 = vunpack.c.l.b16 %v1995
  %v2529 = vunpack.c.l.b16 %v1996
  %v2530 = vunpack.c.h.b16 %v1996
  %v2531 = vunpack.c.l.b16 %v1997
  %v2532 = vunpack.c.h.b16 %v1997
  %v2533 = vunpack.c.l.b16 %v1998
  %v2534 = vunpack.c.l.b16 %v1999
  %v2535 = vunpack.c.h.b16 %v1999
  %v2536 = vunpack.c.l.b16 %v2000
  %v2537 = vunpack.c.h.b16 %v2000
  %v2538 = vunpack.c.l.b16 %v2001
  %v2539 = vunpack.c.l.b16 %v2002
  %v2540 = vunpack.c.h.b16 %v2002
  %v2541 = vunpack.c.l.b16 %v2003
  %v2542 = vunpack.c.h.b16 %v2003
  %v2543 = vunpack.c.l.b16 %v2004
  %v2544 = vunpack.c.l.b16 %v2005
  %v2545 = vunpack.c.h.b16 %v2005
  %v2546 = vunpack.c.l.b16 %v2006
  %v2547 = vunpack.c.h.b16 %v2006
  %v2548 = vunpack.c.l.b16 %v2007
  %v2549 = vunpack.c.l.b16 %v2008
  %v2550 = vunpack.c.h.b16 %v2008
  %v2551 = vunpack.c.l.b16 %v2009
  %v2552 = vunpack.c.h.b16 %v2009
  %v2553 = vunpack.c.l.b16 %v2010
  %v2554 = vunpack.c.l.b16 %v2011
  %v2555 = vunpack.c.h.b16 %v2011
  %v2556 = vunpack.c.l.b16 %v2012
  %v2557 = vunpack.c.h.b16 %v2012
  %v2558 = vunpack.c.l.b16 %v2013
  %v2559 = vunpack.c.l.b16 %v2014
  %v2560 = vunpack.c.h.b16 %v2014
  %v2561 = vunpack.c.l.b16 %v2015
  %v2562 = vunpack.c.h.b16 %v2015
  %v2563 = vunpack.c.l.b16 %v2016
  %v2564 = vunpack.c.l.b16 %v2017
  %v2565 = vunpack.c.h.b16 %v2017
  %v2566 = vunpack.c.l.b16 %v2018
  %v2567 = vunpack.c.h.b16 %v2018
  %v2568 = vunpack.c.l.b16 %v2019
  %v2569 = vunpack.c.l.b16 %v2020
  %v2570 = vunpack.c.h.b16 %v2020
  %v2571 = vunpack.c.l.b16 %v2021
  %v2572 = vunpack.c.h.b16 %v2021
  %v2573 = vunpack.c.l.b16 %v2022
  %v2574 = vunpack.c.l.b16 %v2023
  %v2575 = vunpack.c.h.b16 %v2023
  %v2576 = vunpack.c.l.b16 %v2024
  %v2577 = vunpack.c.h.b16 %v2024
  %v2578 = vunpack.c.l.b16 %v2025
  %v2579 = vunpack.c.l.b16 %v2026
  %v2580 = vunpack.c.h.b16 %v2026
  %v2581 = vunpack.c.l.b16 %v2027
  %v2582 = vunpack.c.h.b16 %v2027
  %v2583 = vunpack.c.l.b16 %v2028
  %v2584 = vunpack.c.l.b16 %v2029
  %v2585 = vunpack.c.h.b16 %v2029
  %v2586 = vunpack.c.l.b16 %v2030
  %v2587 = vunpack.c.h.b16 %v2030
  %v2588 = vunpack.c.l.b16 %v2031
  %v2589 = vunpack.c.l.b16 %v2032
  %v2590 = vunpack.c.h.b16 %v2032
  %v2591 = vunpack.c.l.b16 %v2033
  %v2592 = vunpack.c.h.b16 %v2033
  %v2593 = vunpack.c.l.b16 %v2034
  %v2594 = vunpack.c.l.b16 %v2035
  %v2595 = vunpack.c.h.b16 %v2035
  %v2596 = vunpack.c.l.b16 %v2036
  %v2597 = vunpack.c.h.b16 %v2036
  %v2598 = vunpack.c.l.b16 %v2037
  %v2599 = vunpack.c.l.b16 %v2038
  %v2600 = vunpack.c.h.b16 %v2038
  %v2601 = vunpack.c.l.b16 %v2039
  %v2602 = vunpack.c.h.b16 %v2039
  %v2603 = vunpack.c.l.b16 %v2040
  %v2604 = vunpack.c.l.b16 %v2041
  %v2605 = vunpack.c.h.b16 %v2041
  %v2606 = vunpack.c.l.b16 %v2042
  %v2607 = vunpack.c.h.b16 %v2042
  %v2608 = vunpack.c.l.b16 %v2043
  %v2609 = vunpack.c.l.b16 %v2044
  %v2610 = vunpack.c.h.b16 %v2044
  %v2611 = vunpack.c.l.b16 %v2045
  %v2612 = vunpack.c.h.b16 %v2045
  %v2613 = vunpack.c.l.b16 %v2046
  %v2614 = vunpack.c.l.b16 %v2047
  %v2615 = vunpack.c.h.b16 %v2047
  %v2616 = vunpack.c.l.b16 %v2048
  %v2617 = vunpack.c.h.b16 %v2048
  %v2618 = vunpack.c.l.b16 %v2049
  %v2619 = vunpack.c.l.b16 %v2050
  %v2620 = vunpack.c.h.b16 %v2050
  %v2621 = vunpack.c.l.b16 %v2051
  %v2622 = vunpack.c.h.b16 %v2051
  %v2623 = vunpack.c.l.b16 %v2052
  %v2624 = vunpack.c.l.b16 %v2053
  %v2625 = vunpack.c.h.b16 %v2053
  %v2626 = vunpack.c.l.b16 %v2054
  %v2627 = vunpack.c.h.b16 %v2054
  %v2628 = vunpack.c.l.b16 %v2055
  %v2629 = vunpack.c.l.b16 %v2056
  %v2630 = vunpack.c.h.b16 %v2056
  %v2631 = vunpack.c.l.b16 %v2057
  %v2632 = vunpack.c.h.b16 %v2057
  %v2633 = vunpack.c.l.b16 %v2058
  %v2634 = vunpack.c.l.b16 %v2059
  %v2635 = vunpack.c.h.b16 %v2059
  %v2636 = vunpack.c.l.b16 %v2060
  %v2637 = vunpack.c.h.b16 %v2060
  %v2638 = vunpack.c.l.b16 %v2061
  %v2639 = vunpack.c.l.b16 %v2062
  %v2640 = vunpack.c.h.b16 %v2062
  %v2641 = vunpack.c.l.b16 %v2063
  %v2642 = vunpack.c.h.b16 %v2063
  %v2643 = vunpack.c.l.b16 %v2064
  %v2644 = vunpack.c.l.b16 %v2065
  %v2645 = vunpack.c.h.b16 %v2065
  %v2646 = vunpack.c.l.b16 %v2066
  %v2647 = vunpack.c.h.b16 %v2066
  %v2648 = vunpack.c.l.b16 %v2067
  %v2649 = vunpack.c.l.b16 %v2068
  %v2650 = vunpack.c.h.b16 %v2068
  %v2651 = vunpack.c.l.b16 %v2069
  %v2652 = vunpack.c.h.b16 %v2069
  %v2653 = vunpack.c.l.b16 %v2070
  %v2654 = vunpack.c.l.b16 %v2071
  %v2655 = vunpack.c.h.b16 %v2071
  %v2656 = vunpack.c.l.b16 %v2072
  %v2657 = vunpack.c.h.b16 %v2072
  %v2658 = vunpack.c.l.b16 %v2073
  %v2659 = vunpack.c.l.b16 %v2074
  %v2660 = vunpack.c.h.b16 %v2074
  %v2661 = vunpack.c.l.b16 %v2075
  %v2662 = vunpack.c.h.b16 %v2075
  %v2663 = vunpack.c.l.b16 %v2076
  %v2664 = vunpack.c.l.b16 %v2077
  %v2665 = vunpack.c.h.b16 %v2077
  %v2666 = vunpack.c.l.b16 %v2078
  %v2667 = vunpack.c.h.b16 %v2078
  %v2668 = vunpack.c.l.b16 %v2079
  %v2669 = vunpack.c.l.b16 %v2080
  %v2670 = vunpack.c.h.b16 %v2080
  %v2671 = vunpack.c.l.b16 %v2081
  %v2672 = vunpack.c.h.b16 %v2081
  %v2673 = vunpack.c.l.b16 %v2082
  %v2674 = vunpack.c.l.b16 %v2083
  %v2675 = vunpack.c.h.b16 %v2083
  %v2676 = vunpack.c.l.b16 %v2084
  %v2677 = vunpack.c.h.b16 %v2084
  %v2678 = vunpack.c.l.b16 %v2085
  %v2679 = vunpack.c.l.b16 %v2086
  %v2680 = vunpack.c.h.b16 %v2086
  %v2681 = vunpack.c.l.b16 %v2087
  %v2682 = vunpack.c.h.b16 %v2087
  %v2683 = vunpack.c.l.b16 %v2088
  %v2684 = vunpack.c.l.b16 %v2089
  %v2685 = vunpack.c.h.b16 %v2089
  %v2686 = vunpack.c.l.b16 %v2090
  %v2687 = vunpack.c.h.b16 %v2090
  %v2688 = vunpack.c.l.b16 %v2091
  %v2689 = vunpack.c.l.b16 %v2092
  %v2690 = vunpack.c.h.b16 %v2092
  %v2691 = vunpack.c.l.b16 %v2093
  %v2692 = vunpack.c.h.b16 %v2093
  %v2693 = vunpack.c.l.b16 %v2094
  %v2694 = vunpack.c.l.b16 %v2095
  %v2695 = vunpack.c.h.b16 %v2095
  %v2696 = vunpack.c.l.b16 %v2096
  %v2697 = vunpack.c.h.b16 %v2096
  %v2698 = vunpack.c.l.b16 %v2097
  %v2699 = vunpack.c.l.b16 %v2098
  %v2700 = vunpack.c.h.b16 %v2098
  %v2701 = vunpack.c.l.b16 %v2099
  %v2702 = vunpack.c.h.b16 %v2099
  %v2703 = vunpack.c.l.b16 %v2100
  %v2704 = vunpack.c.l.b16 %v2101
  %v2705 = vunpack.c.h.b16 %v2101
  %v2706 = vunpack.c.l.b16 %v2102
  %v2707 = vunpack.c.h.b16 %v2102
  %v2708 = vunpack.c.l.b16 %v2103
  %v2709 = vunpack.c.l.b16 %v2104
  %v2710 = vunpack.c.h.b16 %v2104
  %v2711 = vunpack.c.l.b16 %v2105
  %v2712 = vunpack.c.h.b16 %v2105
  %v2713 = vunpack.c.l.b16 %v2106
  %v2714 = vunpack.c.l.b16 %v2107
  %v2715 = vunpack.c.h.b16 %v2107
  %v2716 = vunpack.c.l.b16 %v2108
  %v2717 = vunpack.c.h.b16 %v2108
  %v2718 = vunpack.c.l.b16 %v2109
  %v2719 = vunpack.c.l.b16 %v2110
  %v2720 = vunpack.c.h.b16 %v2110
  %v2721 = vunpack.c.l.b16 %v2111
  %v2722 = vunpack.c.h.b16 %v2111
  %v2723 = vunpack.c.l.b16 %v2112
  %v2724 = vunpack.c.l.b16 %v2113
  %v2725 = vunpack.c.h.b16 %v2113
  %v2726 = vunpack.c.l.b16 %v2114
  %v2727 = vunpack.c.h.b16 %v2114
  %v2728 = vunpack.c.l.b16 %v2115
  %v2729 = vunpack.c.l.b16 %v2116
  %v2730 = vunpack.c.h.b16 %v2116
  %v2731 = vunpack.c.l.b16 %v2117
  %v2732 = vunpack.c.h.b16 %v2117
  %v2733 = vunpack.c.l.b16 %v2118
  %v2734 = vunpack.c.l.b16 %v2119
  %v2735 = vunpack.c.h.b16 %v2119
  %v2736 = vunpack.c.l.b16 %v2120
  %v2737 = vunpack.c.h.b16 %v2120
  %v2738 = vunpack.c.l.b16 %v2121
  %v2739 = vunpack.c.l.b16 %v2122
  %v2740 = vunpack.c.h.b16 %v2122
  %v2741 = vunpack.c.l.b16 %v2123
  %v2742 = vunpack.c.h.b16 %v2123
  %v2743 = vunpack.c.l.b16 %v2124
  %v2744 = vunpack.c.l.b16 %v2125
  %v2745 = vunpack.c.h.b16 %v2125
  %v2746 = vunpack.c.l.b16 %v2126
  %v2747 = vunpack.c.h.b16 %v2126
  %v2748 = vunpack.c.l.b16 %v2127
  %v2749 = vunpack.c.l.b16 %v2128
  %v2750 = vunpack.c.h.b16 %v2128
  %v2751 = vunpack.c.l.b16 %v2129
  %v2752 = vunpack.c.h.b16 %v2129
  %v2753 = vunpack.c.l.b16 %v2130
  %v2754 = vunpack.c.l.b16 %v2131
  %v2755 = vunpack.c.h.b16 %v2131
  %v2756 = vunpack.c.l.b16 %v2132
  %v2757 = vunpack.c.h.b16 %v2132
  %v2758 = vunpack.c.l.b16 %v2133
  %v2759 = vunpack.c.l.b16 %v2134
  %v2760 = vunpack.c.h.b16 %v2134
  %v2761 = vunpack.c.l.b16 %v2135
  %v2762 = vunpack.c.h.b16 %v2135
  %v2763 = vunpack.c.l.b16 %v2136
  %v2764 = vunpack.c.l.b16 %v2137
  %v2765 = vunpack.c.h.b16 %v2137
  %v2766 = vunpack.c.l.b16 %v2138
  %v2767 = vunpack.c.h.b16 %v2138
  %v2768 = vunpack.c.l.b16 %v2139
  %v2769 = vunpack.c.l.b16 %v2140
  %v2770 = vunpack.c.h.b16 %v2140
  %v2771 = vunpack.c.l.b16 %v2141
  %v2772 = vunpack.c.h.b16 %v2141
  %v2773 = vunpack.c.l.b16 %v2142
  %v2774 = vunpack.c.l.b16 %v2143
  %v2775 = vunpack.c.h.b16 %v2143
  %v2776 = vunpack.c.l.b16 %v2144
  %v2777 = vunpack.c.h.b16 %v2144
  %v2778 = vunpack.c.l.b16 %v2145
  %v2779 = vunpack.c.l.b16 %v2146
  %v2780 = vunpack.c.h.b16 %v2146
  %v2781 = vunpack.c.l.b16 %v2147
  %v2782 = vunpack.c.h.b16 %v2147
  %v2783 = vunpack.c.l.b16 %v2148
  %v2784 = vunpack.c.l.b16 %v2149
  %v2785 = vunpack.c.h.b16 %v2149
  %v2786 = vunpack.c.l.b16 %v2150
  %v2787 = vunpack.c.h.b16 %v2150
  %v2788 = vunpack.c.l.b16 %v2151
  %v2789 = vunpack.c.l.b16 %v2152
  %v2790 = vunpack.c.h.b16 %v2152
  %v2791 = vunpack.c.l.b16 %v2153
  %v2792 = vunpack.c.h.b16 %v2153
  %v2793 = vunpack.c.l.b16 %v2154
  %v2794 = vunpack.c.l.b16 %v2155
  %v2795 = vunpack.c.h.b16 %v2155
  %v2796 = vunpack.c.l.b16 %v2156
  %v2797 = vunpack.c.h.b16 %v2156
  %v2798 = vunpack.c.l.b16 %v2157
  %v2799 = vunpack.c.l.b16 %v2158
  %v2800 = vunpack.c.h.b16 %v2158
  %v2801 = vunpack.c.l.b16 %v2159
  %v2802 = vunpack.c.h.b16 %v2159
  %v2803 = vunpack.c.l.b16 %v2160
  %v2804 = vunpack.c.l.b16 %v2161
  %v2805 = vunpack.c.h.b16 %v2161
  %v2806 = vunpack.c.l.b16 %v2162
  %v2807 = vunpack.c.h.b16 %v2162
  %v2808 = vunpack.c.l.b16 %v2163
  %v2809 = vunpack.c.l.b16 %v2164
  %v2810 = vunpack.c.h.b16 %v2164
  %v2811 = vunpack.c.l.b16 %v2165
  %v2812 = vunpack.c.h.b16 %v2165
  %v2813 = vunpack.c.l.b16 %v2166
  %v2814 = vunpack.c.l.b16 %v2167
  %v2815 = vunpack.c.h.b16 %v2167
  %v2816 = vunpack.c.l.b16 %v2168
  %v2817 = vunpack.c.h.b16 %v2168
  %v2818 = vunpack.c.l.b16 %v2169
  %v2819 = vunpack.c.l.b16 %v2170
  %v2820 = vunpack.c.h.b16 %v2170
  %v2821 = vunpack.c.l.b16 %v2171
  %v2822 = vunpack.c.h.b16 %v2171
  %v2823 = vunpack.c.l.b16 %v2172
  %v2824 = vunpack.c.l.b16 %v2173
  %v2825 = vunpack.c.h.b16 %v2173
  %v2826 = vunpack.c.l.b16 %v2174
  %v2827 = vunpack.c.h.b16 %v2174
  %v2828 = vunpack.c.l.b16 %v2175
  %v2829 = vunpack.c.l.b16 %v2176
  %v2830 = vunpack.c.h.b16 %v2176
  %v2831 = vunpack.c.l.b16 %v2177
  %v2832 = vunpack.c.h.b16 %v2177
  %v2833 = vunpack.c.l.b16 %v2178
  %v2834 = vunpack.c.l.b16 %v2179
  %v2835 = vunpack.c.h.b16 %v2179
  %v2836 = vunpack.c.l.b16 %v2180
  %v2837 = vunpack.c.h.b16 %v2180
  %v2838 = vunpack.c.l.b16 %v2181
  %v2839 = vunpack.c.l.b16 %v2182
  %v2840 = vunpack.c.h.b16 %v2182
  %v2841 = vunpack.c.l.b16 %v2183
  %v2842 = vunpack.c.h.b16 %v2183
  %v2843 = vunpack.c.l.b16 %v2184
  %v2844 = vunpack.c.l.b16 %v2185
  %v2845 = vunpack.c.h.b16 %v2185
  %v2846 = vunpack.c.l.b16 %v2186
  %v2847 = vunpack.c.h.b16 %v2186
  %v2848 = vunpack.c.l.b16 %v2187
  %v2849 = vunpack.c.l.b16 %v2188
  %v2850 = vunpack.c.h.b16 %v2188
  %v2851 = vunpack.c.l.b16 %v2189
  %v2852 = vunpack.c.h.b16 %v2189
  %v2853 = vunpack.c.l.b16 %v2190
  %v2854 = vunpack.c.l.b16 %v2191
  %v2855 = vunpack.c.h.b16 %v2191
  %v2856 = vunpack.c.l.b16 %v2192
  %v2857 = vunpack.c.h.b16 %v2192
  %v2858 = vunpack.c.l.b16 %v2193
  %v2859 = vunpack.c.l.b16 %v2194
  %v2860 = vunpack.c.h.b16 %v2194
  %v2861 = vunpack.c.l.b16 %v2195
  %v2862 = vunpack.c.h.b16 %v2195
  %v2863 = vunpack.c.l.b16 %v2196
  %v2864 = vpack.c.b16 %v2469, %v2464
  %v2865 = vpack.c.b16 %v2470, %v2465
  %v2866 = vpack.c.b16 %v2471, %v2466
  %v2867 = vpack.c.b16 %v2472, %v2467
  %v2868 = vpack.c.b16 %v2473, %v2468
  %v2869 = vpack.c.b16 %v2479, %v2474
  %v2870 = vpack.c.b16 %v2480, %v2475
  %v2871 = vpack.c.b16 %v2481, %v2476
  %v2872 = vpack.c.b16 %v2482, %v2477
  %v2873 = vpack.c.b16 %v2483, %v2478
  %v2874 = vpack.c.b16 %v2489, %v2484
  %v2875 = vpack.c.b16 %v2490, %v2485
  %v2876 = vpack.c.b16 %v2491, %v2486
  %v2877 = vpack.c.b16 %v2492, %v2487
  %v2878 = vpack.c.b16 %v2493, %v2488
  %v2879 = vpack.c.b16 %v2499, %v2494
  %v2880 = vpack.c.b16 %v2500, %v2495
  %v2881 = vpack.c.b16 %v2501, %v2496
  %v2882 = vpack.c.b16 %v2502, %v2497
  %v2883 = vpack.c.b16 %v2503, %v2498
  %v2884 = vpack.c.b16 %v2509, %v2504
  %v2885 = vpack.c.b16 %v2510, %v2505
  %v2886 = vpack.c.b16 %v2511, %v2506
  %v2887 = vpack.c.b16 %v2512, %v2507
  %v2888 = vpack.c.b16 %v2513, %v2508
  %v2889 = vpack.c.b16 %v2519, %v2514
  %v2890 = vpack.c.b16 %v2520, %v2515
  %v2891 = vpack.c.b16 %v2521, %v2516
  %v2892 = vpack.c.b16 %v2522, %v2517
  %v2893 = vpack.c.b16 %v2523, %v2518
  %v2894 = vpack.c.b16 %v2529, %v2524
  %v2895 = vpack.c.b16 %v2530, %v2525
  %v2896 = vpack.c.b16 %v2531, %v2526
  %v2897 = vpack.c.b16 %v2532, %v2527
  %v2898 = vpack.c.b16 %v2533, %v2528
  %v2899 = vpack.c.b16 %v2539, %v2534
  %v2900 = vpack.c.b16 %v2540, %v2535
  %v2901 = vpack.c.b16 %v2541, %v2536
  %v2902 = vpack.c.b16 %v2542, %v2537
  %v2903 = vpack.c.b16 %v2543, %v2538
  %v2904 = vpack.c.b16 %v2549, %v2544
  %v2905 = vpack.c.b16 %v2550, %v2545
  %v2906 = vpack.c.b16 %v2551, %v2546
  %v2907 = vpack.c.b16 %v2552, %v2547
  %v2908 = vpack.c.b16 %v2553, %v2548
  %v2909 = vpack.c.b16 %v2559, %v2554
  %v2910 = vpack.c.b16 %v2560, %v2555
  %v2911 = vpack.c.b16 %v2561, %v2556
  %v2912 = vpack.c.b16 %v2562, %v2557
  %v2913 = vpack.c.b16 %v2563, %v2558
  %v2914 = vpack.c.b16 %v2569, %v2564
  %v2915 = vpack.c.b16 %v2570, %v2565
  %v2916 = vpack.c.b16 %v2571, %v2566
  %v2917 = vpack.c.b16 %v2572, %v2567
  %v2918 = vpack.c.b16 %v2573, %v2568
  %v2919 = vpack.c.b16 %v2579, %v2574
  %v2920 = vpack.c.b16 %v2580, %v2575
  %v2921 = vpack.c.b16 %v2581, %v2576
  %v2922 = vpack.c.b16 %v2582, %v2577
  %v2923 = vpack.c.b16 %v2583, %v2578
  %v2924 = vpack.c.b16 %v2589, %v2584
  %v2925 = vpack.c.b16 %v2590, %v2585
  %v2926 = vpack.c.b16 %v2591, %v2586
  %v2927 = vpack.c.b16 %v2592, %v2587
  %v2928 = vpack.c.b16 %v2593, %v2588
  %v2929 = vpack.c.b16 %v2599, %v2594
  %v2930 = vpack.c.b16 %v2600, %v2595
  %v2931 = vpack.c.b16 %v2601, %v2596
  %v2932 = vpack.c.b16 %v2602, %v2597
  %v2933 = vpack.c.b16 %v2603, %v2598
  %v2934 = vpack.c.b16 %v2609, %v2604
  %v2935 = vpack.c.b16 %v2610, %v2605
  %v2936 = vpack.c.b16 %v2611, %v2606
  %v2937 = vpack.c.b16 %v2612, %v2607
  %v2938 = vpack.c.b16 %v2613, %v2608
  %v2939 = vpack.c.b16 %v2619, %v2614
  %v2940 = vpack.c.b16 %v2620, %v2615
  %v2941 = vpack.c.b16 %v2621, %v2616
  %v2942 = vpack.c.b16 %v2622, %v2617
  %v2943 = vpack.c.b16 %v2623, %v2618
  %v2944 = vpack.c.b16 %v2629, %v2624
  %v2945 = vpack.c.b16 %v2630, %v2625
  %v2946 = vpack.c.b16 %v2631, %v2626
  %v2947 = vpack.c.b16 %v2632, %v2627
  %v2948 = vpack.c.b16 %v2633, %v2628
  %v2949 = vpack.c.b16 %v2639, %v2634
  %v2950 = vpack.c.b16 %v2640, %v2635
  %v2951 = vpack.c.b16 %v2641, %v2636
  %v2952 = vpack.c.b16 %v2642, %v2637
  %v2953 = vpack.c.b16 %v2643, %v2638
  %v2954 = vpack.c.b16 %v2649, %v2644
  %v2955 = vpack.c.b16 %v2650, %v2645
  %v2956 = vpack.c.b16 %v2651, %v2646
  %v2957 = vpack.c.b16 %v2652, %v2647
  %v2958 = vpack.c.b16 %v2653, %v2648
  %v2959 = vpack.c.b16 %v2659, %v2654
  %v2960 = vpack.c.b16 %v2660, %v2655
  %v2961 = vpack.c.b16 %v2661, %v2656
  %v2962 = vpack.c.b16 %v2662, %v2657
  %v2963 = vpack.c.b16 %v2663, %v2658
  %v2964 = vpack.c.b16 %v2669, %v2664
  %v2965 = vpack.c.b16 %v2670, %v2665
  %v2966 = vpack.c.b16 %v2671, %v2666
  %v2967 = vpack.c.b16 %v2672, %v2667
  %v2968 = vpack.c.b16 %v2673, %v2668
  %v2969 = vpack.c.b16 %v2679, %v2674
  %v2970 = vpack.c.b16 %v2680, %v2675
  %v2971 = vpack.c.b16 %v2681, %v2676
  %v2972 = vpack.c.b16 %v2682, %v2677
  %v2973 = vpack.c.b16 %v2683, %v2678
  %v2974 = vpack.c.b16 %v2689, %v2684
  %v2975 = vpack.c.b16 %v2690, %v2685
  %v2976 = vpack.c.b16 %v2691, %v2686
  %v2977 = vpack.c.b16 %v2692, %v2687
  %v2978 = vpack.c.b16 %v2693, %v2688
  %v2979 = vpack.c.b16 %v2699, %v2694
  %v2980 = vpack.c.b16 %v2700, %v2695
  %v2981 = vpack.c.b16 %v2701, %v2696
  %v2982 = vpack.c.b16 %v2702, %v2697
  %v2983 = vpack.c.b16 %v2703, %v2698
  %v2984 = vpack.c.b16 %v2709, %v2704
  %v2985 = vpack.c.b16 %v2710, %v2705
  %v2986 = vpack.c.b16 %v2711, %v2706
  %v2987 = vpack.c.b16 %v2712, %v2707
  %v2988 = vpack.c.b16 %v2713, %v2708
  %v2989 = vpack.c.b16 %v2719, %v2714
  %v2990 = vpack.c.b16 %v2720, %v2715
  %v2991 = vpack.c.b16 %v2721, %v2716
  %v2992 = vpack.c.b16 %v2722, %v2717
  %v2993 = vpack.c.b16 %v2723, %v2718
  %v2994 = vpack.c.b16 %v2729, %v2724
  %v2995 = vpack.c.b16 %v2730, %v2725
  %v2996 = vpack.c.b16 %v2731, %v2726
  %v2997 = vpack.c.b16 %v2732, %v2727
  %v2998 = vpack.c.b16 %v2733, %v2728
  %v2999 = vpack.c.b16 %v2739, %v2734
  %v3000 = vpack.c.b16 %v2740, %v2735
  %v3001 = vpack.c.b16 %v2741, %v2736
  %v3002 = vpack.c.b16 %v2742, %v2737
  %v3003 = vpack.c.b16 %v2743, %v2738
  %v3004 = vpack.c.b16 %v2749, %v2744
  %v3005 = vpack.c.b16 %v2750, %v2745
  %v3006 = vpack.c.b16 %v2751, %v2746
  %v3007 = vpack.c.b16 %v2752, %v2747
  %v3008 = vpack.c.b16 %v2753, %v2748
  %v3009 = vpack.c.b16 %v2759, %v2754
  %v3010 = vpack.c.b16 %v2760, %v2755
  %v3011 = vpack.c.b16 %v2761, %v2756
  %v3012 = vpack.c.b16 %v2762, %v2757
  %v3013 = vpack.c.b16 %v2763, %v2758
  %v3014 = vpack.c.b16 %v2769, %v2764
  %v3015 = vpack.c.b16 %v2770, %v2765
  %v3016 = vpack.c.b16 %v2771, %v2766
  %v3017 = vpack.c.b16 %v2772, %v2767
  %v3018 = vpack.c.b16 %v2773, %v2768
  %v3019 = vpack.c.b16 %v2779, %v2774
  %v3020 = vpack.c.b16 %v2780, %v2775
  %v3021 = vpack.c.b16 %v2781, %v2776
  %v3022 = vpack.c.b16 %v2782, %v2777
  %v3023 = vpack.c.b16 %v2783, %v2778
  %v3024 = vpack.c.b16 %v2789, %v2784
  %v3025 = vpack.c.b16 %v2790, %v2785
  %v3026 = vpack.c.b16 %v2791, %v2786
  %v3027 = vpack.c.b16 %v2792, %v2787
  %v3028 = vpack.c.b16 %v2793, %v2788
  %v3029 = vpack.c.b16 %v2799, %v2794
  %v3030 = vpack.c.b16 %v2800, %v2795
  %v3031 = vpack.c.b16 %v2801, %v2796
  %v3032 = vpack.c.b16 %v2802, %v2797
  %v3033 = vpack.c.b16 %v2803, %v2798
  %v3034 = vpack.c.b16 %v2809, %v2804
  %v3035 = vpack.c.b16 %v2810, %v2805
  %v3036 = vpack.c.b16 %v2811, %v2806
  %v3037 = vpack.c.b16 %v2812, %v2807
  %v3038 = vpack.c.b16 %v2813, %v2808
  %v3039 = vpack.c.b16 %v2819, %v2814
  %v3040 = vpack.c.b16 %v2820, %v2815
  %v3041 = vpack.c.b16 %v2821, %v2816
  %v3042 = vpack.c.b16 %v2822, %v2817
  %v3043 = vpack.c.b16 %v2823, %v2818
  %v3044 = vpack.c.b16 %v2829, %v2824
  %v3045 = vpack.c.b16 %v2830, %v2825
  %v3046 = vpack.c.b16 %v2831, %v2826
  %v3047 = vpack.c.b16 %v2832, %v2827
  %v3048 = vpack.c.b16 %v2833, %v2828
  %v3049 = vpack.c.b16 %v2839, %v2834
  %v3050 = vpack.c.b16 %v2840, %v2835
  %v3051 = vpack.c.b16 %v2841, %v2836
  %v3052 = vpack.c.b16 %v2842, %v2837
  %v3053 = vpack.c.b16 %v2843, %v2838
  %v3054 = vpack.c.b16 %v2849, %v2844
  %v3055 = vpack.c.b16 %v2850, %v2845
  %v3056 = vpack.c.b16 %v2851, %v2846
  %v3057 = vpack.c.b16 %v2852, %v2847
  %v3058 = vpack.c.b16 %v2853, %v2848
  %v3059 = vpack.c.b16 %v2859, %v2854
  %v3060 = vpack.c.b16 %v2860, %v2855
  %v3061 = vpack.c.b16 %v2861, %v2856
  %v3062 = vpack.c.b16 %v2862, %v2857
  %v3063 = vpack.c.b16 %v2863, %v2858
  %3264 = vmatprep.subr.bf16.mxu0 %v2900
  %3265 = vmatpush1.bf16.msra.mxu0 %v2899
  %3266 = vmatprep.subr.bf16.mxu0 %v2895
  %3267 = vmatpush1.bf16.msra.mxu0 %v2894
  %3268 = vmatprep.subr.bf16.mxu0 %v2890
  %3269 = vmatpush1.bf16.msra.mxu0 %v2889
  %3270 = vmatprep.subr.bf16.mxu0 %v2885
  %3271 = vmatpush1.bf16.msra.mxu0 %v2884
  %3272 = vmatprep.subr.bf16.mxu0 %v2880
  %3273 = vmatpush1.bf16.msra.mxu0 %v2879
  %3274 = vmatprep.subr.bf16.mxu0 %v2875
  %3275 = vmatpush1.bf16.msra.mxu0 %v2874
  %3276 = vmatprep.subr.bf16.mxu0 %v2870
  %3277 = vmatpush1.bf16.msra.mxu0 %v2869
  %3278 = vmatprep.subr.bf16.mxu0 %v2865
  %3279 = vmatpush1.bf16.msra.mxu0 %v2864
  %3280 = vmatprep.subr.bf16.mxu0 %v2940
  %3281 = vmatpush2.bf16.msra.mxu0 %v2939
  %3282 = vmatprep.subr.bf16.mxu0 %v2935
  %3283 = vmatpush2.bf16.msra.mxu0 %v2934
  %3284 = vmatprep.subr.bf16.mxu0 %v2930
  %3285 = vmatpush2.bf16.msra.mxu0 %v2929
  %3286 = vmatprep.subr.bf16.mxu0 %v2925
  %3287 = vmatpush2.bf16.msra.mxu0 %v2924
  %3288 = vmatprep.subr.bf16.mxu0 %v2920
  %3289 = vmatpush2.bf16.msra.mxu0 %v2919
  %3290 = vmatprep.subr.bf16.mxu0 %v2915
  %3291 = vmatpush2.bf16.msra.mxu0 %v2914
  %3292 = vmatprep.subr.bf16.mxu0 %v2910
  %3293 = vmatpush2.bf16.msra.mxu0 %v2909
  %3294 = vmatprep.subr.bf16.mxu0 %v2905
  %3295 = vmatpush2.bf16.msra.mxu0 %v2904
  %3296 = vmatprep.mubr.bf16.mxu0 %v1953
  %3297 = vmatmul.mubr.bf16.gmra.mxu0 %v1952
  %v3298 = vpop.f32.mrf.mxu0
  %v3299 = vadd.f32 %v2202, %v3298
  %v3300 = vpop.f32.mrf.mxu0
  %v3301 = vadd.f32 %v2206, %v3300
  %v3302 = vpop.f32.mrf.mxu0
  %v3303 = vpop.f32.mrf.mxu0
  %3304 = vdwg.mxu0
  %3305 = vmatprep.subr.bf16.mxu0 %v2980
  %3306 = vmatpush1.bf16.msra.mxu0 %v2979
  %3307 = vmatprep.subr.bf16.mxu0 %v2975
  %3308 = vmatpush1.bf16.msra.mxu0 %v2974
  %3309 = vmatprep.subr.bf16.mxu0 %v2970
  %3310 = vmatpush1.bf16.msra.mxu0 %v2969
  %3311 = vmatprep.subr.bf16.mxu0 %v2965
  %3312 = vmatpush1.bf16.msra.mxu0 %v2964
  %3313 = vmatprep.subr.bf16.mxu0 %v2960
  %3314 = vmatpush1.bf16.msra.mxu0 %v2959
  %3315 = vmatprep.subr.bf16.mxu0 %v2955
  %3316 = vmatpush1.bf16.msra.mxu0 %v2954
  %3317 = vmatprep.subr.bf16.mxu0 %v2950
  %3318 = vmatpush1.bf16.msra.mxu0 %v2949
  %3319 = vmatprep.subr.bf16.mxu0 %v2945
  %3320 = vmatpush1.bf16.msra.mxu0 %v2944
  %3321 = vmatprep.subr.bf16.mxu0 %v3020
  %3322 = vmatpush2.bf16.msra.mxu0 %v3019
  %3323 = vmatprep.subr.bf16.mxu0 %v3015
  %3324 = vmatpush2.bf16.msra.mxu0 %v3014
  %3325 = vmatprep.subr.bf16.mxu0 %v3010
  %3326 = vmatpush2.bf16.msra.mxu0 %v3009
  %3327 = vmatprep.subr.bf16.mxu0 %v3005
  %3328 = vmatpush2.bf16.msra.mxu0 %v3004
  %3329 = vmatprep.subr.bf16.mxu0 %v3000
  %3330 = vmatpush2.bf16.msra.mxu0 %v2999
  %3331 = vmatprep.subr.bf16.mxu0 %v2995
  %3332 = vmatpush2.bf16.msra.mxu0 %v2994
  %3333 = vmatprep.subr.bf16.mxu0 %v2990
  %3334 = vmatpush2.bf16.msra.mxu0 %v2989
  %3335 = vmatprep.subr.bf16.mxu0 %v2985
  %3336 = vmatpush2.bf16.msra.mxu0 %v2984
  %3337 = vmatprep.mubr.bf16.mxu0 %v1955
  %3338 = vmatmul.mubr.bf16.gmra.mxu0 %v1954
  %v3339 = vpop.f32.mrf.mxu0
  %v3340 = vadd.f32 %v3299, %v3339
  %v3341 = vpop.f32.mrf.mxu0
  %v3342 = vadd.f32 %v3301, %v3341
  %v3343 = vpop.f32.mrf.mxu0
  %v3344 = vpop.f32.mrf.mxu0
  %3345 = vdwg.mxu0
  %3346 = vmatprep.subr.bf16.mxu0 %v3060
  %3347 = vmatpush1.bf16.msra.mxu0 %v3059
  %3348 = vmatprep.subr.bf16.mxu0 %v3055
  %3349 = vmatpush1.bf16.msra.mxu0 %v3054
  %3350 = vmatprep.subr.bf16.mxu0 %v3050
  %3351 = vmatpush1.bf16.msra.mxu0 %v3049
  %3352 = vmatprep.subr.bf16.mxu0 %v3045
  %3353 = vmatpush1.bf16.msra.mxu0 %v3044
  %3354 = vmatprep.subr.bf16.mxu0 %v3040
  %3355 = vmatpush1.bf16.msra.mxu0 %v3039
  %3356 = vmatprep.subr.bf16.mxu0 %v3035
  %3357 = vmatpush1.bf16.msra.mxu0 %v3034
  %3358 = vmatprep.subr.bf16.mxu0 %v3030
  %3359 = vmatpush1.bf16.msra.mxu0 %v3029
  %3360 = vmatprep.subr.bf16.mxu0 %v3025
  %3361 = vmatpush1.bf16.msra.mxu0 %v3024
  %3362 = vmatprep.subr.bf16.mxu0 0
  %3363 = vmatpush2.bf16.msra.mxu0 0
  %3364 = vmatprep.subr.bf16.mxu0 0
  %3365 = vmatpush2.bf16.msra.mxu0 0
  %3366 = vmatprep.subr.bf16.mxu0 0
  %3367 = vmatpush2.bf16.msra.mxu0 0
  %3368 = vmatprep.subr.bf16.mxu0 0
  %3369 = vmatpush2.bf16.msra.mxu0 0
  %3370 = vmatprep.subr.bf16.mxu0 0
  %3371 = vmatpush2.bf16.msra.mxu0 0
  %3372 = vmatprep.subr.bf16.mxu0 0
  %3373 = vmatpush2.bf16.msra.mxu0 0
  %3374 = vmatprep.subr.bf16.mxu0 0
  %3375 = vmatpush2.bf16.msra.mxu0 0
  %3376 = vmatprep.subr.bf16.mxu0 0
  %3377 = vmatpush2.bf16.msra.mxu0 0
  %3378 = vmatprep.mubr.bf16.mxu0 0
  %3379 = vmatmul.mubr.bf16.gmra.mxu0 %v1956
  %v3380 = vpop.f32.mrf.mxu0
  %v3381 = vadd.f32 %v3340, %v3380
  %v3382 = vpop.f32.mrf.mxu0
  %v3383 = vadd.f32 %v3342, %v3382
  %v3384 = vpop.f32.mrf.mxu0
  %v3385 = vpop.f32.mrf.mxu0
  %3386 = vdwg.mxu0
  %3387 = vmatprep.subr.bf16.mxu0 %v2902
  %3388 = vmatpush1.bf16.msra.mxu0 %v2901
  %3389 = vmatprep.subr.bf16.mxu0 %v2897
  %3390 = vmatpush1.bf16.msra.mxu0 %v2896
  %3391 = vmatprep.subr.bf16.mxu0 %v2892
  %3392 = vmatpush1.bf16.msra.mxu0 %v2891
  %3393 = vmatprep.subr.bf16.mxu0 %v2887
  %3394 = vmatpush1.bf16.msra.mxu0 %v2886
  %3395 = vmatprep.subr.bf16.mxu0 %v2882
  %3396 = vmatpush1.bf16.msra.mxu0 %v2881
  %3397 = vmatprep.subr.bf16.mxu0 %v2877
  %3398 = vmatpush1.bf16.msra.mxu0 %v2876
  %3399 = vmatprep.subr.bf16.mxu0 %v2872
  %3400 = vmatpush1.bf16.msra.mxu0 %v2871
  %3401 = vmatprep.subr.bf16.mxu0 %v2867
  %3402 = vmatpush1.bf16.msra.mxu0 %v2866
  %3403 = vmatprep.subr.bf16.mxu0 %v2942
  %3404 = vmatpush2.bf16.msra.mxu0 %v2941
  %3405 = vmatprep.subr.bf16.mxu0 %v2937
  %3406 = vmatpush2.bf16.msra.mxu0 %v2936
  %3407 = vmatprep.subr.bf16.mxu0 %v2932
  %3408 = vmatpush2.bf16.msra.mxu0 %v2931
  %3409 = vmatprep.subr.bf16.mxu0 %v2927
  %3410 = vmatpush2.bf16.msra.mxu0 %v2926
  %3411 = vmatprep.subr.bf16.mxu0 %v2922
  %3412 = vmatpush2.bf16.msra.mxu0 %v2921
  %3413 = vmatprep.subr.bf16.mxu0 %v2917
  %3414 = vmatpush2.bf16.msra.mxu0 %v2916
  %3415 = vmatprep.subr.bf16.mxu0 %v2912
  %3416 = vmatpush2.bf16.msra.mxu0 %v2911
  %3417 = vmatprep.subr.bf16.mxu0 %v2907
  %3418 = vmatpush2.bf16.msra.mxu0 %v2906
  %3419 = vmatprep.mubr.bf16.mxu0 %v1953
  %3420 = vmatmul.mubr.bf16.gmra.mxu0 %v1952
  %v3421 = vpop.f32.mrf.mxu0
  %v3422 = vadd.f32 %v2210, %v3421
  %v3423 = vpop.f32.mrf.mxu0
  %v3424 = vadd.f32 %v2214, %v3423
  %v3425 = vpop.f32.mrf.mxu0
  %v3426 = vpop.f32.mrf.mxu0
  %3427 = vdwg.mxu0
  %3428 = vmatprep.subr.bf16.mxu0 %v2982
  %3429 = vmatpush1.bf16.msra.mxu0 %v2981
  %3430 = vmatprep.subr.bf16.mxu0 %v2977
  %3431 = vmatpush1.bf16.msra.mxu0 %v2976
  %3432 = vmatprep.subr.bf16.mxu0 %v2972
  %3433 = vmatpush1.bf16.msra.mxu0 %v2971
  %3434 = vmatprep.subr.bf16.mxu0 %v2967
  %3435 = vmatpush1.bf16.msra.mxu0 %v2966
  %3436 = vmatprep.subr.bf16.mxu0 %v2962
  %3437 = vmatpush1.bf16.msra.mxu0 %v2961
  %3438 = vmatprep.subr.bf16.mxu0 %v2957
  %3439 = vmatpush1.bf16.msra.mxu0 %v2956
  %3440 = vmatprep.subr.bf16.mxu0 %v2952
  %3441 = vmatpush1.bf16.msra.mxu0 %v2951
  %3442 = vmatprep.subr.bf16.mxu0 %v2947
  %3443 = vmatpush1.bf16.msra.mxu0 %v2946
  %3444 = vmatprep.subr.bf16.mxu0 %v3022
  %3445 = vmatpush2.bf16.msra.mxu0 %v3021
  %3446 = vmatprep.subr.bf16.mxu0 %v3017
  %3447 = vmatpush2.bf16.msra.mxu0 %v3016
  %3448 = vmatprep.subr.bf16.mxu0 %v3012
  %3449 = vmatpush2.bf16.msra.mxu0 %v3011
  %3450 = vmatprep.subr.bf16.mxu0 %v3007
  %3451 = vmatpush2.bf16.msra.mxu0 %v3006
  %3452 = vmatprep.subr.bf16.mxu0 %v3002
  %3453 = vmatpush2.bf16.msra.mxu0 %v3001
  %3454 = vmatprep.subr.bf16.mxu0 %v2997
  %3455 = vmatpush2.bf16.msra.mxu0 %v2996
  %3456 = vmatprep.subr.bf16.mxu0 %v2992
  %3457 = vmatpush2.bf16.msra.mxu0 %v2991
  %3458 = vmatprep.subr.bf16.mxu0 %v2987
  %3459 = vmatpush2.bf16.msra.mxu0 %v2986
  %3460 = vmatprep.mubr.bf16.mxu0 %v1955
  %3461 = vmatmul.mubr.bf16.gmra.mxu0 %v1954
  %v3462 = vpop.f32.mrf.mxu0
  %v3463 = vadd.f32 %v3422, %v3462
  %v3464 = vpop.f32.mrf.mxu0
  %v3465 = vadd.f32 %v3424, %v3464
  %v3466 = vpop.f32.mrf.mxu0
  %v3467 = vpop.f32.mrf.mxu0
  %3468 = vdwg.mxu0
  %3469 = vmatprep.subr.bf16.mxu0 %v3062
  %3470 = vmatpush1.bf16.msra.mxu0 %v3061
  %3471 = vmatprep.subr.bf16.mxu0 %v3057
  %3472 = vmatpush1.bf16.msra.mxu0 %v3056
  %3473 = vmatprep.subr.bf16.mxu0 %v3052
  %3474 = vmatpush1.bf16.msra.mxu0 %v3051
  %3475 = vmatprep.subr.bf16.mxu0 %v3047
  %3476 = vmatpush1.bf16.msra.mxu0 %v3046
  %3477 = vmatprep.subr.bf16.mxu0 %v3042
  %3478 = vmatpush1.bf16.msra.mxu0 %v3041
  %3479 = vmatprep.subr.bf16.mxu0 %v3037
  %3480 = vmatpush1.bf16.msra.mxu0 %v3036
  %3481 = vmatprep.subr.bf16.mxu0 %v3032
  %3482 = vmatpush1.bf16.msra.mxu0 %v3031
  %3483 = vmatprep.subr.bf16.mxu0 %v3027
  %3484 = vmatpush1.bf16.msra.mxu0 %v3026
  %3485 = vmatprep.subr.bf16.mxu0 0
  %3486 = vmatpush2.bf16.msra.mxu0 0
  %3487 = vmatprep.subr.bf16.mxu0 0
  %3488 = vmatpush2.bf16.msra.mxu0 0
  %3489 = vmatprep.subr.bf16.mxu0 0
  %3490 = vmatpush2.bf16.msra.mxu0 0
  %3491 = vmatprep.subr.bf16.mxu0 0
  %3492 = vmatpush2.bf16.msra.mxu0 0
  %3493 = vmatprep.subr.bf16.mxu0 0
  %3494 = vmatpush2.bf16.msra.mxu0 0
  %3495 = vmatprep.subr.bf16.mxu0 0
  %3496 = vmatpush2.bf16.msra.mxu0 0
  %3497 = vmatprep.subr.bf16.mxu0 0
  %3498 = vmatpush2.bf16.msra.mxu0 0
  %3499 = vmatprep.subr.bf16.mxu0 0
  %3500 = vmatpush2.bf16.msra.mxu0 0
  %3501 = vmatprep.mubr.bf16.mxu0 0
  %3502 = vmatmul.mubr.bf16.gmra.mxu0 %v1956
  %v3503 = vpop.f32.mrf.mxu0
  %v3504 = vadd.f32 %v3463, %v3503
  %v3505 = vpop.f32.mrf.mxu0
  %v3506 = vadd.f32 %v3465, %v3505
  %v3507 = vpop.f32.mrf.mxu0
  %v3508 = vpop.f32.mrf.mxu0
  %3509 = vdwg.mxu0
  %3510 = vmatprep.subr.bf16.mxu0 0
  %3511 = vmatpush1.bf16.msra.mxu0 %v2903
  %3512 = vmatprep.subr.bf16.mxu0 0
  %3513 = vmatpush1.bf16.msra.mxu0 %v2898
  %3514 = vmatprep.subr.bf16.mxu0 0
  %3515 = vmatpush1.bf16.msra.mxu0 %v2893
  %3516 = vmatprep.subr.bf16.mxu0 0
  %3517 = vmatpush1.bf16.msra.mxu0 %v2888
  %3518 = vmatprep.subr.bf16.mxu0 0
  %3519 = vmatpush1.bf16.msra.mxu0 %v2883
  %3520 = vmatprep.subr.bf16.mxu0 0
  %3521 = vmatpush1.bf16.msra.mxu0 %v2878
  %3522 = vmatprep.subr.bf16.mxu0 0
  %3523 = vmatpush1.bf16.msra.mxu0 %v2873
  %3524 = vmatprep.subr.bf16.mxu0 0
  %3525 = vmatpush1.bf16.msra.mxu0 %v2868
  %3526 = vmatprep.subr.bf16.mxu0 0
  %3527 = vmatpush2.bf16.msra.mxu0 %v2943
  %3528 = vmatprep.subr.bf16.mxu0 0
  %3529 = vmatpush2.bf16.msra.mxu0 %v2938
  %3530 = vmatprep.subr.bf16.mxu0 0
  %3531 = vmatpush2.bf16.msra.mxu0 %v2933
  %3532 = vmatprep.subr.bf16.mxu0 0
  %3533 = vmatpush2.bf16.msra.mxu0 %v2928
  %3534 = vmatprep.subr.bf16.mxu0 0
  %3535 = vmatpush2.bf16.msra.mxu0 %v2923
  %3536 = vmatprep.subr.bf16.mxu0 0
  %3537 = vmatpush2.bf16.msra.mxu0 %v2918
  %3538 = vmatprep.subr.bf16.mxu0 0
  %3539 = vmatpush2.bf16.msra.mxu0 %v2913
  %3540 = vmatprep.subr.bf16.mxu0 0
  %3541 = vmatpush2.bf16.msra.mxu0 %v2908
  %3542 = vmatprep.mubr.bf16.mxu0 %v1953
  %3543 = vmatmul.mubr.bf16.gmra.mxu0 %v1952
  %v3544 = vpop.f32.mrf.mxu0
  %v3545 = vadd.f32 %v2218, %v3544
  %v3546 = vpop.f32.mrf.mxu0
  %v3547 = vpop.f32.mrf.mxu0
  %v3548 = vpop.f32.mrf.mxu0
  %3549 = vdwg.mxu0
  %3550 = vmatprep.subr.bf16.mxu0 0
  %3551 = vmatpush1.bf16.msra.mxu0 %v2983
  %3552 = vmatprep.subr.bf16.mxu0 0
  %3553 = vmatpush1.bf16.msra.mxu0 %v2978
  %3554 = vmatprep.subr.bf16.mxu0 0
  %3555 = vmatpush1.bf16.msra.mxu0 %v2973
  %3556 = vmatprep.subr.bf16.mxu0 0
  %3557 = vmatpush1.bf16.msra.mxu0 %v2968
  %3558 = vmatprep.subr.bf16.mxu0 0
  %3559 = vmatpush1.bf16.msra.mxu0 %v2963
  %3560 = vmatprep.subr.bf16.mxu0 0
  %3561 = vmatpush1.bf16.msra.mxu0 %v2958
  %3562 = vmatprep.subr.bf16.mxu0 0
  %3563 = vmatpush1.bf16.msra.mxu0 %v2953
  %3564 = vmatprep.subr.bf16.mxu0 0
  %3565 = vmatpush1.bf16.msra.mxu0 %v2948
  %3566 = vmatprep.subr.bf16.mxu0 0
  %3567 = vmatpush2.bf16.msra.mxu0 %v3023
  %3568 = vmatprep.subr.bf16.mxu0 0
  %3569 = vmatpush2.bf16.msra.mxu0 %v3018
  %3570 = vmatprep.subr.bf16.mxu0 0
  %3571 = vmatpush2.bf16.msra.mxu0 %v3013
  %3572 = vmatprep.subr.bf16.mxu0 0
  %3573 = vmatpush2.bf16.msra.mxu0 %v3008
  %3574 = vmatprep.subr.bf16.mxu0 0
  %3575 = vmatpush2.bf16.msra.mxu0 %v3003
  %3576 = vmatprep.subr.bf16.mxu0 0
  %3577 = vmatpush2.bf16.msra.mxu0 %v2998
  %3578 = vmatprep.subr.bf16.mxu0 0
  %3579 = vmatpush2.bf16.msra.mxu0 %v2993
  %3580 = vmatprep.subr.bf16.mxu0 0
  %3581 = vmatpush2.bf16.msra.mxu0 %v2988
  %3582 = vmatprep.mubr.bf16.mxu0 %v1955
  %3583 = vmatmul.mubr.bf16.gmra.mxu0 %v1954
  %v3584 = vpop.f32.mrf.mxu0
  %v3585 = vadd.f32 %v3545, %v3584
  %v3586 = vpop.f32.mrf.mxu0
  %v3587 = vpop.f32.mrf.mxu0
  %v3588 = vpop.f32.mrf.mxu0
  %3589 = vdwg.mxu0
  %3590 = vmatprep.subr.bf16.mxu0 0
  %3591 = vmatpush1.bf16.msra.mxu0 %v3063
  %3592 = vmatprep.subr.bf16.mxu0 0
  %3593 = vmatpush1.bf16.msra.mxu0 %v3058
  %3594 = vmatprep.subr.bf16.mxu0 0
  %3595 = vmatpush1.bf16.msra.mxu0 %v3053
  %3596 = vmatprep.subr.bf16.mxu0 0
  %3597 = vmatpush1.bf16.msra.mxu0 %v3048
  %3598 = vmatprep.subr.bf16.mxu0 0
  %3599 = vmatpush1.bf16.msra.mxu0 %v3043
  %3600 = vmatprep.subr.bf16.mxu0 0
  %3601 = vmatpush1.bf16.msra.mxu0 %v3038
  %3602 = vmatprep.subr.bf16.mxu0 0
  %3603 = vmatpush1.bf16.msra.mxu0 %v3033
  %3604 = vmatprep.subr.bf16.mxu0 0
  %3605 = vmatpush1.bf16.msra.mxu0 %v3028
  %3606 = vmatprep.subr.bf16.mxu0 0
  %3607 = vmatpush2.bf16.msra.mxu0 0
  %3608 = vmatprep.subr.bf16.mxu0 0
  %3609 = vmatpush2.bf16.msra.mxu0 0
  %3610 = vmatprep.subr.bf16.mxu0 0
  %3611 = vmatpush2.bf16.msra.mxu0 0
  %3612 = vmatprep.subr.bf16.mxu0 0
  %3613 = vmatpush2.bf16.msra.mxu0 0
  %3614 = vmatprep.subr.bf16.mxu0 0
  %3615 = vmatpush2.bf16.msra.mxu0 0
  %3616 = vmatprep.subr.bf16.mxu0 0
  %3617 = vmatpush2.bf16.msra.mxu0 0
  %3618 = vmatprep.subr.bf16.mxu0 0
  %3619 = vmatpush2.bf16.msra.mxu0 0
  %3620 = vmatprep.subr.bf16.mxu0 0
  %3621 = vmatpush2.bf16.msra.mxu0 0
  %3622 = vmatprep.mubr.bf16.mxu0 0
  %3623 = vmatmul.mubr.bf16.gmra.mxu0 %v1956
  %v3624 = vpop.f32.mrf.mxu0
  %v3625 = vadd.f32 %v3585, %v3624
  %v3626 = vpop.f32.mrf.mxu0
  %v3627 = vpop.f32.mrf.mxu0
  %v3628 = vpop.f32.mrf.mxu0
  %3629 = vdwg.mxu0
  %v3630 = vmax.f32 %v3381, 0.0
  %v3631 = vmax.f32 %v3383, 0.0
  %v3632 = vmax.f32 %v3504, 0.0
  %v3633 = vmax.f32 %v3506, 0.0
  %v3634 = vmax.f32 %v3625, 0.0
  %v3635 = vpack.c.bf16 %v3630, %v3630
  %v3636 = vpack.c.bf16 %v3631, %v3631
  %v3637 = vpack.c.bf16 %v3632, %v3632
  %v3638 = vpack.c.bf16 %v3633, %v3633
  %v3639 = vpack.c.bf16 %v3634, %v3634
  %v3640 = vld [vmem:[%s7] sm:$0xff]
  %v3641 = vld [vmem:[%s7 + $0x8] sm:$0xff]
  %v3642 = vld [vmem:[%s7 + $0x10] sm:$0xff]
  %v3643 = vld [vmem:[%s7 + $0x18] sm:$0xf]
  %v3644 = vld [vmem:[%s7 + $0x1c] sm:$0xff]
  %v3645 = vld [vmem:[%s7 + $0x24] sm:$0xff]
  %v3646 = vld [vmem:[%s7 + $0x2c] sm:$0xff]
  %v3647 = vld [vmem:[%s7 + $0x34] sm:$0xf]
  %v3648 = vld [vmem:[%s7 + $0x38] sm:$0xff]
  %v3649 = vld [vmem:[%s7 + $0x40] sm:$0xff]
  %v3650 = vld [vmem:[%s7 + $0x48] sm:$0xff]
  %v3651 = vld [vmem:[%s7 + $0x50] sm:$0xf]
  %v3652 = vld [vmem:[%s7 + $0x54] sm:$0xff]
  %v3653 = vld [vmem:[%s7 + $0x5c] sm:$0xff]
  %v3654 = vld [vmem:[%s7 + $0x64] sm:$0xff]
  %v3655 = vld [vmem:[%s7 + $0x6c] sm:$0xf]
  %v3656 = vld [vmem:[%s7 + $0x70] sm:$0xff]
  %v3657 = vld [vmem:[%s7 + $0x78] sm:$0xff]
  %v3658 = vld [vmem:[%s7 + $0x80] sm:$0xff]
  %v3659 = vld [vmem:[%s7 + $0x88] sm:$0xf]
  %v3660 = vld [vmem:[%s7 + $0x8c] sm:$0xff]
  %v3661 = vld [vmem:[%s7 + $0x94] sm:$0xff]
  %v3662 = vld [vmem:[%s7 + $0x9c] sm:$0xff]
  %v3663 = vld [vmem:[%s7 + $0xa4] sm:$0xf]
  %v3664 = vld [vmem:[%s7 + $0xa8] sm:$0xff]
  %v3665 = vld [vmem:[%s7 + $0xb0] sm:$0xff]
  %v3666 = vld [vmem:[%s7 + $0xb8] sm:$0xff]
  %v3667 = vld [vmem:[%s7 + $0xc0] sm:$0xf]
  %v3668 = vld [vmem:[%s7 + $0xc4] sm:$0xff]
  %v3669 = vld [vmem:[%s7 + $0xcc] sm:$0xff]
  %v3670 = vld [vmem:[%s7 + $0xd4] sm:$0xff]
  %v3671 = vld [vmem:[%s7 + $0xdc] sm:$0xf]
  %v3672 = vld [vmem:[%s7 + $0xe0] sm:$0xff]
  %v3673 = vld [vmem:[%s7 + $0xe8] sm:$0xff]
  %v3674 = vld [vmem:[%s7 + $0xf0] sm:$0xff]
  %v3675 = vld [vmem:[%s7 + $0xf8] sm:$0xf]
  %v3676 = vld [vmem:[%s7 + $0xfc] sm:$0xff]
  %v3677 = vld [vmem:[%s7 + $0x104] sm:$0xff]
  %v3678 = vld [vmem:[%s7 + $0x10c] sm:$0xff]
  %v3679 = vld [vmem:[%s7 + $0x114] sm:$0xf]
  %v3680 = vld [vmem:[%s7 + $0x118] sm:$0xff]
  %v3681 = vld [vmem:[%s7 + $0x120] sm:$0xff]
  %v3682 = vld [vmem:[%s7 + $0x128] sm:$0xff]
  %v3683 = vld [vmem:[%s7 + $0x130] sm:$0xf]
  %v3684 = vld [vmem:[%s7 + $0x134] sm:$0xff]
  %v3685 = vld [vmem:[%s7 + $0x13c] sm:$0xff]
  %v3686 = vld [vmem:[%s7 + $0x144] sm:$0xff]
  %v3687 = vld [vmem:[%s7 + $0x14c] sm:$0xf]
  %v3688 = vld [vmem:[%s7 + $0x150] sm:$0xff]
  %v3689 = vld [vmem:[%s7 + $0x158] sm:$0xff]
  %v3690 = vld [vmem:[%s7 + $0x160] sm:$0xff]
  %v3691 = vld [vmem:[%s7 + $0x168] sm:$0xf]
  %v3692 = vld [vmem:[%s7 + $0x16c] sm:$0xff]
  %v3693 = vld [vmem:[%s7 + $0x174] sm:$0xff]
  %v3694 = vld [vmem:[%s7 + $0x17c] sm:$0xff]
  %v3695 = vld [vmem:[%s7 + $0x184] sm:$0xf]
  %v3696 = vld [vmem:[%s7 + $0x188] sm:$0xff]
  %v3697 = vld [vmem:[%s7 + $0x190] sm:$0xff]
  %v3698 = vld [vmem:[%s7 + $0x198] sm:$0xff]
  %v3699 = vld [vmem:[%s7 + $0x1a0] sm:$0xf]
  %v3700 = vld [vmem:[%s7 + $0x1a4] sm:$0xff]
  %v3701 = vld [vmem:[%s7 + $0x1ac] sm:$0xff]
  %v3702 = vld [vmem:[%s7 + $0x1b4] sm:$0xff]
  %v3703 = vld [vmem:[%s7 + $0x1bc] sm:$0xf]
  %v3704 = vld [vmem:[%s7 + $0x1c0] sm:$0xff]
  %v3705 = vld [vmem:[%s7 + $0x1c8] sm:$0xff]
  %v3706 = vld [vmem:[%s7 + $0x1d0] sm:$0xff]
  %v3707 = vld [vmem:[%s7 + $0x1d8] sm:$0xf]
  %v3708 = vld [vmem:[%s7 + $0x1dc] sm:$0xff]
  %v3709 = vld [vmem:[%s7 + $0x1e4] sm:$0xff]
  %v3710 = vld [vmem:[%s7 + $0x1ec] sm:$0xff]
  %v3711 = vld [vmem:[%s7 + $0x1f4] sm:$0xf]
  %v3712 = vld [vmem:[%s7 + $0x1f8] sm:$0xff]
  %v3713 = vld [vmem:[%s7 + $0x200] sm:$0xff]
  %v3714 = vld [vmem:[%s7 + $0x208] sm:$0xff]
  %v3715 = vld [vmem:[%s7 + $0x210] sm:$0xf]
  %v3716 = vld [vmem:[%s7 + $0x214] sm:$0xff]
  %v3717 = vld [vmem:[%s7 + $0x21c] sm:$0xff]
  %v3718 = vld [vmem:[%s7 + $0x224] sm:$0xff]
  %v3719 = vld [vmem:[%s7 + $0x22c] sm:$0xf]
  %v3720 = vld [vmem:[%s7 + $0x230] sm:$0xff]
  %v3721 = vld [vmem:[%s7 + $0x238] sm:$0xff]
  %v3722 = vld [vmem:[%s7 + $0x240] sm:$0xff]
  %v3723 = vld [vmem:[%s7 + $0x248] sm:$0xf]
  %v3724 = vld [vmem:[%s7 + $0x24c] sm:$0xff]
  %v3725 = vld [vmem:[%s7 + $0x254] sm:$0xff]
  %v3726 = vld [vmem:[%s7 + $0x25c] sm:$0xff]
  %v3727 = vld [vmem:[%s7 + $0x264] sm:$0xf]
  %v3728 = vld [vmem:[%s7 + $0x268] sm:$0xff]
  %v3729 = vld [vmem:[%s7 + $0x270] sm:$0xff]
  %v3730 = vld [vmem:[%s7 + $0x278] sm:$0xff]
  %v3731 = vld [vmem:[%s7 + $0x280] sm:$0xf]
  %v3732 = vld [vmem:[%s7 + $0x284] sm:$0xff]
  %v3733 = vld [vmem:[%s7 + $0x28c] sm:$0xff]
  %v3734 = vld [vmem:[%s7 + $0x294] sm:$0xff]
  %v3735 = vld [vmem:[%s7 + $0x29c] sm:$0xf]
  %v3736 = vld [vmem:[%s7 + $0x2a0] sm:$0xff]
  %v3737 = vld [vmem:[%s7 + $0x2a8] sm:$0xff]
  %v3738 = vld [vmem:[%s7 + $0x2b0] sm:$0xff]
  %v3739 = vld [vmem:[%s7 + $0x2b8] sm:$0xf]
  %v3740 = vld [vmem:[%s7 + $0x2bc] sm:$0xff]
  %v3741 = vld [vmem:[%s7 + $0x2c4] sm:$0xff]
  %v3742 = vld [vmem:[%s7 + $0x2cc] sm:$0xff]
  %v3743 = vld [vmem:[%s7 + $0x2d4] sm:$0xf]
  %v3744 = vld [vmem:[%s7 + $0x2d8] sm:$0xff]
  %v3745 = vld [vmem:[%s7 + $0x2e0] sm:$0xff]
  %v3746 = vld [vmem:[%s7 + $0x2e8] sm:$0xff]
  %v3747 = vld [vmem:[%s7 + $0x2f0] sm:$0xf]
  %v3748 = vld [vmem:[%s7 + $0x2f4] sm:$0xff]
  %v3749 = vld [vmem:[%s7 + $0x2fc] sm:$0xff]
  %v3750 = vld [vmem:[%s7 + $0x304] sm:$0xff]
  %v3751 = vld [vmem:[%s7 + $0x30c] sm:$0xf]
  %v3752 = vld [vmem:[%s7 + $0x310] sm:$0xff]
  %v3753 = vld [vmem:[%s7 + $0x318] sm:$0xff]
  %v3754 = vld [vmem:[%s7 + $0x320] sm:$0xff]
  %v3755 = vld [vmem:[%s7 + $0x328] sm:$0xf]
  %v3756 = vld [vmem:[%s7 + $0x32c] sm:$0xff]
  %v3757 = vld [vmem:[%s7 + $0x334] sm:$0xff]
  %v3758 = vld [vmem:[%s7 + $0x33c] sm:$0xff]
  %v3759 = vld [vmem:[%s7 + $0x344] sm:$0xf]
  %v3760 = vld [vmem:[%s7 + $0x348] sm:$0xff]
  %v3761 = vld [vmem:[%s7 + $0x350] sm:$0xff]
  %v3762 = vld [vmem:[%s7 + $0x358] sm:$0xff]
  %v3763 = vld [vmem:[%s7 + $0x360] sm:$0xf]
  %v3764 = vld [vmem:[%s7 + $0x364] sm:$0xff]
  %v3765 = vld [vmem:[%s7 + $0x36c] sm:$0xff]
  %v3766 = vld [vmem:[%s7 + $0x374] sm:$0xff]
  %v3767 = vld [vmem:[%s7 + $0x37c] sm:$0xf]
  %v3768 = vld [vmem:[%s7 + $0x380] sm:$0xff]
  %v3769 = vld [vmem:[%s7 + $0x388] sm:$0xff]
  %v3770 = vld [vmem:[%s7 + $0x390] sm:$0xff]
  %v3771 = vld [vmem:[%s7 + $0x398] sm:$0xf]
  %v3772 = vld [vmem:[%s7 + $0x39c] sm:$0xff]
  %v3773 = vld [vmem:[%s7 + $0x3a4] sm:$0xff]
  %v3774 = vld [vmem:[%s7 + $0x3ac] sm:$0xff]
  %v3775 = vld [vmem:[%s7 + $0x3b4] sm:$0xf]
  %v3776 = vld [vmem:[%s7 + $0x3b8] sm:$0xff]
  %v3777 = vld [vmem:[%s7 + $0x3c0] sm:$0xff]
  %v3778 = vld [vmem:[%s7 + $0x3c8] sm:$0xff]
  %v3779 = vld [vmem:[%s7 + $0x3d0] sm:$0xf]
  %v3780 = vld [vmem:[%s7 + $0x3d4] sm:$0xff]
  %v3781 = vld [vmem:[%s7 + $0x3dc] sm:$0xff]
  %v3782 = vld [vmem:[%s7 + $0x3e4] sm:$0xff]
  %v3783 = vld [vmem:[%s7 + $0x3ec] sm:$0xf]
  %v3784 = vld [vmem:[%s7 + $0x3f0] sm:$0xff]
  %v3785 = vld [vmem:[%s7 + $0x3f8] sm:$0xff]
  %v3786 = vld [vmem:[%s7 + $0x400] sm:$0xff]
  %v3787 = vld [vmem:[%s7 + $0x408] sm:$0xf]
  %v3788 = vld [vmem:[%s7 + $0x40c] sm:$0xff]
  %v3789 = vld [vmem:[%s7 + $0x414] sm:$0xff]
  %v3790 = vld [vmem:[%s7 + $0x41c] sm:$0xff]
  %v3791 = vld [vmem:[%s7 + $0x424] sm:$0xf]
  %v3792 = vld [vmem:[%s7 + $0x428] sm:$0xff]
  %v3793 = vld [vmem:[%s7 + $0x430] sm:$0xff]
  %v3794 = vld [vmem:[%s7 + $0x438] sm:$0xff]
  %v3795 = vld [vmem:[%s7 + $0x440] sm:$0xf]
  %v3796 = vld [vmem:[%s7 + $0x444] sm:$0xff]
  %v3797 = vld [vmem:[%s7 + $0x44c] sm:$0xff]
  %v3798 = vld [vmem:[%s7 + $0x454] sm:$0xff]
  %v3799 = vld [vmem:[%s7 + $0x45c] sm:$0xf]
  %v3800 = vld [vmem:[%s7 + $0x460] sm:$0xff]
  %v3801 = vld [vmem:[%s7 + $0x468] sm:$0xff]
  %v3802 = vld [vmem:[%s7 + $0x470] sm:$0xff]
  %v3803 = vld [vmem:[%s7 + $0x478] sm:$0xf]
  %v3804 = vld [vmem:[%s7 + $0x47c] sm:$0xff]
  %v3805 = vld [vmem:[%s7 + $0x484] sm:$0xff]
  %v3806 = vld [vmem:[%s7 + $0x48c] sm:$0xff]
  %v3807 = vld [vmem:[%s7 + $0x494] sm:$0xf]
  %v3808 = vld [vmem:[%s7 + $0x498] sm:$0xff]
  %v3809 = vld [vmem:[%s7 + $0x4a0] sm:$0xff]
  %v3810 = vld [vmem:[%s7 + $0x4a8] sm:$0xff]
  %v3811 = vld [vmem:[%s7 + $0x4b0] sm:$0xf]
  %v3812 = vld [vmem:[%s7 + $0x4b4] sm:$0xff]
  %v3813 = vld [vmem:[%s7 + $0x4bc] sm:$0xff]
  %v3814 = vld [vmem:[%s7 + $0x4c4] sm:$0xff]
  %v3815 = vld [vmem:[%s7 + $0x4cc] sm:$0xf]
  %v3816 = vld [vmem:[%s7 + $0x4d0] sm:$0xff]
  %v3817 = vld [vmem:[%s7 + $0x4d8] sm:$0xff]
  %v3818 = vld [vmem:[%s7 + $0x4e0] sm:$0xff]
  %v3819 = vld [vmem:[%s7 + $0x4e8] sm:$0xf]
  %v3820 = vld [vmem:[%s7 + $0x4ec] sm:$0xff]
  %v3821 = vld [vmem:[%s7 + $0x4f4] sm:$0xff]
  %v3822 = vld [vmem:[%s7 + $0x4fc] sm:$0xff]
  %v3823 = vld [vmem:[%s7 + $0x504] sm:$0xf]
  %v3824 = vld [vmem:[%s7 + $0x508] sm:$0xff]
  %v3825 = vld [vmem:[%s7 + $0x510] sm:$0xff]
  %v3826 = vld [vmem:[%s7 + $0x518] sm:$0xff]
  %v3827 = vld [vmem:[%s7 + $0x520] sm:$0xf]
  %v3828 = vld [vmem:[%s7 + $0x524] sm:$0xff]
  %v3829 = vld [vmem:[%s7 + $0x52c] sm:$0xff]
  %v3830 = vld [vmem:[%s7 + $0x534] sm:$0xff]
  %v3831 = vld [vmem:[%s7 + $0x53c] sm:$0xf]
  %v3832 = vld [vmem:[%s7 + $0x540] sm:$0xff]
  %v3833 = vld [vmem:[%s7 + $0x548] sm:$0xff]
  %v3834 = vld [vmem:[%s7 + $0x550] sm:$0xff]
  %v3835 = vld [vmem:[%s7 + $0x558] sm:$0xf]
  %v3836 = vld [vmem:[%s7 + $0x55c] sm:$0xff]
  %v3837 = vld [vmem:[%s7 + $0x564] sm:$0xff]
  %v3838 = vld [vmem:[%s7 + $0x56c] sm:$0xff]
  %v3839 = vld [vmem:[%s7 + $0x574] sm:$0xf]
  %v3840 = vld [vmem:[%s7 + $0x578] sm:$0xff]
  %v3841 = vld [vmem:[%s7 + $0x580] sm:$0xff]
  %v3842 = vld [vmem:[%s7 + $0x588] sm:$0xff]
  %v3843 = vld [vmem:[%s7 + $0x590] sm:$0xf]
  %v3844 = vld [vmem:[%s7 + $0x594] sm:$0xff]
  %v3845 = vld [vmem:[%s7 + $0x59c] sm:$0xff]
  %v3846 = vld [vmem:[%s7 + $0x5a4] sm:$0xff]
  %v3847 = vld [vmem:[%s7 + $0x5ac] sm:$0xf]
  %v3848 = vld [vmem:[%s7 + $0x5b0] sm:$0xff]
  %v3849 = vld [vmem:[%s7 + $0x5b8] sm:$0xff]
  %v3850 = vld [vmem:[%s7 + $0x5c0] sm:$0xff]
  %v3851 = vld [vmem:[%s7 + $0x5c8] sm:$0xf]
  %v3852 = vld [vmem:[%s7 + $0x5cc] sm:$0xff]
  %v3853 = vld [vmem:[%s7 + $0x5d4] sm:$0xff]
  %v3854 = vld [vmem:[%s7 + $0x5dc] sm:$0xff]
  %v3855 = vld [vmem:[%s7 + $0x5e4] sm:$0xf]
  %v3856 = vld [vmem:[%s7 + $0x5e8] sm:$0xff]
  %v3857 = vld [vmem:[%s7 + $0x5f0] sm:$0xff]
  %v3858 = vld [vmem:[%s7 + $0x5f8] sm:$0xff]
  %v3859 = vld [vmem:[%s7 + $0x600] sm:$0xf]
  %v3860 = vld [vmem:[%s7 + $0x604] sm:$0xff]
  %v3861 = vld [vmem:[%s7 + $0x60c] sm:$0xff]
  %v3862 = vld [vmem:[%s7 + $0x614] sm:$0xff]
  %v3863 = vld [vmem:[%s7 + $0x61c] sm:$0xf]
  %v3864 = vld [vmem:[%s7 + $0x620] sm:$0xff]
  %v3865 = vld [vmem:[%s7 + $0x628] sm:$0xff]
  %v3866 = vld [vmem:[%s7 + $0x630] sm:$0xff]
  %v3867 = vld [vmem:[%s7 + $0x638] sm:$0xf]
  %v3868 = vld [vmem:[%s7 + $0x63c] sm:$0xff]
  %v3869 = vld [vmem:[%s7 + $0x644] sm:$0xff]
  %v3870 = vld [vmem:[%s7 + $0x64c] sm:$0xff]
  %v3871 = vld [vmem:[%s7 + $0x654] sm:$0xf]
  %v3872 = vld [vmem:[%s7 + $0x658] sm:$0xff]
  %v3873 = vld [vmem:[%s7 + $0x660] sm:$0xff]
  %v3874 = vld [vmem:[%s7 + $0x668] sm:$0xff]
  %v3875 = vld [vmem:[%s7 + $0x670] sm:$0xf]
  %v3876 = vld [vmem:[%s7 + $0x674] sm:$0xff]
  %v3877 = vld [vmem:[%s7 + $0x67c] sm:$0xff]
  %v3878 = vld [vmem:[%s7 + $0x684] sm:$0xff]
  %v3879 = vld [vmem:[%s7 + $0x68c] sm:$0xf]
  %v3880 = vld [vmem:[%s7 + $0x690] sm:$0xff]
  %v3881 = vld [vmem:[%s7 + $0x698] sm:$0xff]
  %v3882 = vld [vmem:[%s7 + $0x6a0] sm:$0xff]
  %v3883 = vld [vmem:[%s7 + $0x6a8] sm:$0xf]
  %v3884 = vld [vmem:[%s7 + $0x6ac] sm:$0xff]
  %v3885 = vld [vmem:[%s7 + $0x6b4] sm:$0xff]
  %v3886 = vld [vmem:[%s7 + $0x6bc] sm:$0xff]
  %v3887 = vld [vmem:[%s7 + $0x6c4] sm:$0xf]
  %v3888 = vld [vmem:[%s7 + $0x6c8] sm:$0xff]
  %v3889 = vld [vmem:[%s7 + $0x6d0] sm:$0xff]
  %v3890 = vld [vmem:[%s7 + $0x6d8] sm:$0xff]
  %v3891 = vld [vmem:[%s7 + $0x6e0] sm:$0xf]
  %v3892 = vld [vmem:[%s7 + $0x6e4] sm:$0xff]
  %v3893 = vld [vmem:[%s7 + $0x6ec] sm:$0xff]
  %v3894 = vld [vmem:[%s7 + $0x6f4] sm:$0xff]
  %v3895 = vld [vmem:[%s7 + $0x6fc] sm:$0xf]
  %v3896 = vld [vmem:[%s7 + $0x700] sm:$0xff]
  %v3897 = vld [vmem:[%s7 + $0x708] sm:$0xff]
  %v3898 = vld [vmem:[%s7 + $0x710] sm:$0xff]
  %v3899 = vld [vmem:[%s7 + $0x718] sm:$0xf]
  %v3900 = vld [vmem:[%s7 + $0x71c] sm:$0xff]
  %v3901 = vld [vmem:[%s7 + $0x724] sm:$0xff]
  %v3902 = vld [vmem:[%s7 + $0x72c] sm:$0xff]
  %v3903 = vld [vmem:[%s7 + $0x734] sm:$0xf]
  %v3904 = vld [vmem:[%s7 + $0x738] sm:$0xff]
  %v3905 = vld [vmem:[%s7 + $0x740] sm:$0xff]
  %v3906 = vld [vmem:[%s7 + $0x748] sm:$0xff]
  %v3907 = vld [vmem:[%s7 + $0x750] sm:$0xf]
  %v3908 = vld [vmem:[%s7 + $0x754] sm:$0xff]
  %v3909 = vld [vmem:[%s7 + $0x75c] sm:$0xff]
  %v3910 = vld [vmem:[%s7 + $0x764] sm:$0xff]
  %v3911 = vld [vmem:[%s7 + $0x76c] sm:$0xf]
  %v3912 = vld [vmem:[%s7 + $0x770] sm:$0xff]
  %v3913 = vld [vmem:[%s7 + $0x778] sm:$0xff]
  %v3914 = vld [vmem:[%s7 + $0x780] sm:$0xff]
  %v3915 = vld [vmem:[%s7 + $0x788] sm:$0xf]
  %v3916 = vld [vmem:[%s7 + $0x78c] sm:$0xff]
  %v3917 = vld [vmem:[%s7 + $0x794] sm:$0xff]
  %v3918 = vld [vmem:[%s7 + $0x79c] sm:$0xff]
  %v3919 = vld [vmem:[%s7 + $0x7a4] sm:$0xf]
  %v3920 = vld [vmem:[%s7 + $0x7a8] sm:$0xff]
  %v3921 = vld [vmem:[%s7 + $0x7b0] sm:$0xff]
  %v3922 = vld [vmem:[%s7 + $0x7b8] sm:$0xff]
  %v3923 = vld [vmem:[%s7 + $0x7c0] sm:$0xf]
  %v3924 = vld [vmem:[%s7 + $0x7c4] sm:$0xff]
  %v3925 = vld [vmem:[%s7 + $0x7cc] sm:$0xff]
  %v3926 = vld [vmem:[%s7 + $0x7d4] sm:$0xff]
  %v3927 = vld [vmem:[%s7 + $0x7dc] sm:$0xf]
  %v3928 = vld [vmem:[%s7 + $0x7e0] sm:$0xff]
  %v3929 = vld [vmem:[%s7 + $0x7e8] sm:$0xff]
  %v3930 = vld [vmem:[%s7 + $0x7f0] sm:$0xff]
  %v3931 = vld [vmem:[%s7 + $0x7f8] sm:$0xf]
  %v3932 = vld [vmem:[%s7 + $0x7fc] sm:$0xff]
  %v3933 = vld [vmem:[%s7 + $0x804] sm:$0xff]
  %v3934 = vld [vmem:[%s7 + $0x80c] sm:$0xff]
  %v3935 = vld [vmem:[%s7 + $0x814] sm:$0xf]
  %v3936 = vld [vmem:[%s7 + $0x818] sm:$0xff]
  %v3937 = vld [vmem:[%s7 + $0x820] sm:$0xff]
  %v3938 = vld [vmem:[%s7 + $0x828] sm:$0xff]
  %v3939 = vld [vmem:[%s7 + $0x830] sm:$0xf]
  %v3940 = vld [vmem:[%s7 + $0x834] sm:$0xff]
  %v3941 = vld [vmem:[%s7 + $0x83c] sm:$0xff]
  %v3942 = vld [vmem:[%s7 + $0x844] sm:$0xff]
  %v3943 = vld [vmem:[%s7 + $0x84c] sm:$0xf]
  %v3944 = vld [vmem:[%s7 + $0x850] sm:$0xff]
  %v3945 = vld [vmem:[%s7 + $0x858] sm:$0xff]
  %v3946 = vld [vmem:[%s7 + $0x860] sm:$0xff]
  %v3947 = vld [vmem:[%s7 + $0x868] sm:$0xf]
  %v3948 = vld [vmem:[%s7 + $0x86c] sm:$0xff]
  %v3949 = vld [vmem:[%s7 + $0x874] sm:$0xff]
  %v3950 = vld [vmem:[%s7 + $0x87c] sm:$0xff]
  %v3951 = vld [vmem:[%s7 + $0x884] sm:$0xf]
  %v3952 = vld [vmem:[%s7 + $0x888] sm:$0xff]
  %v3953 = vld [vmem:[%s7 + $0x890] sm:$0xff]
  %v3954 = vld [vmem:[%s7 + $0x898] sm:$0xff]
  %v3955 = vld [vmem:[%s7 + $0x8a0] sm:$0xf]
  %v3956 = vld [vmem:[%s7 + $0x8a4] sm:$0xff]
  %v3957 = vld [vmem:[%s7 + $0x8ac] sm:$0xff]
  %v3958 = vld [vmem:[%s7 + $0x8b4] sm:$0xff]
  %v3959 = vld [vmem:[%s7 + $0x8bc] sm:$0xf]
  %v3960 = vld [vmem:[%s8] sm:$0xff]
  %v3962 = vlaneseq
  %v3963 = vshrl.u32 %v3962, 7
  %v3964 = vsub.s32 0, %v3963
  %v3965 = vrot.slane %v3960, %v3964
  %v3966 = vlaneseq
  %v3967 = vshrl.u32 %v3966, 7
  %v3968 = vsub.s32 1, %v3967
  %v3969 = vrot.slane %v3960, %v3968
  %v3970 = vlaneseq
  %v3971 = vshrl.u32 %v3970, 7
  %v3972 = vsub.s32 2, %v3971
  %v3973 = vrot.slane %v3960, %v3972
  %v3974 = vlaneseq
  %v3975 = vshrl.u32 %v3974, 7
  %v3976 = vsub.s32 3, %v3975
  %v3977 = vrot.slane %v3960, %v3976
  %v3978 = vlaneseq
  %v3979 = vshrl.u32 %v3978, 7
  %v3980 = vsub.s32 4, %v3979
  %v3981 = vrot.slane %v3960, %v3980
  %v3982 = vlaneseq
  %v3983 = vshrl.u32 %v3982, 7
  %v3984 = vsub.s32 5, %v3983
  %v3985 = vrot.slane %v3960, %v3984
  %v3986 = vlaneseq
  %v3987 = vshrl.u32 %v3986, 7
  %v3988 = vsub.s32 6, %v3987
  %v3989 = vrot.slane %v3960, %v3988
  %v4317 = vunpack.c.l.b16 %v3640
  %v4318 = vunpack.c.h.b16 %v3640
  %v4319 = vunpack.c.l.b16 %v3641
  %v4320 = vunpack.c.h.b16 %v3641
  %v4321 = vunpack.c.l.b16 %v3642
  %v4322 = vunpack.c.h.b16 %v3642
  %v4323 = vunpack.c.l.b16 %v3643
  %v4324 = vunpack.c.l.b16 %v3644
  %v4325 = vunpack.c.h.b16 %v3644
  %v4326 = vunpack.c.l.b16 %v3645
  %v4327 = vunpack.c.h.b16 %v3645
  %v4328 = vunpack.c.l.b16 %v3646
  %v4329 = vunpack.c.h.b16 %v3646
  %v4330 = vunpack.c.l.b16 %v3647
  %v4331 = vunpack.c.l.b16 %v3648
  %v4332 = vunpack.c.h.b16 %v3648
  %v4333 = vunpack.c.l.b16 %v3649
  %v4334 = vunpack.c.h.b16 %v3649
  %v4335 = vunpack.c.l.b16 %v3650
  %v4336 = vunpack.c.h.b16 %v3650
  %v4337 = vunpack.c.l.b16 %v3651
  %v4338 = vunpack.c.l.b16 %v3652
  %v4339 = vunpack.c.h.b16 %v3652
  %v4340 = vunpack.c.l.b16 %v3653
  %v4341 = vunpack.c.h.b16 %v3653
  %v4342 = vunpack.c.l.b16 %v3654
  %v4343 = vunpack.c.h.b16 %v3654
  %v4344 = vunpack.c.l.b16 %v3655
  %v4345 = vunpack.c.l.b16 %v3656
  %v4346 = vunpack.c.h.b16 %v3656
  %v4347 = vunpack.c.l.b16 %v3657
  %v4348 = vunpack.c.h.b16 %v3657
  %v4349 = vunpack.c.l.b16 %v3658
  %v4350 = vunpack.c.h.b16 %v3658
  %v4351 = vunpack.c.l.b16 %v3659
  %v4352 = vunpack.c.l.b16 %v3660
  %v4353 = vunpack.c.h.b16 %v3660
  %v4354 = vunpack.c.l.b16 %v3661
  %v4355 = vunpack.c.h.b16 %v3661
  %v4356 = vunpack.c.l.b16 %v3662
  %v4357 = vunpack.c.h.b16 %v3662
  %v4358 = vunpack.c.l.b16 %v3663
  %v4359 = vunpack.c.l.b16 %v3664
  %v4360 = vunpack.c.h.b16 %v3664
  %v4361 = vunpack.c.l.b16 %v3665
  %v4362 = vunpack.c.h.b16 %v3665
  %v4363 = vunpack.c.l.b16 %v3666
  %v4364 = vunpack.c.h.b16 %v3666
  %v4365 = vunpack.c.l.b16 %v3667
  %v4366 = vunpack.c.l.b16 %v3668
  %v4367 = vunpack.c.h.b16 %v3668
  %v4368 = vunpack.c.l.b16 %v3669
  %v4369 = vunpack.c.h.b16 %v3669
  %v4370 = vunpack.c.l.b16 %v3670
  %v4371 = vunpack.c.h.b16 %v3670
  %v4372 = vunpack.c.l.b16 %v3671
  %v4373 = vunpack.c.l.b16 %v3672
  %v4374 = vunpack.c.h.b16 %v3672
  %v4375 = vunpack.c.l.b16 %v3673
  %v4376 = vunpack.c.h.b16 %v3673
  %v4377 = vunpack.c.l.b16 %v3674
  %v4378 = vunpack.c.h.b16 %v3674
  %v4379 = vunpack.c.l.b16 %v3675
  %v4380 = vunpack.c.l.b16 %v3676
  %v4381 = vunpack.c.h.b16 %v3676
  %v4382 = vunpack.c.l.b16 %v3677
  %v4383 = vunpack.c.h.b16 %v3677
  %v4384 = vunpack.c.l.b16 %v3678
  %v4385 = vunpack.c.h.b16 %v3678
  %v4386 = vunpack.c.l.b16 %v3679
  %v4387 = vunpack.c.l.b16 %v3680
  %v4388 = vunpack.c.h.b16 %v3680
  %v4389 = vunpack.c.l.b16 %v3681
  %v4390 = vunpack.c.h.b16 %v3681
  %v4391 = vunpack.c.l.b16 %v3682
  %v4392 = vunpack.c.h.b16 %v3682
  %v4393 = vunpack.c.l.b16 %v3683
  %v4394 = vunpack.c.l.b16 %v3684
  %v4395 = vunpack.c.h.b16 %v3684
  %v4396 = vunpack.c.l.b16 %v3685
  %v4397 = vunpack.c.h.b16 %v3685
  %v4398 = vunpack.c.l.b16 %v3686
  %v4399 = vunpack.c.h.b16 %v3686
  %v4400 = vunpack.c.l.b16 %v3687
  %v4401 = vunpack.c.l.b16 %v3688
  %v4402 = vunpack.c.h.b16 %v3688
  %v4403 = vunpack.c.l.b16 %v3689
  %v4404 = vunpack.c.h.b16 %v3689
  %v4405 = vunpack.c.l.b16 %v3690
  %v4406 = vunpack.c.h.b16 %v3690
  %v4407 = vunpack.c.l.b16 %v3691
  %v4408 = vunpack.c.l.b16 %v3692
  %v4409 = vunpack.c.h.b16 %v3692
  %v4410 = vunpack.c.l.b16 %v3693
  %v4411 = vunpack.c.h.b16 %v3693
  %v4412 = vunpack.c.l.b16 %v3694
  %v4413 = vunpack.c.h.b16 %v3694
  %v4414 = vunpack.c.l.b16 %v3695
  %v4415 = vunpack.c.l.b16 %v3696
  %v4416 = vunpack.c.h.b16 %v3696
  %v4417 = vunpack.c.l.b16 %v3697
  %v4418 = vunpack.c.h.b16 %v3697
  %v4419 = vunpack.c.l.b16 %v3698
  %v4420 = vunpack.c.h.b16 %v3698
  %v4421 = vunpack.c.l.b16 %v3699
  %v4422 = vunpack.c.l.b16 %v3700
  %v4423 = vunpack.c.h.b16 %v3700
  %v4424 = vunpack.c.l.b16 %v3701
  %v4425 = vunpack.c.h.b16 %v3701
  %v4426 = vunpack.c.l.b16 %v3702
  %v4427 = vunpack.c.h.b16 %v3702
  %v4428 = vunpack.c.l.b16 %v3703
  %v4429 = vunpack.c.l.b16 %v3704
  %v4430 = vunpack.c.h.b16 %v3704
  %v4431 = vunpack.c.l.b16 %v3705
  %v4432 = vunpack.c.h.b16 %v3705
  %v4433 = vunpack.c.l.b16 %v3706
  %v4434 = vunpack.c.h.b16 %v3706
  %v4435 = vunpack.c.l.b16 %v3707
  %v4436 = vunpack.c.l.b16 %v3708
  %v4437 = vunpack.c.h.b16 %v3708
  %v4438 = vunpack.c.l.b16 %v3709
  %v4439 = vunpack.c.h.b16 %v3709
  %v4440 = vunpack.c.l.b16 %v3710
  %v4441 = vunpack.c.h.b16 %v3710
  %v4442 = vunpack.c.l.b16 %v3711
  %v4443 = vunpack.c.l.b16 %v3712
  %v4444 = vunpack.c.h.b16 %v3712
  %v4445 = vunpack.c.l.b16 %v3713
  %v4446 = vunpack.c.h.b16 %v3713
  %v4447 = vunpack.c.l.b16 %v3714
  %v4448 = vunpack.c.h.b16 %v3714
  %v4449 = vunpack.c.l.b16 %v3715
  %v4450 = vunpack.c.l.b16 %v3716
  %v4451 = vunpack.c.h.b16 %v3716
  %v4452 = vunpack.c.l.b16 %v3717
  %v4453 = vunpack.c.h.b16 %v3717
  %v4454 = vunpack.c.l.b16 %v3718
  %v4455 = vunpack.c.h.b16 %v3718
  %v4456 = vunpack.c.l.b16 %v3719
  %v4457 = vunpack.c.l.b16 %v3720
  %v4458 = vunpack.c.h.b16 %v3720
  %v4459 = vunpack.c.l.b16 %v3721
  %v4460 = vunpack.c.h.b16 %v3721
  %v4461 = vunpack.c.l.b16 %v3722
  %v4462 = vunpack.c.h.b16 %v3722
  %v4463 = vunpack.c.l.b16 %v3723
  %v4464 = vunpack.c.l.b16 %v3724
  %v4465 = vunpack.c.h.b16 %v3724
  %v4466 = vunpack.c.l.b16 %v3725
  %v4467 = vunpack.c.h.b16 %v3725
  %v4468 = vunpack.c.l.b16 %v3726
  %v4469 = vunpack.c.h.b16 %v3726
  %v4470 = vunpack.c.l.b16 %v3727
  %v4471 = vunpack.c.l.b16 %v3728
  %v4472 = vunpack.c.h.b16 %v3728
  %v4473 = vunpack.c.l.b16 %v3729
  %v4474 = vunpack.c.h.b16 %v3729
  %v4475 = vunpack.c.l.b16 %v3730
  %v4476 = vunpack.c.h.b16 %v3730
  %v4477 = vunpack.c.l.b16 %v3731
  %v4478 = vunpack.c.l.b16 %v3732
  %v4479 = vunpack.c.h.b16 %v3732
  %v4480 = vunpack.c.l.b16 %v3733
  %v4481 = vunpack.c.h.b16 %v3733
  %v4482 = vunpack.c.l.b16 %v3734
  %v4483 = vunpack.c.h.b16 %v3734
  %v4484 = vunpack.c.l.b16 %v3735
  %v4485 = vunpack.c.l.b16 %v3736
  %v4486 = vunpack.c.h.b16 %v3736
  %v4487 = vunpack.c.l.b16 %v3737
  %v4488 = vunpack.c.h.b16 %v3737
  %v4489 = vunpack.c.l.b16 %v3738
  %v4490 = vunpack.c.h.b16 %v3738
  %v4491 = vunpack.c.l.b16 %v3739
  %v4492 = vunpack.c.l.b16 %v3740
  %v4493 = vunpack.c.h.b16 %v3740
  %v4494 = vunpack.c.l.b16 %v3741
  %v4495 = vunpack.c.h.b16 %v3741
  %v4496 = vunpack.c.l.b16 %v3742
  %v4497 = vunpack.c.h.b16 %v3742
  %v4498 = vunpack.c.l.b16 %v3743
  %v4499 = vunpack.c.l.b16 %v3744
  %v4500 = vunpack.c.h.b16 %v3744
  %v4501 = vunpack.c.l.b16 %v3745
  %v4502 = vunpack.c.h.b16 %v3745
  %v4503 = vunpack.c.l.b16 %v3746
  %v4504 = vunpack.c.h.b16 %v3746
  %v4505 = vunpack.c.l.b16 %v3747
  %v4506 = vunpack.c.l.b16 %v3748
  %v4507 = vunpack.c.h.b16 %v3748
  %v4508 = vunpack.c.l.b16 %v3749
  %v4509 = vunpack.c.h.b16 %v3749
  %v4510 = vunpack.c.l.b16 %v3750
  %v4511 = vunpack.c.h.b16 %v3750
  %v4512 = vunpack.c.l.b16 %v3751
  %v4513 = vunpack.c.l.b16 %v3752
  %v4514 = vunpack.c.h.b16 %v3752
  %v4515 = vunpack.c.l.b16 %v3753
  %v4516 = vunpack.c.h.b16 %v3753
  %v4517 = vunpack.c.l.b16 %v3754
  %v4518 = vunpack.c.h.b16 %v3754
  %v4519 = vunpack.c.l.b16 %v3755
  %v4520 = vunpack.c.l.b16 %v3756
  %v4521 = vunpack.c.h.b16 %v3756
  %v4522 = vunpack.c.l.b16 %v3757
  %v4523 = vunpack.c.h.b16 %v3757
  %v4524 = vunpack.c.l.b16 %v3758
  %v4525 = vunpack.c.h.b16 %v3758
  %v4526 = vunpack.c.l.b16 %v3759
  %v4527 = vunpack.c.l.b16 %v3760
  %v4528 = vunpack.c.h.b16 %v3760
  %v4529 = vunpack.c.l.b16 %v3761
  %v4530 = vunpack.c.h.b16 %v3761
  %v4531 = vunpack.c.l.b16 %v3762
  %v4532 = vunpack.c.h.b16 %v3762
  %v4533 = vunpack.c.l.b16 %v3763
  %v4534 = vunpack.c.l.b16 %v3764
  %v4535 = vunpack.c.h.b16 %v3764
  %v4536 = vunpack.c.l.b16 %v3765
  %v4537 = vunpack.c.h.b16 %v3765
  %v4538 = vunpack.c.l.b16 %v3766
  %v4539 = vunpack.c.h.b16 %v3766
  %v4540 = vunpack.c.l.b16 %v3767
  %v4541 = vunpack.c.l.b16 %v3768
  %v4542 = vunpack.c.h.b16 %v3768
  %v4543 = vunpack.c.l.b16 %v3769
  %v4544 = vunpack.c.h.b16 %v3769
  %v4545 = vunpack.c.l.b16 %v3770
  %v4546 = vunpack.c.h.b16 %v3770
  %v4547 = vunpack.c.l.b16 %v3771
  %v4548 = vunpack.c.l.b16 %v3772
  %v4549 = vunpack.c.h.b16 %v3772
  %v4550 = vunpack.c.l.b16 %v3773
  %v4551 = vunpack.c.h.b16 %v3773
  %v4552 = vunpack.c.l.b16 %v3774
  %v4553 = vunpack.c.h.b16 %v3774
  %v4554 = vunpack.c.l.b16 %v3775
  %v4555 = vunpack.c.l.b16 %v3776
  %v4556 = vunpack.c.h.b16 %v3776
  %v4557 = vunpack.c.l.b16 %v3777
  %v4558 = vunpack.c.h.b16 %v3777
  %v4559 = vunpack.c.l.b16 %v3778
  %v4560 = vunpack.c.h.b16 %v3778
  %v4561 = vunpack.c.l.b16 %v3779
  %v4562 = vunpack.c.l.b16 %v3780
  %v4563 = vunpack.c.h.b16 %v3780
  %v4564 = vunpack.c.l.b16 %v3781
  %v4565 = vunpack.c.h.b16 %v3781
  %v4566 = vunpack.c.l.b16 %v3782
  %v4567 = vunpack.c.h.b16 %v3782
  %v4568 = vunpack.c.l.b16 %v3783
  %v4569 = vunpack.c.l.b16 %v3784
  %v4570 = vunpack.c.h.b16 %v3784
  %v4571 = vunpack.c.l.b16 %v3785
  %v4572 = vunpack.c.h.b16 %v3785
  %v4573 = vunpack.c.l.b16 %v3786
  %v4574 = vunpack.c.h.b16 %v3786
  %v4575 = vunpack.c.l.b16 %v3787
  %v4576 = vunpack.c.l.b16 %v3788
  %v4577 = vunpack.c.h.b16 %v3788
  %v4578 = vunpack.c.l.b16 %v3789
  %v4579 = vunpack.c.h.b16 %v3789
  %v4580 = vunpack.c.l.b16 %v3790
  %v4581 = vunpack.c.h.b16 %v3790
  %v4582 = vunpack.c.l.b16 %v3791
  %v4583 = vunpack.c.l.b16 %v3792
  %v4584 = vunpack.c.h.b16 %v3792
  %v4585 = vunpack.c.l.b16 %v3793
  %v4586 = vunpack.c.h.b16 %v3793
  %v4587 = vunpack.c.l.b16 %v3794
  %v4588 = vunpack.c.h.b16 %v3794
  %v4589 = vunpack.c.l.b16 %v3795
  %v4590 = vunpack.c.l.b16 %v3796
  %v4591 = vunpack.c.h.b16 %v3796
  %v4592 = vunpack.c.l.b16 %v3797
  %v4593 = vunpack.c.h.b16 %v3797
  %v4594 = vunpack.c.l.b16 %v3798
  %v4595 = vunpack.c.h.b16 %v3798
  %v4596 = vunpack.c.l.b16 %v3799
  %v4597 = vunpack.c.l.b16 %v3800
  %v4598 = vunpack.c.h.b16 %v3800
  %v4599 = vunpack.c.l.b16 %v3801
  %v4600 = vunpack.c.h.b16 %v3801
  %v4601 = vunpack.c.l.b16 %v3802
  %v4602 = vunpack.c.h.b16 %v3802
  %v4603 = vunpack.c.l.b16 %v3803
  %v4604 = vunpack.c.l.b16 %v3804
  %v4605 = vunpack.c.h.b16 %v3804
  %v4606 = vunpack.c.l.b16 %v3805
  %v4607 = vunpack.c.h.b16 %v3805
  %v4608 = vunpack.c.l.b16 %v3806
  %v4609 = vunpack.c.h.b16 %v3806
  %v4610 = vunpack.c.l.b16 %v3807
  %v4611 = vunpack.c.l.b16 %v3808
  %v4612 = vunpack.c.h.b16 %v3808
  %v4613 = vunpack.c.l.b16 %v3809
  %v4614 = vunpack.c.h.b16 %v3809
  %v4615 = vunpack.c.l.b16 %v3810
  %v4616 = vunpack.c.h.b16 %v3810
  %v4617 = vunpack.c.l.b16 %v3811
  %v4618 = vunpack.c.l.b16 %v3812
  %v4619 = vunpack.c.h.b16 %v3812
  %v4620 = vunpack.c.l.b16 %v3813
  %v4621 = vunpack.c.h.b16 %v3813
  %v4622 = vunpack.c.l.b16 %v3814
  %v4623 = vunpack.c.h.b16 %v3814
  %v4624 = vunpack.c.l.b16 %v3815
  %v4625 = vunpack.c.l.b16 %v3816
  %v4626 = vunpack.c.h.b16 %v3816
  %v4627 = vunpack.c.l.b16 %v3817
  %v4628 = vunpack.c.h.b16 %v3817
  %v4629 = vunpack.c.l.b16 %v3818
  %v4630 = vunpack.c.h.b16 %v3818
  %v4631 = vunpack.c.l.b16 %v3819
  %v4632 = vunpack.c.l.b16 %v3820
  %v4633 = vunpack.c.h.b16 %v3820
  %v4634 = vunpack.c.l.b16 %v3821
  %v4635 = vunpack.c.h.b16 %v3821
  %v4636 = vunpack.c.l.b16 %v3822
  %v4637 = vunpack.c.h.b16 %v3822
  %v4638 = vunpack.c.l.b16 %v3823
  %v4639 = vunpack.c.l.b16 %v3824
  %v4640 = vunpack.c.h.b16 %v3824
  %v4641 = vunpack.c.l.b16 %v3825
  %v4642 = vunpack.c.h.b16 %v3825
  %v4643 = vunpack.c.l.b16 %v3826
  %v4644 = vunpack.c.h.b16 %v3826
  %v4645 = vunpack.c.l.b16 %v3827
  %v4646 = vunpack.c.l.b16 %v3828
  %v4647 = vunpack.c.h.b16 %v3828
  %v4648 = vunpack.c.l.b16 %v3829
  %v4649 = vunpack.c.h.b16 %v3829
  %v4650 = vunpack.c.l.b16 %v3830
  %v4651 = vunpack.c.h.b16 %v3830
  %v4652 = vunpack.c.l.b16 %v3831
  %v4653 = vunpack.c.l.b16 %v3832
  %v4654 = vunpack.c.h.b16 %v3832
  %v4655 = vunpack.c.l.b16 %v3833
  %v4656 = vunpack.c.h.b16 %v3833
  %v4657 = vunpack.c.l.b16 %v3834
  %v4658 = vunpack.c.h.b16 %v3834
  %v4659 = vunpack.c.l.b16 %v3835
  %v4660 = vunpack.c.l.b16 %v3836
  %v4661 = vunpack.c.h.b16 %v3836
  %v4662 = vunpack.c.l.b16 %v3837
  %v4663 = vunpack.c.h.b16 %v3837
  %v4664 = vunpack.c.l.b16 %v3838
  %v4665 = vunpack.c.h.b16 %v3838
  %v4666 = vunpack.c.l.b16 %v3839
  %v4667 = vunpack.c.l.b16 %v3840
  %v4668 = vunpack.c.h.b16 %v3840
  %v4669 = vunpack.c.l.b16 %v3841
  %v4670 = vunpack.c.h.b16 %v3841
  %v4671 = vunpack.c.l.b16 %v3842
  %v4672 = vunpack.c.h.b16 %v3842
  %v4673 = vunpack.c.l.b16 %v3843
  %v4674 = vunpack.c.l.b16 %v3844
  %v4675 = vunpack.c.h.b16 %v3844
  %v4676 = vunpack.c.l.b16 %v3845
  %v4677 = vunpack.c.h.b16 %v3845
  %v4678 = vunpack.c.l.b16 %v3846
  %v4679 = vunpack.c.h.b16 %v3846
  %v4680 = vunpack.c.l.b16 %v3847
  %v4681 = vunpack.c.l.b16 %v3848
  %v4682 = vunpack.c.h.b16 %v3848
  %v4683 = vunpack.c.l.b16 %v3849
  %v4684 = vunpack.c.h.b16 %v3849
  %v4685 = vunpack.c.l.b16 %v3850
  %v4686 = vunpack.c.h.b16 %v3850
  %v4687 = vunpack.c.l.b16 %v3851
  %v4688 = vunpack.c.l.b16 %v3852
  %v4689 = vunpack.c.h.b16 %v3852
  %v4690 = vunpack.c.l.b16 %v3853
  %v4691 = vunpack.c.h.b16 %v3853
  %v4692 = vunpack.c.l.b16 %v3854
  %v4693 = vunpack.c.h.b16 %v3854
  %v4694 = vunpack.c.l.b16 %v3855
  %v4695 = vunpack.c.l.b16 %v3856
  %v4696 = vunpack.c.h.b16 %v3856
  %v4697 = vunpack.c.l.b16 %v3857
  %v4698 = vunpack.c.h.b16 %v3857
  %v4699 = vunpack.c.l.b16 %v3858
  %v4700 = vunpack.c.h.b16 %v3858
  %v4701 = vunpack.c.l.b16 %v3859
  %v4702 = vunpack.c.l.b16 %v3860
  %v4703 = vunpack.c.h.b16 %v3860
  %v4704 = vunpack.c.l.b16 %v3861
  %v4705 = vunpack.c.h.b16 %v3861
  %v4706 = vunpack.c.l.b16 %v3862
  %v4707 = vunpack.c.h.b16 %v3862
  %v4708 = vunpack.c.l.b16 %v3863
  %v4709 = vunpack.c.l.b16 %v3864
  %v4710 = vunpack.c.h.b16 %v3864
  %v4711 = vunpack.c.l.b16 %v3865
  %v4712 = vunpack.c.h.b16 %v3865
  %v4713 = vunpack.c.l.b16 %v3866
  %v4714 = vunpack.c.h.b16 %v3866
  %v4715 = vunpack.c.l.b16 %v3867
  %v4716 = vunpack.c.l.b16 %v3868
  %v4717 = vunpack.c.h.b16 %v3868
  %v4718 = vunpack.c.l.b16 %v3869
  %v4719 = vunpack.c.h.b16 %v3869
  %v4720 = vunpack.c.l.b16 %v3870
  %v4721 = vunpack.c.h.b16 %v3870
  %v4722 = vunpack.c.l.b16 %v3871
  %v4723 = vunpack.c.l.b16 %v3872
  %v4724 = vunpack.c.h.b16 %v3872
  %v4725 = vunpack.c.l.b16 %v3873
  %v4726 = vunpack.c.h.b16 %v3873
  %v4727 = vunpack.c.l.b16 %v3874
  %v4728 = vunpack.c.h.b16 %v3874
  %v4729 = vunpack.c.l.b16 %v3875
  %v4730 = vunpack.c.l.b16 %v3876
  %v4731 = vunpack.c.h.b16 %v3876
  %v4732 = vunpack.c.l.b16 %v3877
  %v4733 = vunpack.c.h.b16 %v3877
  %v4734 = vunpack.c.l.b16 %v3878
  %v4735 = vunpack.c.h.b16 %v3878
  %v4736 = vunpack.c.l.b16 %v3879
  %v4737 = vunpack.c.l.b16 %v3880
  %v4738 = vunpack.c.h.b16 %v3880
  %v4739 = vunpack.c.l.b16 %v3881
  %v4740 = vunpack.c.h.b16 %v3881
  %v4741 = vunpack.c.l.b16 %v3882
  %v4742 = vunpack.c.h.b16 %v3882
  %v4743 = vunpack.c.l.b16 %v3883
  %v4744 = vunpack.c.l.b16 %v3884
  %v4745 = vunpack.c.h.b16 %v3884
  %v4746 = vunpack.c.l.b16 %v3885
  %v4747 = vunpack.c.h.b16 %v3885
  %v4748 = vunpack.c.l.b16 %v3886
  %v4749 = vunpack.c.h.b16 %v3886
  %v4750 = vunpack.c.l.b16 %v3887
  %v4751 = vunpack.c.l.b16 %v3888
  %v4752 = vunpack.c.h.b16 %v3888
  %v4753 = vunpack.c.l.b16 %v3889
  %v4754 = vunpack.c.h.b16 %v3889
  %v4755 = vunpack.c.l.b16 %v3890
  %v4756 = vunpack.c.h.b16 %v3890
  %v4757 = vunpack.c.l.b16 %v3891
  %v4758 = vunpack.c.l.b16 %v3892
  %v4759 = vunpack.c.h.b16 %v3892
  %v4760 = vunpack.c.l.b16 %v3893
  %v4761 = vunpack.c.h.b16 %v3893
  %v4762 = vunpack.c.l.b16 %v3894
  %v4763 = vunpack.c.h.b16 %v3894
  %v4764 = vunpack.c.l.b16 %v3895
  %v4765 = vunpack.c.l.b16 %v3896
  %v4766 = vunpack.c.h.b16 %v3896
  %v4767 = vunpack.c.l.b16 %v3897
  %v4768 = vunpack.c.h.b16 %v3897
  %v4769 = vunpack.c.l.b16 %v3898
  %v4770 = vunpack.c.h.b16 %v3898
  %v4771 = vunpack.c.l.b16 %v3899
  %v4772 = vunpack.c.l.b16 %v3900
  %v4773 = vunpack.c.h.b16 %v3900
  %v4774 = vunpack.c.l.b16 %v3901
  %v4775 = vunpack.c.h.b16 %v3901
  %v4776 = vunpack.c.l.b16 %v3902
  %v4777 = vunpack.c.h.b16 %v3902
  %v4778 = vunpack.c.l.b16 %v3903
  %v4779 = vunpack.c.l.b16 %v3904
  %v4780 = vunpack.c.h.b16 %v3904
  %v4781 = vunpack.c.l.b16 %v3905
  %v4782 = vunpack.c.h.b16 %v3905
  %v4783 = vunpack.c.l.b16 %v3906
  %v4784 = vunpack.c.h.b16 %v3906
  %v4785 = vunpack.c.l.b16 %v3907
  %v4786 = vunpack.c.l.b16 %v3908
  %v4787 = vunpack.c.h.b16 %v3908
  %v4788 = vunpack.c.l.b16 %v3909
  %v4789 = vunpack.c.h.b16 %v3909
  %v4790 = vunpack.c.l.b16 %v3910
  %v4791 = vunpack.c.h.b16 %v3910
  %v4792 = vunpack.c.l.b16 %v3911
  %v4793 = vunpack.c.l.b16 %v3912
  %v4794 = vunpack.c.h.b16 %v3912
  %v4795 = vunpack.c.l.b16 %v3913
  %v4796 = vunpack.c.h.b16 %v3913
  %v4797 = vunpack.c.l.b16 %v3914
  %v4798 = vunpack.c.h.b16 %v3914
  %v4799 = vunpack.c.l.b16 %v3915
  %v4800 = vunpack.c.l.b16 %v3916
  %v4801 = vunpack.c.h.b16 %v3916
  %v4802 = vunpack.c.l.b16 %v3917
  %v4803 = vunpack.c.h.b16 %v3917
  %v4804 = vunpack.c.l.b16 %v3918
  %v4805 = vunpack.c.h.b16 %v3918
  %v4806 = vunpack.c.l.b16 %v3919
  %v4807 = vunpack.c.l.b16 %v3920
  %v4808 = vunpack.c.h.b16 %v3920
  %v4809 = vunpack.c.l.b16 %v3921
  %v4810 = vunpack.c.h.b16 %v3921
  %v4811 = vunpack.c.l.b16 %v3922
  %v4812 = vunpack.c.h.b16 %v3922
  %v4813 = vunpack.c.l.b16 %v3923
  %v4814 = vunpack.c.l.b16 %v3924
  %v4815 = vunpack.c.h.b16 %v3924
  %v4816 = vunpack.c.l.b16 %v3925
  %v4817 = vunpack.c.h.b16 %v3925
  %v4818 = vunpack.c.l.b16 %v3926
  %v4819 = vunpack.c.h.b16 %v3926
  %v4820 = vunpack.c.l.b16 %v3927
  %v4821 = vunpack.c.l.b16 %v3928
  %v4822 = vunpack.c.h.b16 %v3928
  %v4823 = vunpack.c.l.b16 %v3929
  %v4824 = vunpack.c.h.b16 %v3929
  %v4825 = vunpack.c.l.b16 %v3930
  %v4826 = vunpack.c.h.b16 %v3930
  %v4827 = vunpack.c.l.b16 %v3931
  %v4828 = vunpack.c.l.b16 %v3932
  %v4829 = vunpack.c.h.b16 %v3932
  %v4830 = vunpack.c.l.b16 %v3933
  %v4831 = vunpack.c.h.b16 %v3933
  %v4832 = vunpack.c.l.b16 %v3934
  %v4833 = vunpack.c.h.b16 %v3934
  %v4834 = vunpack.c.l.b16 %v3935
  %v4835 = vunpack.c.l.b16 %v3936
  %v4836 = vunpack.c.h.b16 %v3936
  %v4837 = vunpack.c.l.b16 %v3937
  %v4838 = vunpack.c.h.b16 %v3937
  %v4839 = vunpack.c.l.b16 %v3938
  %v4840 = vunpack.c.h.b16 %v3938
  %v4841 = vunpack.c.l.b16 %v3939
  %v4842 = vunpack.c.l.b16 %v3940
  %v4843 = vunpack.c.h.b16 %v3940
  %v4844 = vunpack.c.l.b16 %v3941
  %v4845 = vunpack.c.h.b16 %v3941
  %v4846 = vunpack.c.l.b16 %v3942
  %v4847 = vunpack.c.h.b16 %v3942
  %v4848 = vunpack.c.l.b16 %v3943
  %v4849 = vunpack.c.l.b16 %v3944
  %v4850 = vunpack.c.h.b16 %v3944
  %v4851 = vunpack.c.l.b16 %v3945
  %v4852 = vunpack.c.h.b16 %v3945
  %v4853 = vunpack.c.l.b16 %v3946
  %v4854 = vunpack.c.h.b16 %v3946
  %v4855 = vunpack.c.l.b16 %v3947
  %v4856 = vunpack.c.l.b16 %v3948
  %v4857 = vunpack.c.h.b16 %v3948
  %v4858 = vunpack.c.l.b16 %v3949
  %v4859 = vunpack.c.h.b16 %v3949
  %v4860 = vunpack.c.l.b16 %v3950
  %v4861 = vunpack.c.h.b16 %v3950
  %v4862 = vunpack.c.l.b16 %v3951
  %v4863 = vunpack.c.l.b16 %v3952
  %v4864 = vunpack.c.h.b16 %v3952
  %v4865 = vunpack.c.l.b16 %v3953
  %v4866 = vunpack.c.h.b16 %v3953
  %v4867 = vunpack.c.l.b16 %v3954
  %v4868 = vunpack.c.h.b16 %v3954
  %v4869 = vunpack.c.l.b16 %v3955
  %v4870 = vunpack.c.l.b16 %v3956
  %v4871 = vunpack.c.h.b16 %v3956
  %v4872 = vunpack.c.l.b16 %v3957
  %v4873 = vunpack.c.h.b16 %v3957
  %v4874 = vunpack.c.l.b16 %v3958
  %v4875 = vunpack.c.h.b16 %v3958
  %v4876 = vunpack.c.l.b16 %v3959
  %v4877 = vpack.c.b16 %v4324, %v4317
  %v4878 = vpack.c.b16 %v4325, %v4318
  %v4879 = vpack.c.b16 %v4326, %v4319
  %v4880 = vpack.c.b16 %v4327, %v4320
  %v4881 = vpack.c.b16 %v4328, %v4321
  %v4882 = vpack.c.b16 %v4329, %v4322
  %v4883 = vpack.c.b16 %v4330, %v4323
  %v4884 = vpack.c.b16 %v4338, %v4331
  %v4885 = vpack.c.b16 %v4339, %v4332
  %v4886 = vpack.c.b16 %v4340, %v4333
  %v4887 = vpack.c.b16 %v4341, %v4334
  %v4888 = vpack.c.b16 %v4342, %v4335
  %v4889 = vpack.c.b16 %v4343, %v4336
  %v4890 = vpack.c.b16 %v4344, %v4337
  %v4891 = vpack.c.b16 %v4352, %v4345
  %v4892 = vpack.c.b16 %v4353, %v4346
  %v4893 = vpack.c.b16 %v4354, %v4347
  %v4894 = vpack.c.b16 %v4355, %v4348
  %v4895 = vpack.c.b16 %v4356, %v4349
  %v4896 = vpack.c.b16 %v4357, %v4350
  %v4897 = vpack.c.b16 %v4358, %v4351
  %v4898 = vpack.c.b16 %v4366, %v4359
  %v4899 = vpack.c.b16 %v4367, %v4360
  %v4900 = vpack.c.b16 %v4368, %v4361
  %v4901 = vpack.c.b16 %v4369, %v4362
  %v4902 = vpack.c.b16 %v4370, %v4363
  %v4903 = vpack.c.b16 %v4371, %v4364
  %v4904 = vpack.c.b16 %v4372, %v4365
  %v4905 = vpack.c.b16 %v4380, %v4373
  %v4906 = vpack.c.b16 %v4381, %v4374
  %v4907 = vpack.c.b16 %v4382, %v4375
  %v4908 = vpack.c.b16 %v4383, %v4376
  %v4909 = vpack.c.b16 %v4384, %v4377
  %v4910 = vpack.c.b16 %v4385, %v4378
  %v4911 = vpack.c.b16 %v4386, %v4379
  %v4912 = vpack.c.b16 %v4394, %v4387
  %v4913 = vpack.c.b16 %v4395, %v4388
  %v4914 = vpack.c.b16 %v4396, %v4389
  %v4915 = vpack.c.b16 %v4397, %v4390
  %v4916 = vpack.c.b16 %v4398, %v4391
  %v4917 = vpack.c.b16 %v4399, %v4392
  %v4918 = vpack.c.b16 %v4400, %v4393
  %v4919 = vpack.c.b16 %v4408, %v4401
  %v4920 = vpack.c.b16 %v4409, %v4402
  %v4921 = vpack.c.b16 %v4410, %v4403
  %v4922 = vpack.c.b16 %v4411, %v4404
  %v4923 = vpack.c.b16 %v4412, %v4405
  %v4924 = vpack.c.b16 %v4413, %v4406
  %v4925 = vpack.c.b16 %v4414, %v4407
  %v4926 = vpack.c.b16 %v4422, %v4415
  %v4927 = vpack.c.b16 %v4423, %v4416
  %v4928 = vpack.c.b16 %v4424, %v4417
  %v4929 = vpack.c.b16 %v4425, %v4418
  %v4930 = vpack.c.b16 %v4426, %v4419
  %v4931 = vpack.c.b16 %v4427, %v4420
  %v4932 = vpack.c.b16 %v4428, %v4421
  %v4933 = vpack.c.b16 %v4436, %v4429
  %v4934 = vpack.c.b16 %v4437, %v4430
  %v4935 = vpack.c.b16 %v4438, %v4431
  %v4936 = vpack.c.b16 %v4439, %v4432
  %v4937 = vpack.c.b16 %v4440, %v4433
  %v4938 = vpack.c.b16 %v4441, %v4434
  %v4939 = vpack.c.b16 %v4442, %v4435
  %v4940 = vpack.c.b16 %v4450, %v4443
  %v4941 = vpack.c.b16 %v4451, %v4444
  %v4942 = vpack.c.b16 %v4452, %v4445
  %v4943 = vpack.c.b16 %v4453, %v4446
  %v4944 = vpack.c.b16 %v4454, %v4447
  %v4945 = vpack.c.b16 %v4455, %v4448
  %v4946 = vpack.c.b16 %v4456, %v4449
  %v4947 = vpack.c.b16 %v4464, %v4457
  %v4948 = vpack.c.b16 %v4465, %v4458
  %v4949 = vpack.c.b16 %v4466, %v4459
  %v4950 = vpack.c.b16 %v4467, %v4460
  %v4951 = vpack.c.b16 %v4468, %v4461
  %v4952 = vpack.c.b16 %v4469, %v4462
  %v4953 = vpack.c.b16 %v4470, %v4463
  %v4954 = vpack.c.b16 %v4478, %v4471
  %v4955 = vpack.c.b16 %v4479, %v4472
  %v4956 = vpack.c.b16 %v4480, %v4473
  %v4957 = vpack.c.b16 %v4481, %v4474
  %v4958 = vpack.c.b16 %v4482, %v4475
  %v4959 = vpack.c.b16 %v4483, %v4476
  %v4960 = vpack.c.b16 %v4484, %v4477
  %v4961 = vpack.c.b16 %v4492, %v4485
  %v4962 = vpack.c.b16 %v4493, %v4486
  %v4963 = vpack.c.b16 %v4494, %v4487
  %v4964 = vpack.c.b16 %v4495, %v4488
  %v4965 = vpack.c.b16 %v4496, %v4489
  %v4966 = vpack.c.b16 %v4497, %v4490
  %v4967 = vpack.c.b16 %v4498, %v4491
  %v4968 = vpack.c.b16 %v4506, %v4499
  %v4969 = vpack.c.b16 %v4507, %v4500
  %v4970 = vpack.c.b16 %v4508, %v4501
  %v4971 = vpack.c.b16 %v4509, %v4502
  %v4972 = vpack.c.b16 %v4510, %v4503
  %v4973 = vpack.c.b16 %v4511, %v4504
  %v4974 = vpack.c.b16 %v4512, %v4505
  %v4975 = vpack.c.b16 %v4520, %v4513
  %v4976 = vpack.c.b16 %v4521, %v4514
  %v4977 = vpack.c.b16 %v4522, %v4515
  %v4978 = vpack.c.b16 %v4523, %v4516
  %v4979 = vpack.c.b16 %v4524, %v4517
  %v4980 = vpack.c.b16 %v4525, %v4518
  %v4981 = vpack.c.b16 %v4526, %v4519
  %v4982 = vpack.c.b16 %v4534, %v4527
  %v4983 = vpack.c.b16 %v4535, %v4528
  %v4984 = vpack.c.b16 %v4536, %v4529
  %v4985 = vpack.c.b16 %v4537, %v4530
  %v4986 = vpack.c.b16 %v4538, %v4531
  %v4987 = vpack.c.b16 %v4539, %v4532
  %v4988 = vpack.c.b16 %v4540, %v4533
  %v4989 = vpack.c.b16 %v4548, %v4541
  %v4990 = vpack.c.b16 %v4549, %v4542
  %v4991 = vpack.c.b16 %v4550, %v4543
  %v4992 = vpack.c.b16 %v4551, %v4544
  %v4993 = vpack.c.b16 %v4552, %v4545
  %v4994 = vpack.c.b16 %v4553, %v4546
  %v4995 = vpack.c.b16 %v4554, %v4547
  %v4996 = vpack.c.b16 %v4562, %v4555
  %v4997 = vpack.c.b16 %v4563, %v4556
  %v4998 = vpack.c.b16 %v4564, %v4557
  %v4999 = vpack.c.b16 %v4565, %v4558
  %v5000 = vpack.c.b16 %v4566, %v4559
  %v5001 = vpack.c.b16 %v4567, %v4560
  %v5002 = vpack.c.b16 %v4568, %v4561
  %v5003 = vpack.c.b16 %v4576, %v4569
  %v5004 = vpack.c.b16 %v4577, %v4570
  %v5005 = vpack.c.b16 %v4578, %v4571
  %v5006 = vpack.c.b16 %v4579, %v4572
  %v5007 = vpack.c.b16 %v4580, %v4573
  %v5008 = vpack.c.b16 %v4581, %v4574
  %v5009 = vpack.c.b16 %v4582, %v4575
  %v5010 = vpack.c.b16 %v4590, %v4583
  %v5011 = vpack.c.b16 %v4591, %v4584
  %v5012 = vpack.c.b16 %v4592, %v4585
  %v5013 = vpack.c.b16 %v4593, %v4586
  %v5014 = vpack.c.b16 %v4594, %v4587
  %v5015 = vpack.c.b16 %v4595, %v4588
  %v5016 = vpack.c.b16 %v4596, %v4589
  %v5017 = vpack.c.b16 %v4604, %v4597
  %v5018 = vpack.c.b16 %v4605, %v4598
  %v5019 = vpack.c.b16 %v4606, %v4599
  %v5020 = vpack.c.b16 %v4607, %v4600
  %v5021 = vpack.c.b16 %v4608, %v4601
  %v5022 = vpack.c.b16 %v4609, %v4602
  %v5023 = vpack.c.b16 %v4610, %v4603
  %v5024 = vpack.c.b16 %v4618, %v4611
  %v5025 = vpack.c.b16 %v4619, %v4612
  %v5026 = vpack.c.b16 %v4620, %v4613
  %v5027 = vpack.c.b16 %v4621, %v4614
  %v5028 = vpack.c.b16 %v4622, %v4615
  %v5029 = vpack.c.b16 %v4623, %v4616
  %v5030 = vpack.c.b16 %v4624, %v4617
  %v5031 = vpack.c.b16 %v4632, %v4625
  %v5032 = vpack.c.b16 %v4633, %v4626
  %v5033 = vpack.c.b16 %v4634, %v4627
  %v5034 = vpack.c.b16 %v4635, %v4628
  %v5035 = vpack.c.b16 %v4636, %v4629
  %v5036 = vpack.c.b16 %v4637, %v4630
  %v5037 = vpack.c.b16 %v4638, %v4631
  %v5038 = vpack.c.b16 %v4646, %v4639
  %v5039 = vpack.c.b16 %v4647, %v4640
  %v5040 = vpack.c.b16 %v4648, %v4641
  %v5041 = vpack.c.b16 %v4649, %v4642
  %v5042 = vpack.c.b16 %v4650, %v4643
  %v5043 = vpack.c.b16 %v4651, %v4644
  %v5044 = vpack.c.b16 %v4652, %v4645
  %v5045 = vpack.c.b16 %v4660, %v4653
  %v5046 = vpack.c.b16 %v4661, %v4654
  %v5047 = vpack.c.b16 %v4662, %v4655
  %v5048 = vpack.c.b16 %v4663, %v4656
  %v5049 = vpack.c.b16 %v4664, %v4657
  %v5050 = vpack.c.b16 %v4665, %v4658
  %v5051 = vpack.c.b16 %v4666, %v4659
  %v5052 = vpack.c.b16 %v4674, %v4667
  %v5053 = vpack.c.b16 %v4675, %v4668
  %v5054 = vpack.c.b16 %v4676, %v4669
  %v5055 = vpack.c.b16 %v4677, %v4670
  %v5056 = vpack.c.b16 %v4678, %v4671
  %v5057 = vpack.c.b16 %v4679, %v4672
  %v5058 = vpack.c.b16 %v4680, %v4673
  %v5059 = vpack.c.b16 %v4688, %v4681
  %v5060 = vpack.c.b16 %v4689, %v4682
  %v5061 = vpack.c.b16 %v4690, %v4683
  %v5062 = vpack.c.b16 %v4691, %v4684
  %v5063 = vpack.c.b16 %v4692, %v4685
  %v5064 = vpack.c.b16 %v4693, %v4686
  %v5065 = vpack.c.b16 %v4694, %v4687
  %v5066 = vpack.c.b16 %v4702, %v4695
  %v5067 = vpack.c.b16 %v4703, %v4696
  %v5068 = vpack.c.b16 %v4704, %v4697
  %v5069 = vpack.c.b16 %v4705, %v4698
  %v5070 = vpack.c.b16 %v4706, %v4699
  %v5071 = vpack.c.b16 %v4707, %v4700
  %v5072 = vpack.c.b16 %v4708, %v4701
  %v5073 = vpack.c.b16 %v4716, %v4709
  %v5074 = vpack.c.b16 %v4717, %v4710
  %v5075 = vpack.c.b16 %v4718, %v4711
  %v5076 = vpack.c.b16 %v4719, %v4712
  %v5077 = vpack.c.b16 %v4720, %v4713
  %v5078 = vpack.c.b16 %v4721, %v4714
  %v5079 = vpack.c.b16 %v4722, %v4715
  %v5080 = vpack.c.b16 %v4730, %v4723
  %v5081 = vpack.c.b16 %v4731, %v4724
  %v5082 = vpack.c.b16 %v4732, %v4725
  %v5083 = vpack.c.b16 %v4733, %v4726
  %v5084 = vpack.c.b16 %v4734, %v4727
  %v5085 = vpack.c.b16 %v4735, %v4728
  %v5086 = vpack.c.b16 %v4736, %v4729
  %v5087 = vpack.c.b16 %v4744, %v4737
  %v5088 = vpack.c.b16 %v4745, %v4738
  %v5089 = vpack.c.b16 %v4746, %v4739
  %v5090 = vpack.c.b16 %v4747, %v4740
  %v5091 = vpack.c.b16 %v4748, %v4741
  %v5092 = vpack.c.b16 %v4749, %v4742
  %v5093 = vpack.c.b16 %v4750, %v4743
  %v5094 = vpack.c.b16 %v4758, %v4751
  %v5095 = vpack.c.b16 %v4759, %v4752
  %v5096 = vpack.c.b16 %v4760, %v4753
  %v5097 = vpack.c.b16 %v4761, %v4754
  %v5098 = vpack.c.b16 %v4762, %v4755
  %v5099 = vpack.c.b16 %v4763, %v4756
  %v5100 = vpack.c.b16 %v4764, %v4757
  %v5101 = vpack.c.b16 %v4772, %v4765
  %v5102 = vpack.c.b16 %v4773, %v4766
  %v5103 = vpack.c.b16 %v4774, %v4767
  %v5104 = vpack.c.b16 %v4775, %v4768
  %v5105 = vpack.c.b16 %v4776, %v4769
  %v5106 = vpack.c.b16 %v4777, %v4770
  %v5107 = vpack.c.b16 %v4778, %v4771
  %v5108 = vpack.c.b16 %v4786, %v4779
  %v5109 = vpack.c.b16 %v4787, %v4780
  %v5110 = vpack.c.b16 %v4788, %v4781
  %v5111 = vpack.c.b16 %v4789, %v4782
  %v5112 = vpack.c.b16 %v4790, %v4783
  %v5113 = vpack.c.b16 %v4791, %v4784
  %v5114 = vpack.c.b16 %v4792, %v4785
  %v5115 = vpack.c.b16 %v4800, %v4793
  %v5116 = vpack.c.b16 %v4801, %v4794
  %v5117 = vpack.c.b16 %v4802, %v4795
  %v5118 = vpack.c.b16 %v4803, %v4796
  %v5119 = vpack.c.b16 %v4804, %v4797
  %v5120 = vpack.c.b16 %v4805, %v4798
  %v5121 = vpack.c.b16 %v4806, %v4799
  %v5122 = vpack.c.b16 %v4814, %v4807
  %v5123 = vpack.c.b16 %v4815, %v4808
  %v5124 = vpack.c.b16 %v4816, %v4809
  %v5125 = vpack.c.b16 %v4817, %v4810
  %v5126 = vpack.c.b16 %v4818, %v4811
  %v5127 = vpack.c.b16 %v4819, %v4812
  %v5128 = vpack.c.b16 %v4820, %v4813
  %v5129 = vpack.c.b16 %v4828, %v4821
  %v5130 = vpack.c.b16 %v4829, %v4822
  %v5131 = vpack.c.b16 %v4830, %v4823
  %v5132 = vpack.c.b16 %v4831, %v4824
  %v5133 = vpack.c.b16 %v4832, %v4825
  %v5134 = vpack.c.b16 %v4833, %v4826
  %v5135 = vpack.c.b16 %v4834, %v4827
  %v5136 = vpack.c.b16 %v4842, %v4835
  %v5137 = vpack.c.b16 %v4843, %v4836
  %v5138 = vpack.c.b16 %v4844, %v4837
  %v5139 = vpack.c.b16 %v4845, %v4838
  %v5140 = vpack.c.b16 %v4846, %v4839
  %v5141 = vpack.c.b16 %v4847, %v4840
  %v5142 = vpack.c.b16 %v4848, %v4841
  %v5143 = vpack.c.b16 %v4856, %v4849
  %v5144 = vpack.c.b16 %v4857, %v4850
  %v5145 = vpack.c.b16 %v4858, %v4851
  %v5146 = vpack.c.b16 %v4859, %v4852
  %v5147 = vpack.c.b16 %v4860, %v4853
  %v5148 = vpack.c.b16 %v4861, %v4854
  %v5149 = vpack.c.b16 %v4862, %v4855
  %v5150 = vpack.c.b16 %v4870, %v4863
  %v5151 = vpack.c.b16 %v4871, %v4864
  %v5152 = vpack.c.b16 %v4872, %v4865
  %v5153 = vpack.c.b16 %v4873, %v4866
  %v5154 = vpack.c.b16 %v4874, %v4867
  %v5155 = vpack.c.b16 %v4875, %v4868
  %v5156 = vpack.c.b16 %v4876, %v4869
  %5437 = vmatprep.subr.bf16.mxu0 %v4927
  %5438 = vmatpush1.bf16.msra.mxu0 %v4926
  %5439 = vmatprep.subr.bf16.mxu0 %v4920
  %5440 = vmatpush1.bf16.msra.mxu0 %v4919
  %5441 = vmatprep.subr.bf16.mxu0 %v4913
  %5442 = vmatpush1.bf16.msra.mxu0 %v4912
  %5443 = vmatprep.subr.bf16.mxu0 %v4906
  %5444 = vmatpush1.bf16.msra.mxu0 %v4905
  %5445 = vmatprep.subr.bf16.mxu0 %v4899
  %5446 = vmatpush1.bf16.msra.mxu0 %v4898
  %5447 = vmatprep.subr.bf16.mxu0 %v4892
  %5448 = vmatpush1.bf16.msra.mxu0 %v4891
  %5449 = vmatprep.subr.bf16.mxu0 %v4885
  %5450 = vmatpush1.bf16.msra.mxu0 %v4884
  %5451 = vmatprep.subr.bf16.mxu0 %v4878
  %5452 = vmatpush1.bf16.msra.mxu0 %v4877
  %5453 = vmatprep.subr.bf16.mxu0 %v4983
  %5454 = vmatpush2.bf16.msra.mxu0 %v4982
  %5455 = vmatprep.subr.bf16.mxu0 %v4976
  %5456 = vmatpush2.bf16.msra.mxu0 %v4975
  %5457 = vmatprep.subr.bf16.mxu0 %v4969
  %5458 = vmatpush2.bf16.msra.mxu0 %v4968
  %5459 = vmatprep.subr.bf16.mxu0 %v4962
  %5460 = vmatpush2.bf16.msra.mxu0 %v4961
  %5461 = vmatprep.subr.bf16.mxu0 %v4955
  %5462 = vmatpush2.bf16.msra.mxu0 %v4954
  %5463 = vmatprep.subr.bf16.mxu0 %v4948
  %5464 = vmatpush2.bf16.msra.mxu0 %v4947
  %5465 = vmatprep.subr.bf16.mxu0 %v4941
  %5466 = vmatpush2.bf16.msra.mxu0 %v4940
  %5467 = vmatprep.subr.bf16.mxu0 %v4934
  %5468 = vmatpush2.bf16.msra.mxu0 %v4933
  %5469 = vmatprep.mubr.bf16.mxu0 %v3636
  %5470 = vmatmul.mubr.bf16.gmra.mxu0 %v3635
  %v5471 = vpop.f32.mrf.mxu0
  %v5472 = vadd.f32 %v3965, %v5471
  %v5473 = vpop.f32.mrf.mxu0
  %v5474 = vadd.f32 %v3969, %v5473
  %v5475 = vpop.f32.mrf.mxu0
  %v5476 = vpop.f32.mrf.mxu0
  %5477 = vdwg.mxu0
  %5478 = vmatprep.subr.bf16.mxu0 %v5039
  %5479 = vmatpush1.bf16.msra.mxu0 %v5038
  %5480 = vmatprep.subr.bf16.mxu0 %v5032
  %5481 = vmatpush1.bf16.msra.mxu0 %v5031
  %5482 = vmatprep.subr.bf16.mxu0 %v5025
  %5483 = vmatpush1.bf16.msra.mxu0 %v5024
  %5484 = vmatprep.subr.bf16.mxu0 %v5018
  %5485 = vmatpush1.bf16.msra.mxu0 %v5017
  %5486 = vmatprep.subr.bf16.mxu0 %v5011
  %5487 = vmatpush1.bf16.msra.mxu0 %v5010
  %5488 = vmatprep.subr.bf16.mxu0 %v5004
  %5489 = vmatpush1.bf16.msra.mxu0 %v5003
  %5490 = vmatprep.subr.bf16.mxu0 %v4997
  %5491 = vmatpush1.bf16.msra.mxu0 %v4996
  %5492 = vmatprep.subr.bf16.mxu0 %v4990
  %5493 = vmatpush1.bf16.msra.mxu0 %v4989
  %5494 = vmatprep.subr.bf16.mxu0 %v5095
  %5495 = vmatpush2.bf16.msra.mxu0 %v5094
  %5496 = vmatprep.subr.bf16.mxu0 %v5088
  %5497 = vmatpush2.bf16.msra.mxu0 %v5087
  %5498 = vmatprep.subr.bf16.mxu0 %v5081
  %5499 = vmatpush2.bf16.msra.mxu0 %v5080
  %5500 = vmatprep.subr.bf16.mxu0 %v5074
  %5501 = vmatpush2.bf16.msra.mxu0 %v5073
  %5502 = vmatprep.subr.bf16.mxu0 %v5067
  %5503 = vmatpush2.bf16.msra.mxu0 %v5066
  %5504 = vmatprep.subr.bf16.mxu0 %v5060
  %5505 = vmatpush2.bf16.msra.mxu0 %v5059
  %5506 = vmatprep.subr.bf16.mxu0 %v5053
  %5507 = vmatpush2.bf16.msra.mxu0 %v5052
  %5508 = vmatprep.subr.bf16.mxu0 %v5046
  %5509 = vmatpush2.bf16.msra.mxu0 %v5045
  %5510 = vmatprep.mubr.bf16.mxu0 %v3638
  %5511 = vmatmul.mubr.bf16.gmra.mxu0 %v3637
  %v5512 = vpop.f32.mrf.mxu0
  %v5513 = vadd.f32 %v5472, %v5512
  %v5514 = vpop.f32.mrf.mxu0
  %v5515 = vadd.f32 %v5474, %v5514
  %v5516 = vpop.f32.mrf.mxu0
  %v5517 = vpop.f32.mrf.mxu0
  %5518 = vdwg.mxu0
  %5519 = vmatprep.subr.bf16.mxu0 %v5151
  %5520 = vmatpush1.bf16.msra.mxu0 %v5150
  %5521 = vmatprep.subr.bf16.mxu0 %v5144
  %5522 = vmatpush1.bf16.msra.mxu0 %v5143
  %5523 = vmatprep.subr.bf16.mxu0 %v5137
  %5524 = vmatpush1.bf16.msra.mxu0 %v5136
  %5525 = vmatprep.subr.bf16.mxu0 %v5130
  %5526 = vmatpush1.bf16.msra.mxu0 %v5129
  %5527 = vmatprep.subr.bf16.mxu0 %v5123
  %5528 = vmatpush1.bf16.msra.mxu0 %v5122
  %5529 = vmatprep.subr.bf16.mxu0 %v5116
  %5530 = vmatpush1.bf16.msra.mxu0 %v5115
  %5531 = vmatprep.subr.bf16.mxu0 %v5109
  %5532 = vmatpush1.bf16.msra.mxu0 %v5108
  %5533 = vmatprep.subr.bf16.mxu0 %v5102
  %5534 = vmatpush1.bf16.msra.mxu0 %v5101
  %5535 = vmatprep.subr.bf16.mxu0 0
  %5536 = vmatpush2.bf16.msra.mxu0 0
  %5537 = vmatprep.subr.bf16.mxu0 0
  %5538 = vmatpush2.bf16.msra.mxu0 0
  %5539 = vmatprep.subr.bf16.mxu0 0
  %5540 = vmatpush2.bf16.msra.mxu0 0
  %5541 = vmatprep.subr.bf16.mxu0 0
  %5542 = vmatpush2.bf16.msra.mxu0 0
  %5543 = vmatprep.subr.bf16.mxu0 0
  %5544 = vmatpush2.bf16.msra.mxu0 0
  %5545 = vmatprep.subr.bf16.mxu0 0
  %5546 = vmatpush2.bf16.msra.mxu0 0
  %5547 = vmatprep.subr.bf16.mxu0 0
  %5548 = vmatpush2.bf16.msra.mxu0 0
  %5549 = vmatprep.subr.bf16.mxu0 0
  %5550 = vmatpush2.bf16.msra.mxu0 0
  %5551 = vmatprep.mubr.bf16.mxu0 0
  %5552 = vmatmul.mubr.bf16.gmra.mxu0 %v3639
  %v5553 = vpop.f32.mrf.mxu0
  %v5554 = vadd.f32 %v5513, %v5553
  %v5555 = vpop.f32.mrf.mxu0
  %v5556 = vadd.f32 %v5515, %v5555
  %v5557 = vpop.f32.mrf.mxu0
  %v5558 = vpop.f32.mrf.mxu0
  %5559 = vdwg.mxu0
  %5560 = vmatprep.subr.bf16.mxu0 %v4929
  %5561 = vmatpush1.bf16.msra.mxu0 %v4928
  %5562 = vmatprep.subr.bf16.mxu0 %v4922
  %5563 = vmatpush1.bf16.msra.mxu0 %v4921
  %5564 = vmatprep.subr.bf16.mxu0 %v4915
  %5565 = vmatpush1.bf16.msra.mxu0 %v4914
  %5566 = vmatprep.subr.bf16.mxu0 %v4908
  %5567 = vmatpush1.bf16.msra.mxu0 %v4907
  %5568 = vmatprep.subr.bf16.mxu0 %v4901
  %5569 = vmatpush1.bf16.msra.mxu0 %v4900
  %5570 = vmatprep.subr.bf16.mxu0 %v4894
  %5571 = vmatpush1.bf16.msra.mxu0 %v4893
  %5572 = vmatprep.subr.bf16.mxu0 %v4887
  %5573 = vmatpush1.bf16.msra.mxu0 %v4886
  %5574 = vmatprep.subr.bf16.mxu0 %v4880
  %5575 = vmatpush1.bf16.msra.mxu0 %v4879
  %5576 = vmatprep.subr.bf16.mxu0 %v4985
  %5577 = vmatpush2.bf16.msra.mxu0 %v4984
  %5578 = vmatprep.subr.bf16.mxu0 %v4978
  %5579 = vmatpush2.bf16.msra.mxu0 %v4977
  %5580 = vmatprep.subr.bf16.mxu0 %v4971
  %5581 = vmatpush2.bf16.msra.mxu0 %v4970
  %5582 = vmatprep.subr.bf16.mxu0 %v4964
  %5583 = vmatpush2.bf16.msra.mxu0 %v4963
  %5584 = vmatprep.subr.bf16.mxu0 %v4957
  %5585 = vmatpush2.bf16.msra.mxu0 %v4956
  %5586 = vmatprep.subr.bf16.mxu0 %v4950
  %5587 = vmatpush2.bf16.msra.mxu0 %v4949
  %5588 = vmatprep.subr.bf16.mxu0 %v4943
  %5589 = vmatpush2.bf16.msra.mxu0 %v4942
  %5590 = vmatprep.subr.bf16.mxu0 %v4936
  %5591 = vmatpush2.bf16.msra.mxu0 %v4935
  %5592 = vmatprep.mubr.bf16.mxu0 %v3636
  %5593 = vmatmul.mubr.bf16.gmra.mxu0 %v3635
  %v5594 = vpop.f32.mrf.mxu0
  %v5595 = vadd.f32 %v3973, %v5594
  %v5596 = vpop.f32.mrf.mxu0
  %v5597 = vadd.f32 %v3977, %v5596
  %v5598 = vpop.f32.mrf.mxu0
  %v5599 = vpop.f32.mrf.mxu0
  %5600 = vdwg.mxu0
  %5601 = vmatprep.subr.bf16.mxu0 %v5041
  %5602 = vmatpush1.bf16.msra.mxu0 %v5040
  %5603 = vmatprep.subr.bf16.mxu0 %v5034
  %5604 = vmatpush1.bf16.msra.mxu0 %v5033
  %5605 = vmatprep.subr.bf16.mxu0 %v5027
  %5606 = vmatpush1.bf16.msra.mxu0 %v5026
  %5607 = vmatprep.subr.bf16.mxu0 %v5020
  %5608 = vmatpush1.bf16.msra.mxu0 %v5019
  %5609 = vmatprep.subr.bf16.mxu0 %v5013
  %5610 = vmatpush1.bf16.msra.mxu0 %v5012
  %5611 = vmatprep.subr.bf16.mxu0 %v5006
  %5612 = vmatpush1.bf16.msra.mxu0 %v5005
  %5613 = vmatprep.subr.bf16.mxu0 %v4999
  %5614 = vmatpush1.bf16.msra.mxu0 %v4998
  %5615 = vmatprep.subr.bf16.mxu0 %v4992
  %5616 = vmatpush1.bf16.msra.mxu0 %v4991
  %5617 = vmatprep.subr.bf16.mxu0 %v5097
  %5618 = vmatpush2.bf16.msra.mxu0 %v5096
  %5619 = vmatprep.subr.bf16.mxu0 %v5090
  %5620 = vmatpush2.bf16.msra.mxu0 %v5089
  %5621 = vmatprep.subr.bf16.mxu0 %v5083
  %5622 = vmatpush2.bf16.msra.mxu0 %v5082
  %5623 = vmatprep.subr.bf16.mxu0 %v5076
  %5624 = vmatpush2.bf16.msra.mxu0 %v5075
  %5625 = vmatprep.subr.bf16.mxu0 %v5069
  %5626 = vmatpush2.bf16.msra.mxu0 %v5068
  %5627 = vmatprep.subr.bf16.mxu0 %v5062
  %5628 = vmatpush2.bf16.msra.mxu0 %v5061
  %5629 = vmatprep.subr.bf16.mxu0 %v5055
  %5630 = vmatpush2.bf16.msra.mxu0 %v5054
  %5631 = vmatprep.subr.bf16.mxu0 %v5048
  %5632 = vmatpush2.bf16.msra.mxu0 %v5047
  %5633 = vmatprep.mubr.bf16.mxu0 %v3638
  %5634 = vmatmul.mubr.bf16.gmra.mxu0 %v3637
  %v5635 = vpop.f32.mrf.mxu0
  %v5636 = vadd.f32 %v5595, %v5635
  %v5637 = vpop.f32.mrf.mxu0
  %v5638 = vadd.f32 %v5597, %v5637
  %v5639 = vpop.f32.mrf.mxu0
  %v5640 = vpop.f32.mrf.mxu0
  %5641 = vdwg.mxu0
  %5642 = vmatprep.subr.bf16.mxu0 %v5153
  %5643 = vmatpush1.bf16.msra.mxu0 %v5152
  %5644 = vmatprep.subr.bf16.mxu0 %v5146
  %5645 = vmatpush1.bf16.msra.mxu0 %v5145
  %5646 = vmatprep.subr.bf16.mxu0 %v5139
  %5647 = vmatpush1.bf16.msra.mxu0 %v5138
  %5648 = vmatprep.subr.bf16.mxu0 %v5132
  %5649 = vmatpush1.bf16.msra.mxu0 %v5131
  %5650 = vmatprep.subr.bf16.mxu0 %v5125
  %5651 = vmatpush1.bf16.msra.mxu0 %v5124
  %5652 = vmatprep.subr.bf16.mxu0 %v5118
  %5653 = vmatpush1.bf16.msra.mxu0 %v5117
  %5654 = vmatprep.subr.bf16.mxu0 %v5111
  %5655 = vmatpush1.bf16.msra.mxu0 %v5110
  %5656 = vmatprep.subr.bf16.mxu0 %v5104
  %5657 = vmatpush1.bf16.msra.mxu0 %v5103
  %5658 = vmatprep.subr.bf16.mxu0 0
  %5659 = vmatpush2.bf16.msra.mxu0 0
  %5660 = vmatprep.subr.bf16.mxu0 0
  %5661 = vmatpush2.bf16.msra.mxu0 0
  %5662 = vmatprep.subr.bf16.mxu0 0
  %5663 = vmatpush2.bf16.msra.mxu0 0
  %5664 = vmatprep.subr.bf16.mxu0 0
  %5665 = vmatpush2.bf16.msra.mxu0 0
  %5666 = vmatprep.subr.bf16.mxu0 0
  %5667 = vmatpush2.bf16.msra.mxu0 0
  %5668 = vmatprep.subr.bf16.mxu0 0
  %5669 = vmatpush2.bf16.msra.mxu0 0
  %5670 = vmatprep.subr.bf16.mxu0 0
  %5671 = vmatpush2.bf16.msra.mxu0 0
  %5672 = vmatprep.subr.bf16.mxu0 0
  %5673 = vmatpush2.bf16.msra.mxu0 0
  %5674 = vmatprep.mubr.bf16.mxu0 0
  %5675 = vmatmul.mubr.bf16.gmra.mxu0 %v3639
  %v5676 = vpop.f32.mrf.mxu0
  %v5677 = vadd.f32 %v5636, %v5676
  %v5678 = vpop.f32.mrf.mxu0
  %v5679 = vadd.f32 %v5638, %v5678
  %v5680 = vpop.f32.mrf.mxu0
  %v5681 = vpop.f32.mrf.mxu0
  %5682 = vdwg.mxu0
  %5683 = vmatprep.subr.bf16.mxu0 %v4931
  %5684 = vmatpush1.bf16.msra.mxu0 %v4930
  %5685 = vmatprep.subr.bf16.mxu0 %v4924
  %5686 = vmatpush1.bf16.msra.mxu0 %v4923
  %5687 = vmatprep.subr.bf16.mxu0 %v4917
  %5688 = vmatpush1.bf16.msra.mxu0 %v4916
  %5689 = vmatprep.subr.bf16.mxu0 %v4910
  %5690 = vmatpush1.bf16.msra.mxu0 %v4909
  %5691 = vmatprep.subr.bf16.mxu0 %v4903
  %5692 = vmatpush1.bf16.msra.mxu0 %v4902
  %5693 = vmatprep.subr.bf16.mxu0 %v4896
  %5694 = vmatpush1.bf16.msra.mxu0 %v4895
  %5695 = vmatprep.subr.bf16.mxu0 %v4889
  %5696 = vmatpush1.bf16.msra.mxu0 %v4888
  %5697 = vmatprep.subr.bf16.mxu0 %v4882
  %5698 = vmatpush1.bf16.msra.mxu0 %v4881
  %5699 = vmatprep.subr.bf16.mxu0 %v4987
  %5700 = vmatpush2.bf16.msra.mxu0 %v4986
  %5701 = vmatprep.subr.bf16.mxu0 %v4980
  %5702 = vmatpush2.bf16.msra.mxu0 %v4979
  %5703 = vmatprep.subr.bf16.mxu0 %v4973
  %5704 = vmatpush2.bf16.msra.mxu0 %v4972
  %5705 = vmatprep.subr.bf16.mxu0 %v4966
  %5706 = vmatpush2.bf16.msra.mxu0 %v4965
  %5707 = vmatprep.subr.bf16.mxu0 %v4959
  %5708 = vmatpush2.bf16.msra.mxu0 %v4958
  %5709 = vmatprep.subr.bf16.mxu0 %v4952
  %5710 = vmatpush2.bf16.msra.mxu0 %v4951
  %5711 = vmatprep.subr.bf16.mxu0 %v4945
  %5712 = vmatpush2.bf16.msra.mxu0 %v4944
  %5713 = vmatprep.subr.bf16.mxu0 %v4938
  %5714 = vmatpush2.bf16.msra.mxu0 %v4937
  %5715 = vmatprep.mubr.bf16.mxu0 %v3636
  %5716 = vmatmul.mubr.bf16.gmra.mxu0 %v3635
  %v5717 = vpop.f32.mrf.mxu0
  %v5718 = vadd.f32 %v3981, %v5717
  %v5719 = vpop.f32.mrf.mxu0
  %v5720 = vadd.f32 %v3985, %v5719
  %v5721 = vpop.f32.mrf.mxu0
  %v5722 = vpop.f32.mrf.mxu0
  %5723 = vdwg.mxu0
  %5724 = vmatprep.subr.bf16.mxu0 %v5043
  %5725 = vmatpush1.bf16.msra.mxu0 %v5042
  %5726 = vmatprep.subr.bf16.mxu0 %v5036
  %5727 = vmatpush1.bf16.msra.mxu0 %v5035
  %5728 = vmatprep.subr.bf16.mxu0 %v5029
  %5729 = vmatpush1.bf16.msra.mxu0 %v5028
  %5730 = vmatprep.subr.bf16.mxu0 %v5022
  %5731 = vmatpush1.bf16.msra.mxu0 %v5021
  %5732 = vmatprep.subr.bf16.mxu0 %v5015
  %5733 = vmatpush1.bf16.msra.mxu0 %v5014
  %5734 = vmatprep.subr.bf16.mxu0 %v5008
  %5735 = vmatpush1.bf16.msra.mxu0 %v5007
  %5736 = vmatprep.subr.bf16.mxu0 %v5001
  %5737 = vmatpush1.bf16.msra.mxu0 %v5000
  %5738 = vmatprep.subr.bf16.mxu0 %v4994
  %5739 = vmatpush1.bf16.msra.mxu0 %v4993
  %5740 = vmatprep.subr.bf16.mxu0 %v5099
  %5741 = vmatpush2.bf16.msra.mxu0 %v5098
  %5742 = vmatprep.subr.bf16.mxu0 %v5092
  %5743 = vmatpush2.bf16.msra.mxu0 %v5091
  %5744 = vmatprep.subr.bf16.mxu0 %v5085
  %5745 = vmatpush2.bf16.msra.mxu0 %v5084
  %5746 = vmatprep.subr.bf16.mxu0 %v5078
  %5747 = vmatpush2.bf16.msra.mxu0 %v5077
  %5748 = vmatprep.subr.bf16.mxu0 %v5071
  %5749 = vmatpush2.bf16.msra.mxu0 %v5070
  %5750 = vmatprep.subr.bf16.mxu0 %v5064
  %5751 = vmatpush2.bf16.msra.mxu0 %v5063
  %5752 = vmatprep.subr.bf16.mxu0 %v5057
  %5753 = vmatpush2.bf16.msra.mxu0 %v5056
  %5754 = vmatprep.subr.bf16.mxu0 %v5050
  %5755 = vmatpush2.bf16.msra.mxu0 %v5049
  %5756 = vmatprep.mubr.bf16.mxu0 %v3638
  %5757 = vmatmul.mubr.bf16.gmra.mxu0 %v3637
  %v5758 = vpop.f32.mrf.mxu0
  %v5759 = vadd.f32 %v5718, %v5758
  %v5760 = vpop.f32.mrf.mxu0
  %v5761 = vadd.f32 %v5720, %v5760
  %v5762 = vpop.f32.mrf.mxu0
  %v5763 = vpop.f32.mrf.mxu0
  %5764 = vdwg.mxu0
  %5765 = vmatprep.subr.bf16.mxu0 %v5155
  %5766 = vmatpush1.bf16.msra.mxu0 %v5154
  %5767 = vmatprep.subr.bf16.mxu0 %v5148
  %5768 = vmatpush1.bf16.msra.mxu0 %v5147
  %5769 = vmatprep.subr.bf16.mxu0 %v5141
  %5770 = vmatpush1.bf16.msra.mxu0 %v5140
  %5771 = vmatprep.subr.bf16.mxu0 %v5134
  %5772 = vmatpush1.bf16.msra.mxu0 %v5133
  %5773 = vmatprep.subr.bf16.mxu0 %v5127
  %5774 = vmatpush1.bf16.msra.mxu0 %v5126
  %5775 = vmatprep.subr.bf16.mxu0 %v5120
  %5776 = vmatpush1.bf16.msra.mxu0 %v5119
  %5777 = vmatprep.subr.bf16.mxu0 %v5113
  %5778 = vmatpush1.bf16.msra.mxu0 %v5112
  %5779 = vmatprep.subr.bf16.mxu0 %v5106
  %5780 = vmatpush1.bf16.msra.mxu0 %v5105
  %5781 = vmatprep.subr.bf16.mxu0 0
  %5782 = vmatpush2.bf16.msra.mxu0 0
  %5783 = vmatprep.subr.bf16.mxu0 0
  %5784 = vmatpush2.bf16.msra.mxu0 0
  %5785 = vmatprep.subr.bf16.mxu0 0
  %5786 = vmatpush2.bf16.msra.mxu0 0
  %5787 = vmatprep.subr.bf16.mxu0 0
  %5788 = vmatpush2.bf16.msra.mxu0 0
  %5789 = vmatprep.subr.bf16.mxu0 0
  %5790 = vmatpush2.bf16.msra.mxu0 0
  %5791 = vmatprep.subr.bf16.mxu0 0
  %5792 = vmatpush2.bf16.msra.mxu0 0
  %5793 = vmatprep.subr.bf16.mxu0 0
  %5794 = vmatpush2.bf16.msra.mxu0 0
  %5795 = vmatprep.subr.bf16.mxu0 0
  %5796 = vmatpush2.bf16.msra.mxu0 0
  %5797 = vmatprep.mubr.bf16.mxu0 0
  %5798 = vmatmul.mubr.bf16.gmra.mxu0 %v3639
  %v5799 = vpop.f32.mrf.mxu0
  %v5800 = vadd.f32 %v5759, %v5799
  %v5801 = vpop.f32.mrf.mxu0
  %v5802 = vadd.f32 %v5761, %v5801
  %v5803 = vpop.f32.mrf.mxu0
  %v5804 = vpop.f32.mrf.mxu0
  %5805 = vdwg.mxu0
  %5806 = vmatprep.subr.bf16.mxu0 0
  %5807 = vmatpush1.bf16.msra.mxu0 %v4932
  %5808 = vmatprep.subr.bf16.mxu0 0
  %5809 = vmatpush1.bf16.msra.mxu0 %v4925
  %5810 = vmatprep.subr.bf16.mxu0 0
  %5811 = vmatpush1.bf16.msra.mxu0 %v4918
  %5812 = vmatprep.subr.bf16.mxu0 0
  %5813 = vmatpush1.bf16.msra.mxu0 %v4911
  %5814 = vmatprep.subr.bf16.mxu0 0
  %5815 = vmatpush1.bf16.msra.mxu0 %v4904
  %5816 = vmatprep.subr.bf16.mxu0 0
  %5817 = vmatpush1.bf16.msra.mxu0 %v4897
  %5818 = vmatprep.subr.bf16.mxu0 0
  %5819 = vmatpush1.bf16.msra.mxu0 %v4890
  %5820 = vmatprep.subr.bf16.mxu0 0
  %5821 = vmatpush1.bf16.msra.mxu0 %v4883
  %5822 = vmatprep.subr.bf16.mxu0 0
  %5823 = vmatpush2.bf16.msra.mxu0 %v4988
  %5824 = vmatprep.subr.bf16.mxu0 0
  %5825 = vmatpush2.bf16.msra.mxu0 %v4981
  %5826 = vmatprep.subr.bf16.mxu0 0
  %5827 = vmatpush2.bf16.msra.mxu0 %v4974
  %5828 = vmatprep.subr.bf16.mxu0 0
  %5829 = vmatpush2.bf16.msra.mxu0 %v4967
  %5830 = vmatprep.subr.bf16.mxu0 0
  %5831 = vmatpush2.bf16.msra.mxu0 %v4960
  %5832 = vmatprep.subr.bf16.mxu0 0
  %5833 = vmatpush2.bf16.msra.mxu0 %v4953
  %5834 = vmatprep.subr.bf16.mxu0 0
  %5835 = vmatpush2.bf16.msra.mxu0 %v4946
  %5836 = vmatprep.subr.bf16.mxu0 0
  %5837 = vmatpush2.bf16.msra.mxu0 %v4939
  %5838 = vmatprep.mubr.bf16.mxu0 %v3636
  %5839 = vmatmul.mubr.bf16.gmra.mxu0 %v3635
  %v5840 = vpop.f32.mrf.mxu0
  %v5841 = vadd.f32 %v3989, %v5840
  %v5842 = vpop.f32.mrf.mxu0
  %v5843 = vpop.f32.mrf.mxu0
  %v5844 = vpop.f32.mrf.mxu0
  %5845 = vdwg.mxu0
  %5846 = vmatprep.subr.bf16.mxu0 0
  %5847 = vmatpush1.bf16.msra.mxu0 %v5044
  %5848 = vmatprep.subr.bf16.mxu0 0
  %5849 = vmatpush1.bf16.msra.mxu0 %v5037
  %5850 = vmatprep.subr.bf16.mxu0 0
  %5851 = vmatpush1.bf16.msra.mxu0 %v5030
  %5852 = vmatprep.subr.bf16.mxu0 0
  %5853 = vmatpush1.bf16.msra.mxu0 %v5023
  %5854 = vmatprep.subr.bf16.mxu0 0
  %5855 = vmatpush1.bf16.msra.mxu0 %v5016
  %5856 = vmatprep.subr.bf16.mxu0 0
  %5857 = vmatpush1.bf16.msra.mxu0 %v5009
  %5858 = vmatprep.subr.bf16.mxu0 0
  %5859 = vmatpush1.bf16.msra.mxu0 %v5002
  %5860 = vmatprep.subr.bf16.mxu0 0
  %5861 = vmatpush1.bf16.msra.mxu0 %v4995
  %5862 = vmatprep.subr.bf16.mxu0 0
  %5863 = vmatpush2.bf16.msra.mxu0 %v5100
  %5864 = vmatprep.subr.bf16.mxu0 0
  %5865 = vmatpush2.bf16.msra.mxu0 %v5093
  %5866 = vmatprep.subr.bf16.mxu0 0
  %5867 = vmatpush2.bf16.msra.mxu0 %v5086
  %5868 = vmatprep.subr.bf16.mxu0 0
  %5869 = vmatpush2.bf16.msra.mxu0 %v5079
  %5870 = vmatprep.subr.bf16.mxu0 0
  %5871 = vmatpush2.bf16.msra.mxu0 %v5072
  %5872 = vmatprep.subr.bf16.mxu0 0
  %5873 = vmatpush2.bf16.msra.mxu0 %v5065
  %5874 = vmatprep.subr.bf16.mxu0 0
  %5875 = vmatpush2.bf16.msra.mxu0 %v5058
  %5876 = vmatprep.subr.bf16.mxu0 0
  %5877 = vmatpush2.bf16.msra.mxu0 %v5051
  %5878 = vmatprep.mubr.bf16.mxu0 %v3638
  %5879 = vmatmul.mubr.bf16.gmra.mxu0 %v3637
  %v5880 = vpop.f32.mrf.mxu0
  %v5881 = vadd.f32 %v5841, %v5880
  %v5882 = vpop.f32.mrf.mxu0
  %v5883 = vpop.f32.mrf.mxu0
  %v5884 = vpop.f32.mrf.mxu0
  %5885 = vdwg.mxu0
  %5886 = vmatprep.subr.bf16.mxu0 0
  %5887 = vmatpush1.bf16.msra.mxu0 %v5156
  %5888 = vmatprep.subr.bf16.mxu0 0
  %5889 = vmatpush1.bf16.msra.mxu0 %v5149
  %5890 = vmatprep.subr.bf16.mxu0 0
  %5891 = vmatpush1.bf16.msra.mxu0 %v5142
  %5892 = vmatprep.subr.bf16.mxu0 0
  %5893 = vmatpush1.bf16.msra.mxu0 %v5135
  %5894 = vmatprep.subr.bf16.mxu0 0
  %5895 = vmatpush1.bf16.msra.mxu0 %v5128
  %5896 = vmatprep.subr.bf16.mxu0 0
  %5897 = vmatpush1.bf16.msra.mxu0 %v5121
  %5898 = vmatprep.subr.bf16.mxu0 0
  %5899 = vmatpush1.bf16.msra.mxu0 %v5114
  %5900 = vmatprep.subr.bf16.mxu0 0
  %5901 = vmatpush1.bf16.msra.mxu0 %v5107
  %5902 = vmatprep.subr.bf16.mxu0 0
  %5903 = vmatpush2.bf16.msra.mxu0 0
  %5904 = vmatprep.subr.bf16.mxu0 0
  %5905 = vmatpush2.bf16.msra.mxu0 0
  %5906 = vmatprep.subr.bf16.mxu0 0
  %5907 = vmatpush2.bf16.msra.mxu0 0
  %5908 = vmatprep.subr.bf16.mxu0 0
  %5909 = vmatpush2.bf16.msra.mxu0 0
  %5910 = vmatprep.subr.bf16.mxu0 0
  %5911 = vmatpush2.bf16.msra.mxu0 0
  %5912 = vmatprep.subr.bf16.mxu0 0
  %5913 = vmatpush2.bf16.msra.mxu0 0
  %5914 = vmatprep.subr.bf16.mxu0 0
  %5915 = vmatpush2.bf16.msra.mxu0 0
  %5916 = vmatprep.subr.bf16.mxu0 0
  %5917 = vmatpush2.bf16.msra.mxu0 0
  %5918 = vmatprep.mubr.bf16.mxu0 0
  %5919 = vmatmul.mubr.bf16.gmra.mxu0 %v3639
  %v5920 = vpop.f32.mrf.mxu0
  %v5921 = vadd.f32 %v5881, %v5920
  %v5922 = vpop.f32.mrf.mxu0
  %v5923 = vpop.f32.mrf.mxu0
  %v5924 = vpop.f32.mrf.mxu0
  %5925 = vdwg.mxu0
  %v5926 = vmax.f32 %v5554, 0.0
  %v5927 = vmax.f32 %v5556, 0.0
  %v5928 = vmax.f32 %v5677, 0.0
  %v5929 = vmax.f32 %v5679, 0.0
  %v5930 = vmax.f32 %v5800, 0.0
  %v5931 = vmax.f32 %v5802, 0.0
  %v5932 = vmax.f32 %v5921, 0.0
  %v5933 = vpack.c.bf16 %v5926, %v5926
  %v5934 = vpack.c.bf16 %v5927, %v5927
  %v5935 = vpack.c.bf16 %v5928, %v5928
  %v5936 = vpack.c.bf16 %v5929, %v5929
  %v5937 = vpack.c.bf16 %v5930, %v5930
  %v5938 = vpack.c.bf16 %v5931, %v5931
  %v5939 = vpack.c.bf16 %v5932, %v5932
  %v5940 = vld [vmem:[%s9] sm:$0xff]
  %v5941 = vld [vmem:[%s9 + $0x8] sm:$0xff]
  %v5942 = vld [vmem:[%s9 + $0x10] sm:$0xff]
  %v5943 = vld [vmem:[%s9 + $0x18] sm:$0xf]
  %v5944 = vld [vmem:[%s9 + $0x1c] sm:$0xff]
  %v5945 = vld [vmem:[%s9 + $0x24] sm:$0xff]
  %v5946 = vld [vmem:[%s9 + $0x2c] sm:$0xff]
  %v5947 = vld [vmem:[%s9 + $0x34] sm:$0xf]
  %v5948 = vld [vmem:[%s9 + $0x38] sm:$0xff]
  %v5949 = vld [vmem:[%s9 + $0x40] sm:$0xff]
  %v5950 = vld [vmem:[%s9 + $0x48] sm:$0xff]
  %v5951 = vld [vmem:[%s9 + $0x50] sm:$0xf]
  %v5952 = vld [vmem:[%s9 + $0x54] sm:$0xff]
  %v5953 = vld [vmem:[%s9 + $0x5c] sm:$0xff]
  %v5954 = vld [vmem:[%s9 + $0x64] sm:$0xff]
  %v5955 = vld [vmem:[%s9 + $0x6c] sm:$0xf]
  %v5956 = vld [vmem:[%s9 + $0x70] sm:$0xff]
  %v5957 = vld [vmem:[%s9 + $0x78] sm:$0xff]
  %v5958 = vld [vmem:[%s9 + $0x80] sm:$0xff]
  %v5959 = vld [vmem:[%s9 + $0x88] sm:$0xf]
  %v5960 = vld [vmem:[%s9 + $0x8c] sm:$0xff]
  %v5961 = vld [vmem:[%s9 + $0x94] sm:$0xff]
  %v5962 = vld [vmem:[%s9 + $0x9c] sm:$0xff]
  %v5963 = vld [vmem:[%s9 + $0xa4] sm:$0xf]
  %v5964 = vld [vmem:[%s9 + $0xa8] sm:$0xff]
  %v5965 = vld [vmem:[%s9 + $0xb0] sm:$0xff]
  %v5966 = vld [vmem:[%s9 + $0xb8] sm:$0xff]
  %v5967 = vld [vmem:[%s9 + $0xc0] sm:$0xf]
  %v5968 = vld [vmem:[%s9 + $0xc4] sm:$0xff]
  %v5969 = vld [vmem:[%s9 + $0xcc] sm:$0xff]
  %v5970 = vld [vmem:[%s9 + $0xd4] sm:$0xff]
  %v5971 = vld [vmem:[%s9 + $0xdc] sm:$0xf]
  %v5972 = vld [vmem:[%s9 + $0xe0] sm:$0xff]
  %v5973 = vld [vmem:[%s9 + $0xe8] sm:$0xff]
  %v5974 = vld [vmem:[%s9 + $0xf0] sm:$0xff]
  %v5975 = vld [vmem:[%s9 + $0xf8] sm:$0xf]
  %v5976 = vld [vmem:[%s9 + $0xfc] sm:$0xff]
  %v5977 = vld [vmem:[%s9 + $0x104] sm:$0xff]
  %v5978 = vld [vmem:[%s9 + $0x10c] sm:$0xff]
  %v5979 = vld [vmem:[%s9 + $0x114] sm:$0xf]
  %v5980 = vld [vmem:[%s9 + $0x118] sm:$0xff]
  %v5981 = vld [vmem:[%s9 + $0x120] sm:$0xff]
  %v5982 = vld [vmem:[%s9 + $0x128] sm:$0xff]
  %v5983 = vld [vmem:[%s9 + $0x130] sm:$0xf]
  %v5984 = vld [vmem:[%s9 + $0x134] sm:$0xff]
  %v5985 = vld [vmem:[%s9 + $0x13c] sm:$0xff]
  %v5986 = vld [vmem:[%s9 + $0x144] sm:$0xff]
  %v5987 = vld [vmem:[%s9 + $0x14c] sm:$0xf]
  %v5988 = vld [vmem:[%s9 + $0x150] sm:$0xff]
  %v5989 = vld [vmem:[%s9 + $0x158] sm:$0xff]
  %v5990 = vld [vmem:[%s9 + $0x160] sm:$0xff]
  %v5991 = vld [vmem:[%s9 + $0x168] sm:$0xf]
  %v5992 = vld [vmem:[%s9 + $0x16c] sm:$0xff]
  %v5993 = vld [vmem:[%s9 + $0x174] sm:$0xff]
  %v5994 = vld [vmem:[%s9 + $0x17c] sm:$0xff]
  %v5995 = vld [vmem:[%s9 + $0x184] sm:$0xf]
  %v5996 = vld [vmem:[%s9 + $0x188] sm:$0xff]
  %v5997 = vld [vmem:[%s9 + $0x190] sm:$0xff]
  %v5998 = vld [vmem:[%s9 + $0x198] sm:$0xff]
  %v5999 = vld [vmem:[%s9 + $0x1a0] sm:$0xf]
  %v6000 = vld [vmem:[%s9 + $0x1a4] sm:$0xff]
  %v6001 = vld [vmem:[%s9 + $0x1ac] sm:$0xff]
  %v6002 = vld [vmem:[%s9 + $0x1b4] sm:$0xff]
  %v6003 = vld [vmem:[%s9 + $0x1bc] sm:$0xf]
  %v6004 = vld [vmem:[%s9 + $0x1c0] sm:$0xff]
  %v6005 = vld [vmem:[%s9 + $0x1c8] sm:$0xff]
  %v6006 = vld [vmem:[%s9 + $0x1d0] sm:$0xff]
  %v6007 = vld [vmem:[%s9 + $0x1d8] sm:$0xf]
  %v6008 = vld [vmem:[%s9 + $0x1dc] sm:$0xff]
  %v6009 = vld [vmem:[%s9 + $0x1e4] sm:$0xff]
  %v6010 = vld [vmem:[%s9 + $0x1ec] sm:$0xff]
  %v6011 = vld [vmem:[%s9 + $0x1f4] sm:$0xf]
  %v6012 = vld [vmem:[%s9 + $0x1f8] sm:$0xff]
  %v6013 = vld [vmem:[%s9 + $0x200] sm:$0xff]
  %v6014 = vld [vmem:[%s9 + $0x208] sm:$0xff]
  %v6015 = vld [vmem:[%s9 + $0x210] sm:$0xf]
  %v6016 = vld [vmem:[%s9 + $0x214] sm:$0xff]
  %v6017 = vld [vmem:[%s9 + $0x21c] sm:$0xff]
  %v6018 = vld [vmem:[%s9 + $0x224] sm:$0xff]
  %v6019 = vld [vmem:[%s9 + $0x22c] sm:$0xf]
  %v6020 = vld [vmem:[%s9 + $0x230] sm:$0xff]
  %v6021 = vld [vmem:[%s9 + $0x238] sm:$0xff]
  %v6022 = vld [vmem:[%s9 + $0x240] sm:$0xff]
  %v6023 = vld [vmem:[%s9 + $0x248] sm:$0xf]
  %v6024 = vld [vmem:[%s9 + $0x24c] sm:$0xff]
  %v6025 = vld [vmem:[%s9 + $0x254] sm:$0xff]
  %v6026 = vld [vmem:[%s9 + $0x25c] sm:$0xff]
  %v6027 = vld [vmem:[%s9 + $0x264] sm:$0xf]
  %v6028 = vld [vmem:[%s9 + $0x268] sm:$0xff]
  %v6029 = vld [vmem:[%s9 + $0x270] sm:$0xff]
  %v6030 = vld [vmem:[%s9 + $0x278] sm:$0xff]
  %v6031 = vld [vmem:[%s9 + $0x280] sm:$0xf]
  %v6032 = vld [vmem:[%s9 + $0x284] sm:$0xff]
  %v6033 = vld [vmem:[%s9 + $0x28c] sm:$0xff]
  %v6034 = vld [vmem:[%s9 + $0x294] sm:$0xff]
  %v6035 = vld [vmem:[%s9 + $0x29c] sm:$0xf]
  %v6036 = vld [vmem:[%s9 + $0x2a0] sm:$0xff]
  %v6037 = vld [vmem:[%s9 + $0x2a8] sm:$0xff]
  %v6038 = vld [vmem:[%s9 + $0x2b0] sm:$0xff]
  %v6039 = vld [vmem:[%s9 + $0x2b8] sm:$0xf]
  %v6040 = vld [vmem:[%s9 + $0x2bc] sm:$0xff]
  %v6041 = vld [vmem:[%s9 + $0x2c4] sm:$0xff]
  %v6042 = vld [vmem:[%s9 + $0x2cc] sm:$0xff]
  %v6043 = vld [vmem:[%s9 + $0x2d4] sm:$0xf]
  %v6044 = vld [vmem:[%s9 + $0x2d8] sm:$0xff]
  %v6045 = vld [vmem:[%s9 + $0x2e0] sm:$0xff]
  %v6046 = vld [vmem:[%s9 + $0x2e8] sm:$0xff]
  %v6047 = vld [vmem:[%s9 + $0x2f0] sm:$0xf]
  %v6048 = vld [vmem:[%s9 + $0x2f4] sm:$0xff]
  %v6049 = vld [vmem:[%s9 + $0x2fc] sm:$0xff]
  %v6050 = vld [vmem:[%s9 + $0x304] sm:$0xff]
  %v6051 = vld [vmem:[%s9 + $0x30c] sm:$0xf]
  %v6052 = vld [vmem:[%s9 + $0x310] sm:$0xff]
  %v6053 = vld [vmem:[%s9 + $0x318] sm:$0xff]
  %v6054 = vld [vmem:[%s9 + $0x320] sm:$0xff]
  %v6055 = vld [vmem:[%s9 + $0x328] sm:$0xf]
  %v6056 = vld [vmem:[%s9 + $0x32c] sm:$0xff]
  %v6057 = vld [vmem:[%s9 + $0x334] sm:$0xff]
  %v6058 = vld [vmem:[%s9 + $0x33c] sm:$0xff]
  %v6059 = vld [vmem:[%s9 + $0x344] sm:$0xf]
  %v6060 = vld [vmem:[%s9 + $0x348] sm:$0xff]
  %v6061 = vld [vmem:[%s9 + $0x350] sm:$0xff]
  %v6062 = vld [vmem:[%s9 + $0x358] sm:$0xff]
  %v6063 = vld [vmem:[%s9 + $0x360] sm:$0xf]
  %v6064 = vld [vmem:[%s9 + $0x364] sm:$0xff]
  %v6065 = vld [vmem:[%s9 + $0x36c] sm:$0xff]
  %v6066 = vld [vmem:[%s9 + $0x374] sm:$0xff]
  %v6067 = vld [vmem:[%s9 + $0x37c] sm:$0xf]
  %v6068 = vld [vmem:[%s9 + $0x380] sm:$0xff]
  %v6069 = vld [vmem:[%s9 + $0x388] sm:$0xff]
  %v6070 = vld [vmem:[%s9 + $0x390] sm:$0xff]
  %v6071 = vld [vmem:[%s9 + $0x398] sm:$0xf]
  %v6072 = vld [vmem:[%s9 + $0x39c] sm:$0xff]
  %v6073 = vld [vmem:[%s9 + $0x3a4] sm:$0xff]
  %v6074 = vld [vmem:[%s9 + $0x3ac] sm:$0xff]
  %v6075 = vld [vmem:[%s9 + $0x3b4] sm:$0xf]
  %v6076 = vld [vmem:[%s9 + $0x3b8] sm:$0xff]
  %v6077 = vld [vmem:[%s9 + $0x3c0] sm:$0xff]
  %v6078 = vld [vmem:[%s9 + $0x3c8] sm:$0xff]
  %v6079 = vld [vmem:[%s9 + $0x3d0] sm:$0xf]
  %v6080 = vld [vmem:[%s9 + $0x3d4] sm:$0xff]
  %v6081 = vld [vmem:[%s9 + $0x3dc] sm:$0xff]
  %v6082 = vld [vmem:[%s9 + $0x3e4] sm:$0xff]
  %v6083 = vld [vmem:[%s9 + $0x3ec] sm:$0xf]
  %v6084 = vld [vmem:[%s9 + $0x3f0] sm:$0xff]
  %v6085 = vld [vmem:[%s9 + $0x3f8] sm:$0xff]
  %v6086 = vld [vmem:[%s9 + $0x400] sm:$0xff]
  %v6087 = vld [vmem:[%s9 + $0x408] sm:$0xf]
  %v6088 = vld [vmem:[%s9 + $0x40c] sm:$0xff]
  %v6089 = vld [vmem:[%s9 + $0x414] sm:$0xff]
  %v6090 = vld [vmem:[%s9 + $0x41c] sm:$0xff]
  %v6091 = vld [vmem:[%s9 + $0x424] sm:$0xf]
  %v6092 = vld [vmem:[%s9 + $0x428] sm:$0xff]
  %v6093 = vld [vmem:[%s9 + $0x430] sm:$0xff]
  %v6094 = vld [vmem:[%s9 + $0x438] sm:$0xff]
  %v6095 = vld [vmem:[%s9 + $0x440] sm:$0xf]
  %v6096 = vld [vmem:[%s9 + $0x444] sm:$0xff]
  %v6097 = vld [vmem:[%s9 + $0x44c] sm:$0xff]
  %v6098 = vld [vmem:[%s9 + $0x454] sm:$0xff]
  %v6099 = vld [vmem:[%s9 + $0x45c] sm:$0xf]
  %v6100 = vld [vmem:[%s9 + $0x460] sm:$0xff]
  %v6101 = vld [vmem:[%s9 + $0x468] sm:$0xff]
  %v6102 = vld [vmem:[%s9 + $0x470] sm:$0xff]
  %v6103 = vld [vmem:[%s9 + $0x478] sm:$0xf]
  %v6104 = vld [vmem:[%s9 + $0x47c] sm:$0xff]
  %v6105 = vld [vmem:[%s9 + $0x484] sm:$0xff]
  %v6106 = vld [vmem:[%s9 + $0x48c] sm:$0xff]
  %v6107 = vld [vmem:[%s9 + $0x494] sm:$0xf]
  %v6108 = vld [vmem:[%s9 + $0x498] sm:$0xff]
  %v6109 = vld [vmem:[%s9 + $0x4a0] sm:$0xff]
  %v6110 = vld [vmem:[%s9 + $0x4a8] sm:$0xff]
  %v6111 = vld [vmem:[%s9 + $0x4b0] sm:$0xf]
  %v6112 = vld [vmem:[%s9 + $0x4b4] sm:$0xff]
  %v6113 = vld [vmem:[%s9 + $0x4bc] sm:$0xff]
  %v6114 = vld [vmem:[%s9 + $0x4c4] sm:$0xff]
  %v6115 = vld [vmem:[%s9 + $0x4cc] sm:$0xf]
  %v6116 = vld [vmem:[%s9 + $0x4d0] sm:$0xff]
  %v6117 = vld [vmem:[%s9 + $0x4d8] sm:$0xff]
  %v6118 = vld [vmem:[%s9 + $0x4e0] sm:$0xff]
  %v6119 = vld [vmem:[%s9 + $0x4e8] sm:$0xf]
  %v6120 = vld [vmem:[%s9 + $0x4ec] sm:$0xff]
  %v6121 = vld [vmem:[%s9 + $0x4f4] sm:$0xff]
  %v6122 = vld [vmem:[%s9 + $0x4fc] sm:$0xff]
  %v6123 = vld [vmem:[%s9 + $0x504] sm:$0xf]
  %v6124 = vld [vmem:[%s9 + $0x508] sm:$0xff]
  %v6125 = vld [vmem:[%s9 + $0x510] sm:$0xff]
  %v6126 = vld [vmem:[%s9 + $0x518] sm:$0xff]
  %v6127 = vld [vmem:[%s9 + $0x520] sm:$0xf]
  %v6128 = vld [vmem:[%s9 + $0x524] sm:$0xff]
  %v6129 = vld [vmem:[%s9 + $0x52c] sm:$0xff]
  %v6130 = vld [vmem:[%s9 + $0x534] sm:$0xff]
  %v6131 = vld [vmem:[%s9 + $0x53c] sm:$0xf]
  %v6132 = vld [vmem:[%s9 + $0x540] sm:$0xff]
  %v6133 = vld [vmem:[%s9 + $0x548] sm:$0xff]
  %v6134 = vld [vmem:[%s9 + $0x550] sm:$0xff]
  %v6135 = vld [vmem:[%s9 + $0x558] sm:$0xf]
  %v6136 = vld [vmem:[%s9 + $0x55c] sm:$0xff]
  %v6137 = vld [vmem:[%s9 + $0x564] sm:$0xff]
  %v6138 = vld [vmem:[%s9 + $0x56c] sm:$0xff]
  %v6139 = vld [vmem:[%s9 + $0x574] sm:$0xf]
  %v6140 = vld [vmem:[%s9 + $0x578] sm:$0xff]
  %v6141 = vld [vmem:[%s9 + $0x580] sm:$0xff]
  %v6142 = vld [vmem:[%s9 + $0x588] sm:$0xff]
  %v6143 = vld [vmem:[%s9 + $0x590] sm:$0xf]
  %v6144 = vld [vmem:[%s9 + $0x594] sm:$0xff]
  %v6145 = vld [vmem:[%s9 + $0x59c] sm:$0xff]
  %v6146 = vld [vmem:[%s9 + $0x5a4] sm:$0xff]
  %v6147 = vld [vmem:[%s9 + $0x5ac] sm:$0xf]
  %v6148 = vld [vmem:[%s9 + $0x5b0] sm:$0xff]
  %v6149 = vld [vmem:[%s9 + $0x5b8] sm:$0xff]
  %v6150 = vld [vmem:[%s9 + $0x5c0] sm:$0xff]
  %v6151 = vld [vmem:[%s9 + $0x5c8] sm:$0xf]
  %v6152 = vld [vmem:[%s9 + $0x5cc] sm:$0xff]
  %v6153 = vld [vmem:[%s9 + $0x5d4] sm:$0xff]
  %v6154 = vld [vmem:[%s9 + $0x5dc] sm:$0xff]
  %v6155 = vld [vmem:[%s9 + $0x5e4] sm:$0xf]
  %v6156 = vld [vmem:[%s9 + $0x5e8] sm:$0xff]
  %v6157 = vld [vmem:[%s9 + $0x5f0] sm:$0xff]
  %v6158 = vld [vmem:[%s9 + $0x5f8] sm:$0xff]
  %v6159 = vld [vmem:[%s9 + $0x600] sm:$0xf]
  %v6160 = vld [vmem:[%s9 + $0x604] sm:$0xff]
  %v6161 = vld [vmem:[%s9 + $0x60c] sm:$0xff]
  %v6162 = vld [vmem:[%s9 + $0x614] sm:$0xff]
  %v6163 = vld [vmem:[%s9 + $0x61c] sm:$0xf]
  %v6164 = vld [vmem:[%s9 + $0x620] sm:$0xff]
  %v6165 = vld [vmem:[%s9 + $0x628] sm:$0xff]
  %v6166 = vld [vmem:[%s9 + $0x630] sm:$0xff]
  %v6167 = vld [vmem:[%s9 + $0x638] sm:$0xf]
  %v6168 = vld [vmem:[%s9 + $0x63c] sm:$0xff]
  %v6169 = vld [vmem:[%s9 + $0x644] sm:$0xff]
  %v6170 = vld [vmem:[%s9 + $0x64c] sm:$0xff]
  %v6171 = vld [vmem:[%s9 + $0x654] sm:$0xf]
  %v6172 = vld [vmem:[%s9 + $0x658] sm:$0xff]
  %v6173 = vld [vmem:[%s9 + $0x660] sm:$0xff]
  %v6174 = vld [vmem:[%s9 + $0x668] sm:$0xff]
  %v6175 = vld [vmem:[%s9 + $0x670] sm:$0xf]
  %v6176 = vld [vmem:[%s9 + $0x674] sm:$0xff]
  %v6177 = vld [vmem:[%s9 + $0x67c] sm:$0xff]
  %v6178 = vld [vmem:[%s9 + $0x684] sm:$0xff]
  %v6179 = vld [vmem:[%s9 + $0x68c] sm:$0xf]
  %v6180 = vld [vmem:[%s9 + $0x690] sm:$0xff]
  %v6181 = vld [vmem:[%s9 + $0x698] sm:$0xff]
  %v6182 = vld [vmem:[%s9 + $0x6a0] sm:$0xff]
  %v6183 = vld [vmem:[%s9 + $0x6a8] sm:$0xf]
  %v6184 = vld [vmem:[%s9 + $0x6ac] sm:$0xff]
  %v6185 = vld [vmem:[%s9 + $0x6b4] sm:$0xff]
  %v6186 = vld [vmem:[%s9 + $0x6bc] sm:$0xff]
  %v6187 = vld [vmem:[%s9 + $0x6c4] sm:$0xf]
  %v6188 = vld [vmem:[%s9 + $0x6c8] sm:$0xff]
  %v6189 = vld [vmem:[%s9 + $0x6d0] sm:$0xff]
  %v6190 = vld [vmem:[%s9 + $0x6d8] sm:$0xff]
  %v6191 = vld [vmem:[%s9 + $0x6e0] sm:$0xf]
  %v6192 = vld [vmem:[%s9 + $0x6e4] sm:$0xff]
  %v6193 = vld [vmem:[%s9 + $0x6ec] sm:$0xff]
  %v6194 = vld [vmem:[%s9 + $0x6f4] sm:$0xff]
  %v6195 = vld [vmem:[%s9 + $0x6fc] sm:$0xf]
  %v6196 = vld [vmem:[%s9 + $0x700] sm:$0xff]
  %v6197 = vld [vmem:[%s9 + $0x708] sm:$0xff]
  %v6198 = vld [vmem:[%s9 + $0x710] sm:$0xff]
  %v6199 = vld [vmem:[%s9 + $0x718] sm:$0xf]
  %v6200 = vld [vmem:[%s9 + $0x71c] sm:$0xff]
  %v6201 = vld [vmem:[%s9 + $0x724] sm:$0xff]
  %v6202 = vld [vmem:[%s9 + $0x72c] sm:$0xff]
  %v6203 = vld [vmem:[%s9 + $0x734] sm:$0xf]
  %v6204 = vld [vmem:[%s9 + $0x738] sm:$0xff]
  %v6205 = vld [vmem:[%s9 + $0x740] sm:$0xff]
  %v6206 = vld [vmem:[%s9 + $0x748] sm:$0xff]
  %v6207 = vld [vmem:[%s9 + $0x750] sm:$0xf]
  %v6208 = vld [vmem:[%s9 + $0x754] sm:$0xff]
  %v6209 = vld [vmem:[%s9 + $0x75c] sm:$0xff]
  %v6210 = vld [vmem:[%s9 + $0x764] sm:$0xff]
  %v6211 = vld [vmem:[%s9 + $0x76c] sm:$0xf]
  %v6212 = vld [vmem:[%s9 + $0x770] sm:$0xff]
  %v6213 = vld [vmem:[%s9 + $0x778] sm:$0xff]
  %v6214 = vld [vmem:[%s9 + $0x780] sm:$0xff]
  %v6215 = vld [vmem:[%s9 + $0x788] sm:$0xf]
  %v6216 = vld [vmem:[%s9 + $0x78c] sm:$0xff]
  %v6217 = vld [vmem:[%s9 + $0x794] sm:$0xff]
  %v6218 = vld [vmem:[%s9 + $0x79c] sm:$0xff]
  %v6219 = vld [vmem:[%s9 + $0x7a4] sm:$0xf]
  %v6220 = vld [vmem:[%s9 + $0x7a8] sm:$0xff]
  %v6221 = vld [vmem:[%s9 + $0x7b0] sm:$0xff]
  %v6222 = vld [vmem:[%s9 + $0x7b8] sm:$0xff]
  %v6223 = vld [vmem:[%s9 + $0x7c0] sm:$0xf]
  %v6224 = vld [vmem:[%s9 + $0x7c4] sm:$0xff]
  %v6225 = vld [vmem:[%s9 + $0x7cc] sm:$0xff]
  %v6226 = vld [vmem:[%s9 + $0x7d4] sm:$0xff]
  %v6227 = vld [vmem:[%s9 + $0x7dc] sm:$0xf]
  %v6228 = vld [vmem:[%s9 + $0x7e0] sm:$0xff]
  %v6229 = vld [vmem:[%s9 + $0x7e8] sm:$0xff]
  %v6230 = vld [vmem:[%s9 + $0x7f0] sm:$0xff]
  %v6231 = vld [vmem:[%s9 + $0x7f8] sm:$0xf]
  %v6232 = vld [vmem:[%s9 + $0x7fc] sm:$0xff]
  %v6233 = vld [vmem:[%s9 + $0x804] sm:$0xff]
  %v6234 = vld [vmem:[%s9 + $0x80c] sm:$0xff]
  %v6235 = vld [vmem:[%s9 + $0x814] sm:$0xf]
  %v6236 = vld [vmem:[%s9 + $0x818] sm:$0xff]
  %v6237 = vld [vmem:[%s9 + $0x820] sm:$0xff]
  %v6238 = vld [vmem:[%s9 + $0x828] sm:$0xff]
  %v6239 = vld [vmem:[%s9 + $0x830] sm:$0xf]
  %v6240 = vld [vmem:[%s9 + $0x834] sm:$0xff]
  %v6241 = vld [vmem:[%s9 + $0x83c] sm:$0xff]
  %v6242 = vld [vmem:[%s9 + $0x844] sm:$0xff]
  %v6243 = vld [vmem:[%s9 + $0x84c] sm:$0xf]
  %v6244 = vld [vmem:[%s9 + $0x850] sm:$0xff]
  %v6245 = vld [vmem:[%s9 + $0x858] sm:$0xff]
  %v6246 = vld [vmem:[%s9 + $0x860] sm:$0xff]
  %v6247 = vld [vmem:[%s9 + $0x868] sm:$0xf]
  %v6248 = vld [vmem:[%s9 + $0x86c] sm:$0xff]
  %v6249 = vld [vmem:[%s9 + $0x874] sm:$0xff]
  %v6250 = vld [vmem:[%s9 + $0x87c] sm:$0xff]
  %v6251 = vld [vmem:[%s9 + $0x884] sm:$0xf]
  %v6252 = vld [vmem:[%s9 + $0x888] sm:$0xff]
  %v6253 = vld [vmem:[%s9 + $0x890] sm:$0xff]
  %v6254 = vld [vmem:[%s9 + $0x898] sm:$0xff]
  %v6255 = vld [vmem:[%s9 + $0x8a0] sm:$0xf]
  %v6256 = vld [vmem:[%s9 + $0x8a4] sm:$0xff]
  %v6257 = vld [vmem:[%s9 + $0x8ac] sm:$0xff]
  %v6258 = vld [vmem:[%s9 + $0x8b4] sm:$0xff]
  %v6259 = vld [vmem:[%s9 + $0x8bc] sm:$0xf]
  %v6260 = vld [vmem:[%s9 + $0x8c0] sm:$0xff]
  %v6261 = vld [vmem:[%s9 + $0x8c8] sm:$0xff]
  %v6262 = vld [vmem:[%s9 + $0x8d0] sm:$0xff]
  %v6263 = vld [vmem:[%s9 + $0x8d8] sm:$0xf]
  %v6264 = vld [vmem:[%s9 + $0x8dc] sm:$0xff]
  %v6265 = vld [vmem:[%s9 + $0x8e4] sm:$0xff]
  %v6266 = vld [vmem:[%s9 + $0x8ec] sm:$0xff]
  %v6267 = vld [vmem:[%s9 + $0x8f4] sm:$0xf]
  %v6268 = vld [vmem:[%s9 + $0x8f8] sm:$0xff]
  %v6269 = vld [vmem:[%s9 + $0x900] sm:$0xff]
  %v6270 = vld [vmem:[%s9 + $0x908] sm:$0xff]
  %v6271 = vld [vmem:[%s9 + $0x910] sm:$0xf]
  %v6272 = vld [vmem:[%s9 + $0x914] sm:$0xff]
  %v6273 = vld [vmem:[%s9 + $0x91c] sm:$0xff]
  %v6274 = vld [vmem:[%s9 + $0x924] sm:$0xff]
  %v6275 = vld [vmem:[%s9 + $0x92c] sm:$0xf]
  %v6276 = vld [vmem:[%s9 + $0x930] sm:$0xff]
  %v6277 = vld [vmem:[%s9 + $0x938] sm:$0xff]
  %v6278 = vld [vmem:[%s9 + $0x940] sm:$0xff]
  %v6279 = vld [vmem:[%s9 + $0x948] sm:$0xf]
  %v6280 = vld [vmem:[%s9 + $0x94c] sm:$0xff]
  %v6281 = vld [vmem:[%s9 + $0x954] sm:$0xff]
  %v6282 = vld [vmem:[%s9 + $0x95c] sm:$0xff]
  %v6283 = vld [vmem:[%s9 + $0x964] sm:$0xf]
  %v6284 = vld [vmem:[%s9 + $0x968] sm:$0xff]
  %v6285 = vld [vmem:[%s9 + $0x970] sm:$0xff]
  %v6286 = vld [vmem:[%s9 + $0x978] sm:$0xff]
  %v6287 = vld [vmem:[%s9 + $0x980] sm:$0xf]
  %v6288 = vld [vmem:[%s9 + $0x984] sm:$0xff]
  %v6289 = vld [vmem:[%s9 + $0x98c] sm:$0xff]
  %v6290 = vld [vmem:[%s9 + $0x994] sm:$0xff]
  %v6291 = vld [vmem:[%s9 + $0x99c] sm:$0xf]
  %v6292 = vld [vmem:[%s9 + $0x9a0] sm:$0xff]
  %v6293 = vld [vmem:[%s9 + $0x9a8] sm:$0xff]
  %v6294 = vld [vmem:[%s9 + $0x9b0] sm:$0xff]
  %v6295 = vld [vmem:[%s9 + $0x9b8] sm:$0xf]
  %v6296 = vld [vmem:[%s9 + $0x9bc] sm:$0xff]
  %v6297 = vld [vmem:[%s9 + $0x9c4] sm:$0xff]
  %v6298 = vld [vmem:[%s9 + $0x9cc] sm:$0xff]
  %v6299 = vld [vmem:[%s9 + $0x9d4] sm:$0xf]
  %v6300 = vld [vmem:[%s9 + $0x9d8] sm:$0xff]
  %v6301 = vld [vmem:[%s9 + $0x9e0] sm:$0xff]
  %v6302 = vld [vmem:[%s9 + $0x9e8] sm:$0xff]
  %v6303 = vld [vmem:[%s9 + $0x9f0] sm:$0xf]
  %v6304 = vld [vmem:[%s9 + $0x9f4] sm:$0xff]
  %v6305 = vld [vmem:[%s9 + $0x9fc] sm:$0xff]
  %v6306 = vld [vmem:[%s9 + $0xa04] sm:$0xff]
  %v6307 = vld [vmem:[%s9 + $0xa0c] sm:$0xf]
  %v6308 = vld [vmem:[%s9 + $0xa10] sm:$0xff]
  %v6309 = vld [vmem:[%s9 + $0xa18] sm:$0xff]
  %v6310 = vld [vmem:[%s9 + $0xa20] sm:$0xff]
  %v6311 = vld [vmem:[%s9 + $0xa28] sm:$0xf]
  %v6312 = vld [vmem:[%s9 + $0xa2c] sm:$0xff]
  %v6313 = vld [vmem:[%s9 + $0xa34] sm:$0xff]
  %v6314 = vld [vmem:[%s9 + $0xa3c] sm:$0xff]
  %v6315 = vld [vmem:[%s9 + $0xa44] sm:$0xf]
  %v6316 = vld [vmem:[%s9 + $0xa48] sm:$0xff]
  %v6317 = vld [vmem:[%s9 + $0xa50] sm:$0xff]
  %v6318 = vld [vmem:[%s9 + $0xa58] sm:$0xff]
  %v6319 = vld [vmem:[%s9 + $0xa60] sm:$0xf]
  %v6320 = vld [vmem:[%s9 + $0xa64] sm:$0xff]
  %v6321 = vld [vmem:[%s9 + $0xa6c] sm:$0xff]
  %v6322 = vld [vmem:[%s9 + $0xa74] sm:$0xff]
  %v6323 = vld [vmem:[%s9 + $0xa7c] sm:$0xf]
  %v6324 = vld [vmem:[%s9 + $0xa80] sm:$0xff]
  %v6325 = vld [vmem:[%s9 + $0xa88] sm:$0xff]
  %v6326 = vld [vmem:[%s9 + $0xa90] sm:$0xff]
  %v6327 = vld [vmem:[%s9 + $0xa98] sm:$0xf]
  %v6328 = vld [vmem:[%s9 + $0xa9c] sm:$0xff]
  %v6329 = vld [vmem:[%s9 + $0xaa4] sm:$0xff]
  %v6330 = vld [vmem:[%s9 + $0xaac] sm:$0xff]
  %v6331 = vld [vmem:[%s9 + $0xab4] sm:$0xf]
  %v6332 = vld [vmem:[%s9 + $0xab8] sm:$0xff]
  %v6333 = vld [vmem:[%s9 + $0xac0] sm:$0xff]
  %v6334 = vld [vmem:[%s9 + $0xac8] sm:$0xff]
  %v6335 = vld [vmem:[%s9 + $0xad0] sm:$0xf]
  %v6336 = vld [vmem:[%s9 + $0xad4] sm:$0xff]
  %v6337 = vld [vmem:[%s9 + $0xadc] sm:$0xff]
  %v6338 = vld [vmem:[%s9 + $0xae4] sm:$0xff]
  %v6339 = vld [vmem:[%s9 + $0xaec] sm:$0xf]
  %v6340 = vld [vmem:[%s9 + $0xaf0] sm:$0xff]
  %v6341 = vld [vmem:[%s9 + $0xaf8] sm:$0xff]
  %v6342 = vld [vmem:[%s9 + $0xb00] sm:$0xff]
  %v6343 = vld [vmem:[%s9 + $0xb08] sm:$0xf]
  %v6344 = vld [vmem:[%s9 + $0xb0c] sm:$0xff]
  %v6345 = vld [vmem:[%s9 + $0xb14] sm:$0xff]
  %v6346 = vld [vmem:[%s9 + $0xb1c] sm:$0xff]
  %v6347 = vld [vmem:[%s9 + $0xb24] sm:$0xf]
  %v6348 = vld [vmem:[%s9 + $0xb28] sm:$0xff]
  %v6349 = vld [vmem:[%s9 + $0xb30] sm:$0xff]
  %v6350 = vld [vmem:[%s9 + $0xb38] sm:$0xff]
  %v6351 = vld [vmem:[%s9 + $0xb40] sm:$0xf]
  %v6352 = vld [vmem:[%s9 + $0xb44] sm:$0xff]
  %v6353 = vld [vmem:[%s9 + $0xb4c] sm:$0xff]
  %v6354 = vld [vmem:[%s9 + $0xb54] sm:$0xff]
  %v6355 = vld [vmem:[%s9 + $0xb5c] sm:$0xf]
  %v6356 = vld [vmem:[%s9 + $0xb60] sm:$0xff]
  %v6357 = vld [vmem:[%s9 + $0xb68] sm:$0xff]
  %v6358 = vld [vmem:[%s9 + $0xb70] sm:$0xff]
  %v6359 = vld [vmem:[%s9 + $0xb78] sm:$0xf]
  %v6360 = vld [vmem:[%s9 + $0xb7c] sm:$0xff]
  %v6361 = vld [vmem:[%s9 + $0xb84] sm:$0xff]
  %v6362 = vld [vmem:[%s9 + $0xb8c] sm:$0xff]
  %v6363 = vld [vmem:[%s9 + $0xb94] sm:$0xf]
  %v6364 = vld [vmem:[%s9 + $0xb98] sm:$0xff]
  %v6365 = vld [vmem:[%s9 + $0xba0] sm:$0xff]
  %v6366 = vld [vmem:[%s9 + $0xba8] sm:$0xff]
  %v6367 = vld [vmem:[%s9 + $0xbb0] sm:$0xf]
  %v6368 = vld [vmem:[%s9 + $0xbb4] sm:$0xff]
  %v6369 = vld [vmem:[%s9 + $0xbbc] sm:$0xff]
  %v6370 = vld [vmem:[%s9 + $0xbc4] sm:$0xff]
  %v6371 = vld [vmem:[%s9 + $0xbcc] sm:$0xf]
  %v6372 = vld [vmem:[%s9 + $0xbd0] sm:$0xff]
  %v6373 = vld [vmem:[%s9 + $0xbd8] sm:$0xff]
  %v6374 = vld [vmem:[%s9 + $0xbe0] sm:$0xff]
  %v6375 = vld [vmem:[%s9 + $0xbe8] sm:$0xf]
  %v6376 = vld [vmem:[%s9 + $0xbec] sm:$0xff]
  %v6377 = vld [vmem:[%s9 + $0xbf4] sm:$0xff]
  %v6378 = vld [vmem:[%s9 + $0xbfc] sm:$0xff]
  %v6379 = vld [vmem:[%s9 + $0xc04] sm:$0xf]
  %v6380 = vld [vmem:[%s9 + $0xc08] sm:$0xff]
  %v6381 = vld [vmem:[%s9 + $0xc10] sm:$0xff]
  %v6382 = vld [vmem:[%s9 + $0xc18] sm:$0xff]
  %v6383 = vld [vmem:[%s9 + $0xc20] sm:$0xf]
  %v6384 = vld [vmem:[%s9 + $0xc24] sm:$0xff]
  %v6385 = vld [vmem:[%s9 + $0xc2c] sm:$0xff]
  %v6386 = vld [vmem:[%s9 + $0xc34] sm:$0xff]
  %v6387 = vld [vmem:[%s9 + $0xc3c] sm:$0xf]
  %v6388 = vld [vmem:[%s10] sm:$0xff]
  %v6390 = vlaneseq
  %v6391 = vshrl.u32 %v6390, 7
  %v6392 = vsub.s32 0, %v6391
  %v6393 = vrot.slane %v6388, %v6392
  %v6394 = vlaneseq
  %v6395 = vshrl.u32 %v6394, 7
  %v6396 = vsub.s32 1, %v6395
  %v6397 = vrot.slane %v6388, %v6396
  %v6398 = vlaneseq
  %v6399 = vshrl.u32 %v6398, 7
  %v6400 = vsub.s32 2, %v6399
  %v6401 = vrot.slane %v6388, %v6400
  %v6402 = vlaneseq
  %v6403 = vshrl.u32 %v6402, 7
  %v6404 = vsub.s32 3, %v6403
  %v6405 = vrot.slane %v6388, %v6404
  %v6406 = vlaneseq
  %v6407 = vshrl.u32 %v6406, 7
  %v6408 = vsub.s32 4, %v6407
  %v6409 = vrot.slane %v6388, %v6408
  %v6410 = vlaneseq
  %v6411 = vshrl.u32 %v6410, 7
  %v6412 = vsub.s32 5, %v6411
  %v6413 = vrot.slane %v6388, %v6412
  %v6414 = vlaneseq
  %v6415 = vshrl.u32 %v6414, 7
  %v6416 = vsub.s32 6, %v6415
  %v6417 = vrot.slane %v6388, %v6416
  %v6873 = vunpack.c.l.b16 %v5940
  %v6874 = vunpack.c.h.b16 %v5940
  %v6875 = vunpack.c.l.b16 %v5941
  %v6876 = vunpack.c.h.b16 %v5941
  %v6877 = vunpack.c.l.b16 %v5942
  %v6878 = vunpack.c.h.b16 %v5942
  %v6879 = vunpack.c.l.b16 %v5943
  %v6880 = vunpack.c.l.b16 %v5944
  %v6881 = vunpack.c.h.b16 %v5944
  %v6882 = vunpack.c.l.b16 %v5945
  %v6883 = vunpack.c.h.b16 %v5945
  %v6884 = vunpack.c.l.b16 %v5946
  %v6885 = vunpack.c.h.b16 %v5946
  %v6886 = vunpack.c.l.b16 %v5947
  %v6887 = vunpack.c.l.b16 %v5948
  %v6888 = vunpack.c.h.b16 %v5948
  %v6889 = vunpack.c.l.b16 %v5949
  %v6890 = vunpack.c.h.b16 %v5949
  %v6891 = vunpack.c.l.b16 %v5950
  %v6892 = vunpack.c.h.b16 %v5950
  %v6893 = vunpack.c.l.b16 %v5951
  %v6894 = vunpack.c.l.b16 %v5952
  %v6895 = vunpack.c.h.b16 %v5952
  %v6896 = vunpack.c.l.b16 %v5953
  %v6897 = vunpack.c.h.b16 %v5953
  %v6898 = vunpack.c.l.b16 %v5954
  %v6899 = vunpack.c.h.b16 %v5954
  %v6900 = vunpack.c.l.b16 %v5955
  %v6901 = vunpack.c.l.b16 %v5956
  %v6902 = vunpack.c.h.b16 %v5956
  %v6903 = vunpack.c.l.b16 %v5957
  %v6904 = vunpack.c.h.b16 %v5957
  %v6905 = vunpack.c.l.b16 %v5958
  %v6906 = vunpack.c.h.b16 %v5958
  %v6907 = vunpack.c.l.b16 %v5959
  %v6908 = vunpack.c.l.b16 %v5960
  %v6909 = vunpack.c.h.b16 %v5960
  %v6910 = vunpack.c.l.b16 %v5961
  %v6911 = vunpack.c.h.b16 %v5961
  %v6912 = vunpack.c.l.b16 %v5962
  %v6913 = vunpack.c.h.b16 %v5962
  %v6914 = vunpack.c.l.b16 %v5963
  %v6915 = vunpack.c.l.b16 %v5964
  %v6916 = vunpack.c.h.b16 %v5964
  %v6917 = vunpack.c.l.b16 %v5965
  %v6918 = vunpack.c.h.b16 %v5965
  %v6919 = vunpack.c.l.b16 %v5966
  %v6920 = vunpack.c.h.b16 %v5966
  %v6921 = vunpack.c.l.b16 %v5967
  %v6922 = vunpack.c.l.b16 %v5968
  %v6923 = vunpack.c.h.b16 %v5968
  %v6924 = vunpack.c.l.b16 %v5969
  %v6925 = vunpack.c.h.b16 %v5969
  %v6926 = vunpack.c.l.b16 %v5970
  %v6927 = vunpack.c.h.b16 %v5970
  %v6928 = vunpack.c.l.b16 %v5971
  %v6929 = vunpack.c.l.b16 %v5972
  %v6930 = vunpack.c.h.b16 %v5972
  %v6931 = vunpack.c.l.b16 %v5973
  %v6932 = vunpack.c.h.b16 %v5973
  %v6933 = vunpack.c.l.b16 %v5974
  %v6934 = vunpack.c.h.b16 %v5974
  %v6935 = vunpack.c.l.b16 %v5975
  %v6936 = vunpack.c.l.b16 %v5976
  %v6937 = vunpack.c.h.b16 %v5976
  %v6938 = vunpack.c.l.b16 %v5977
  %v6939 = vunpack.c.h.b16 %v5977
  %v6940 = vunpack.c.l.b16 %v5978
  %v6941 = vunpack.c.h.b16 %v5978
  %v6942 = vunpack.c.l.b16 %v5979
  %v6943 = vunpack.c.l.b16 %v5980
  %v6944 = vunpack.c.h.b16 %v5980
  %v6945 = vunpack.c.l.b16 %v5981
  %v6946 = vunpack.c.h.b16 %v5981
  %v6947 = vunpack.c.l.b16 %v5982
  %v6948 = vunpack.c.h.b16 %v5982
  %v6949 = vunpack.c.l.b16 %v5983
  %v6950 = vunpack.c.l.b16 %v5984
  %v6951 = vunpack.c.h.b16 %v5984
  %v6952 = vunpack.c.l.b16 %v5985
  %v6953 = vunpack.c.h.b16 %v5985
  %v6954 = vunpack.c.l.b16 %v5986
  %v6955 = vunpack.c.h.b16 %v5986
  %v6956 = vunpack.c.l.b16 %v5987
  %v6957 = vunpack.c.l.b16 %v5988
  %v6958 = vunpack.c.h.b16 %v5988
  %v6959 = vunpack.c.l.b16 %v5989
  %v6960 = vunpack.c.h.b16 %v5989
  %v6961 = vunpack.c.l.b16 %v5990
  %v6962 = vunpack.c.h.b16 %v5990
  %v6963 = vunpack.c.l.b16 %v5991
  %v6964 = vunpack.c.l.b16 %v5992
  %v6965 = vunpack.c.h.b16 %v5992
  %v6966 = vunpack.c.l.b16 %v5993
  %v6967 = vunpack.c.h.b16 %v5993
  %v6968 = vunpack.c.l.b16 %v5994
  %v6969 = vunpack.c.h.b16 %v5994
  %v6970 = vunpack.c.l.b16 %v5995
  %v6971 = vunpack.c.l.b16 %v5996
  %v6972 = vunpack.c.h.b16 %v5996
  %v6973 = vunpack.c.l.b16 %v5997
  %v6974 = vunpack.c.h.b16 %v5997
  %v6975 = vunpack.c.l.b16 %v5998
  %v6976 = vunpack.c.h.b16 %v5998
  %v6977 = vunpack.c.l.b16 %v5999
  %v6978 = vunpack.c.l.b16 %v6000
  %v6979 = vunpack.c.h.b16 %v6000
  %v6980 = vunpack.c.l.b16 %v6001
  %v6981 = vunpack.c.h.b16 %v6001
  %v6982 = vunpack.c.l.b16 %v6002
  %v6983 = vunpack.c.h.b16 %v6002
  %v6984 = vunpack.c.l.b16 %v6003
  %v6985 = vunpack.c.l.b16 %v6004
  %v6986 = vunpack.c.h.b16 %v6004
  %v6987 = vunpack.c.l.b16 %v6005
  %v6988 = vunpack.c.h.b16 %v6005
  %v6989 = vunpack.c.l.b16 %v6006
  %v6990 = vunpack.c.h.b16 %v6006
  %v6991 = vunpack.c.l.b16 %v6007
  %v6992 = vunpack.c.l.b16 %v6008
  %v6993 = vunpack.c.h.b16 %v6008
  %v6994 = vunpack.c.l.b16 %v6009
  %v6995 = vunpack.c.h.b16 %v6009
  %v6996 = vunpack.c.l.b16 %v6010
  %v6997 = vunpack.c.h.b16 %v6010
  %v6998 = vunpack.c.l.b16 %v6011
  %v6999 = vunpack.c.l.b16 %v6012
  %v7000 = vunpack.c.h.b16 %v6012
  %v7001 = vunpack.c.l.b16 %v6013
  %v7002 = vunpack.c.h.b16 %v6013
  %v7003 = vunpack.c.l.b16 %v6014
  %v7004 = vunpack.c.h.b16 %v6014
  %v7005 = vunpack.c.l.b16 %v6015
  %v7006 = vunpack.c.l.b16 %v6016
  %v7007 = vunpack.c.h.b16 %v6016
  %v7008 = vunpack.c.l.b16 %v6017
  %v7009 = vunpack.c.h.b16 %v6017
  %v7010 = vunpack.c.l.b16 %v6018
  %v7011 = vunpack.c.h.b16 %v6018
  %v7012 = vunpack.c.l.b16 %v6019
  %v7013 = vunpack.c.l.b16 %v6020
  %v7014 = vunpack.c.h.b16 %v6020
  %v7015 = vunpack.c.l.b16 %v6021
  %v7016 = vunpack.c.h.b16 %v6021
  %v7017 = vunpack.c.l.b16 %v6022
  %v7018 = vunpack.c.h.b16 %v6022
  %v7019 = vunpack.c.l.b16 %v6023
  %v7020 = vunpack.c.l.b16 %v6024
  %v7021 = vunpack.c.h.b16 %v6024
  %v7022 = vunpack.c.l.b16 %v6025
  %v7023 = vunpack.c.h.b16 %v6025
  %v7024 = vunpack.c.l.b16 %v6026
  %v7025 = vunpack.c.h.b16 %v6026
  %v7026 = vunpack.c.l.b16 %v6027
  %v7027 = vunpack.c.l.b16 %v6028
  %v7028 = vunpack.c.h.b16 %v6028
  %v7029 = vunpack.c.l.b16 %v6029
  %v7030 = vunpack.c.h.b16 %v6029
  %v7031 = vunpack.c.l.b16 %v6030
  %v7032 = vunpack.c.h.b16 %v6030
  %v7033 = vunpack.c.l.b16 %v6031
  %v7034 = vunpack.c.l.b16 %v6032
  %v7035 = vunpack.c.h.b16 %v6032
  %v7036 = vunpack.c.l.b16 %v6033
  %v7037 = vunpack.c.h.b16 %v6033
  %v7038 = vunpack.c.l.b16 %v6034
  %v7039 = vunpack.c.h.b16 %v6034
  %v7040 = vunpack.c.l.b16 %v6035
  %v7041 = vunpack.c.l.b16 %v6036
  %v7042 = vunpack.c.h.b16 %v6036
  %v7043 = vunpack.c.l.b16 %v6037
  %v7044 = vunpack.c.h.b16 %v6037
  %v7045 = vunpack.c.l.b16 %v6038
  %v7046 = vunpack.c.h.b16 %v6038
  %v7047 = vunpack.c.l.b16 %v6039
  %v7048 = vunpack.c.l.b16 %v6040
  %v7049 = vunpack.c.h.b16 %v6040
  %v7050 = vunpack.c.l.b16 %v6041
  %v7051 = vunpack.c.h.b16 %v6041
  %v7052 = vunpack.c.l.b16 %v6042
  %v7053 = vunpack.c.h.b16 %v6042
  %v7054 = vunpack.c.l.b16 %v6043
  %v7055 = vunpack.c.l.b16 %v6044
  %v7056 = vunpack.c.h.b16 %v6044
  %v7057 = vunpack.c.l.b16 %v6045
  %v7058 = vunpack.c.h.b16 %v6045
  %v7059 = vunpack.c.l.b16 %v6046
  %v7060 = vunpack.c.h.b16 %v6046
  %v7061 = vunpack.c.l.b16 %v6047
  %v7062 = vunpack.c.l.b16 %v6048
  %v7063 = vunpack.c.h.b16 %v6048
  %v7064 = vunpack.c.l.b16 %v6049
  %v7065 = vunpack.c.h.b16 %v6049
  %v7066 = vunpack.c.l.b16 %v6050
  %v7067 = vunpack.c.h.b16 %v6050
  %v7068 = vunpack.c.l.b16 %v6051
  %v7069 = vunpack.c.l.b16 %v6052
  %v7070 = vunpack.c.h.b16 %v6052
  %v7071 = vunpack.c.l.b16 %v6053
  %v7072 = vunpack.c.h.b16 %v6053
  %v7073 = vunpack.c.l.b16 %v6054
  %v7074 = vunpack.c.h.b16 %v6054
  %v7075 = vunpack.c.l.b16 %v6055
  %v7076 = vunpack.c.l.b16 %v6056
  %v7077 = vunpack.c.h.b16 %v6056
  %v7078 = vunpack.c.l.b16 %v6057
  %v7079 = vunpack.c.h.b16 %v6057
  %v7080 = vunpack.c.l.b16 %v6058
  %v7081 = vunpack.c.h.b16 %v6058
  %v7082 = vunpack.c.l.b16 %v6059
  %v7083 = vunpack.c.l.b16 %v6060
  %v7084 = vunpack.c.h.b16 %v6060
  %v7085 = vunpack.c.l.b16 %v6061
  %v7086 = vunpack.c.h.b16 %v6061
  %v7087 = vunpack.c.l.b16 %v6062
  %v7088 = vunpack.c.h.b16 %v6062
  %v7089 = vunpack.c.l.b16 %v6063
  %v7090 = vunpack.c.l.b16 %v6064
  %v7091 = vunpack.c.h.b16 %v6064
  %v7092 = vunpack.c.l.b16 %v6065
  %v7093 = vunpack.c.h.b16 %v6065
  %v7094 = vunpack.c.l.b16 %v6066
  %v7095 = vunpack.c.h.b16 %v6066
  %v7096 = vunpack.c.l.b16 %v6067
  %v7097 = vunpack.c.l.b16 %v6068
  %v7098 = vunpack.c.h.b16 %v6068
  %v7099 = vunpack.c.l.b16 %v6069
  %v7100 = vunpack.c.h.b16 %v6069
  %v7101 = vunpack.c.l.b16 %v6070
  %v7102 = vunpack.c.h.b16 %v6070
  %v7103 = vunpack.c.l.b16 %v6071
  %v7104 = vunpack.c.l.b16 %v6072
  %v7105 = vunpack.c.h.b16 %v6072
  %v7106 = vunpack.c.l.b16 %v6073
  %v7107 = vunpack.c.h.b16 %v6073
  %v7108 = vunpack.c.l.b16 %v6074
  %v7109 = vunpack.c.h.b16 %v6074
  %v7110 = vunpack.c.l.b16 %v6075
  %v7111 = vunpack.c.l.b16 %v6076
  %v7112 = vunpack.c.h.b16 %v6076
  %v7113 = vunpack.c.l.b16 %v6077
  %v7114 = vunpack.c.h.b16 %v6077
  %v7115 = vunpack.c.l.b16 %v6078
  %v7116 = vunpack.c.h.b16 %v6078
  %v7117 = vunpack.c.l.b16 %v6079
  %v7118 = vunpack.c.l.b16 %v6080
  %v7119 = vunpack.c.h.b16 %v6080
  %v7120 = vunpack.c.l.b16 %v6081
  %v7121 = vunpack.c.h.b16 %v6081
  %v7122 = vunpack.c.l.b16 %v6082
  %v7123 = vunpack.c.h.b16 %v6082
  %v7124 = vunpack.c.l.b16 %v6083
  %v7125 = vunpack.c.l.b16 %v6084
  %v7126 = vunpack.c.h.b16 %v6084
  %v7127 = vunpack.c.l.b16 %v6085
  %v7128 = vunpack.c.h.b16 %v6085
  %v7129 = vunpack.c.l.b16 %v6086
  %v7130 = vunpack.c.h.b16 %v6086
  %v7131 = vunpack.c.l.b16 %v6087
  %v7132 = vunpack.c.l.b16 %v6088
  %v7133 = vunpack.c.h.b16 %v6088
  %v7134 = vunpack.c.l.b16 %v6089
  %v7135 = vunpack.c.h.b16 %v6089
  %v7136 = vunpack.c.l.b16 %v6090
  %v7137 = vunpack.c.h.b16 %v6090
  %v7138 = vunpack.c.l.b16 %v6091
  %v7139 = vunpack.c.l.b16 %v6092
  %v7140 = vunpack.c.h.b16 %v6092
  %v7141 = vunpack.c.l.b16 %v6093
  %v7142 = vunpack.c.h.b16 %v6093
  %v7143 = vunpack.c.l.b16 %v6094
  %v7144 = vunpack.c.h.b16 %v6094
  %v7145 = vunpack.c.l.b16 %v6095
  %v7146 = vunpack.c.l.b16 %v6096
  %v7147 = vunpack.c.h.b16 %v6096
  %v7148 = vunpack.c.l.b16 %v6097
  %v7149 = vunpack.c.h.b16 %v6097
  %v7150 = vunpack.c.l.b16 %v6098
  %v7151 = vunpack.c.h.b16 %v6098
  %v7152 = vunpack.c.l.b16 %v6099
  %v7153 = vunpack.c.l.b16 %v6100
  %v7154 = vunpack.c.h.b16 %v6100
  %v7155 = vunpack.c.l.b16 %v6101
  %v7156 = vunpack.c.h.b16 %v6101
  %v7157 = vunpack.c.l.b16 %v6102
  %v7158 = vunpack.c.h.b16 %v6102
  %v7159 = vunpack.c.l.b16 %v6103
  %v7160 = vunpack.c.l.b16 %v6104
  %v7161 = vunpack.c.h.b16 %v6104
  %v7162 = vunpack.c.l.b16 %v6105
  %v7163 = vunpack.c.h.b16 %v6105
  %v7164 = vunpack.c.l.b16 %v6106
  %v7165 = vunpack.c.h.b16 %v6106
  %v7166 = vunpack.c.l.b16 %v6107
  %v7167 = vunpack.c.l.b16 %v6108
  %v7168 = vunpack.c.h.b16 %v6108
  %v7169 = vunpack.c.l.b16 %v6109
  %v7170 = vunpack.c.h.b16 %v6109
  %v7171 = vunpack.c.l.b16 %v6110
  %v7172 = vunpack.c.h.b16 %v6110
  %v7173 = vunpack.c.l.b16 %v6111
  %v7174 = vunpack.c.l.b16 %v6112
  %v7175 = vunpack.c.h.b16 %v6112
  %v7176 = vunpack.c.l.b16 %v6113
  %v7177 = vunpack.c.h.b16 %v6113
  %v7178 = vunpack.c.l.b16 %v6114
  %v7179 = vunpack.c.h.b16 %v6114
  %v7180 = vunpack.c.l.b16 %v6115
  %v7181 = vunpack.c.l.b16 %v6116
  %v7182 = vunpack.c.h.b16 %v6116
  %v7183 = vunpack.c.l.b16 %v6117
  %v7184 = vunpack.c.h.b16 %v6117
  %v7185 = vunpack.c.l.b16 %v6118
  %v7186 = vunpack.c.h.b16 %v6118
  %v7187 = vunpack.c.l.b16 %v6119
  %v7188 = vunpack.c.l.b16 %v6120
  %v7189 = vunpack.c.h.b16 %v6120
  %v7190 = vunpack.c.l.b16 %v6121
  %v7191 = vunpack.c.h.b16 %v6121
  %v7192 = vunpack.c.l.b16 %v6122
  %v7193 = vunpack.c.h.b16 %v6122
  %v7194 = vunpack.c.l.b16 %v6123
  %v7195 = vunpack.c.l.b16 %v6124
  %v7196 = vunpack.c.h.b16 %v6124
  %v7197 = vunpack.c.l.b16 %v6125
  %v7198 = vunpack.c.h.b16 %v6125
  %v7199 = vunpack.c.l.b16 %v6126
  %v7200 = vunpack.c.h.b16 %v6126
  %v7201 = vunpack.c.l.b16 %v6127
  %v7202 = vunpack.c.l.b16 %v6128
  %v7203 = vunpack.c.h.b16 %v6128
  %v7204 = vunpack.c.l.b16 %v6129
  %v7205 = vunpack.c.h.b16 %v6129
  %v7206 = vunpack.c.l.b16 %v6130
  %v7207 = vunpack.c.h.b16 %v6130
  %v7208 = vunpack.c.l.b16 %v6131
  %v7209 = vunpack.c.l.b16 %v6132
  %v7210 = vunpack.c.h.b16 %v6132
  %v7211 = vunpack.c.l.b16 %v6133
  %v7212 = vunpack.c.h.b16 %v6133
  %v7213 = vunpack.c.l.b16 %v6134
  %v7214 = vunpack.c.h.b16 %v6134
  %v7215 = vunpack.c.l.b16 %v6135
  %v7216 = vunpack.c.l.b16 %v6136
  %v7217 = vunpack.c.h.b16 %v6136
  %v7218 = vunpack.c.l.b16 %v6137
  %v7219 = vunpack.c.h.b16 %v6137
  %v7220 = vunpack.c.l.b16 %v6138
  %v7221 = vunpack.c.h.b16 %v6138
  %v7222 = vunpack.c.l.b16 %v6139
  %v7223 = vunpack.c.l.b16 %v6140
  %v7224 = vunpack.c.h.b16 %v6140
  %v7225 = vunpack.c.l.b16 %v6141
  %v7226 = vunpack.c.h.b16 %v6141
  %v7227 = vunpack.c.l.b16 %v6142
  %v7228 = vunpack.c.h.b16 %v6142
  %v7229 = vunpack.c.l.b16 %v6143
  %v7230 = vunpack.c.l.b16 %v6144
  %v7231 = vunpack.c.h.b16 %v6144
  %v7232 = vunpack.c.l.b16 %v6145
  %v7233 = vunpack.c.h.b16 %v6145
  %v7234 = vunpack.c.l.b16 %v6146
  %v7235 = vunpack.c.h.b16 %v6146
  %v7236 = vunpack.c.l.b16 %v6147
  %v7237 = vunpack.c.l.b16 %v6148
  %v7238 = vunpack.c.h.b16 %v6148
  %v7239 = vunpack.c.l.b16 %v6149
  %v7240 = vunpack.c.h.b16 %v6149
  %v7241 = vunpack.c.l.b16 %v6150
  %v7242 = vunpack.c.h.b16 %v6150
  %v7243 = vunpack.c.l.b16 %v6151
  %v7244 = vunpack.c.l.b16 %v6152
  %v7245 = vunpack.c.h.b16 %v6152
  %v7246 = vunpack.c.l.b16 %v6153
  %v7247 = vunpack.c.h.b16 %v6153
  %v7248 = vunpack.c.l.b16 %v6154
  %v7249 = vunpack.c.h.b16 %v6154
  %v7250 = vunpack.c.l.b16 %v6155
  %v7251 = vunpack.c.l.b16 %v6156
  %v7252 = vunpack.c.h.b16 %v6156
  %v7253 = vunpack.c.l.b16 %v6157
  %v7254 = vunpack.c.h.b16 %v6157
  %v7255 = vunpack.c.l.b16 %v6158
  %v7256 = vunpack.c.h.b16 %v6158
  %v7257 = vunpack.c.l.b16 %v6159
  %v7258 = vunpack.c.l.b16 %v6160
  %v7259 = vunpack.c.h.b16 %v6160
  %v7260 = vunpack.c.l.b16 %v6161
  %v7261 = vunpack.c.h.b16 %v6161
  %v7262 = vunpack.c.l.b16 %v6162
  %v7263 = vunpack.c.h.b16 %v6162
  %v7264 = vunpack.c.l.b16 %v6163
  %v7265 = vunpack.c.l.b16 %v6164
  %v7266 = vunpack.c.h.b16 %v6164
  %v7267 = vunpack.c.l.b16 %v6165
  %v7268 = vunpack.c.h.b16 %v6165
  %v7269 = vunpack.c.l.b16 %v6166
  %v7270 = vunpack.c.h.b16 %v6166
  %v7271 = vunpack.c.l.b16 %v6167
  %v7272 = vunpack.c.l.b16 %v6168
  %v7273 = vunpack.c.h.b16 %v6168
  %v7274 = vunpack.c.l.b16 %v6169
  %v7275 = vunpack.c.h.b16 %v6169
  %v7276 = vunpack.c.l.b16 %v6170
  %v7277 = vunpack.c.h.b16 %v6170
  %v7278 = vunpack.c.l.b16 %v6171
  %v7279 = vunpack.c.l.b16 %v6172
  %v7280 = vunpack.c.h.b16 %v6172
  %v7281 = vunpack.c.l.b16 %v6173
  %v7282 = vunpack.c.h.b16 %v6173
  %v7283 = vunpack.c.l.b16 %v6174
  %v7284 = vunpack.c.h.b16 %v6174
  %v7285 = vunpack.c.l.b16 %v6175
  %v7286 = vunpack.c.l.b16 %v6176
  %v7287 = vunpack.c.h.b16 %v6176
  %v7288 = vunpack.c.l.b16 %v6177
  %v7289 = vunpack.c.h.b16 %v6177
  %v7290 = vunpack.c.l.b16 %v6178
  %v7291 = vunpack.c.h.b16 %v6178
  %v7292 = vunpack.c.l.b16 %v6179
  %v7293 = vunpack.c.l.b16 %v6180
  %v7294 = vunpack.c.h.b16 %v6180
  %v7295 = vunpack.c.l.b16 %v6181
  %v7296 = vunpack.c.h.b16 %v6181
  %v7297 = vunpack.c.l.b16 %v6182
  %v7298 = vunpack.c.h.b16 %v6182
  %v7299 = vunpack.c.l.b16 %v6183
  %v7300 = vunpack.c.l.b16 %v6184
  %v7301 = vunpack.c.h.b16 %v6184
  %v7302 = vunpack.c.l.b16 %v6185
  %v7303 = vunpack.c.h.b16 %v6185
  %v7304 = vunpack.c.l.b16 %v6186
  %v7305 = vunpack.c.h.b16 %v6186
  %v7306 = vunpack.c.l.b16 %v6187
  %v7307 = vunpack.c.l.b16 %v6188
  %v7308 = vunpack.c.h.b16 %v6188
  %v7309 = vunpack.c.l.b16 %v6189
  %v7310 = vunpack.c.h.b16 %v6189
  %v7311 = vunpack.c.l.b16 %v6190
  %v7312 = vunpack.c.h.b16 %v6190
  %v7313 = vunpack.c.l.b16 %v6191
  %v7314 = vunpack.c.l.b16 %v6192
  %v7315 = vunpack.c.h.b16 %v6192
  %v7316 = vunpack.c.l.b16 %v6193
  %v7317 = vunpack.c.h.b16 %v6193
  %v7318 = vunpack.c.l.b16 %v6194
  %v7319 = vunpack.c.h.b16 %v6194
  %v7320 = vunpack.c.l.b16 %v6195
  %v7321 = vunpack.c.l.b16 %v6196
  %v7322 = vunpack.c.h.b16 %v6196
  %v7323 = vunpack.c.l.b16 %v6197
  %v7324 = vunpack.c.h.b16 %v6197
  %v7325 = vunpack.c.l.b16 %v6198
  %v7326 = vunpack.c.h.b16 %v6198
  %v7327 = vunpack.c.l.b16 %v6199
  %v7328 = vunpack.c.l.b16 %v6200
  %v7329 = vunpack.c.h.b16 %v6200
  %v7330 = vunpack.c.l.b16 %v6201
  %v7331 = vunpack.c.h.b16 %v6201
  %v7332 = vunpack.c.l.b16 %v6202
  %v7333 = vunpack.c.h.b16 %v6202
  %v7334 = vunpack.c.l.b16 %v6203
  %v7335 = vunpack.c.l.b16 %v6204
  %v7336 = vunpack.c.h.b16 %v6204
  %v7337 = vunpack.c.l.b16 %v6205
  %v7338 = vunpack.c.h.b16 %v6205
  %v7339 = vunpack.c.l.b16 %v6206
  %v7340 = vunpack.c.h.b16 %v6206
  %v7341 = vunpack.c.l.b16 %v6207
  %v7342 = vunpack.c.l.b16 %v6208
  %v7343 = vunpack.c.h.b16 %v6208
  %v7344 = vunpack.c.l.b16 %v6209
  %v7345 = vunpack.c.h.b16 %v6209
  %v7346 = vunpack.c.l.b16 %v6210
  %v7347 = vunpack.c.h.b16 %v6210
  %v7348 = vunpack.c.l.b16 %v6211
  %v7349 = vunpack.c.l.b16 %v6212
  %v7350 = vunpack.c.h.b16 %v6212
  %v7351 = vunpack.c.l.b16 %v6213
  %v7352 = vunpack.c.h.b16 %v6213
  %v7353 = vunpack.c.l.b16 %v6214
  %v7354 = vunpack.c.h.b16 %v6214
  %v7355 = vunpack.c.l.b16 %v6215
  %v7356 = vunpack.c.l.b16 %v6216
  %v7357 = vunpack.c.h.b16 %v6216
  %v7358 = vunpack.c.l.b16 %v6217
  %v7359 = vunpack.c.h.b16 %v6217
  %v7360 = vunpack.c.l.b16 %v6218
  %v7361 = vunpack.c.h.b16 %v6218
  %v7362 = vunpack.c.l.b16 %v6219
  %v7363 = vunpack.c.l.b16 %v6220
  %v7364 = vunpack.c.h.b16 %v6220
  %v7365 = vunpack.c.l.b16 %v6221
  %v7366 = vunpack.c.h.b16 %v6221
  %v7367 = vunpack.c.l.b16 %v6222
  %v7368 = vunpack.c.h.b16 %v6222
  %v7369 = vunpack.c.l.b16 %v6223
  %v7370 = vunpack.c.l.b16 %v6224
  %v7371 = vunpack.c.h.b16 %v6224
  %v7372 = vunpack.c.l.b16 %v6225
  %v7373 = vunpack.c.h.b16 %v6225
  %v7374 = vunpack.c.l.b16 %v6226
  %v7375 = vunpack.c.h.b16 %v6226
  %v7376 = vunpack.c.l.b16 %v6227
  %v7377 = vunpack.c.l.b16 %v6228
  %v7378 = vunpack.c.h.b16 %v6228
  %v7379 = vunpack.c.l.b16 %v6229
  %v7380 = vunpack.c.h.b16 %v6229
  %v7381 = vunpack.c.l.b16 %v6230
  %v7382 = vunpack.c.h.b16 %v6230
  %v7383 = vunpack.c.l.b16 %v6231
  %v7384 = vunpack.c.l.b16 %v6232
  %v7385 = vunpack.c.h.b16 %v6232
  %v7386 = vunpack.c.l.b16 %v6233
  %v7387 = vunpack.c.h.b16 %v6233
  %v7388 = vunpack.c.l.b16 %v6234
  %v7389 = vunpack.c.h.b16 %v6234
  %v7390 = vunpack.c.l.b16 %v6235
  %v7391 = vunpack.c.l.b16 %v6236
  %v7392 = vunpack.c.h.b16 %v6236
  %v7393 = vunpack.c.l.b16 %v6237
  %v7394 = vunpack.c.h.b16 %v6237
  %v7395 = vunpack.c.l.b16 %v6238
  %v7396 = vunpack.c.h.b16 %v6238
  %v7397 = vunpack.c.l.b16 %v6239
  %v7398 = vunpack.c.l.b16 %v6240
  %v7399 = vunpack.c.h.b16 %v6240
  %v7400 = vunpack.c.l.b16 %v6241
  %v7401 = vunpack.c.h.b16 %v6241
  %v7402 = vunpack.c.l.b16 %v6242
  %v7403 = vunpack.c.h.b16 %v6242
  %v7404 = vunpack.c.l.b16 %v6243
  %v7405 = vunpack.c.l.b16 %v6244
  %v7406 = vunpack.c.h.b16 %v6244
  %v7407 = vunpack.c.l.b16 %v6245
  %v7408 = vunpack.c.h.b16 %v6245
  %v7409 = vunpack.c.l.b16 %v6246
  %v7410 = vunpack.c.h.b16 %v6246
  %v7411 = vunpack.c.l.b16 %v6247
  %v7412 = vunpack.c.l.b16 %v6248
  %v7413 = vunpack.c.h.b16 %v6248
  %v7414 = vunpack.c.l.b16 %v6249
  %v7415 = vunpack.c.h.b16 %v6249
  %v7416 = vunpack.c.l.b16 %v6250
  %v7417 = vunpack.c.h.b16 %v6250
  %v7418 = vunpack.c.l.b16 %v6251
  %v7419 = vunpack.c.l.b16 %v6252
  %v7420 = vunpack.c.h.b16 %v6252
  %v7421 = vunpack.c.l.b16 %v6253
  %v7422 = vunpack.c.h.b16 %v6253
  %v7423 = vunpack.c.l.b16 %v6254
  %v7424 = vunpack.c.h.b16 %v6254
  %v7425 = vunpack.c.l.b16 %v6255
  %v7426 = vunpack.c.l.b16 %v6256
  %v7427 = vunpack.c.h.b16 %v6256
  %v7428 = vunpack.c.l.b16 %v6257
  %v7429 = vunpack.c.h.b16 %v6257
  %v7430 = vunpack.c.l.b16 %v6258
  %v7431 = vunpack.c.h.b16 %v6258
  %v7432 = vunpack.c.l.b16 %v6259
  %v7433 = vunpack.c.l.b16 %v6260
  %v7434 = vunpack.c.h.b16 %v6260
  %v7435 = vunpack.c.l.b16 %v6261
  %v7436 = vunpack.c.h.b16 %v6261
  %v7437 = vunpack.c.l.b16 %v6262
  %v7438 = vunpack.c.h.b16 %v6262
  %v7439 = vunpack.c.l.b16 %v6263
  %v7440 = vunpack.c.l.b16 %v6264
  %v7441 = vunpack.c.h.b16 %v6264
  %v7442 = vunpack.c.l.b16 %v6265
  %v7443 = vunpack.c.h.b16 %v6265
  %v7444 = vunpack.c.l.b16 %v6266
  %v7445 = vunpack.c.h.b16 %v6266
  %v7446 = vunpack.c.l.b16 %v6267
  %v7447 = vunpack.c.l.b16 %v6268
  %v7448 = vunpack.c.h.b16 %v6268
  %v7449 = vunpack.c.l.b16 %v6269
  %v7450 = vunpack.c.h.b16 %v6269
  %v7451 = vunpack.c.l.b16 %v6270
  %v7452 = vunpack.c.h.b16 %v6270
  %v7453 = vunpack.c.l.b16 %v6271
  %v7454 = vunpack.c.l.b16 %v6272
  %v7455 = vunpack.c.h.b16 %v6272
  %v7456 = vunpack.c.l.b16 %v6273
  %v7457 = vunpack.c.h.b16 %v6273
  %v7458 = vunpack.c.l.b16 %v6274
  %v7459 = vunpack.c.h.b16 %v6274
  %v7460 = vunpack.c.l.b16 %v6275
  %v7461 = vunpack.c.l.b16 %v6276
  %v7462 = vunpack.c.h.b16 %v6276
  %v7463 = vunpack.c.l.b16 %v6277
  %v7464 = vunpack.c.h.b16 %v6277
  %v7465 = vunpack.c.l.b16 %v6278
  %v7466 = vunpack.c.h.b16 %v6278
  %v7467 = vunpack.c.l.b16 %v6279
  %v7468 = vunpack.c.l.b16 %v6280
  %v7469 = vunpack.c.h.b16 %v6280
  %v7470 = vunpack.c.l.b16 %v6281
  %v7471 = vunpack.c.h.b16 %v6281
  %v7472 = vunpack.c.l.b16 %v6282
  %v7473 = vunpack.c.h.b16 %v6282
  %v7474 = vunpack.c.l.b16 %v6283
  %v7475 = vunpack.c.l.b16 %v6284
  %v7476 = vunpack.c.h.b16 %v6284
  %v7477 = vunpack.c.l.b16 %v6285
  %v7478 = vunpack.c.h.b16 %v6285
  %v7479 = vunpack.c.l.b16 %v6286
  %v7480 = vunpack.c.h.b16 %v6286
  %v7481 = vunpack.c.l.b16 %v6287
  %v7482 = vunpack.c.l.b16 %v6288
  %v7483 = vunpack.c.h.b16 %v6288
  %v7484 = vunpack.c.l.b16 %v6289
  %v7485 = vunpack.c.h.b16 %v6289
  %v7486 = vunpack.c.l.b16 %v6290
  %v7487 = vunpack.c.h.b16 %v6290
  %v7488 = vunpack.c.l.b16 %v6291
  %v7489 = vunpack.c.l.b16 %v6292
  %v7490 = vunpack.c.h.b16 %v6292
  %v7491 = vunpack.c.l.b16 %v6293
  %v7492 = vunpack.c.h.b16 %v6293
  %v7493 = vunpack.c.l.b16 %v6294
  %v7494 = vunpack.c.h.b16 %v6294
  %v7495 = vunpack.c.l.b16 %v6295
  %v7496 = vunpack.c.l.b16 %v6296
  %v7497 = vunpack.c.h.b16 %v6296
  %v7498 = vunpack.c.l.b16 %v6297
  %v7499 = vunpack.c.h.b16 %v6297
  %v7500 = vunpack.c.l.b16 %v6298
  %v7501 = vunpack.c.h.b16 %v6298
  %v7502 = vunpack.c.l.b16 %v6299
  %v7503 = vunpack.c.l.b16 %v6300
  %v7504 = vunpack.c.h.b16 %v6300
  %v7505 = vunpack.c.l.b16 %v6301
  %v7506 = vunpack.c.h.b16 %v6301
  %v7507 = vunpack.c.l.b16 %v6302
  %v7508 = vunpack.c.h.b16 %v6302
  %v7509 = vunpack.c.l.b16 %v6303
  %v7510 = vunpack.c.l.b16 %v6304
  %v7511 = vunpack.c.h.b16 %v6304
  %v7512 = vunpack.c.l.b16 %v6305
  %v7513 = vunpack.c.h.b16 %v6305
  %v7514 = vunpack.c.l.b16 %v6306
  %v7515 = vunpack.c.h.b16 %v6306
  %v7516 = vunpack.c.l.b16 %v6307
  %v7517 = vunpack.c.l.b16 %v6308
  %v7518 = vunpack.c.h.b16 %v6308
  %v7519 = vunpack.c.l.b16 %v6309
  %v7520 = vunpack.c.h.b16 %v6309
  %v7521 = vunpack.c.l.b16 %v6310
  %v7522 = vunpack.c.h.b16 %v6310
  %v7523 = vunpack.c.l.b16 %v6311
  %v7524 = vunpack.c.l.b16 %v6312
  %v7525 = vunpack.c.h.b16 %v6312
  %v7526 = vunpack.c.l.b16 %v6313
  %v7527 = vunpack.c.h.b16 %v6313
  %v7528 = vunpack.c.l.b16 %v6314
  %v7529 = vunpack.c.h.b16 %v6314
  %v7530 = vunpack.c.l.b16 %v6315
  %v7531 = vunpack.c.l.b16 %v6316
  %v7532 = vunpack.c.h.b16 %v6316
  %v7533 = vunpack.c.l.b16 %v6317
  %v7534 = vunpack.c.h.b16 %v6317
  %v7535 = vunpack.c.l.b16 %v6318
  %v7536 = vunpack.c.h.b16 %v6318
  %v7537 = vunpack.c.l.b16 %v6319
  %v7538 = vunpack.c.l.b16 %v6320
  %v7539 = vunpack.c.h.b16 %v6320
  %v7540 = vunpack.c.l.b16 %v6321
  %v7541 = vunpack.c.h.b16 %v6321
  %v7542 = vunpack.c.l.b16 %v6322
  %v7543 = vunpack.c.h.b16 %v6322
  %v7544 = vunpack.c.l.b16 %v6323
  %v7545 = vunpack.c.l.b16 %v6324
  %v7546 = vunpack.c.h.b16 %v6324
  %v7547 = vunpack.c.l.b16 %v6325
  %v7548 = vunpack.c.h.b16 %v6325
  %v7549 = vunpack.c.l.b16 %v6326
  %v7550 = vunpack.c.h.b16 %v6326
  %v7551 = vunpack.c.l.b16 %v6327
  %v7552 = vunpack.c.l.b16 %v6328
  %v7553 = vunpack.c.h.b16 %v6328
  %v7554 = vunpack.c.l.b16 %v6329
  %v7555 = vunpack.c.h.b16 %v6329
  %v7556 = vunpack.c.l.b16 %v6330
  %v7557 = vunpack.c.h.b16 %v6330
  %v7558 = vunpack.c.l.b16 %v6331
  %v7559 = vunpack.c.l.b16 %v6332
  %v7560 = vunpack.c.h.b16 %v6332
  %v7561 = vunpack.c.l.b16 %v6333
  %v7562 = vunpack.c.h.b16 %v6333
  %v7563 = vunpack.c.l.b16 %v6334
  %v7564 = vunpack.c.h.b16 %v6334
  %v7565 = vunpack.c.l.b16 %v6335
  %v7566 = vunpack.c.l.b16 %v6336
  %v7567 = vunpack.c.h.b16 %v6336
  %v7568 = vunpack.c.l.b16 %v6337
  %v7569 = vunpack.c.h.b16 %v6337
  %v7570 = vunpack.c.l.b16 %v6338
  %v7571 = vunpack.c.h.b16 %v6338
  %v7572 = vunpack.c.l.b16 %v6339
  %v7573 = vunpack.c.l.b16 %v6340
  %v7574 = vunpack.c.h.b16 %v6340
  %v7575 = vunpack.c.l.b16 %v6341
  %v7576 = vunpack.c.h.b16 %v6341
  %v7577 = vunpack.c.l.b16 %v6342
  %v7578 = vunpack.c.h.b16 %v6342
  %v7579 = vunpack.c.l.b16 %v6343
  %v7580 = vunpack.c.l.b16 %v6344
  %v7581 = vunpack.c.h.b16 %v6344
  %v7582 = vunpack.c.l.b16 %v6345
  %v7583 = vunpack.c.h.b16 %v6345
  %v7584 = vunpack.c.l.b16 %v6346
  %v7585 = vunpack.c.h.b16 %v6346
  %v7586 = vunpack.c.l.b16 %v6347
  %v7587 = vunpack.c.l.b16 %v6348
  %v7588 = vunpack.c.h.b16 %v6348
  %v7589 = vunpack.c.l.b16 %v6349
  %v7590 = vunpack.c.h.b16 %v6349
  %v7591 = vunpack.c.l.b16 %v6350
  %v7592 = vunpack.c.h.b16 %v6350
  %v7593 = vunpack.c.l.b16 %v6351
  %v7594 = vunpack.c.l.b16 %v6352
  %v7595 = vunpack.c.h.b16 %v6352
  %v7596 = vunpack.c.l.b16 %v6353
  %v7597 = vunpack.c.h.b16 %v6353
  %v7598 = vunpack.c.l.b16 %v6354
  %v7599 = vunpack.c.h.b16 %v6354
  %v7600 = vunpack.c.l.b16 %v6355
  %v7601 = vunpack.c.l.b16 %v6356
  %v7602 = vunpack.c.h.b16 %v6356
  %v7603 = vunpack.c.l.b16 %v6357
  %v7604 = vunpack.c.h.b16 %v6357
  %v7605 = vunpack.c.l.b16 %v6358
  %v7606 = vunpack.c.h.b16 %v6358
  %v7607 = vunpack.c.l.b16 %v6359
  %v7608 = vunpack.c.l.b16 %v6360
  %v7609 = vunpack.c.h.b16 %v6360
  %v7610 = vunpack.c.l.b16 %v6361
  %v7611 = vunpack.c.h.b16 %v6361
  %v7612 = vunpack.c.l.b16 %v6362
  %v7613 = vunpack.c.h.b16 %v6362
  %v7614 = vunpack.c.l.b16 %v6363
  %v7615 = vunpack.c.l.b16 %v6364
  %v7616 = vunpack.c.h.b16 %v6364
  %v7617 = vunpack.c.l.b16 %v6365
  %v7618 = vunpack.c.h.b16 %v6365
  %v7619 = vunpack.c.l.b16 %v6366
  %v7620 = vunpack.c.h.b16 %v6366
  %v7621 = vunpack.c.l.b16 %v6367
  %v7622 = vunpack.c.l.b16 %v6368
  %v7623 = vunpack.c.h.b16 %v6368
  %v7624 = vunpack.c.l.b16 %v6369
  %v7625 = vunpack.c.h.b16 %v6369
  %v7626 = vunpack.c.l.b16 %v6370
  %v7627 = vunpack.c.h.b16 %v6370
  %v7628 = vunpack.c.l.b16 %v6371
  %v7629 = vunpack.c.l.b16 %v6372
  %v7630 = vunpack.c.h.b16 %v6372
  %v7631 = vunpack.c.l.b16 %v6373
  %v7632 = vunpack.c.h.b16 %v6373
  %v7633 = vunpack.c.l.b16 %v6374
  %v7634 = vunpack.c.h.b16 %v6374
  %v7635 = vunpack.c.l.b16 %v6375
  %v7636 = vunpack.c.l.b16 %v6376
  %v7637 = vunpack.c.h.b16 %v6376
  %v7638 = vunpack.c.l.b16 %v6377
  %v7639 = vunpack.c.h.b16 %v6377
  %v7640 = vunpack.c.l.b16 %v6378
  %v7641 = vunpack.c.h.b16 %v6378
  %v7642 = vunpack.c.l.b16 %v6379
  %v7643 = vunpack.c.l.b16 %v6380
  %v7644 = vunpack.c.h.b16 %v6380
  %v7645 = vunpack.c.l.b16 %v6381
  %v7646 = vunpack.c.h.b16 %v6381
  %v7647 = vunpack.c.l.b16 %v6382
  %v7648 = vunpack.c.h.b16 %v6382
  %v7649 = vunpack.c.l.b16 %v6383
  %v7650 = vunpack.c.l.b16 %v6384
  %v7651 = vunpack.c.h.b16 %v6384
  %v7652 = vunpack.c.l.b16 %v6385
  %v7653 = vunpack.c.h.b16 %v6385
  %v7654 = vunpack.c.l.b16 %v6386
  %v7655 = vunpack.c.h.b16 %v6386
  %v7656 = vunpack.c.l.b16 %v6387
  %v7657 = vpack.c.b16 %v6880, %v6873
  %v7658 = vpack.c.b16 %v6881, %v6874
  %v7659 = vpack.c.b16 %v6882, %v6875
  %v7660 = vpack.c.b16 %v6883, %v6876
  %v7661 = vpack.c.b16 %v6884, %v6877
  %v7662 = vpack.c.b16 %v6885, %v6878
  %v7663 = vpack.c.b16 %v6886, %v6879
  %v7664 = vpack.c.b16 %v6894, %v6887
  %v7665 = vpack.c.b16 %v6895, %v6888
  %v7666 = vpack.c.b16 %v6896, %v6889
  %v7667 = vpack.c.b16 %v6897, %v6890
  %v7668 = vpack.c.b16 %v6898, %v6891
  %v7669 = vpack.c.b16 %v6899, %v6892
  %v7670 = vpack.c.b16 %v6900, %v6893
  %v7671 = vpack.c.b16 %v6908, %v6901
  %v7672 = vpack.c.b16 %v6909, %v6902
  %v7673 = vpack.c.b16 %v6910, %v6903
  %v7674 = vpack.c.b16 %v6911, %v6904
  %v7675 = vpack.c.b16 %v6912, %v6905
  %v7676 = vpack.c.b16 %v6913, %v6906
  %v7677 = vpack.c.b16 %v6914, %v6907
  %v7678 = vpack.c.b16 %v6922, %v6915
  %v7679 = vpack.c.b16 %v6923, %v6916
  %v7680 = vpack.c.b16 %v6924, %v6917
  %v7681 = vpack.c.b16 %v6925, %v6918
  %v7682 = vpack.c.b16 %v6926, %v6919
  %v7683 = vpack.c.b16 %v6927, %v6920
  %v7684 = vpack.c.b16 %v6928, %v6921
  %v7685 = vpack.c.b16 %v6936, %v6929
  %v7686 = vpack.c.b16 %v6937, %v6930
  %v7687 = vpack.c.b16 %v6938, %v6931
  %v7688 = vpack.c.b16 %v6939, %v6932
  %v7689 = vpack.c.b16 %v6940, %v6933
  %v7690 = vpack.c.b16 %v6941, %v6934
  %v7691 = vpack.c.b16 %v6942, %v6935
  %v7692 = vpack.c.b16 %v6950, %v6943
  %v7693 = vpack.c.b16 %v6951, %v6944
  %v7694 = vpack.c.b16 %v6952, %v6945
  %v7695 = vpack.c.b16 %v6953, %v6946
  %v7696 = vpack.c.b16 %v6954, %v6947
  %v7697 = vpack.c.b16 %v6955, %v6948
  %v7698 = vpack.c.b16 %v6956, %v6949
  %v7699 = vpack.c.b16 %v6964, %v6957
  %v7700 = vpack.c.b16 %v6965, %v6958
  %v7701 = vpack.c.b16 %v6966, %v6959
  %v7702 = vpack.c.b16 %v6967, %v6960
  %v7703 = vpack.c.b16 %v6968, %v6961
  %v7704 = vpack.c.b16 %v6969, %v6962
  %v7705 = vpack.c.b16 %v6970, %v6963
  %v7706 = vpack.c.b16 %v6978, %v6971
  %v7707 = vpack.c.b16 %v6979, %v6972
  %v7708 = vpack.c.b16 %v6980, %v6973
  %v7709 = vpack.c.b16 %v6981, %v6974
  %v7710 = vpack.c.b16 %v6982, %v6975
  %v7711 = vpack.c.b16 %v6983, %v6976
  %v7712 = vpack.c.b16 %v6984, %v6977
  %v7713 = vpack.c.b16 %v6992, %v6985
  %v7714 = vpack.c.b16 %v6993, %v6986
  %v7715 = vpack.c.b16 %v6994, %v6987
  %v7716 = vpack.c.b16 %v6995, %v6988
  %v7717 = vpack.c.b16 %v6996, %v6989
  %v7718 = vpack.c.b16 %v6997, %v6990
  %v7719 = vpack.c.b16 %v6998, %v6991
  %v7720 = vpack.c.b16 %v7006, %v6999
  %v7721 = vpack.c.b16 %v7007, %v7000
  %v7722 = vpack.c.b16 %v7008, %v7001
  %v7723 = vpack.c.b16 %v7009, %v7002
  %v7724 = vpack.c.b16 %v7010, %v7003
  %v7725 = vpack.c.b16 %v7011, %v7004
  %v7726 = vpack.c.b16 %v7012, %v7005
  %v7727 = vpack.c.b16 %v7020, %v7013
  %v7728 = vpack.c.b16 %v7021, %v7014
  %v7729 = vpack.c.b16 %v7022, %v7015
  %v7730 = vpack.c.b16 %v7023, %v7016
  %v7731 = vpack.c.b16 %v7024, %v7017
  %v7732 = vpack.c.b16 %v7025, %v7018
  %v7733 = vpack.c.b16 %v7026, %v7019
  %v7734 = vpack.c.b16 %v7034, %v7027
  %v7735 = vpack.c.b16 %v7035, %v7028
  %v7736 = vpack.c.b16 %v7036, %v7029
  %v7737 = vpack.c.b16 %v7037, %v7030
  %v7738 = vpack.c.b16 %v7038, %v7031
  %v7739 = vpack.c.b16 %v7039, %v7032
  %v7740 = vpack.c.b16 %v7040, %v7033
  %v7741 = vpack.c.b16 %v7048, %v7041
  %v7742 = vpack.c.b16 %v7049, %v7042
  %v7743 = vpack.c.b16 %v7050, %v7043
  %v7744 = vpack.c.b16 %v7051, %v7044
  %v7745 = vpack.c.b16 %v7052, %v7045
  %v7746 = vpack.c.b16 %v7053, %v7046
  %v7747 = vpack.c.b16 %v7054, %v7047
  %v7748 = vpack.c.b16 %v7062, %v7055
  %v7749 = vpack.c.b16 %v7063, %v7056
  %v7750 = vpack.c.b16 %v7064, %v7057
  %v7751 = vpack.c.b16 %v7065, %v7058
  %v7752 = vpack.c.b16 %v7066, %v7059
  %v7753 = vpack.c.b16 %v7067, %v7060
  %v7754 = vpack.c.b16 %v7068, %v7061
  %v7755 = vpack.c.b16 %v7076, %v7069
  %v7756 = vpack.c.b16 %v7077, %v7070
  %v7757 = vpack.c.b16 %v7078, %v7071
  %v7758 = vpack.c.b16 %v7079, %v7072
  %v7759 = vpack.c.b16 %v7080, %v7073
  %v7760 = vpack.c.b16 %v7081, %v7074
  %v7761 = vpack.c.b16 %v7082, %v7075
  %v7762 = vpack.c.b16 %v7090, %v7083
  %v7763 = vpack.c.b16 %v7091, %v7084
  %v7764 = vpack.c.b16 %v7092, %v7085
  %v7765 = vpack.c.b16 %v7093, %v7086
  %v7766 = vpack.c.b16 %v7094, %v7087
  %v7767 = vpack.c.b16 %v7095, %v7088
  %v7768 = vpack.c.b16 %v7096, %v7089
  %v7769 = vpack.c.b16 %v7104, %v7097
  %v7770 = vpack.c.b16 %v7105, %v7098
  %v7771 = vpack.c.b16 %v7106, %v7099
  %v7772 = vpack.c.b16 %v7107, %v7100
  %v7773 = vpack.c.b16 %v7108, %v7101
  %v7774 = vpack.c.b16 %v7109, %v7102
  %v7775 = vpack.c.b16 %v7110, %v7103
  %v7776 = vpack.c.b16 %v7118, %v7111
  %v7777 = vpack.c.b16 %v7119, %v7112
  %v7778 = vpack.c.b16 %v7120, %v7113
  %v7779 = vpack.c.b16 %v7121, %v7114
  %v7780 = vpack.c.b16 %v7122, %v7115
  %v7781 = vpack.c.b16 %v7123, %v7116
  %v7782 = vpack.c.b16 %v7124, %v7117
  %v7783 = vpack.c.b16 %v7132, %v7125
  %v7784 = vpack.c.b16 %v7133, %v7126
  %v7785 = vpack.c.b16 %v7134, %v7127
  %v7786 = vpack.c.b16 %v7135, %v7128
  %v7787 = vpack.c.b16 %v7136, %v7129
  %v7788 = vpack.c.b16 %v7137, %v7130
  %v7789 = vpack.c.b16 %v7138, %v7131
  %v7790 = vpack.c.b16 %v7146, %v7139
  %v7791 = vpack.c.b16 %v7147, %v7140
  %v7792 = vpack.c.b16 %v7148, %v7141
  %v7793 = vpack.c.b16 %v7149, %v7142
  %v7794 = vpack.c.b16 %v7150, %v7143
  %v7795 = vpack.c.b16 %v7151, %v7144
  %v7796 = vpack.c.b16 %v7152, %v7145
  %v7797 = vpack.c.b16 %v7160, %v7153
  %v7798 = vpack.c.b16 %v7161, %v7154
  %v7799 = vpack.c.b16 %v7162, %v7155
  %v7800 = vpack.c.b16 %v7163, %v7156
  %v7801 = vpack.c.b16 %v7164, %v7157
  %v7802 = vpack.c.b16 %v7165, %v7158
  %v7803 = vpack.c.b16 %v7166, %v7159
  %v7804 = vpack.c.b16 %v7174, %v7167
  %v7805 = vpack.c.b16 %v7175, %v7168
  %v7806 = vpack.c.b16 %v7176, %v7169
  %v7807 = vpack.c.b16 %v7177, %v7170
  %v7808 = vpack.c.b16 %v7178, %v7171
  %v7809 = vpack.c.b16 %v7179, %v7172
  %v7810 = vpack.c.b16 %v7180, %v7173
  %v7811 = vpack.c.b16 %v7188, %v7181
  %v7812 = vpack.c.b16 %v7189, %v7182
  %v7813 = vpack.c.b16 %v7190, %v7183
  %v7814 = vpack.c.b16 %v7191, %v7184
  %v7815 = vpack.c.b16 %v7192, %v7185
  %v7816 = vpack.c.b16 %v7193, %v7186
  %v7817 = vpack.c.b16 %v7194, %v7187
  %v7818 = vpack.c.b16 %v7202, %v7195
  %v7819 = vpack.c.b16 %v7203, %v7196
  %v7820 = vpack.c.b16 %v7204, %v7197
  %v7821 = vpack.c.b16 %v7205, %v7198
  %v7822 = vpack.c.b16 %v7206, %v7199
  %v7823 = vpack.c.b16 %v7207, %v7200
  %v7824 = vpack.c.b16 %v7208, %v7201
  %v7825 = vpack.c.b16 %v7216, %v7209
  %v7826 = vpack.c.b16 %v7217, %v7210
  %v7827 = vpack.c.b16 %v7218, %v7211
  %v7828 = vpack.c.b16 %v7219, %v7212
  %v7829 = vpack.c.b16 %v7220, %v7213
  %v7830 = vpack.c.b16 %v7221, %v7214
  %v7831 = vpack.c.b16 %v7222, %v7215
  %v7832 = vpack.c.b16 %v7230, %v7223
  %v7833 = vpack.c.b16 %v7231, %v7224
  %v7834 = vpack.c.b16 %v7232, %v7225
  %v7835 = vpack.c.b16 %v7233, %v7226
  %v7836 = vpack.c.b16 %v7234, %v7227
  %v7837 = vpack.c.b16 %v7235, %v7228
  %v7838 = vpack.c.b16 %v7236, %v7229
  %v7839 = vpack.c.b16 %v7244, %v7237
  %v7840 = vpack.c.b16 %v7245, %v7238
  %v7841 = vpack.c.b16 %v7246, %v7239
  %v7842 = vpack.c.b16 %v7247, %v7240
  %v7843 = vpack.c.b16 %v7248, %v7241
  %v7844 = vpack.c.b16 %v7249, %v7242
  %v7845 = vpack.c.b16 %v7250, %v7243
  %v7846 = vpack.c.b16 %v7258, %v7251
  %v7847 = vpack.c.b16 %v7259, %v7252
  %v7848 = vpack.c.b16 %v7260, %v7253
  %v7849 = vpack.c.b16 %v7261, %v7254
  %v7850 = vpack.c.b16 %v7262, %v7255
  %v7851 = vpack.c.b16 %v7263, %v7256
  %v7852 = vpack.c.b16 %v7264, %v7257
  %v7853 = vpack.c.b16 %v7272, %v7265
  %v7854 = vpack.c.b16 %v7273, %v7266
  %v7855 = vpack.c.b16 %v7274, %v7267
  %v7856 = vpack.c.b16 %v7275, %v7268
  %v7857 = vpack.c.b16 %v7276, %v7269
  %v7858 = vpack.c.b16 %v7277, %v7270
  %v7859 = vpack.c.b16 %v7278, %v7271
  %v7860 = vpack.c.b16 %v7286, %v7279
  %v7861 = vpack.c.b16 %v7287, %v7280
  %v7862 = vpack.c.b16 %v7288, %v7281
  %v7863 = vpack.c.b16 %v7289, %v7282
  %v7864 = vpack.c.b16 %v7290, %v7283
  %v7865 = vpack.c.b16 %v7291, %v7284
  %v7866 = vpack.c.b16 %v7292, %v7285
  %v7867 = vpack.c.b16 %v7300, %v7293
  %v7868 = vpack.c.b16 %v7301, %v7294
  %v7869 = vpack.c.b16 %v7302, %v7295
  %v7870 = vpack.c.b16 %v7303, %v7296
  %v7871 = vpack.c.b16 %v7304, %v7297
  %v7872 = vpack.c.b16 %v7305, %v7298
  %v7873 = vpack.c.b16 %v7306, %v7299
  %v7874 = vpack.c.b16 %v7314, %v7307
  %v7875 = vpack.c.b16 %v7315, %v7308
  %v7876 = vpack.c.b16 %v7316, %v7309
  %v7877 = vpack.c.b16 %v7317, %v7310
  %v7878 = vpack.c.b16 %v7318, %v7311
  %v7879 = vpack.c.b16 %v7319, %v7312
  %v7880 = vpack.c.b16 %v7320, %v7313
  %v7881 = vpack.c.b16 %v7328, %v7321
  %v7882 = vpack.c.b16 %v7329, %v7322
  %v7883 = vpack.c.b16 %v7330, %v7323
  %v7884 = vpack.c.b16 %v7331, %v7324
  %v7885 = vpack.c.b16 %v7332, %v7325
  %v7886 = vpack.c.b16 %v7333, %v7326
  %v7887 = vpack.c.b16 %v7334, %v7327
  %v7888 = vpack.c.b16 %v7342, %v7335
  %v7889 = vpack.c.b16 %v7343, %v7336
  %v7890 = vpack.c.b16 %v7344, %v7337
  %v7891 = vpack.c.b16 %v7345, %v7338
  %v7892 = vpack.c.b16 %v7346, %v7339
  %v7893 = vpack.c.b16 %v7347, %v7340
  %v7894 = vpack.c.b16 %v7348, %v7341
  %v7895 = vpack.c.b16 %v7356, %v7349
  %v7896 = vpack.c.b16 %v7357, %v7350
  %v7897 = vpack.c.b16 %v7358, %v7351
  %v7898 = vpack.c.b16 %v7359, %v7352
  %v7899 = vpack.c.b16 %v7360, %v7353
  %v7900 = vpack.c.b16 %v7361, %v7354
  %v7901 = vpack.c.b16 %v7362, %v7355
  %v7902 = vpack.c.b16 %v7370, %v7363
  %v7903 = vpack.c.b16 %v7371, %v7364
  %v7904 = vpack.c.b16 %v7372, %v7365
  %v7905 = vpack.c.b16 %v7373, %v7366
  %v7906 = vpack.c.b16 %v7374, %v7367
  %v7907 = vpack.c.b16 %v7375, %v7368
  %v7908 = vpack.c.b16 %v7376, %v7369
  %v7909 = vpack.c.b16 %v7384, %v7377
  %v7910 = vpack.c.b16 %v7385, %v7378
  %v7911 = vpack.c.b16 %v7386, %v7379
  %v7912 = vpack.c.b16 %v7387, %v7380
  %v7913 = vpack.c.b16 %v7388, %v7381
  %v7914 = vpack.c.b16 %v7389, %v7382
  %v7915 = vpack.c.b16 %v7390, %v7383
  %v7916 = vpack.c.b16 %v7398, %v7391
  %v7917 = vpack.c.b16 %v7399, %v7392
  %v7918 = vpack.c.b16 %v7400, %v7393
  %v7919 = vpack.c.b16 %v7401, %v7394
  %v7920 = vpack.c.b16 %v7402, %v7395
  %v7921 = vpack.c.b16 %v7403, %v7396
  %v7922 = vpack.c.b16 %v7404, %v7397
  %v7923 = vpack.c.b16 %v7412, %v7405
  %v7924 = vpack.c.b16 %v7413, %v7406
  %v7925 = vpack.c.b16 %v7414, %v7407
  %v7926 = vpack.c.b16 %v7415, %v7408
  %v7927 = vpack.c.b16 %v7416, %v7409
  %v7928 = vpack.c.b16 %v7417, %v7410
  %v7929 = vpack.c.b16 %v7418, %v7411
  %v7930 = vpack.c.b16 %v7426, %v7419
  %v7931 = vpack.c.b16 %v7427, %v7420
  %v7932 = vpack.c.b16 %v7428, %v7421
  %v7933 = vpack.c.b16 %v7429, %v7422
  %v7934 = vpack.c.b16 %v7430, %v7423
  %v7935 = vpack.c.b16 %v7431, %v7424
  %v7936 = vpack.c.b16 %v7432, %v7425
  %v7937 = vpack.c.b16 %v7440, %v7433
  %v7938 = vpack.c.b16 %v7441, %v7434
  %v7939 = vpack.c.b16 %v7442, %v7435
  %v7940 = vpack.c.b16 %v7443, %v7436
  %v7941 = vpack.c.b16 %v7444, %v7437
  %v7942 = vpack.c.b16 %v7445, %v7438
  %v7943 = vpack.c.b16 %v7446, %v7439
  %v7944 = vpack.c.b16 %v7454, %v7447
  %v7945 = vpack.c.b16 %v7455, %v7448
  %v7946 = vpack.c.b16 %v7456, %v7449
  %v7947 = vpack.c.b16 %v7457, %v7450
  %v7948 = vpack.c.b16 %v7458, %v7451
  %v7949 = vpack.c.b16 %v7459, %v7452
  %v7950 = vpack.c.b16 %v7460, %v7453
  %v7951 = vpack.c.b16 %v7468, %v7461
  %v7952 = vpack.c.b16 %v7469, %v7462
  %v7953 = vpack.c.b16 %v7470, %v7463
  %v7954 = vpack.c.b16 %v7471, %v7464
  %v7955 = vpack.c.b16 %v7472, %v7465
  %v7956 = vpack.c.b16 %v7473, %v7466
  %v7957 = vpack.c.b16 %v7474, %v7467
  %v7958 = vpack.c.b16 %v7482, %v7475
  %v7959 = vpack.c.b16 %v7483, %v7476
  %v7960 = vpack.c.b16 %v7484, %v7477
  %v7961 = vpack.c.b16 %v7485, %v7478
  %v7962 = vpack.c.b16 %v7486, %v7479
  %v7963 = vpack.c.b16 %v7487, %v7480
  %v7964 = vpack.c.b16 %v7488, %v7481
  %v7965 = vpack.c.b16 %v7496, %v7489
  %v7966 = vpack.c.b16 %v7497, %v7490
  %v7967 = vpack.c.b16 %v7498, %v7491
  %v7968 = vpack.c.b16 %v7499, %v7492
  %v7969 = vpack.c.b16 %v7500, %v7493
  %v7970 = vpack.c.b16 %v7501, %v7494
  %v7971 = vpack.c.b16 %v7502, %v7495
  %v7972 = vpack.c.b16 %v7510, %v7503
  %v7973 = vpack.c.b16 %v7511, %v7504
  %v7974 = vpack.c.b16 %v7512, %v7505
  %v7975 = vpack.c.b16 %v7513, %v7506
  %v7976 = vpack.c.b16 %v7514, %v7507
  %v7977 = vpack.c.b16 %v7515, %v7508
  %v7978 = vpack.c.b16 %v7516, %v7509
  %v7979 = vpack.c.b16 %v7524, %v7517
  %v7980 = vpack.c.b16 %v7525, %v7518
  %v7981 = vpack.c.b16 %v7526, %v7519
  %v7982 = vpack.c.b16 %v7527, %v7520
  %v7983 = vpack.c.b16 %v7528, %v7521
  %v7984 = vpack.c.b16 %v7529, %v7522
  %v7985 = vpack.c.b16 %v7530, %v7523
  %v7986 = vpack.c.b16 %v7538, %v7531
  %v7987 = vpack.c.b16 %v7539, %v7532
  %v7988 = vpack.c.b16 %v7540, %v7533
  %v7989 = vpack.c.b16 %v7541, %v7534
  %v7990 = vpack.c.b16 %v7542, %v7535
  %v7991 = vpack.c.b16 %v7543, %v7536
  %v7992 = vpack.c.b16 %v7544, %v7537
  %v7993 = vpack.c.b16 %v7552, %v7545
  %v7994 = vpack.c.b16 %v7553, %v7546
  %v7995 = vpack.c.b16 %v7554, %v7547
  %v7996 = vpack.c.b16 %v7555, %v7548
  %v7997 = vpack.c.b16 %v7556, %v7549
  %v7998 = vpack.c.b16 %v7557, %v7550
  %v7999 = vpack.c.b16 %v7558, %v7551
  %v8000 = vpack.c.b16 %v7566, %v7559
  %v8001 = vpack.c.b16 %v7567, %v7560
  %v8002 = vpack.c.b16 %v7568, %v7561
  %v8003 = vpack.c.b16 %v7569, %v7562
  %v8004 = vpack.c.b16 %v7570, %v7563
  %v8005 = vpack.c.b16 %v7571, %v7564
  %v8006 = vpack.c.b16 %v7572, %v7565
  %v8007 = vpack.c.b16 %v7580, %v7573
  %v8008 = vpack.c.b16 %v7581, %v7574
  %v8009 = vpack.c.b16 %v7582, %v7575
  %v8010 = vpack.c.b16 %v7583, %v7576
  %v8011 = vpack.c.b16 %v7584, %v7577
  %v8012 = vpack.c.b16 %v7585, %v7578
  %v8013 = vpack.c.b16 %v7586, %v7579
  %v8014 = vpack.c.b16 %v7594, %v7587
  %v8015 = vpack.c.b16 %v7595, %v7588
  %v8016 = vpack.c.b16 %v7596, %v7589
  %v8017 = vpack.c.b16 %v7597, %v7590
  %v8018 = vpack.c.b16 %v7598, %v7591
  %v8019 = vpack.c.b16 %v7599, %v7592
  %v8020 = vpack.c.b16 %v7600, %v7593
  %v8021 = vpack.c.b16 %v7608, %v7601
  %v8022 = vpack.c.b16 %v7609, %v7602
  %v8023 = vpack.c.b16 %v7610, %v7603
  %v8024 = vpack.c.b16 %v7611, %v7604
  %v8025 = vpack.c.b16 %v7612, %v7605
  %v8026 = vpack.c.b16 %v7613, %v7606
  %v8027 = vpack.c.b16 %v7614, %v7607
  %v8028 = vpack.c.b16 %v7622, %v7615
  %v8029 = vpack.c.b16 %v7623, %v7616
  %v8030 = vpack.c.b16 %v7624, %v7617
  %v8031 = vpack.c.b16 %v7625, %v7618
  %v8032 = vpack.c.b16 %v7626, %v7619
  %v8033 = vpack.c.b16 %v7627, %v7620
  %v8034 = vpack.c.b16 %v7628, %v7621
  %v8035 = vpack.c.b16 %v7636, %v7629
  %v8036 = vpack.c.b16 %v7637, %v7630
  %v8037 = vpack.c.b16 %v7638, %v7631
  %v8038 = vpack.c.b16 %v7639, %v7632
  %v8039 = vpack.c.b16 %v7640, %v7633
  %v8040 = vpack.c.b16 %v7641, %v7634
  %v8041 = vpack.c.b16 %v7642, %v7635
  %v8042 = vpack.c.b16 %v7650, %v7643
  %v8043 = vpack.c.b16 %v7651, %v7644
  %v8044 = vpack.c.b16 %v7652, %v7645
  %v8045 = vpack.c.b16 %v7653, %v7646
  %v8046 = vpack.c.b16 %v7654, %v7647
  %v8047 = vpack.c.b16 %v7655, %v7648
  %v8048 = vpack.c.b16 %v7656, %v7649
  %8441 = vmatprep.subr.bf16.mxu0 %v7707
  %8442 = vmatpush1.bf16.msra.mxu0 %v7706
  %8443 = vmatprep.subr.bf16.mxu0 %v7700
  %8444 = vmatpush1.bf16.msra.mxu0 %v7699
  %8445 = vmatprep.subr.bf16.mxu0 %v7693
  %8446 = vmatpush1.bf16.msra.mxu0 %v7692
  %8447 = vmatprep.subr.bf16.mxu0 %v7686
  %8448 = vmatpush1.bf16.msra.mxu0 %v7685
  %8449 = vmatprep.subr.bf16.mxu0 %v7679
  %8450 = vmatpush1.bf16.msra.mxu0 %v7678
  %8451 = vmatprep.subr.bf16.mxu0 %v7672
  %8452 = vmatpush1.bf16.msra.mxu0 %v7671
  %8453 = vmatprep.subr.bf16.mxu0 %v7665
  %8454 = vmatpush1.bf16.msra.mxu0 %v7664
  %8455 = vmatprep.subr.bf16.mxu0 %v7658
  %8456 = vmatpush1.bf16.msra.mxu0 %v7657
  %8457 = vmatprep.subr.bf16.mxu0 %v7763
  %8458 = vmatpush2.bf16.msra.mxu0 %v7762
  %8459 = vmatprep.subr.bf16.mxu0 %v7756
  %8460 = vmatpush2.bf16.msra.mxu0 %v7755
  %8461 = vmatprep.subr.bf16.mxu0 %v7749
  %8462 = vmatpush2.bf16.msra.mxu0 %v7748
  %8463 = vmatprep.subr.bf16.mxu0 %v7742
  %8464 = vmatpush2.bf16.msra.mxu0 %v7741
  %8465 = vmatprep.subr.bf16.mxu0 %v7735
  %8466 = vmatpush2.bf16.msra.mxu0 %v7734
  %8467 = vmatprep.subr.bf16.mxu0 %v7728
  %8468 = vmatpush2.bf16.msra.mxu0 %v7727
  %8469 = vmatprep.subr.bf16.mxu0 %v7721
  %8470 = vmatpush2.bf16.msra.mxu0 %v7720
  %8471 = vmatprep.subr.bf16.mxu0 %v7714
  %8472 = vmatpush2.bf16.msra.mxu0 %v7713
  %8473 = vmatprep.mubr.bf16.mxu0 %v5934
  %8474 = vmatmul.mubr.bf16.gmra.mxu0 %v5933
  %v8475 = vpop.f32.mrf.mxu0
  %v8476 = vadd.f32 %v6393, %v8475
  %v8477 = vpop.f32.mrf.mxu0
  %v8478 = vadd.f32 %v6397, %v8477
  %v8479 = vpop.f32.mrf.mxu0
  %v8480 = vpop.f32.mrf.mxu0
  %8481 = vdwg.mxu0
  %8482 = vmatprep.subr.bf16.mxu0 %v7819
  %8483 = vmatpush1.bf16.msra.mxu0 %v7818
  %8484 = vmatprep.subr.bf16.mxu0 %v7812
  %8485 = vmatpush1.bf16.msra.mxu0 %v7811
  %8486 = vmatprep.subr.bf16.mxu0 %v7805
  %8487 = vmatpush1.bf16.msra.mxu0 %v7804
  %8488 = vmatprep.subr.bf16.mxu0 %v7798
  %8489 = vmatpush1.bf16.msra.mxu0 %v7797
  %8490 = vmatprep.subr.bf16.mxu0 %v7791
  %8491 = vmatpush1.bf16.msra.mxu0 %v7790
  %8492 = vmatprep.subr.bf16.mxu0 %v7784
  %8493 = vmatpush1.bf16.msra.mxu0 %v7783
  %8494 = vmatprep.subr.bf16.mxu0 %v7777
  %8495 = vmatpush1.bf16.msra.mxu0 %v7776
  %8496 = vmatprep.subr.bf16.mxu0 %v7770
  %8497 = vmatpush1.bf16.msra.mxu0 %v7769
  %8498 = vmatprep.subr.bf16.mxu0 %v7875
  %8499 = vmatpush2.bf16.msra.mxu0 %v7874
  %8500 = vmatprep.subr.bf16.mxu0 %v7868
  %8501 = vmatpush2.bf16.msra.mxu0 %v7867
  %8502 = vmatprep.subr.bf16.mxu0 %v7861
  %8503 = vmatpush2.bf16.msra.mxu0 %v7860
  %8504 = vmatprep.subr.bf16.mxu0 %v7854
  %8505 = vmatpush2.bf16.msra.mxu0 %v7853
  %8506 = vmatprep.subr.bf16.mxu0 %v7847
  %8507 = vmatpush2.bf16.msra.mxu0 %v7846
  %8508 = vmatprep.subr.bf16.mxu0 %v7840
  %8509 = vmatpush2.bf16.msra.mxu0 %v7839
  %8510 = vmatprep.subr.bf16.mxu0 %v7833
  %8511 = vmatpush2.bf16.msra.mxu0 %v7832
  %8512 = vmatprep.subr.bf16.mxu0 %v7826
  %8513 = vmatpush2.bf16.msra.mxu0 %v7825
  %8514 = vmatprep.mubr.bf16.mxu0 %v5936
  %8515 = vmatmul.mubr.bf16.gmra.mxu0 %v5935
  %v8516 = vpop.f32.mrf.mxu0
  %v8517 = vadd.f32 %v8476, %v8516
  %v8518 = vpop.f32.mrf.mxu0
  %v8519 = vadd.f32 %v8478, %v8518
  %v8520 = vpop.f32.mrf.mxu0
  %v8521 = vpop.f32.mrf.mxu0
  %8522 = vdwg.mxu0
  %8523 = vmatprep.subr.bf16.mxu0 %v7931
  %8524 = vmatpush1.bf16.msra.mxu0 %v7930
  %8525 = vmatprep.subr.bf16.mxu0 %v7924
  %8526 = vmatpush1.bf16.msra.mxu0 %v7923
  %8527 = vmatprep.subr.bf16.mxu0 %v7917
  %8528 = vmatpush1.bf16.msra.mxu0 %v7916
  %8529 = vmatprep.subr.bf16.mxu0 %v7910
  %8530 = vmatpush1.bf16.msra.mxu0 %v7909
  %8531 = vmatprep.subr.bf16.mxu0 %v7903
  %8532 = vmatpush1.bf16.msra.mxu0 %v7902
  %8533 = vmatprep.subr.bf16.mxu0 %v7896
  %8534 = vmatpush1.bf16.msra.mxu0 %v7895
  %8535 = vmatprep.subr.bf16.mxu0 %v7889
  %8536 = vmatpush1.bf16.msra.mxu0 %v7888
  %8537 = vmatprep.subr.bf16.mxu0 %v7882
  %8538 = vmatpush1.bf16.msra.mxu0 %v7881
  %8539 = vmatprep.subr.bf16.mxu0 %v7987
  %8540 = vmatpush2.bf16.msra.mxu0 %v7986
  %8541 = vmatprep.subr.bf16.mxu0 %v7980
  %8542 = vmatpush2.bf16.msra.mxu0 %v7979
  %8543 = vmatprep.subr.bf16.mxu0 %v7973
  %8544 = vmatpush2.bf16.msra.mxu0 %v7972
  %8545 = vmatprep.subr.bf16.mxu0 %v7966
  %8546 = vmatpush2.bf16.msra.mxu0 %v7965
  %8547 = vmatprep.subr.bf16.mxu0 %v7959
  %8548 = vmatpush2.bf16.msra.mxu0 %v7958
  %8549 = vmatprep.subr.bf16.mxu0 %v7952
  %8550 = vmatpush2.bf16.msra.mxu0 %v7951
  %8551 = vmatprep.subr.bf16.mxu0 %v7945
  %8552 = vmatpush2.bf16.msra.mxu0 %v7944
  %8553 = vmatprep.subr.bf16.mxu0 %v7938
  %8554 = vmatpush2.bf16.msra.mxu0 %v7937
  %8555 = vmatprep.mubr.bf16.mxu0 %v5938
  %8556 = vmatmul.mubr.bf16.gmra.mxu0 %v5937
  %v8557 = vpop.f32.mrf.mxu0
  %v8558 = vadd.f32 %v8517, %v8557
  %v8559 = vpop.f32.mrf.mxu0
  %v8560 = vadd.f32 %v8519, %v8559
  %v8561 = vpop.f32.mrf.mxu0
  %v8562 = vpop.f32.mrf.mxu0
  %8563 = vdwg.mxu0
  %8564 = vmatprep.subr.bf16.mxu0 %v8043
  %8565 = vmatpush1.bf16.msra.mxu0 %v8042
  %8566 = vmatprep.subr.bf16.mxu0 %v8036
  %8567 = vmatpush1.bf16.msra.mxu0 %v8035
  %8568 = vmatprep.subr.bf16.mxu0 %v8029
  %8569 = vmatpush1.bf16.msra.mxu0 %v8028
  %8570 = vmatprep.subr.bf16.mxu0 %v8022
  %8571 = vmatpush1.bf16.msra.mxu0 %v8021
  %8572 = vmatprep.subr.bf16.mxu0 %v8015
  %8573 = vmatpush1.bf16.msra.mxu0 %v8014
  %8574 = vmatprep.subr.bf16.mxu0 %v8008
  %8575 = vmatpush1.bf16.msra.mxu0 %v8007
  %8576 = vmatprep.subr.bf16.mxu0 %v8001
  %8577 = vmatpush1.bf16.msra.mxu0 %v8000
  %8578 = vmatprep.subr.bf16.mxu0 %v7994
  %8579 = vmatpush1.bf16.msra.mxu0 %v7993
  %8580 = vmatprep.subr.bf16.mxu0 0
  %8581 = vmatpush2.bf16.msra.mxu0 0
  %8582 = vmatprep.subr.bf16.mxu0 0
  %8583 = vmatpush2.bf16.msra.mxu0 0
  %8584 = vmatprep.subr.bf16.mxu0 0
  %8585 = vmatpush2.bf16.msra.mxu0 0
  %8586 = vmatprep.subr.bf16.mxu0 0
  %8587 = vmatpush2.bf16.msra.mxu0 0
  %8588 = vmatprep.subr.bf16.mxu0 0
  %8589 = vmatpush2.bf16.msra.mxu0 0
  %8590 = vmatprep.subr.bf16.mxu0 0
  %8591 = vmatpush2.bf16.msra.mxu0 0
  %8592 = vmatprep.subr.bf16.mxu0 0
  %8593 = vmatpush2.bf16.msra.mxu0 0
  %8594 = vmatprep.subr.bf16.mxu0 0
  %8595 = vmatpush2.bf16.msra.mxu0 0
  %8596 = vmatprep.mubr.bf16.mxu0 0
  %8597 = vmatmul.mubr.bf16.gmra.mxu0 %v5939
  %v8598 = vpop.f32.mrf.mxu0
  %v8599 = vadd.f32 %v8558, %v8598
  %v8600 = vpop.f32.mrf.mxu0
  %v8601 = vadd.f32 %v8560, %v8600
  %v8602 = vpop.f32.mrf.mxu0
  %v8603 = vpop.f32.mrf.mxu0
  %8604 = vdwg.mxu0
  %8605 = vmatprep.subr.bf16.mxu0 %v7709
  %8606 = vmatpush1.bf16.msra.mxu0 %v7708
  %8607 = vmatprep.subr.bf16.mxu0 %v7702
  %8608 = vmatpush1.bf16.msra.mxu0 %v7701
  %8609 = vmatprep.subr.bf16.mxu0 %v7695
  %8610 = vmatpush1.bf16.msra.mxu0 %v7694
  %8611 = vmatprep.subr.bf16.mxu0 %v7688
  %8612 = vmatpush1.bf16.msra.mxu0 %v7687
  %8613 = vmatprep.subr.bf16.mxu0 %v7681
  %8614 = vmatpush1.bf16.msra.mxu0 %v7680
  %8615 = vmatprep.subr.bf16.mxu0 %v7674
  %8616 = vmatpush1.bf16.msra.mxu0 %v7673
  %8617 = vmatprep.subr.bf16.mxu0 %v7667
  %8618 = vmatpush1.bf16.msra.mxu0 %v7666
  %8619 = vmatprep.subr.bf16.mxu0 %v7660
  %8620 = vmatpush1.bf16.msra.mxu0 %v7659
  %8621 = vmatprep.subr.bf16.mxu0 %v7765
  %8622 = vmatpush2.bf16.msra.mxu0 %v7764
  %8623 = vmatprep.subr.bf16.mxu0 %v7758
  %8624 = vmatpush2.bf16.msra.mxu0 %v7757
  %8625 = vmatprep.subr.bf16.mxu0 %v7751
  %8626 = vmatpush2.bf16.msra.mxu0 %v7750
  %8627 = vmatprep.subr.bf16.mxu0 %v7744
  %8628 = vmatpush2.bf16.msra.mxu0 %v7743
  %8629 = vmatprep.subr.bf16.mxu0 %v7737
  %8630 = vmatpush2.bf16.msra.mxu0 %v7736
  %8631 = vmatprep.subr.bf16.mxu0 %v7730
  %8632 = vmatpush2.bf16.msra.mxu0 %v7729
  %8633 = vmatprep.subr.bf16.mxu0 %v7723
  %8634 = vmatpush2.bf16.msra.mxu0 %v7722
  %8635 = vmatprep.subr.bf16.mxu0 %v7716
  %8636 = vmatpush2.bf16.msra.mxu0 %v7715
  %8637 = vmatprep.mubr.bf16.mxu0 %v5934
  %8638 = vmatmul.mubr.bf16.gmra.mxu0 %v5933
  %v8639 = vpop.f32.mrf.mxu0
  %v8640 = vadd.f32 %v6401, %v8639
  %v8641 = vpop.f32.mrf.mxu0
  %v8642 = vadd.f32 %v6405, %v8641
  %v8643 = vpop.f32.mrf.mxu0
  %v8644 = vpop.f32.mrf.mxu0
  %8645 = vdwg.mxu0
  %8646 = vmatprep.subr.bf16.mxu0 %v7821
  %8647 = vmatpush1.bf16.msra.mxu0 %v7820
  %8648 = vmatprep.subr.bf16.mxu0 %v7814
  %8649 = vmatpush1.bf16.msra.mxu0 %v7813
  %8650 = vmatprep.subr.bf16.mxu0 %v7807
  %8651 = vmatpush1.bf16.msra.mxu0 %v7806
  %8652 = vmatprep.subr.bf16.mxu0 %v7800
  %8653 = vmatpush1.bf16.msra.mxu0 %v7799
  %8654 = vmatprep.subr.bf16.mxu0 %v7793
  %8655 = vmatpush1.bf16.msra.mxu0 %v7792
  %8656 = vmatprep.subr.bf16.mxu0 %v7786
  %8657 = vmatpush1.bf16.msra.mxu0 %v7785
  %8658 = vmatprep.subr.bf16.mxu0 %v7779
  %8659 = vmatpush1.bf16.msra.mxu0 %v7778
  %8660 = vmatprep.subr.bf16.mxu0 %v7772
  %8661 = vmatpush1.bf16.msra.mxu0 %v7771
  %8662 = vmatprep.subr.bf16.mxu0 %v7877
  %8663 = vmatpush2.bf16.msra.mxu0 %v7876
  %8664 = vmatprep.subr.bf16.mxu0 %v7870
  %8665 = vmatpush2.bf16.msra.mxu0 %v7869
  %8666 = vmatprep.subr.bf16.mxu0 %v7863
  %8667 = vmatpush2.bf16.msra.mxu0 %v7862
  %8668 = vmatprep.subr.bf16.mxu0 %v7856
  %8669 = vmatpush2.bf16.msra.mxu0 %v7855
  %8670 = vmatprep.subr.bf16.mxu0 %v7849
  %8671 = vmatpush2.bf16.msra.mxu0 %v7848
  %8672 = vmatprep.subr.bf16.mxu0 %v7842
  %8673 = vmatpush2.bf16.msra.mxu0 %v7841
  %8674 = vmatprep.subr.bf16.mxu0 %v7835
  %8675 = vmatpush2.bf16.msra.mxu0 %v7834
  %8676 = vmatprep.subr.bf16.mxu0 %v7828
  %8677 = vmatpush2.bf16.msra.mxu0 %v7827
  %8678 = vmatprep.mubr.bf16.mxu0 %v5936
  %8679 = vmatmul.mubr.bf16.gmra.mxu0 %v5935
  %v8680 = vpop.f32.mrf.mxu0
  %v8681 = vadd.f32 %v8640, %v8680
  %v8682 = vpop.f32.mrf.mxu0
  %v8683 = vadd.f32 %v8642, %v8682
  %v8684 = vpop.f32.mrf.mxu0
  %v8685 = vpop.f32.mrf.mxu0
  %8686 = vdwg.mxu0
  %8687 = vmatprep.subr.bf16.mxu0 %v7933
  %8688 = vmatpush1.bf16.msra.mxu0 %v7932
  %8689 = vmatprep.subr.bf16.mxu0 %v7926
  %8690 = vmatpush1.bf16.msra.mxu0 %v7925
  %8691 = vmatprep.subr.bf16.mxu0 %v7919
  %8692 = vmatpush1.bf16.msra.mxu0 %v7918
  %8693 = vmatprep.subr.bf16.mxu0 %v7912
  %8694 = vmatpush1.bf16.msra.mxu0 %v7911
  %8695 = vmatprep.subr.bf16.mxu0 %v7905
  %8696 = vmatpush1.bf16.msra.mxu0 %v7904
  %8697 = vmatprep.subr.bf16.mxu0 %v7898
  %8698 = vmatpush1.bf16.msra.mxu0 %v7897
  %8699 = vmatprep.subr.bf16.mxu0 %v7891
  %8700 = vmatpush1.bf16.msra.mxu0 %v7890
  %8701 = vmatprep.subr.bf16.mxu0 %v7884
  %8702 = vmatpush1.bf16.msra.mxu0 %v7883
  %8703 = vmatprep.subr.bf16.mxu0 %v7989
  %8704 = vmatpush2.bf16.msra.mxu0 %v7988
  %8705 = vmatprep.subr.bf16.mxu0 %v7982
  %8706 = vmatpush2.bf16.msra.mxu0 %v7981
  %8707 = vmatprep.subr.bf16.mxu0 %v7975
  %8708 = vmatpush2.bf16.msra.mxu0 %v7974
  %8709 = vmatprep.subr.bf16.mxu0 %v7968
  %8710 = vmatpush2.bf16.msra.mxu0 %v7967
  %8711 = vmatprep.subr.bf16.mxu0 %v7961
  %8712 = vmatpush2.bf16.msra.mxu0 %v7960
  %8713 = vmatprep.subr.bf16.mxu0 %v7954
  %8714 = vmatpush2.bf16.msra.mxu0 %v7953
  %8715 = vmatprep.subr.bf16.mxu0 %v7947
  %8716 = vmatpush2.bf16.msra.mxu0 %v7946
  %8717 = vmatprep.subr.bf16.mxu0 %v7940
  %8718 = vmatpush2.bf16.msra.mxu0 %v7939
  %8719 = vmatprep.mubr.bf16.mxu0 %v5938
  %8720 = vmatmul.mubr.bf16.gmra.mxu0 %v5937
  %v8721 = vpop.f32.mrf.mxu0
  %v8722 = vadd.f32 %v8681, %v8721
  %v8723 = vpop.f32.mrf.mxu0
  %v8724 = vadd.f32 %v8683, %v8723
  %v8725 = vpop.f32.mrf.mxu0
  %v8726 = vpop.f32.mrf.mxu0
  %8727 = vdwg.mxu0
  %8728 = vmatprep.subr.bf16.mxu0 %v8045
  %8729 = vmatpush1.bf16.msra.mxu0 %v8044
  %8730 = vmatprep.subr.bf16.mxu0 %v8038
  %8731 = vmatpush1.bf16.msra.mxu0 %v8037
  %8732 = vmatprep.subr.bf16.mxu0 %v8031
  %8733 = vmatpush1.bf16.msra.mxu0 %v8030
  %8734 = vmatprep.subr.bf16.mxu0 %v8024
  %8735 = vmatpush1.bf16.msra.mxu0 %v8023
  %8736 = vmatprep.subr.bf16.mxu0 %v8017
  %8737 = vmatpush1.bf16.msra.mxu0 %v8016
  %8738 = vmatprep.subr.bf16.mxu0 %v8010
  %8739 = vmatpush1.bf16.msra.mxu0 %v8009
  %8740 = vmatprep.subr.bf16.mxu0 %v8003
  %8741 = vmatpush1.bf16.msra.mxu0 %v8002
  %8742 = vmatprep.subr.bf16.mxu0 %v7996
  %8743 = vmatpush1.bf16.msra.mxu0 %v7995
  %8744 = vmatprep.subr.bf16.mxu0 0
  %8745 = vmatpush2.bf16.msra.mxu0 0
  %8746 = vmatprep.subr.bf16.mxu0 0
  %8747 = vmatpush2.bf16.msra.mxu0 0
  %8748 = vmatprep.subr.bf16.mxu0 0
  %8749 = vmatpush2.bf16.msra.mxu0 0
  %8750 = vmatprep.subr.bf16.mxu0 0
  %8751 = vmatpush2.bf16.msra.mxu0 0
  %8752 = vmatprep.subr.bf16.mxu0 0
  %8753 = vmatpush2.bf16.msra.mxu0 0
  %8754 = vmatprep.subr.bf16.mxu0 0
  %8755 = vmatpush2.bf16.msra.mxu0 0
  %8756 = vmatprep.subr.bf16.mxu0 0
  %8757 = vmatpush2.bf16.msra.mxu0 0
  %8758 = vmatprep.subr.bf16.mxu0 0
  %8759 = vmatpush2.bf16.msra.mxu0 0
  %8760 = vmatprep.mubr.bf16.mxu0 0
  %8761 = vmatmul.mubr.bf16.gmra.mxu0 %v5939
  %v8762 = vpop.f32.mrf.mxu0
  %v8763 = vadd.f32 %v8722, %v8762
  %v8764 = vpop.f32.mrf.mxu0
  %v8765 = vadd.f32 %v8724, %v8764
  %v8766 = vpop.f32.mrf.mxu0
  %v8767 = vpop.f32.mrf.mxu0
  %8768 = vdwg.mxu0
  %8769 = vmatprep.subr.bf16.mxu0 %v7711
  %8770 = vmatpush1.bf16.msra.mxu0 %v7710
  %8771 = vmatprep.subr.bf16.mxu0 %v7704
  %8772 = vmatpush1.bf16.msra.mxu0 %v7703
  %8773 = vmatprep.subr.bf16.mxu0 %v7697
  %8774 = vmatpush1.bf16.msra.mxu0 %v7696
  %8775 = vmatprep.subr.bf16.mxu0 %v7690
  %8776 = vmatpush1.bf16.msra.mxu0 %v7689
  %8777 = vmatprep.subr.bf16.mxu0 %v7683
  %8778 = vmatpush1.bf16.msra.mxu0 %v7682
  %8779 = vmatprep.subr.bf16.mxu0 %v7676
  %8780 = vmatpush1.bf16.msra.mxu0 %v7675
  %8781 = vmatprep.subr.bf16.mxu0 %v7669
  %8782 = vmatpush1.bf16.msra.mxu0 %v7668
  %8783 = vmatprep.subr.bf16.mxu0 %v7662
  %8784 = vmatpush1.bf16.msra.mxu0 %v7661
  %8785 = vmatprep.subr.bf16.mxu0 %v7767
  %8786 = vmatpush2.bf16.msra.mxu0 %v7766
  %8787 = vmatprep.subr.bf16.mxu0 %v7760
  %8788 = vmatpush2.bf16.msra.mxu0 %v7759
  %8789 = vmatprep.subr.bf16.mxu0 %v7753
  %8790 = vmatpush2.bf16.msra.mxu0 %v7752
  %8791 = vmatprep.subr.bf16.mxu0 %v7746
  %8792 = vmatpush2.bf16.msra.mxu0 %v7745
  %8793 = vmatprep.subr.bf16.mxu0 %v7739
  %8794 = vmatpush2.bf16.msra.mxu0 %v7738
  %8795 = vmatprep.subr.bf16.mxu0 %v7732
  %8796 = vmatpush2.bf16.msra.mxu0 %v7731
  %8797 = vmatprep.subr.bf16.mxu0 %v7725
  %8798 = vmatpush2.bf16.msra.mxu0 %v7724
  %8799 = vmatprep.subr.bf16.mxu0 %v7718
  %8800 = vmatpush2.bf16.msra.mxu0 %v7717
  %8801 = vmatprep.mubr.bf16.mxu0 %v5934
  %8802 = vmatmul.mubr.bf16.gmra.mxu0 %v5933
  %v8803 = vpop.f32.mrf.mxu0
  %v8804 = vadd.f32 %v6409, %v8803
  %v8805 = vpop.f32.mrf.mxu0
  %v8806 = vadd.f32 %v6413, %v8805
  %v8807 = vpop.f32.mrf.mxu0
  %v8808 = vpop.f32.mrf.mxu0
  %8809 = vdwg.mxu0
  %8810 = vmatprep.subr.bf16.mxu0 %v7823
  %8811 = vmatpush1.bf16.msra.mxu0 %v7822
  %8812 = vmatprep.subr.bf16.mxu0 %v7816
  %8813 = vmatpush1.bf16.msra.mxu0 %v7815
  %8814 = vmatprep.subr.bf16.mxu0 %v7809
  %8815 = vmatpush1.bf16.msra.mxu0 %v7808
  %8816 = vmatprep.subr.bf16.mxu0 %v7802
  %8817 = vmatpush1.bf16.msra.mxu0 %v7801
  %8818 = vmatprep.subr.bf16.mxu0 %v7795
  %8819 = vmatpush1.bf16.msra.mxu0 %v7794
  %8820 = vmatprep.subr.bf16.mxu0 %v7788
  %8821 = vmatpush1.bf16.msra.mxu0 %v7787
  %8822 = vmatprep.subr.bf16.mxu0 %v7781
  %8823 = vmatpush1.bf16.msra.mxu0 %v7780
  %8824 = vmatprep.subr.bf16.mxu0 %v7774
  %8825 = vmatpush1.bf16.msra.mxu0 %v7773
  %8826 = vmatprep.subr.bf16.mxu0 %v7879
  %8827 = vmatpush2.bf16.msra.mxu0 %v7878
  %8828 = vmatprep.subr.bf16.mxu0 %v7872
  %8829 = vmatpush2.bf16.msra.mxu0 %v7871
  %8830 = vmatprep.subr.bf16.mxu0 %v7865
  %8831 = vmatpush2.bf16.msra.mxu0 %v7864
  %8832 = vmatprep.subr.bf16.mxu0 %v7858
  %8833 = vmatpush2.bf16.msra.mxu0 %v7857
  %8834 = vmatprep.subr.bf16.mxu0 %v7851
  %8835 = vmatpush2.bf16.msra.mxu0 %v7850
  %8836 = vmatprep.subr.bf16.mxu0 %v7844
  %8837 = vmatpush2.bf16.msra.mxu0 %v7843
  %8838 = vmatprep.subr.bf16.mxu0 %v7837
  %8839 = vmatpush2.bf16.msra.mxu0 %v7836
  %8840 = vmatprep.subr.bf16.mxu0 %v7830
  %8841 = vmatpush2.bf16.msra.mxu0 %v7829
  %8842 = vmatprep.mubr.bf16.mxu0 %v5936
  %8843 = vmatmul.mubr.bf16.gmra.mxu0 %v5935
  %v8844 = vpop.f32.mrf.mxu0
  %v8845 = vadd.f32 %v8804, %v8844
  %v8846 = vpop.f32.mrf.mxu0
  %v8847 = vadd.f32 %v8806, %v8846
  %v8848 = vpop.f32.mrf.mxu0
  %v8849 = vpop.f32.mrf.mxu0
  %8850 = vdwg.mxu0
  %8851 = vmatprep.subr.bf16.mxu0 %v7935
  %8852 = vmatpush1.bf16.msra.mxu0 %v7934
  %8853 = vmatprep.subr.bf16.mxu0 %v7928
  %8854 = vmatpush1.bf16.msra.mxu0 %v7927
  %8855 = vmatprep.subr.bf16.mxu0 %v7921
  %8856 = vmatpush1.bf16.msra.mxu0 %v7920
  %8857 = vmatprep.subr.bf16.mxu0 %v7914
  %8858 = vmatpush1.bf16.msra.mxu0 %v7913
  %8859 = vmatprep.subr.bf16.mxu0 %v7907
  %8860 = vmatpush1.bf16.msra.mxu0 %v7906
  %8861 = vmatprep.subr.bf16.mxu0 %v7900
  %8862 = vmatpush1.bf16.msra.mxu0 %v7899
  %8863 = vmatprep.subr.bf16.mxu0 %v7893
  %8864 = vmatpush1.bf16.msra.mxu0 %v7892
  %8865 = vmatprep.subr.bf16.mxu0 %v7886
  %8866 = vmatpush1.bf16.msra.mxu0 %v7885
  %8867 = vmatprep.subr.bf16.mxu0 %v7991
  %8868 = vmatpush2.bf16.msra.mxu0 %v7990
  %8869 = vmatprep.subr.bf16.mxu0 %v7984
  %8870 = vmatpush2.bf16.msra.mxu0 %v7983
  %8871 = vmatprep.subr.bf16.mxu0 %v7977
  %8872 = vmatpush2.bf16.msra.mxu0 %v7976
  %8873 = vmatprep.subr.bf16.mxu0 %v7970
  %8874 = vmatpush2.bf16.msra.mxu0 %v7969
  %8875 = vmatprep.subr.bf16.mxu0 %v7963
  %8876 = vmatpush2.bf16.msra.mxu0 %v7962
  %8877 = vmatprep.subr.bf16.mxu0 %v7956
  %8878 = vmatpush2.bf16.msra.mxu0 %v7955
  %8879 = vmatprep.subr.bf16.mxu0 %v7949
  %8880 = vmatpush2.bf16.msra.mxu0 %v7948
  %8881 = vmatprep.subr.bf16.mxu0 %v7942
  %8882 = vmatpush2.bf16.msra.mxu0 %v7941
  %8883 = vmatprep.mubr.bf16.mxu0 %v5938
  %8884 = vmatmul.mubr.bf16.gmra.mxu0 %v5937
  %v8885 = vpop.f32.mrf.mxu0
  %v8886 = vadd.f32 %v8845, %v8885
  %v8887 = vpop.f32.mrf.mxu0
  %v8888 = vadd.f32 %v8847, %v8887
  %v8889 = vpop.f32.mrf.mxu0
  %v8890 = vpop.f32.mrf.mxu0
  %8891 = vdwg.mxu0
  %8892 = vmatprep.subr.bf16.mxu0 %v8047
  %8893 = vmatpush1.bf16.msra.mxu0 %v8046
  %8894 = vmatprep.subr.bf16.mxu0 %v8040
  %8895 = vmatpush1.bf16.msra.mxu0 %v8039
  %8896 = vmatprep.subr.bf16.mxu0 %v8033
  %8897 = vmatpush1.bf16.msra.mxu0 %v8032
  %8898 = vmatprep.subr.bf16.mxu0 %v8026
  %8899 = vmatpush1.bf16.msra.mxu0 %v8025
  %8900 = vmatprep.subr.bf16.mxu0 %v8019
  %8901 = vmatpush1.bf16.msra.mxu0 %v8018
  %8902 = vmatprep.subr.bf16.mxu0 %v8012
  %8903 = vmatpush1.bf16.msra.mxu0 %v8011
  %8904 = vmatprep.subr.bf16.mxu0 %v8005
  %8905 = vmatpush1.bf16.msra.mxu0 %v8004
  %8906 = vmatprep.subr.bf16.mxu0 %v7998
  %8907 = vmatpush1.bf16.msra.mxu0 %v7997
  %8908 = vmatprep.subr.bf16.mxu0 0
  %8909 = vmatpush2.bf16.msra.mxu0 0
  %8910 = vmatprep.subr.bf16.mxu0 0
  %8911 = vmatpush2.bf16.msra.mxu0 0
  %8912 = vmatprep.subr.bf16.mxu0 0
  %8913 = vmatpush2.bf16.msra.mxu0 0
  %8914 = vmatprep.subr.bf16.mxu0 0
  %8915 = vmatpush2.bf16.msra.mxu0 0
  %8916 = vmatprep.subr.bf16.mxu0 0
  %8917 = vmatpush2.bf16.msra.mxu0 0
  %8918 = vmatprep.subr.bf16.mxu0 0
  %8919 = vmatpush2.bf16.msra.mxu0 0
  %8920 = vmatprep.subr.bf16.mxu0 0
  %8921 = vmatpush2.bf16.msra.mxu0 0
  %8922 = vmatprep.subr.bf16.mxu0 0
  %8923 = vmatpush2.bf16.msra.mxu0 0
  %8924 = vmatprep.mubr.bf16.mxu0 0
  %8925 = vmatmul.mubr.bf16.gmra.mxu0 %v5939
  %v8926 = vpop.f32.mrf.mxu0
  %v8927 = vadd.f32 %v8886, %v8926
  %v8928 = vpop.f32.mrf.mxu0
  %v8929 = vadd.f32 %v8888, %v8928
  %v8930 = vpop.f32.mrf.mxu0
  %v8931 = vpop.f32.mrf.mxu0
  %8932 = vdwg.mxu0
  %8933 = vmatprep.subr.bf16.mxu0 0
  %8934 = vmatpush1.bf16.msra.mxu0 %v7712
  %8935 = vmatprep.subr.bf16.mxu0 0
  %8936 = vmatpush1.bf16.msra.mxu0 %v7705
  %8937 = vmatprep.subr.bf16.mxu0 0
  %8938 = vmatpush1.bf16.msra.mxu0 %v7698
  %8939 = vmatprep.subr.bf16.mxu0 0
  %8940 = vmatpush1.bf16.msra.mxu0 %v7691
  %8941 = vmatprep.subr.bf16.mxu0 0
  %8942 = vmatpush1.bf16.msra.mxu0 %v7684
  %8943 = vmatprep.subr.bf16.mxu0 0
  %8944 = vmatpush1.bf16.msra.mxu0 %v7677
  %8945 = vmatprep.subr.bf16.mxu0 0
  %8946 = vmatpush1.bf16.msra.mxu0 %v7670
  %8947 = vmatprep.subr.bf16.mxu0 0
  %8948 = vmatpush1.bf16.msra.mxu0 %v7663
  %8949 = vmatprep.subr.bf16.mxu0 0
  %8950 = vmatpush2.bf16.msra.mxu0 %v7768
  %8951 = vmatprep.subr.bf16.mxu0 0
  %8952 = vmatpush2.bf16.msra.mxu0 %v7761
  %8953 = vmatprep.subr.bf16.mxu0 0
  %8954 = vmatpush2.bf16.msra.mxu0 %v7754
  %8955 = vmatprep.subr.bf16.mxu0 0
  %8956 = vmatpush2.bf16.msra.mxu0 %v7747
  %8957 = vmatprep.subr.bf16.mxu0 0
  %8958 = vmatpush2.bf16.msra.mxu0 %v7740
  %8959 = vmatprep.subr.bf16.mxu0 0
  %8960 = vmatpush2.bf16.msra.mxu0 %v7733
  %8961 = vmatprep.subr.bf16.mxu0 0
  %8962 = vmatpush2.bf16.msra.mxu0 %v7726
  %8963 = vmatprep.subr.bf16.mxu0 0
  %8964 = vmatpush2.bf16.msra.mxu0 %v7719
  %8965 = vmatprep.mubr.bf16.mxu0 %v5934
  %8966 = vmatmul.mubr.bf16.gmra.mxu0 %v5933
  %v8967 = vpop.f32.mrf.mxu0
  %v8968 = vadd.f32 %v6417, %v8967
  %v8969 = vpop.f32.mrf.mxu0
  %v8970 = vpop.f32.mrf.mxu0
  %v8971 = vpop.f32.mrf.mxu0
  %8972 = vdwg.mxu0
  %8973 = vmatprep.subr.bf16.mxu0 0
  %8974 = vmatpush1.bf16.msra.mxu0 %v7824
  %8975 = vmatprep.subr.bf16.mxu0 0
  %8976 = vmatpush1.bf16.msra.mxu0 %v7817
  %8977 = vmatprep.subr.bf16.mxu0 0
  %8978 = vmatpush1.bf16.msra.mxu0 %v7810
  %8979 = vmatprep.subr.bf16.mxu0 0
  %8980 = vmatpush1.bf16.msra.mxu0 %v7803
  %8981 = vmatprep.subr.bf16.mxu0 0
  %8982 = vmatpush1.bf16.msra.mxu0 %v7796
  %8983 = vmatprep.subr.bf16.mxu0 0
  %8984 = vmatpush1.bf16.msra.mxu0 %v7789
  %8985 = vmatprep.subr.bf16.mxu0 0
  %8986 = vmatpush1.bf16.msra.mxu0 %v7782
  %8987 = vmatprep.subr.bf16.mxu0 0
  %8988 = vmatpush1.bf16.msra.mxu0 %v7775
  %8989 = vmatprep.subr.bf16.mxu0 0
  %8990 = vmatpush2.bf16.msra.mxu0 %v7880
  %8991 = vmatprep.subr.bf16.mxu0 0
  %8992 = vmatpush2.bf16.msra.mxu0 %v7873
  %8993 = vmatprep.subr.bf16.mxu0 0
  %8994 = vmatpush2.bf16.msra.mxu0 %v7866
  %8995 = vmatprep.subr.bf16.mxu0 0
  %8996 = vmatpush2.bf16.msra.mxu0 %v7859
  %8997 = vmatprep.subr.bf16.mxu0 0
  %8998 = vmatpush2.bf16.msra.mxu0 %v7852
  %8999 = vmatprep.subr.bf16.mxu0 0
  %9000 = vmatpush2.bf16.msra.mxu0 %v7845
  %9001 = vmatprep.subr.bf16.mxu0 0
  %9002 = vmatpush2.bf16.msra.mxu0 %v7838
  %9003 = vmatprep.subr.bf16.mxu0 0
  %9004 = vmatpush2.bf16.msra.mxu0 %v7831
  %9005 = vmatprep.mubr.bf16.mxu0 %v5936
  %9006 = vmatmul.mubr.bf16.gmra.mxu0 %v5935
  %v9007 = vpop.f32.mrf.mxu0
  %v9008 = vadd.f32 %v8968, %v9007
  %v9009 = vpop.f32.mrf.mxu0
  %v9010 = vpop.f32.mrf.mxu0
  %v9011 = vpop.f32.mrf.mxu0
  %9012 = vdwg.mxu0
  %9013 = vmatprep.subr.bf16.mxu0 0
  %9014 = vmatpush1.bf16.msra.mxu0 %v7936
  %9015 = vmatprep.subr.bf16.mxu0 0
  %9016 = vmatpush1.bf16.msra.mxu0 %v7929
  %9017 = vmatprep.subr.bf16.mxu0 0
  %9018 = vmatpush1.bf16.msra.mxu0 %v7922
  %9019 = vmatprep.subr.bf16.mxu0 0
  %9020 = vmatpush1.bf16.msra.mxu0 %v7915
  %9021 = vmatprep.subr.bf16.mxu0 0
  %9022 = vmatpush1.bf16.msra.mxu0 %v7908
  %9023 = vmatprep.subr.bf16.mxu0 0
  %9024 = vmatpush1.bf16.msra.mxu0 %v7901
  %9025 = vmatprep.subr.bf16.mxu0 0
  %9026 = vmatpush1.bf16.msra.mxu0 %v7894
  %9027 = vmatprep.subr.bf16.mxu0 0
  %9028 = vmatpush1.bf16.msra.mxu0 %v7887
  %9029 = vmatprep.subr.bf16.mxu0 0
  %9030 = vmatpush2.bf16.msra.mxu0 %v7992
  %9031 = vmatprep.subr.bf16.mxu0 0
  %9032 = vmatpush2.bf16.msra.mxu0 %v7985
  %9033 = vmatprep.subr.bf16.mxu0 0
  %9034 = vmatpush2.bf16.msra.mxu0 %v7978
  %9035 = vmatprep.subr.bf16.mxu0 0
  %9036 = vmatpush2.bf16.msra.mxu0 %v7971
  %9037 = vmatprep.subr.bf16.mxu0 0
  %9038 = vmatpush2.bf16.msra.mxu0 %v7964
  %9039 = vmatprep.subr.bf16.mxu0 0
  %9040 = vmatpush2.bf16.msra.mxu0 %v7957
  %9041 = vmatprep.subr.bf16.mxu0 0
  %9042 = vmatpush2.bf16.msra.mxu0 %v7950
  %9043 = vmatprep.subr.bf16.mxu0 0
  %9044 = vmatpush2.bf16.msra.mxu0 %v7943
  %9045 = vmatprep.mubr.bf16.mxu0 %v5938
  %9046 = vmatmul.mubr.bf16.gmra.mxu0 %v5937
  %v9047 = vpop.f32.mrf.mxu0
  %v9048 = vadd.f32 %v9008, %v9047
  %v9049 = vpop.f32.mrf.mxu0
  %v9050 = vpop.f32.mrf.mxu0
  %v9051 = vpop.f32.mrf.mxu0
  %9052 = vdwg.mxu0
  %9053 = vmatprep.subr.bf16.mxu0 0
  %9054 = vmatpush1.bf16.msra.mxu0 %v8048
  %9055 = vmatprep.subr.bf16.mxu0 0
  %9056 = vmatpush1.bf16.msra.mxu0 %v8041
  %9057 = vmatprep.subr.bf16.mxu0 0
  %9058 = vmatpush1.bf16.msra.mxu0 %v8034
  %9059 = vmatprep.subr.bf16.mxu0 0
  %9060 = vmatpush1.bf16.msra.mxu0 %v8027
  %9061 = vmatprep.subr.bf16.mxu0 0
  %9062 = vmatpush1.bf16.msra.mxu0 %v8020
  %9063 = vmatprep.subr.bf16.mxu0 0
  %9064 = vmatpush1.bf16.msra.mxu0 %v8013
  %9065 = vmatprep.subr.bf16.mxu0 0
  %9066 = vmatpush1.bf16.msra.mxu0 %v8006
  %9067 = vmatprep.subr.bf16.mxu0 0
  %9068 = vmatpush1.bf16.msra.mxu0 %v7999
  %9069 = vmatprep.subr.bf16.mxu0 0
  %9070 = vmatpush2.bf16.msra.mxu0 0
  %9071 = vmatprep.subr.bf16.mxu0 0
  %9072 = vmatpush2.bf16.msra.mxu0 0
  %9073 = vmatprep.subr.bf16.mxu0 0
  %9074 = vmatpush2.bf16.msra.mxu0 0
  %9075 = vmatprep.subr.bf16.mxu0 0
  %9076 = vmatpush2.bf16.msra.mxu0 0
  %9077 = vmatprep.subr.bf16.mxu0 0
  %9078 = vmatpush2.bf16.msra.mxu0 0
  %9079 = vmatprep.subr.bf16.mxu0 0
  %9080 = vmatpush2.bf16.msra.mxu0 0
  %9081 = vmatprep.subr.bf16.mxu0 0
  %9082 = vmatpush2.bf16.msra.mxu0 0
  %9083 = vmatprep.subr.bf16.mxu0 0
  %9084 = vmatpush2.bf16.msra.mxu0 0
  %9085 = vmatprep.mubr.bf16.mxu0 0
  %9086 = vmatmul.mubr.bf16.gmra.mxu0 %v5939
  %v9087 = vpop.f32.mrf.mxu0
  %v9088 = vadd.f32 %v9048, %v9087
  %v9089 = vpop.f32.mrf.mxu0
  %v9090 = vpop.f32.mrf.mxu0
  %v9091 = vpop.f32.mrf.mxu0
  %9092 = vdwg.mxu0
  %v9093 = vmax.f32 %v8599, 0.0
  %v9094 = vmax.f32 %v8601, 0.0
  %v9095 = vmax.f32 %v8763, 0.0
  %v9096 = vmax.f32 %v8765, 0.0
  %v9097 = vmax.f32 %v8927, 0.0
  %v9098 = vmax.f32 %v8929, 0.0
  %v9099 = vmax.f32 %v9088, 0.0
  %v9100 = vpack.c.bf16 %v9093, %v9093
  %v9101 = vpack.c.bf16 %v9094, %v9094
  %v9102 = vpack.c.bf16 %v9095, %v9095
  %v9103 = vpack.c.bf16 %v9096, %v9096
  %v9104 = vpack.c.bf16 %v9097, %v9097
  %v9105 = vpack.c.bf16 %v9098, %v9098
  %v9106 = vpack.c.bf16 %v9099, %v9099
  %v9107 = vld [vmem:[%s11] sm:$0xff]
  %v9108 = vld [vmem:[%s11 + $0x8] sm:$0xff]
  %v9109 = vld [vmem:[%s11 + $0x10] sm:$0xff]
  %v9110 = vld [vmem:[%s11 + $0x18] sm:$0xf]
  %v9111 = vld [vmem:[%s11 + $0x1c] sm:$0xff]
  %v9112 = vld [vmem:[%s11 + $0x24] sm:$0xff]
  %v9113 = vld [vmem:[%s11 + $0x2c] sm:$0xff]
  %v9114 = vld [vmem:[%s11 + $0x34] sm:$0xf]
  %v9115 = vld [vmem:[%s11 + $0x38] sm:$0xff]
  %v9116 = vld [vmem:[%s11 + $0x40] sm:$0xff]
  %v9117 = vld [vmem:[%s11 + $0x48] sm:$0xff]
  %v9118 = vld [vmem:[%s11 + $0x50] sm:$0xf]
  %v9119 = vld [vmem:[%s11 + $0x54] sm:$0xff]
  %v9120 = vld [vmem:[%s11 + $0x5c] sm:$0xff]
  %v9121 = vld [vmem:[%s11 + $0x64] sm:$0xff]
  %v9122 = vld [vmem:[%s11 + $0x6c] sm:$0xf]
  %v9123 = vld [vmem:[%s11 + $0x70] sm:$0xff]
  %v9124 = vld [vmem:[%s11 + $0x78] sm:$0xff]
  %v9125 = vld [vmem:[%s11 + $0x80] sm:$0xff]
  %v9126 = vld [vmem:[%s11 + $0x88] sm:$0xf]
  %v9127 = vld [vmem:[%s11 + $0x8c] sm:$0xff]
  %v9128 = vld [vmem:[%s11 + $0x94] sm:$0xff]
  %v9129 = vld [vmem:[%s11 + $0x9c] sm:$0xff]
  %v9130 = vld [vmem:[%s11 + $0xa4] sm:$0xf]
  %v9131 = vld [vmem:[%s11 + $0xa8] sm:$0xff]
  %v9132 = vld [vmem:[%s11 + $0xb0] sm:$0xff]
  %v9133 = vld [vmem:[%s11 + $0xb8] sm:$0xff]
  %v9134 = vld [vmem:[%s11 + $0xc0] sm:$0xf]
  %v9135 = vld [vmem:[%s11 + $0xc4] sm:$0xff]
  %v9136 = vld [vmem:[%s11 + $0xcc] sm:$0xff]
  %v9137 = vld [vmem:[%s11 + $0xd4] sm:$0xff]
  %v9138 = vld [vmem:[%s11 + $0xdc] sm:$0xf]
  %v9139 = vld [vmem:[%s11 + $0xe0] sm:$0xff]
  %v9140 = vld [vmem:[%s11 + $0xe8] sm:$0xff]
  %v9141 = vld [vmem:[%s11 + $0xf0] sm:$0xff]
  %v9142 = vld [vmem:[%s11 + $0xf8] sm:$0xf]
  %v9143 = vld [vmem:[%s11 + $0xfc] sm:$0xff]
  %v9144 = vld [vmem:[%s11 + $0x104] sm:$0xff]
  %v9145 = vld [vmem:[%s11 + $0x10c] sm:$0xff]
  %v9146 = vld [vmem:[%s11 + $0x114] sm:$0xf]
  %v9147 = vld [vmem:[%s11 + $0x118] sm:$0xff]
  %v9148 = vld [vmem:[%s11 + $0x120] sm:$0xff]
  %v9149 = vld [vmem:[%s11 + $0x128] sm:$0xff]
  %v9150 = vld [vmem:[%s11 + $0x130] sm:$0xf]
  %v9151 = vld [vmem:[%s11 + $0x134] sm:$0xff]
  %v9152 = vld [vmem:[%s11 + $0x13c] sm:$0xff]
  %v9153 = vld [vmem:[%s11 + $0x144] sm:$0xff]
  %v9154 = vld [vmem:[%s11 + $0x14c] sm:$0xf]
  %v9155 = vld [vmem:[%s11 + $0x150] sm:$0xff]
  %v9156 = vld [vmem:[%s11 + $0x158] sm:$0xff]
  %v9157 = vld [vmem:[%s11 + $0x160] sm:$0xff]
  %v9158 = vld [vmem:[%s11 + $0x168] sm:$0xf]
  %v9159 = vld [vmem:[%s11 + $0x16c] sm:$0xff]
  %v9160 = vld [vmem:[%s11 + $0x174] sm:$0xff]
  %v9161 = vld [vmem:[%s11 + $0x17c] sm:$0xff]
  %v9162 = vld [vmem:[%s11 + $0x184] sm:$0xf]
  %v9163 = vld [vmem:[%s11 + $0x188] sm:$0xff]
  %v9164 = vld [vmem:[%s11 + $0x190] sm:$0xff]
  %v9165 = vld [vmem:[%s11 + $0x198] sm:$0xff]
  %v9166 = vld [vmem:[%s11 + $0x1a0] sm:$0xf]
  %v9167 = vld [vmem:[%s11 + $0x1a4] sm:$0xff]
  %v9168 = vld [vmem:[%s11 + $0x1ac] sm:$0xff]
  %v9169 = vld [vmem:[%s11 + $0x1b4] sm:$0xff]
  %v9170 = vld [vmem:[%s11 + $0x1bc] sm:$0xf]
  %v9171 = vld [vmem:[%s11 + $0x1c0] sm:$0xff]
  %v9172 = vld [vmem:[%s11 + $0x1c8] sm:$0xff]
  %v9173 = vld [vmem:[%s11 + $0x1d0] sm:$0xff]
  %v9174 = vld [vmem:[%s11 + $0x1d8] sm:$0xf]
  %v9175 = vld [vmem:[%s11 + $0x1dc] sm:$0xff]
  %v9176 = vld [vmem:[%s11 + $0x1e4] sm:$0xff]
  %v9177 = vld [vmem:[%s11 + $0x1ec] sm:$0xff]
  %v9178 = vld [vmem:[%s11 + $0x1f4] sm:$0xf]
  %v9179 = vld [vmem:[%s11 + $0x1f8] sm:$0xff]
  %v9180 = vld [vmem:[%s11 + $0x200] sm:$0xff]
  %v9181 = vld [vmem:[%s11 + $0x208] sm:$0xff]
  %v9182 = vld [vmem:[%s11 + $0x210] sm:$0xf]
  %v9183 = vld [vmem:[%s11 + $0x214] sm:$0xff]
  %v9184 = vld [vmem:[%s11 + $0x21c] sm:$0xff]
  %v9185 = vld [vmem:[%s11 + $0x224] sm:$0xff]
  %v9186 = vld [vmem:[%s11 + $0x22c] sm:$0xf]
  %v9187 = vld [vmem:[%s11 + $0x230] sm:$0xff]
  %v9188 = vld [vmem:[%s11 + $0x238] sm:$0xff]
  %v9189 = vld [vmem:[%s11 + $0x240] sm:$0xff]
  %v9190 = vld [vmem:[%s11 + $0x248] sm:$0xf]
  %v9191 = vld [vmem:[%s11 + $0x24c] sm:$0xff]
  %v9192 = vld [vmem:[%s11 + $0x254] sm:$0xff]
  %v9193 = vld [vmem:[%s11 + $0x25c] sm:$0xff]
  %v9194 = vld [vmem:[%s11 + $0x264] sm:$0xf]
  %v9195 = vld [vmem:[%s11 + $0x268] sm:$0xff]
  %v9196 = vld [vmem:[%s11 + $0x270] sm:$0xff]
  %v9197 = vld [vmem:[%s11 + $0x278] sm:$0xff]
  %v9198 = vld [vmem:[%s11 + $0x280] sm:$0xf]
  %v9199 = vld [vmem:[%s11 + $0x284] sm:$0xff]
  %v9200 = vld [vmem:[%s11 + $0x28c] sm:$0xff]
  %v9201 = vld [vmem:[%s11 + $0x294] sm:$0xff]
  %v9202 = vld [vmem:[%s11 + $0x29c] sm:$0xf]
  %v9203 = vld [vmem:[%s11 + $0x2a0] sm:$0xff]
  %v9204 = vld [vmem:[%s11 + $0x2a8] sm:$0xff]
  %v9205 = vld [vmem:[%s11 + $0x2b0] sm:$0xff]
  %v9206 = vld [vmem:[%s11 + $0x2b8] sm:$0xf]
  %v9207 = vld [vmem:[%s11 + $0x2bc] sm:$0xff]
  %v9208 = vld [vmem:[%s11 + $0x2c4] sm:$0xff]
  %v9209 = vld [vmem:[%s11 + $0x2cc] sm:$0xff]
  %v9210 = vld [vmem:[%s11 + $0x2d4] sm:$0xf]
  %v9211 = vld [vmem:[%s11 + $0x2d8] sm:$0xff]
  %v9212 = vld [vmem:[%s11 + $0x2e0] sm:$0xff]
  %v9213 = vld [vmem:[%s11 + $0x2e8] sm:$0xff]
  %v9214 = vld [vmem:[%s11 + $0x2f0] sm:$0xf]
  %v9215 = vld [vmem:[%s11 + $0x2f4] sm:$0xff]
  %v9216 = vld [vmem:[%s11 + $0x2fc] sm:$0xff]
  %v9217 = vld [vmem:[%s11 + $0x304] sm:$0xff]
  %v9218 = vld [vmem:[%s11 + $0x30c] sm:$0xf]
  %v9219 = vld [vmem:[%s11 + $0x310] sm:$0xff]
  %v9220 = vld [vmem:[%s11 + $0x318] sm:$0xff]
  %v9221 = vld [vmem:[%s11 + $0x320] sm:$0xff]
  %v9222 = vld [vmem:[%s11 + $0x328] sm:$0xf]
  %v9223 = vld [vmem:[%s11 + $0x32c] sm:$0xff]
  %v9224 = vld [vmem:[%s11 + $0x334] sm:$0xff]
  %v9225 = vld [vmem:[%s11 + $0x33c] sm:$0xff]
  %v9226 = vld [vmem:[%s11 + $0x344] sm:$0xf]
  %v9227 = vld [vmem:[%s11 + $0x348] sm:$0xff]
  %v9228 = vld [vmem:[%s11 + $0x350] sm:$0xff]
  %v9229 = vld [vmem:[%s11 + $0x358] sm:$0xff]
  %v9230 = vld [vmem:[%s11 + $0x360] sm:$0xf]
  %v9231 = vld [vmem:[%s11 + $0x364] sm:$0xff]
  %v9232 = vld [vmem:[%s11 + $0x36c] sm:$0xff]
  %v9233 = vld [vmem:[%s11 + $0x374] sm:$0xff]
  %v9234 = vld [vmem:[%s11 + $0x37c] sm:$0xf]
  %v9235 = vld [vmem:[%s11 + $0x380] sm:$0xff]
  %v9236 = vld [vmem:[%s11 + $0x388] sm:$0xff]
  %v9237 = vld [vmem:[%s11 + $0x390] sm:$0xff]
  %v9238 = vld [vmem:[%s11 + $0x398] sm:$0xf]
  %v9239 = vld [vmem:[%s11 + $0x39c] sm:$0xff]
  %v9240 = vld [vmem:[%s11 + $0x3a4] sm:$0xff]
  %v9241 = vld [vmem:[%s11 + $0x3ac] sm:$0xff]
  %v9242 = vld [vmem:[%s11 + $0x3b4] sm:$0xf]
  %v9243 = vld [vmem:[%s11 + $0x3b8] sm:$0xff]
  %v9244 = vld [vmem:[%s11 + $0x3c0] sm:$0xff]
  %v9245 = vld [vmem:[%s11 + $0x3c8] sm:$0xff]
  %v9246 = vld [vmem:[%s11 + $0x3d0] sm:$0xf]
  %v9247 = vld [vmem:[%s11 + $0x3d4] sm:$0xff]
  %v9248 = vld [vmem:[%s11 + $0x3dc] sm:$0xff]
  %v9249 = vld [vmem:[%s11 + $0x3e4] sm:$0xff]
  %v9250 = vld [vmem:[%s11 + $0x3ec] sm:$0xf]
  %v9251 = vld [vmem:[%s11 + $0x3f0] sm:$0xff]
  %v9252 = vld [vmem:[%s11 + $0x3f8] sm:$0xff]
  %v9253 = vld [vmem:[%s11 + $0x400] sm:$0xff]
  %v9254 = vld [vmem:[%s11 + $0x408] sm:$0xf]
  %v9255 = vld [vmem:[%s11 + $0x40c] sm:$0xff]
  %v9256 = vld [vmem:[%s11 + $0x414] sm:$0xff]
  %v9257 = vld [vmem:[%s11 + $0x41c] sm:$0xff]
  %v9258 = vld [vmem:[%s11 + $0x424] sm:$0xf]
  %v9259 = vld [vmem:[%s11 + $0x428] sm:$0xff]
  %v9260 = vld [vmem:[%s11 + $0x430] sm:$0xff]
  %v9261 = vld [vmem:[%s11 + $0x438] sm:$0xff]
  %v9262 = vld [vmem:[%s11 + $0x440] sm:$0xf]
  %v9263 = vld [vmem:[%s11 + $0x444] sm:$0xff]
  %v9264 = vld [vmem:[%s11 + $0x44c] sm:$0xff]
  %v9265 = vld [vmem:[%s11 + $0x454] sm:$0xff]
  %v9266 = vld [vmem:[%s11 + $0x45c] sm:$0xf]
  %v9267 = vld [vmem:[%s11 + $0x460] sm:$0xff]
  %v9268 = vld [vmem:[%s11 + $0x468] sm:$0xff]
  %v9269 = vld [vmem:[%s11 + $0x470] sm:$0xff]
  %v9270 = vld [vmem:[%s11 + $0x478] sm:$0xf]
  %v9271 = vld [vmem:[%s11 + $0x47c] sm:$0xff]
  %v9272 = vld [vmem:[%s11 + $0x484] sm:$0xff]
  %v9273 = vld [vmem:[%s11 + $0x48c] sm:$0xff]
  %v9274 = vld [vmem:[%s11 + $0x494] sm:$0xf]
  %v9275 = vld [vmem:[%s11 + $0x498] sm:$0xff]
  %v9276 = vld [vmem:[%s11 + $0x4a0] sm:$0xff]
  %v9277 = vld [vmem:[%s11 + $0x4a8] sm:$0xff]
  %v9278 = vld [vmem:[%s11 + $0x4b0] sm:$0xf]
  %v9279 = vld [vmem:[%s11 + $0x4b4] sm:$0xff]
  %v9280 = vld [vmem:[%s11 + $0x4bc] sm:$0xff]
  %v9281 = vld [vmem:[%s11 + $0x4c4] sm:$0xff]
  %v9282 = vld [vmem:[%s11 + $0x4cc] sm:$0xf]
  %v9283 = vld [vmem:[%s11 + $0x4d0] sm:$0xff]
  %v9284 = vld [vmem:[%s11 + $0x4d8] sm:$0xff]
  %v9285 = vld [vmem:[%s11 + $0x4e0] sm:$0xff]
  %v9286 = vld [vmem:[%s11 + $0x4e8] sm:$0xf]
  %v9287 = vld [vmem:[%s11 + $0x4ec] sm:$0xff]
  %v9288 = vld [vmem:[%s11 + $0x4f4] sm:$0xff]
  %v9289 = vld [vmem:[%s11 + $0x4fc] sm:$0xff]
  %v9290 = vld [vmem:[%s11 + $0x504] sm:$0xf]
  %v9291 = vld [vmem:[%s11 + $0x508] sm:$0xff]
  %v9292 = vld [vmem:[%s11 + $0x510] sm:$0xff]
  %v9293 = vld [vmem:[%s11 + $0x518] sm:$0xff]
  %v9294 = vld [vmem:[%s11 + $0x520] sm:$0xf]
  %v9295 = vld [vmem:[%s11 + $0x524] sm:$0xff]
  %v9296 = vld [vmem:[%s11 + $0x52c] sm:$0xff]
  %v9297 = vld [vmem:[%s11 + $0x534] sm:$0xff]
  %v9298 = vld [vmem:[%s11 + $0x53c] sm:$0xf]
  %v9299 = vld [vmem:[%s11 + $0x540] sm:$0xff]
  %v9300 = vld [vmem:[%s11 + $0x548] sm:$0xff]
  %v9301 = vld [vmem:[%s11 + $0x550] sm:$0xff]
  %v9302 = vld [vmem:[%s11 + $0x558] sm:$0xf]
  %v9303 = vld [vmem:[%s11 + $0x55c] sm:$0xff]
  %v9304 = vld [vmem:[%s11 + $0x564] sm:$0xff]
  %v9305 = vld [vmem:[%s11 + $0x56c] sm:$0xff]
  %v9306 = vld [vmem:[%s11 + $0x574] sm:$0xf]
  %v9307 = vld [vmem:[%s11 + $0x578] sm:$0xff]
  %v9308 = vld [vmem:[%s11 + $0x580] sm:$0xff]
  %v9309 = vld [vmem:[%s11 + $0x588] sm:$0xff]
  %v9310 = vld [vmem:[%s11 + $0x590] sm:$0xf]
  %v9311 = vld [vmem:[%s11 + $0x594] sm:$0xff]
  %v9312 = vld [vmem:[%s11 + $0x59c] sm:$0xff]
  %v9313 = vld [vmem:[%s11 + $0x5a4] sm:$0xff]
  %v9314 = vld [vmem:[%s11 + $0x5ac] sm:$0xf]
  %v9315 = vld [vmem:[%s11 + $0x5b0] sm:$0xff]
  %v9316 = vld [vmem:[%s11 + $0x5b8] sm:$0xff]
  %v9317 = vld [vmem:[%s11 + $0x5c0] sm:$0xff]
  %v9318 = vld [vmem:[%s11 + $0x5c8] sm:$0xf]
  %v9319 = vld [vmem:[%s11 + $0x5cc] sm:$0xff]
  %v9320 = vld [vmem:[%s11 + $0x5d4] sm:$0xff]
  %v9321 = vld [vmem:[%s11 + $0x5dc] sm:$0xff]
  %v9322 = vld [vmem:[%s11 + $0x5e4] sm:$0xf]
  %v9323 = vld [vmem:[%s11 + $0x5e8] sm:$0xff]
  %v9324 = vld [vmem:[%s11 + $0x5f0] sm:$0xff]
  %v9325 = vld [vmem:[%s11 + $0x5f8] sm:$0xff]
  %v9326 = vld [vmem:[%s11 + $0x600] sm:$0xf]
  %v9327 = vld [vmem:[%s11 + $0x604] sm:$0xff]
  %v9328 = vld [vmem:[%s11 + $0x60c] sm:$0xff]
  %v9329 = vld [vmem:[%s11 + $0x614] sm:$0xff]
  %v9330 = vld [vmem:[%s11 + $0x61c] sm:$0xf]
  %v9331 = vld [vmem:[%s11 + $0x620] sm:$0xff]
  %v9332 = vld [vmem:[%s11 + $0x628] sm:$0xff]
  %v9333 = vld [vmem:[%s11 + $0x630] sm:$0xff]
  %v9334 = vld [vmem:[%s11 + $0x638] sm:$0xf]
  %v9335 = vld [vmem:[%s11 + $0x63c] sm:$0xff]
  %v9336 = vld [vmem:[%s11 + $0x644] sm:$0xff]
  %v9337 = vld [vmem:[%s11 + $0x64c] sm:$0xff]
  %v9338 = vld [vmem:[%s11 + $0x654] sm:$0xf]
  %v9339 = vld [vmem:[%s11 + $0x658] sm:$0xff]
  %v9340 = vld [vmem:[%s11 + $0x660] sm:$0xff]
  %v9341 = vld [vmem:[%s11 + $0x668] sm:$0xff]
  %v9342 = vld [vmem:[%s11 + $0x670] sm:$0xf]
  %v9343 = vld [vmem:[%s11 + $0x674] sm:$0xff]
  %v9344 = vld [vmem:[%s11 + $0x67c] sm:$0xff]
  %v9345 = vld [vmem:[%s11 + $0x684] sm:$0xff]
  %v9346 = vld [vmem:[%s11 + $0x68c] sm:$0xf]
  %v9347 = vld [vmem:[%s11 + $0x690] sm:$0xff]
  %v9348 = vld [vmem:[%s11 + $0x698] sm:$0xff]
  %v9349 = vld [vmem:[%s11 + $0x6a0] sm:$0xff]
  %v9350 = vld [vmem:[%s11 + $0x6a8] sm:$0xf]
  %v9351 = vld [vmem:[%s11 + $0x6ac] sm:$0xff]
  %v9352 = vld [vmem:[%s11 + $0x6b4] sm:$0xff]
  %v9353 = vld [vmem:[%s11 + $0x6bc] sm:$0xff]
  %v9354 = vld [vmem:[%s11 + $0x6c4] sm:$0xf]
  %v9355 = vld [vmem:[%s11 + $0x6c8] sm:$0xff]
  %v9356 = vld [vmem:[%s11 + $0x6d0] sm:$0xff]
  %v9357 = vld [vmem:[%s11 + $0x6d8] sm:$0xff]
  %v9358 = vld [vmem:[%s11 + $0x6e0] sm:$0xf]
  %v9359 = vld [vmem:[%s11 + $0x6e4] sm:$0xff]
  %v9360 = vld [vmem:[%s11 + $0x6ec] sm:$0xff]
  %v9361 = vld [vmem:[%s11 + $0x6f4] sm:$0xff]
  %v9362 = vld [vmem:[%s11 + $0x6fc] sm:$0xf]
  %v9363 = vld [vmem:[%s11 + $0x700] sm:$0xff]
  %v9364 = vld [vmem:[%s11 + $0x708] sm:$0xff]
  %v9365 = vld [vmem:[%s11 + $0x710] sm:$0xff]
  %v9366 = vld [vmem:[%s11 + $0x718] sm:$0xf]
  %v9367 = vld [vmem:[%s11 + $0x71c] sm:$0xff]
  %v9368 = vld [vmem:[%s11 + $0x724] sm:$0xff]
  %v9369 = vld [vmem:[%s11 + $0x72c] sm:$0xff]
  %v9370 = vld [vmem:[%s11 + $0x734] sm:$0xf]
  %v9371 = vld [vmem:[%s11 + $0x738] sm:$0xff]
  %v9372 = vld [vmem:[%s11 + $0x740] sm:$0xff]
  %v9373 = vld [vmem:[%s11 + $0x748] sm:$0xff]
  %v9374 = vld [vmem:[%s11 + $0x750] sm:$0xf]
  %v9375 = vld [vmem:[%s11 + $0x754] sm:$0xff]
  %v9376 = vld [vmem:[%s11 + $0x75c] sm:$0xff]
  %v9377 = vld [vmem:[%s11 + $0x764] sm:$0xff]
  %v9378 = vld [vmem:[%s11 + $0x76c] sm:$0xf]
  %v9379 = vld [vmem:[%s11 + $0x770] sm:$0xff]
  %v9380 = vld [vmem:[%s11 + $0x778] sm:$0xff]
  %v9381 = vld [vmem:[%s11 + $0x780] sm:$0xff]
  %v9382 = vld [vmem:[%s11 + $0x788] sm:$0xf]
  %v9383 = vld [vmem:[%s11 + $0x78c] sm:$0xff]
  %v9384 = vld [vmem:[%s11 + $0x794] sm:$0xff]
  %v9385 = vld [vmem:[%s11 + $0x79c] sm:$0xff]
  %v9386 = vld [vmem:[%s11 + $0x7a4] sm:$0xf]
  %v9387 = vld [vmem:[%s11 + $0x7a8] sm:$0xff]
  %v9388 = vld [vmem:[%s11 + $0x7b0] sm:$0xff]
  %v9389 = vld [vmem:[%s11 + $0x7b8] sm:$0xff]
  %v9390 = vld [vmem:[%s11 + $0x7c0] sm:$0xf]
  %v9391 = vld [vmem:[%s11 + $0x7c4] sm:$0xff]
  %v9392 = vld [vmem:[%s11 + $0x7cc] sm:$0xff]
  %v9393 = vld [vmem:[%s11 + $0x7d4] sm:$0xff]
  %v9394 = vld [vmem:[%s11 + $0x7dc] sm:$0xf]
  %v9395 = vld [vmem:[%s11 + $0x7e0] sm:$0xff]
  %v9396 = vld [vmem:[%s11 + $0x7e8] sm:$0xff]
  %v9397 = vld [vmem:[%s11 + $0x7f0] sm:$0xff]
  %v9398 = vld [vmem:[%s11 + $0x7f8] sm:$0xf]
  %v9399 = vld [vmem:[%s11 + $0x7fc] sm:$0xff]
  %v9400 = vld [vmem:[%s11 + $0x804] sm:$0xff]
  %v9401 = vld [vmem:[%s11 + $0x80c] sm:$0xff]
  %v9402 = vld [vmem:[%s11 + $0x814] sm:$0xf]
  %v9403 = vld [vmem:[%s11 + $0x818] sm:$0xff]
  %v9404 = vld [vmem:[%s11 + $0x820] sm:$0xff]
  %v9405 = vld [vmem:[%s11 + $0x828] sm:$0xff]
  %v9406 = vld [vmem:[%s11 + $0x830] sm:$0xf]
  %v9407 = vld [vmem:[%s11 + $0x834] sm:$0xff]
  %v9408 = vld [vmem:[%s11 + $0x83c] sm:$0xff]
  %v9409 = vld [vmem:[%s11 + $0x844] sm:$0xff]
  %v9410 = vld [vmem:[%s11 + $0x84c] sm:$0xf]
  %v9411 = vld [vmem:[%s11 + $0x850] sm:$0xff]
  %v9412 = vld [vmem:[%s11 + $0x858] sm:$0xff]
  %v9413 = vld [vmem:[%s11 + $0x860] sm:$0xff]
  %v9414 = vld [vmem:[%s11 + $0x868] sm:$0xf]
  %v9415 = vld [vmem:[%s11 + $0x86c] sm:$0xff]
  %v9416 = vld [vmem:[%s11 + $0x874] sm:$0xff]
  %v9417 = vld [vmem:[%s11 + $0x87c] sm:$0xff]
  %v9418 = vld [vmem:[%s11 + $0x884] sm:$0xf]
  %v9419 = vld [vmem:[%s11 + $0x888] sm:$0xff]
  %v9420 = vld [vmem:[%s11 + $0x890] sm:$0xff]
  %v9421 = vld [vmem:[%s11 + $0x898] sm:$0xff]
  %v9422 = vld [vmem:[%s11 + $0x8a0] sm:$0xf]
  %v9423 = vld [vmem:[%s11 + $0x8a4] sm:$0xff]
  %v9424 = vld [vmem:[%s11 + $0x8ac] sm:$0xff]
  %v9425 = vld [vmem:[%s11 + $0x8b4] sm:$0xff]
  %v9426 = vld [vmem:[%s11 + $0x8bc] sm:$0xf]
  %v9427 = vld [vmem:[%s11 + $0x8c0] sm:$0xff]
  %v9428 = vld [vmem:[%s11 + $0x8c8] sm:$0xff]
  %v9429 = vld [vmem:[%s11 + $0x8d0] sm:$0xff]
  %v9430 = vld [vmem:[%s11 + $0x8d8] sm:$0xf]
  %v9431 = vld [vmem:[%s11 + $0x8dc] sm:$0xff]
  %v9432 = vld [vmem:[%s11 + $0x8e4] sm:$0xff]
  %v9433 = vld [vmem:[%s11 + $0x8ec] sm:$0xff]
  %v9434 = vld [vmem:[%s11 + $0x8f4] sm:$0xf]
  %v9435 = vld [vmem:[%s11 + $0x8f8] sm:$0xff]
  %v9436 = vld [vmem:[%s11 + $0x900] sm:$0xff]
  %v9437 = vld [vmem:[%s11 + $0x908] sm:$0xff]
  %v9438 = vld [vmem:[%s11 + $0x910] sm:$0xf]
  %v9439 = vld [vmem:[%s11 + $0x914] sm:$0xff]
  %v9440 = vld [vmem:[%s11 + $0x91c] sm:$0xff]
  %v9441 = vld [vmem:[%s11 + $0x924] sm:$0xff]
  %v9442 = vld [vmem:[%s11 + $0x92c] sm:$0xf]
  %v9443 = vld [vmem:[%s11 + $0x930] sm:$0xff]
  %v9444 = vld [vmem:[%s11 + $0x938] sm:$0xff]
  %v9445 = vld [vmem:[%s11 + $0x940] sm:$0xff]
  %v9446 = vld [vmem:[%s11 + $0x948] sm:$0xf]
  %v9447 = vld [vmem:[%s11 + $0x94c] sm:$0xff]
  %v9448 = vld [vmem:[%s11 + $0x954] sm:$0xff]
  %v9449 = vld [vmem:[%s11 + $0x95c] sm:$0xff]
  %v9450 = vld [vmem:[%s11 + $0x964] sm:$0xf]
  %v9451 = vld [vmem:[%s11 + $0x968] sm:$0xff]
  %v9452 = vld [vmem:[%s11 + $0x970] sm:$0xff]
  %v9453 = vld [vmem:[%s11 + $0x978] sm:$0xff]
  %v9454 = vld [vmem:[%s11 + $0x980] sm:$0xf]
  %v9455 = vld [vmem:[%s11 + $0x984] sm:$0xff]
  %v9456 = vld [vmem:[%s11 + $0x98c] sm:$0xff]
  %v9457 = vld [vmem:[%s11 + $0x994] sm:$0xff]
  %v9458 = vld [vmem:[%s11 + $0x99c] sm:$0xf]
  %v9459 = vld [vmem:[%s11 + $0x9a0] sm:$0xff]
  %v9460 = vld [vmem:[%s11 + $0x9a8] sm:$0xff]
  %v9461 = vld [vmem:[%s11 + $0x9b0] sm:$0xff]
  %v9462 = vld [vmem:[%s11 + $0x9b8] sm:$0xf]
  %v9463 = vld [vmem:[%s11 + $0x9bc] sm:$0xff]
  %v9464 = vld [vmem:[%s11 + $0x9c4] sm:$0xff]
  %v9465 = vld [vmem:[%s11 + $0x9cc] sm:$0xff]
  %v9466 = vld [vmem:[%s11 + $0x9d4] sm:$0xf]
  %v9467 = vld [vmem:[%s11 + $0x9d8] sm:$0xff]
  %v9468 = vld [vmem:[%s11 + $0x9e0] sm:$0xff]
  %v9469 = vld [vmem:[%s11 + $0x9e8] sm:$0xff]
  %v9470 = vld [vmem:[%s11 + $0x9f0] sm:$0xf]
  %v9471 = vld [vmem:[%s11 + $0x9f4] sm:$0xff]
  %v9472 = vld [vmem:[%s11 + $0x9fc] sm:$0xff]
  %v9473 = vld [vmem:[%s11 + $0xa04] sm:$0xff]
  %v9474 = vld [vmem:[%s11 + $0xa0c] sm:$0xf]
  %v9475 = vld [vmem:[%s11 + $0xa10] sm:$0xff]
  %v9476 = vld [vmem:[%s11 + $0xa18] sm:$0xff]
  %v9477 = vld [vmem:[%s11 + $0xa20] sm:$0xff]
  %v9478 = vld [vmem:[%s11 + $0xa28] sm:$0xf]
  %v9479 = vld [vmem:[%s11 + $0xa2c] sm:$0xff]
  %v9480 = vld [vmem:[%s11 + $0xa34] sm:$0xff]
  %v9481 = vld [vmem:[%s11 + $0xa3c] sm:$0xff]
  %v9482 = vld [vmem:[%s11 + $0xa44] sm:$0xf]
  %v9483 = vld [vmem:[%s11 + $0xa48] sm:$0xff]
  %v9484 = vld [vmem:[%s11 + $0xa50] sm:$0xff]
  %v9485 = vld [vmem:[%s11 + $0xa58] sm:$0xff]
  %v9486 = vld [vmem:[%s11 + $0xa60] sm:$0xf]
  %v9487 = vld [vmem:[%s11 + $0xa64] sm:$0xff]
  %v9488 = vld [vmem:[%s11 + $0xa6c] sm:$0xff]
  %v9489 = vld [vmem:[%s11 + $0xa74] sm:$0xff]
  %v9490 = vld [vmem:[%s11 + $0xa7c] sm:$0xf]
  %v9491 = vld [vmem:[%s11 + $0xa80] sm:$0xff]
  %v9492 = vld [vmem:[%s11 + $0xa88] sm:$0xff]
  %v9493 = vld [vmem:[%s11 + $0xa90] sm:$0xff]
  %v9494 = vld [vmem:[%s11 + $0xa98] sm:$0xf]
  %v9495 = vld [vmem:[%s11 + $0xa9c] sm:$0xff]
  %v9496 = vld [vmem:[%s11 + $0xaa4] sm:$0xff]
  %v9497 = vld [vmem:[%s11 + $0xaac] sm:$0xff]
  %v9498 = vld [vmem:[%s11 + $0xab4] sm:$0xf]
  %v9499 = vld [vmem:[%s11 + $0xab8] sm:$0xff]
  %v9500 = vld [vmem:[%s11 + $0xac0] sm:$0xff]
  %v9501 = vld [vmem:[%s11 + $0xac8] sm:$0xff]
  %v9502 = vld [vmem:[%s11 + $0xad0] sm:$0xf]
  %v9503 = vld [vmem:[%s11 + $0xad4] sm:$0xff]
  %v9504 = vld [vmem:[%s11 + $0xadc] sm:$0xff]
  %v9505 = vld [vmem:[%s11 + $0xae4] sm:$0xff]
  %v9506 = vld [vmem:[%s11 + $0xaec] sm:$0xf]
  %v9507 = vld [vmem:[%s11 + $0xaf0] sm:$0xff]
  %v9508 = vld [vmem:[%s11 + $0xaf8] sm:$0xff]
  %v9509 = vld [vmem:[%s11 + $0xb00] sm:$0xff]
  %v9510 = vld [vmem:[%s11 + $0xb08] sm:$0xf]
  %v9511 = vld [vmem:[%s11 + $0xb0c] sm:$0xff]
  %v9512 = vld [vmem:[%s11 + $0xb14] sm:$0xff]
  %v9513 = vld [vmem:[%s11 + $0xb1c] sm:$0xff]
  %v9514 = vld [vmem:[%s11 + $0xb24] sm:$0xf]
  %v9515 = vld [vmem:[%s11 + $0xb28] sm:$0xff]
  %v9516 = vld [vmem:[%s11 + $0xb30] sm:$0xff]
  %v9517 = vld [vmem:[%s11 + $0xb38] sm:$0xff]
  %v9518 = vld [vmem:[%s11 + $0xb40] sm:$0xf]
  %v9519 = vld [vmem:[%s11 + $0xb44] sm:$0xff]
  %v9520 = vld [vmem:[%s11 + $0xb4c] sm:$0xff]
  %v9521 = vld [vmem:[%s11 + $0xb54] sm:$0xff]
  %v9522 = vld [vmem:[%s11 + $0xb5c] sm:$0xf]
  %v9523 = vld [vmem:[%s11 + $0xb60] sm:$0xff]
  %v9524 = vld [vmem:[%s11 + $0xb68] sm:$0xff]
  %v9525 = vld [vmem:[%s11 + $0xb70] sm:$0xff]
  %v9526 = vld [vmem:[%s11 + $0xb78] sm:$0xf]
  %v9527 = vld [vmem:[%s11 + $0xb7c] sm:$0xff]
  %v9528 = vld [vmem:[%s11 + $0xb84] sm:$0xff]
  %v9529 = vld [vmem:[%s11 + $0xb8c] sm:$0xff]
  %v9530 = vld [vmem:[%s11 + $0xb94] sm:$0xf]
  %v9531 = vld [vmem:[%s11 + $0xb98] sm:$0xff]
  %v9532 = vld [vmem:[%s11 + $0xba0] sm:$0xff]
  %v9533 = vld [vmem:[%s11 + $0xba8] sm:$0xff]
  %v9534 = vld [vmem:[%s11 + $0xbb0] sm:$0xf]
  %v9535 = vld [vmem:[%s11 + $0xbb4] sm:$0xff]
  %v9536 = vld [vmem:[%s11 + $0xbbc] sm:$0xff]
  %v9537 = vld [vmem:[%s11 + $0xbc4] sm:$0xff]
  %v9538 = vld [vmem:[%s11 + $0xbcc] sm:$0xf]
  %v9539 = vld [vmem:[%s11 + $0xbd0] sm:$0xff]
  %v9540 = vld [vmem:[%s11 + $0xbd8] sm:$0xff]
  %v9541 = vld [vmem:[%s11 + $0xbe0] sm:$0xff]
  %v9542 = vld [vmem:[%s11 + $0xbe8] sm:$0xf]
  %v9543 = vld [vmem:[%s11 + $0xbec] sm:$0xff]
  %v9544 = vld [vmem:[%s11 + $0xbf4] sm:$0xff]
  %v9545 = vld [vmem:[%s11 + $0xbfc] sm:$0xff]
  %v9546 = vld [vmem:[%s11 + $0xc04] sm:$0xf]
  %v9547 = vld [vmem:[%s11 + $0xc08] sm:$0xff]
  %v9548 = vld [vmem:[%s11 + $0xc10] sm:$0xff]
  %v9549 = vld [vmem:[%s11 + $0xc18] sm:$0xff]
  %v9550 = vld [vmem:[%s11 + $0xc20] sm:$0xf]
  %v9551 = vld [vmem:[%s11 + $0xc24] sm:$0xff]
  %v9552 = vld [vmem:[%s11 + $0xc2c] sm:$0xff]
  %v9553 = vld [vmem:[%s11 + $0xc34] sm:$0xff]
  %v9554 = vld [vmem:[%s11 + $0xc3c] sm:$0xf]
  %v9555 = vld [vmem:[%s12] sm:$0xff]
  %v9557 = vlaneseq
  %v9558 = vshrl.u32 %v9557, 7
  %v9559 = vsub.s32 0, %v9558
  %v9560 = vrot.slane %v9555, %v9559
  %v9561 = vlaneseq
  %v9562 = vshrl.u32 %v9561, 7
  %v9563 = vsub.s32 1, %v9562
  %v9564 = vrot.slane %v9555, %v9563
  %v9565 = vlaneseq
  %v9566 = vshrl.u32 %v9565, 7
  %v9567 = vsub.s32 2, %v9566
  %v9568 = vrot.slane %v9555, %v9567
  %v9569 = vlaneseq
  %v9570 = vshrl.u32 %v9569, 7
  %v9571 = vsub.s32 3, %v9570
  %v9572 = vrot.slane %v9555, %v9571
  %v9573 = vlaneseq
  %v9574 = vshrl.u32 %v9573, 7
  %v9575 = vsub.s32 4, %v9574
  %v9576 = vrot.slane %v9555, %v9575
  %v9577 = vlaneseq
  %v9578 = vshrl.u32 %v9577, 7
  %v9579 = vsub.s32 5, %v9578
  %v9580 = vrot.slane %v9555, %v9579
  %v9581 = vlaneseq
  %v9582 = vshrl.u32 %v9581, 7
  %v9583 = vsub.s32 6, %v9582
  %v9584 = vrot.slane %v9555, %v9583
  %v10040 = vunpack.c.l.b16 %v9107
  %v10041 = vunpack.c.h.b16 %v9107
  %v10042 = vunpack.c.l.b16 %v9108
  %v10043 = vunpack.c.h.b16 %v9108
  %v10044 = vunpack.c.l.b16 %v9109
  %v10045 = vunpack.c.h.b16 %v9109
  %v10046 = vunpack.c.l.b16 %v9110
  %v10047 = vunpack.c.l.b16 %v9111
  %v10048 = vunpack.c.h.b16 %v9111
  %v10049 = vunpack.c.l.b16 %v9112
  %v10050 = vunpack.c.h.b16 %v9112
  %v10051 = vunpack.c.l.b16 %v9113
  %v10052 = vunpack.c.h.b16 %v9113
  %v10053 = vunpack.c.l.b16 %v9114
  %v10054 = vunpack.c.l.b16 %v9115
  %v10055 = vunpack.c.h.b16 %v9115
  %v10056 = vunpack.c.l.b16 %v9116
  %v10057 = vunpack.c.h.b16 %v9116
  %v10058 = vunpack.c.l.b16 %v9117
  %v10059 = vunpack.c.h.b16 %v9117
  %v10060 = vunpack.c.l.b16 %v9118
  %v10061 = vunpack.c.l.b16 %v9119
  %v10062 = vunpack.c.h.b16 %v9119
  %v10063 = vunpack.c.l.b16 %v9120
  %v10064 = vunpack.c.h.b16 %v9120
  %v10065 = vunpack.c.l.b16 %v9121
  %v10066 = vunpack.c.h.b16 %v9121
  %v10067 = vunpack.c.l.b16 %v9122
  %v10068 = vunpack.c.l.b16 %v9123
  %v10069 = vunpack.c.h.b16 %v9123
  %v10070 = vunpack.c.l.b16 %v9124
  %v10071 = vunpack.c.h.b16 %v9124
  %v10072 = vunpack.c.l.b16 %v9125
  %v10073 = vunpack.c.h.b16 %v9125
  %v10074 = vunpack.c.l.b16 %v9126
  %v10075 = vunpack.c.l.b16 %v9127
  %v10076 = vunpack.c.h.b16 %v9127
  %v10077 = vunpack.c.l.b16 %v9128
  %v10078 = vunpack.c.h.b16 %v9128
  %v10079 = vunpack.c.l.b16 %v9129
  %v10080 = vunpack.c.h.b16 %v9129
  %v10081 = vunpack.c.l.b16 %v9130
  %v10082 = vunpack.c.l.b16 %v9131
  %v10083 = vunpack.c.h.b16 %v9131
  %v10084 = vunpack.c.l.b16 %v9132
  %v10085 = vunpack.c.h.b16 %v9132
  %v10086 = vunpack.c.l.b16 %v9133
  %v10087 = vunpack.c.h.b16 %v9133
  %v10088 = vunpack.c.l.b16 %v9134
  %v10089 = vunpack.c.l.b16 %v9135
  %v10090 = vunpack.c.h.b16 %v9135
  %v10091 = vunpack.c.l.b16 %v9136
  %v10092 = vunpack.c.h.b16 %v9136
  %v10093 = vunpack.c.l.b16 %v9137
  %v10094 = vunpack.c.h.b16 %v9137
  %v10095 = vunpack.c.l.b16 %v9138
  %v10096 = vunpack.c.l.b16 %v9139
  %v10097 = vunpack.c.h.b16 %v9139
  %v10098 = vunpack.c.l.b16 %v9140
  %v10099 = vunpack.c.h.b16 %v9140
  %v10100 = vunpack.c.l.b16 %v9141
  %v10101 = vunpack.c.h.b16 %v9141
  %v10102 = vunpack.c.l.b16 %v9142
  %v10103 = vunpack.c.l.b16 %v9143
  %v10104 = vunpack.c.h.b16 %v9143
  %v10105 = vunpack.c.l.b16 %v9144
  %v10106 = vunpack.c.h.b16 %v9144
  %v10107 = vunpack.c.l.b16 %v9145
  %v10108 = vunpack.c.h.b16 %v9145
  %v10109 = vunpack.c.l.b16 %v9146
  %v10110 = vunpack.c.l.b16 %v9147
  %v10111 = vunpack.c.h.b16 %v9147
  %v10112 = vunpack.c.l.b16 %v9148
  %v10113 = vunpack.c.h.b16 %v9148
  %v10114 = vunpack.c.l.b16 %v9149
  %v10115 = vunpack.c.h.b16 %v9149
  %v10116 = vunpack.c.l.b16 %v9150
  %v10117 = vunpack.c.l.b16 %v9151
  %v10118 = vunpack.c.h.b16 %v9151
  %v10119 = vunpack.c.l.b16 %v9152
  %v10120 = vunpack.c.h.b16 %v9152
  %v10121 = vunpack.c.l.b16 %v9153
  %v10122 = vunpack.c.h.b16 %v9153
  %v10123 = vunpack.c.l.b16 %v9154
  %v10124 = vunpack.c.l.b16 %v9155
  %v10125 = vunpack.c.h.b16 %v9155
  %v10126 = vunpack.c.l.b16 %v9156
  %v10127 = vunpack.c.h.b16 %v9156
  %v10128 = vunpack.c.l.b16 %v9157
  %v10129 = vunpack.c.h.b16 %v9157
  %v10130 = vunpack.c.l.b16 %v9158
  %v10131 = vunpack.c.l.b16 %v9159
  %v10132 = vunpack.c.h.b16 %v9159
  %v10133 = vunpack.c.l.b16 %v9160
  %v10134 = vunpack.c.h.b16 %v9160
  %v10135 = vunpack.c.l.b16 %v9161
  %v10136 = vunpack.c.h.b16 %v9161
  %v10137 = vunpack.c.l.b16 %v9162
  %v10138 = vunpack.c.l.b16 %v9163
  %v10139 = vunpack.c.h.b16 %v9163
  %v10140 = vunpack.c.l.b16 %v9164
  %v10141 = vunpack.c.h.b16 %v9164
  %v10142 = vunpack.c.l.b16 %v9165
  %v10143 = vunpack.c.h.b16 %v9165
  %v10144 = vunpack.c.l.b16 %v9166
  %v10145 = vunpack.c.l.b16 %v9167
  %v10146 = vunpack.c.h.b16 %v9167
  %v10147 = vunpack.c.l.b16 %v9168
  %v10148 = vunpack.c.h.b16 %v9168
  %v10149 = vunpack.c.l.b16 %v9169
  %v10150 = vunpack.c.h.b16 %v9169
  %v10151 = vunpack.c.l.b16 %v9170
  %v10152 = vunpack.c.l.b16 %v9171
  %v10153 = vunpack.c.h.b16 %v9171
  %v10154 = vunpack.c.l.b16 %v9172
  %v10155 = vunpack.c.h.b16 %v9172
  %v10156 = vunpack.c.l.b16 %v9173
  %v10157 = vunpack.c.h.b16 %v9173
  %v10158 = vunpack.c.l.b16 %v9174
  %v10159 = vunpack.c.l.b16 %v9175
  %v10160 = vunpack.c.h.b16 %v9175
  %v10161 = vunpack.c.l.b16 %v9176
  %v10162 = vunpack.c.h.b16 %v9176
  %v10163 = vunpack.c.l.b16 %v9177
  %v10164 = vunpack.c.h.b16 %v9177
  %v10165 = vunpack.c.l.b16 %v9178
  %v10166 = vunpack.c.l.b16 %v9179
  %v10167 = vunpack.c.h.b16 %v9179
  %v10168 = vunpack.c.l.b16 %v9180
  %v10169 = vunpack.c.h.b16 %v9180
  %v10170 = vunpack.c.l.b16 %v9181
  %v10171 = vunpack.c.h.b16 %v9181
  %v10172 = vunpack.c.l.b16 %v9182
  %v10173 = vunpack.c.l.b16 %v9183
  %v10174 = vunpack.c.h.b16 %v9183
  %v10175 = vunpack.c.l.b16 %v9184
  %v10176 = vunpack.c.h.b16 %v9184
  %v10177 = vunpack.c.l.b16 %v9185
  %v10178 = vunpack.c.h.b16 %v9185
  %v10179 = vunpack.c.l.b16 %v9186
  %v10180 = vunpack.c.l.b16 %v9187
  %v10181 = vunpack.c.h.b16 %v9187
  %v10182 = vunpack.c.l.b16 %v9188
  %v10183 = vunpack.c.h.b16 %v9188
  %v10184 = vunpack.c.l.b16 %v9189
  %v10185 = vunpack.c.h.b16 %v9189
  %v10186 = vunpack.c.l.b16 %v9190
  %v10187 = vunpack.c.l.b16 %v9191
  %v10188 = vunpack.c.h.b16 %v9191
  %v10189 = vunpack.c.l.b16 %v9192
  %v10190 = vunpack.c.h.b16 %v9192
  %v10191 = vunpack.c.l.b16 %v9193
  %v10192 = vunpack.c.h.b16 %v9193
  %v10193 = vunpack.c.l.b16 %v9194
  %v10194 = vunpack.c.l.b16 %v9195
  %v10195 = vunpack.c.h.b16 %v9195
  %v10196 = vunpack.c.l.b16 %v9196
  %v10197 = vunpack.c.h.b16 %v9196
  %v10198 = vunpack.c.l.b16 %v9197
  %v10199 = vunpack.c.h.b16 %v9197
  %v10200 = vunpack.c.l.b16 %v9198
  %v10201 = vunpack.c.l.b16 %v9199
  %v10202 = vunpack.c.h.b16 %v9199
  %v10203 = vunpack.c.l.b16 %v9200
  %v10204 = vunpack.c.h.b16 %v9200
  %v10205 = vunpack.c.l.b16 %v9201
  %v10206 = vunpack.c.h.b16 %v9201
  %v10207 = vunpack.c.l.b16 %v9202
  %v10208 = vunpack.c.l.b16 %v9203
  %v10209 = vunpack.c.h.b16 %v9203
  %v10210 = vunpack.c.l.b16 %v9204
  %v10211 = vunpack.c.h.b16 %v9204
  %v10212 = vunpack.c.l.b16 %v9205
  %v10213 = vunpack.c.h.b16 %v9205
  %v10214 = vunpack.c.l.b16 %v9206
  %v10215 = vunpack.c.l.b16 %v9207
  %v10216 = vunpack.c.h.b16 %v9207
  %v10217 = vunpack.c.l.b16 %v9208
  %v10218 = vunpack.c.h.b16 %v9208
  %v10219 = vunpack.c.l.b16 %v9209
  %v10220 = vunpack.c.h.b16 %v9209
  %v10221 = vunpack.c.l.b16 %v9210
  %v10222 = vunpack.c.l.b16 %v9211
  %v10223 = vunpack.c.h.b16 %v9211
  %v10224 = vunpack.c.l.b16 %v9212
  %v10225 = vunpack.c.h.b16 %v9212
  %v10226 = vunpack.c.l.b16 %v9213
  %v10227 = vunpack.c.h.b16 %v9213
  %v10228 = vunpack.c.l.b16 %v9214
  %v10229 = vunpack.c.l.b16 %v9215
  %v10230 = vunpack.c.h.b16 %v9215
  %v10231 = vunpack.c.l.b16 %v9216
  %v10232 = vunpack.c.h.b16 %v9216
  %v10233 = vunpack.c.l.b16 %v9217
  %v10234 = vunpack.c.h.b16 %v9217
  %v10235 = vunpack.c.l.b16 %v9218
  %v10236 = vunpack.c.l.b16 %v9219
  %v10237 = vunpack.c.h.b16 %v9219
  %v10238 = vunpack.c.l.b16 %v9220
  %v10239 = vunpack.c.h.b16 %v9220
  %v10240 = vunpack.c.l.b16 %v9221
  %v10241 = vunpack.c.h.b16 %v9221
  %v10242 = vunpack.c.l.b16 %v9222
  %v10243 = vunpack.c.l.b16 %v9223
  %v10244 = vunpack.c.h.b16 %v9223
  %v10245 = vunpack.c.l.b16 %v9224
  %v10246 = vunpack.c.h.b16 %v9224
  %v10247 = vunpack.c.l.b16 %v9225
  %v10248 = vunpack.c.h.b16 %v9225
  %v10249 = vunpack.c.l.b16 %v9226
  %v10250 = vunpack.c.l.b16 %v9227
  %v10251 = vunpack.c.h.b16 %v9227
  %v10252 = vunpack.c.l.b16 %v9228
  %v10253 = vunpack.c.h.b16 %v9228
  %v10254 = vunpack.c.l.b16 %v9229
  %v10255 = vunpack.c.h.b16 %v9229
  %v10256 = vunpack.c.l.b16 %v9230
  %v10257 = vunpack.c.l.b16 %v9231
  %v10258 = vunpack.c.h.b16 %v9231
  %v10259 = vunpack.c.l.b16 %v9232
  %v10260 = vunpack.c.h.b16 %v9232
  %v10261 = vunpack.c.l.b16 %v9233
  %v10262 = vunpack.c.h.b16 %v9233
  %v10263 = vunpack.c.l.b16 %v9234
  %v10264 = vunpack.c.l.b16 %v9235
  %v10265 = vunpack.c.h.b16 %v9235
  %v10266 = vunpack.c.l.b16 %v9236
  %v10267 = vunpack.c.h.b16 %v9236
  %v10268 = vunpack.c.l.b16 %v9237
  %v10269 = vunpack.c.h.b16 %v9237
  %v10270 = vunpack.c.l.b16 %v9238
  %v10271 = vunpack.c.l.b16 %v9239
  %v10272 = vunpack.c.h.b16 %v9239
  %v10273 = vunpack.c.l.b16 %v9240
  %v10274 = vunpack.c.h.b16 %v9240
  %v10275 = vunpack.c.l.b16 %v9241
  %v10276 = vunpack.c.h.b16 %v9241
  %v10277 = vunpack.c.l.b16 %v9242
  %v10278 = vunpack.c.l.b16 %v9243
  %v10279 = vunpack.c.h.b16 %v9243
  %v10280 = vunpack.c.l.b16 %v9244
  %v10281 = vunpack.c.h.b16 %v9244
  %v10282 = vunpack.c.l.b16 %v9245
  %v10283 = vunpack.c.h.b16 %v9245
  %v10284 = vunpack.c.l.b16 %v9246
  %v10285 = vunpack.c.l.b16 %v9247
  %v10286 = vunpack.c.h.b16 %v9247
  %v10287 = vunpack.c.l.b16 %v9248
  %v10288 = vunpack.c.h.b16 %v9248
  %v10289 = vunpack.c.l.b16 %v9249
  %v10290 = vunpack.c.h.b16 %v9249
  %v10291 = vunpack.c.l.b16 %v9250
  %v10292 = vunpack.c.l.b16 %v9251
  %v10293 = vunpack.c.h.b16 %v9251
  %v10294 = vunpack.c.l.b16 %v9252
  %v10295 = vunpack.c.h.b16 %v9252
  %v10296 = vunpack.c.l.b16 %v9253
  %v10297 = vunpack.c.h.b16 %v9253
  %v10298 = vunpack.c.l.b16 %v9254
  %v10299 = vunpack.c.l.b16 %v9255
  %v10300 = vunpack.c.h.b16 %v9255
  %v10301 = vunpack.c.l.b16 %v9256
  %v10302 = vunpack.c.h.b16 %v9256
  %v10303 = vunpack.c.l.b16 %v9257
  %v10304 = vunpack.c.h.b16 %v9257
  %v10305 = vunpack.c.l.b16 %v9258
  %v10306 = vunpack.c.l.b16 %v9259
  %v10307 = vunpack.c.h.b16 %v9259
  %v10308 = vunpack.c.l.b16 %v9260
  %v10309 = vunpack.c.h.b16 %v9260
  %v10310 = vunpack.c.l.b16 %v9261
  %v10311 = vunpack.c.h.b16 %v9261
  %v10312 = vunpack.c.l.b16 %v9262
  %v10313 = vunpack.c.l.b16 %v9263
  %v10314 = vunpack.c.h.b16 %v9263
  %v10315 = vunpack.c.l.b16 %v9264
  %v10316 = vunpack.c.h.b16 %v9264
  %v10317 = vunpack.c.l.b16 %v9265
  %v10318 = vunpack.c.h.b16 %v9265
  %v10319 = vunpack.c.l.b16 %v9266
  %v10320 = vunpack.c.l.b16 %v9267
  %v10321 = vunpack.c.h.b16 %v9267
  %v10322 = vunpack.c.l.b16 %v9268
  %v10323 = vunpack.c.h.b16 %v9268
  %v10324 = vunpack.c.l.b16 %v9269
  %v10325 = vunpack.c.h.b16 %v9269
  %v10326 = vunpack.c.l.b16 %v9270
  %v10327 = vunpack.c.l.b16 %v9271
  %v10328 = vunpack.c.h.b16 %v9271
  %v10329 = vunpack.c.l.b16 %v9272
  %v10330 = vunpack.c.h.b16 %v9272
  %v10331 = vunpack.c.l.b16 %v9273
  %v10332 = vunpack.c.h.b16 %v9273
  %v10333 = vunpack.c.l.b16 %v9274
  %v10334 = vunpack.c.l.b16 %v9275
  %v10335 = vunpack.c.h.b16 %v9275
  %v10336 = vunpack.c.l.b16 %v9276
  %v10337 = vunpack.c.h.b16 %v9276
  %v10338 = vunpack.c.l.b16 %v9277
  %v10339 = vunpack.c.h.b16 %v9277
  %v10340 = vunpack.c.l.b16 %v9278
  %v10341 = vunpack.c.l.b16 %v9279
  %v10342 = vunpack.c.h.b16 %v9279
  %v10343 = vunpack.c.l.b16 %v9280
  %v10344 = vunpack.c.h.b16 %v9280
  %v10345 = vunpack.c.l.b16 %v9281
  %v10346 = vunpack.c.h.b16 %v9281
  %v10347 = vunpack.c.l.b16 %v9282
  %v10348 = vunpack.c.l.b16 %v9283
  %v10349 = vunpack.c.h.b16 %v9283
  %v10350 = vunpack.c.l.b16 %v9284
  %v10351 = vunpack.c.h.b16 %v9284
  %v10352 = vunpack.c.l.b16 %v9285
  %v10353 = vunpack.c.h.b16 %v9285
  %v10354 = vunpack.c.l.b16 %v9286
  %v10355 = vunpack.c.l.b16 %v9287
  %v10356 = vunpack.c.h.b16 %v9287
  %v10357 = vunpack.c.l.b16 %v9288
  %v10358 = vunpack.c.h.b16 %v9288
  %v10359 = vunpack.c.l.b16 %v9289
  %v10360 = vunpack.c.h.b16 %v9289
  %v10361 = vunpack.c.l.b16 %v9290
  %v10362 = vunpack.c.l.b16 %v9291
  %v10363 = vunpack.c.h.b16 %v9291
  %v10364 = vunpack.c.l.b16 %v9292
  %v10365 = vunpack.c.h.b16 %v9292
  %v10366 = vunpack.c.l.b16 %v9293
  %v10367 = vunpack.c.h.b16 %v9293
  %v10368 = vunpack.c.l.b16 %v9294
  %v10369 = vunpack.c.l.b16 %v9295
  %v10370 = vunpack.c.h.b16 %v9295
  %v10371 = vunpack.c.l.b16 %v9296
  %v10372 = vunpack.c.h.b16 %v9296
  %v10373 = vunpack.c.l.b16 %v9297
  %v10374 = vunpack.c.h.b16 %v9297
  %v10375 = vunpack.c.l.b16 %v9298
  %v10376 = vunpack.c.l.b16 %v9299
  %v10377 = vunpack.c.h.b16 %v9299
  %v10378 = vunpack.c.l.b16 %v9300
  %v10379 = vunpack.c.h.b16 %v9300
  %v10380 = vunpack.c.l.b16 %v9301
  %v10381 = vunpack.c.h.b16 %v9301
  %v10382 = vunpack.c.l.b16 %v9302
  %v10383 = vunpack.c.l.b16 %v9303
  %v10384 = vunpack.c.h.b16 %v9303
  %v10385 = vunpack.c.l.b16 %v9304
  %v10386 = vunpack.c.h.b16 %v9304
  %v10387 = vunpack.c.l.b16 %v9305
  %v10388 = vunpack.c.h.b16 %v9305
  %v10389 = vunpack.c.l.b16 %v9306
  %v10390 = vunpack.c.l.b16 %v9307
  %v10391 = vunpack.c.h.b16 %v9307
  %v10392 = vunpack.c.l.b16 %v9308
  %v10393 = vunpack.c.h.b16 %v9308
  %v10394 = vunpack.c.l.b16 %v9309
  %v10395 = vunpack.c.h.b16 %v9309
  %v10396 = vunpack.c.l.b16 %v9310
  %v10397 = vunpack.c.l.b16 %v9311
  %v10398 = vunpack.c.h.b16 %v9311
  %v10399 = vunpack.c.l.b16 %v9312
  %v10400 = vunpack.c.h.b16 %v9312
  %v10401 = vunpack.c.l.b16 %v9313
  %v10402 = vunpack.c.h.b16 %v9313
  %v10403 = vunpack.c.l.b16 %v9314
  %v10404 = vunpack.c.l.b16 %v9315
  %v10405 = vunpack.c.h.b16 %v9315
  %v10406 = vunpack.c.l.b16 %v9316
  %v10407 = vunpack.c.h.b16 %v9316
  %v10408 = vunpack.c.l.b16 %v9317
  %v10409 = vunpack.c.h.b16 %v9317
  %v10410 = vunpack.c.l.b16 %v9318
  %v10411 = vunpack.c.l.b16 %v9319
  %v10412 = vunpack.c.h.b16 %v9319
  %v10413 = vunpack.c.l.b16 %v9320
  %v10414 = vunpack.c.h.b16 %v9320
  %v10415 = vunpack.c.l.b16 %v9321
  %v10416 = vunpack.c.h.b16 %v9321
  %v10417 = vunpack.c.l.b16 %v9322
  %v10418 = vunpack.c.l.b16 %v9323
  %v10419 = vunpack.c.h.b16 %v9323
  %v10420 = vunpack.c.l.b16 %v9324
  %v10421 = vunpack.c.h.b16 %v9324
  %v10422 = vunpack.c.l.b16 %v9325
  %v10423 = vunpack.c.h.b16 %v9325
  %v10424 = vunpack.c.l.b16 %v9326
  %v10425 = vunpack.c.l.b16 %v9327
  %v10426 = vunpack.c.h.b16 %v9327
  %v10427 = vunpack.c.l.b16 %v9328
  %v10428 = vunpack.c.h.b16 %v9328
  %v10429 = vunpack.c.l.b16 %v9329
  %v10430 = vunpack.c.h.b16 %v9329
  %v10431 = vunpack.c.l.b16 %v9330
  %v10432 = vunpack.c.l.b16 %v9331
  %v10433 = vunpack.c.h.b16 %v9331
  %v10434 = vunpack.c.l.b16 %v9332
  %v10435 = vunpack.c.h.b16 %v9332
  %v10436 = vunpack.c.l.b16 %v9333
  %v10437 = vunpack.c.h.b16 %v9333
  %v10438 = vunpack.c.l.b16 %v9334
  %v10439 = vunpack.c.l.b16 %v9335
  %v10440 = vunpack.c.h.b16 %v9335
  %v10441 = vunpack.c.l.b16 %v9336
  %v10442 = vunpack.c.h.b16 %v9336
  %v10443 = vunpack.c.l.b16 %v9337
  %v10444 = vunpack.c.h.b16 %v9337
  %v10445 = vunpack.c.l.b16 %v9338
  %v10446 = vunpack.c.l.b16 %v9339
  %v10447 = vunpack.c.h.b16 %v9339
  %v10448 = vunpack.c.l.b16 %v9340
  %v10449 = vunpack.c.h.b16 %v9340
  %v10450 = vunpack.c.l.b16 %v9341
  %v10451 = vunpack.c.h.b16 %v9341
  %v10452 = vunpack.c.l.b16 %v9342
  %v10453 = vunpack.c.l.b16 %v9343
  %v10454 = vunpack.c.h.b16 %v9343
  %v10455 = vunpack.c.l.b16 %v9344
  %v10456 = vunpack.c.h.b16 %v9344
  %v10457 = vunpack.c.l.b16 %v9345
  %v10458 = vunpack.c.h.b16 %v9345
  %v10459 = vunpack.c.l.b16 %v9346
  %v10460 = vunpack.c.l.b16 %v9347
  %v10461 = vunpack.c.h.b16 %v9347
  %v10462 = vunpack.c.l.b16 %v9348
  %v10463 = vunpack.c.h.b16 %v9348
  %v10464 = vunpack.c.l.b16 %v9349
  %v10465 = vunpack.c.h.b16 %v9349
  %v10466 = vunpack.c.l.b16 %v9350
  %v10467 = vunpack.c.l.b16 %v9351
  %v10468 = vunpack.c.h.b16 %v9351
  %v10469 = vunpack.c.l.b16 %v9352
  %v10470 = vunpack.c.h.b16 %v9352
  %v10471 = vunpack.c.l.b16 %v9353
  %v10472 = vunpack.c.h.b16 %v9353
  %v10473 = vunpack.c.l.b16 %v9354
  %v10474 = vunpack.c.l.b16 %v9355
  %v10475 = vunpack.c.h.b16 %v9355
  %v10476 = vunpack.c.l.b16 %v9356
  %v10477 = vunpack.c.h.b16 %v9356
  %v10478 = vunpack.c.l.b16 %v9357
  %v10479 = vunpack.c.h.b16 %v9357
  %v10480 = vunpack.c.l.b16 %v9358
  %v10481 = vunpack.c.l.b16 %v9359
  %v10482 = vunpack.c.h.b16 %v9359
  %v10483 = vunpack.c.l.b16 %v9360
  %v10484 = vunpack.c.h.b16 %v9360
  %v10485 = vunpack.c.l.b16 %v9361
  %v10486 = vunpack.c.h.b16 %v9361
  %v10487 = vunpack.c.l.b16 %v9362
  %v10488 = vunpack.c.l.b16 %v9363
  %v10489 = vunpack.c.h.b16 %v9363
  %v10490 = vunpack.c.l.b16 %v9364
  %v10491 = vunpack.c.h.b16 %v9364
  %v10492 = vunpack.c.l.b16 %v9365
  %v10493 = vunpack.c.h.b16 %v9365
  %v10494 = vunpack.c.l.b16 %v9366
  %v10495 = vunpack.c.l.b16 %v9367
  %v10496 = vunpack.c.h.b16 %v9367
  %v10497 = vunpack.c.l.b16 %v9368
  %v10498 = vunpack.c.h.b16 %v9368
  %v10499 = vunpack.c.l.b16 %v9369
  %v10500 = vunpack.c.h.b16 %v9369
  %v10501 = vunpack.c.l.b16 %v9370
  %v10502 = vunpack.c.l.b16 %v9371
  %v10503 = vunpack.c.h.b16 %v9371
  %v10504 = vunpack.c.l.b16 %v9372
  %v10505 = vunpack.c.h.b16 %v9372
  %v10506 = vunpack.c.l.b16 %v9373
  %v10507 = vunpack.c.h.b16 %v9373
  %v10508 = vunpack.c.l.b16 %v9374
  %v10509 = vunpack.c.l.b16 %v9375
  %v10510 = vunpack.c.h.b16 %v9375
  %v10511 = vunpack.c.l.b16 %v9376
  %v10512 = vunpack.c.h.b16 %v9376
  %v10513 = vunpack.c.l.b16 %v9377
  %v10514 = vunpack.c.h.b16 %v9377
  %v10515 = vunpack.c.l.b16 %v9378
  %v10516 = vunpack.c.l.b16 %v9379
  %v10517 = vunpack.c.h.b16 %v9379
  %v10518 = vunpack.c.l.b16 %v9380
  %v10519 = vunpack.c.h.b16 %v9380
  %v10520 = vunpack.c.l.b16 %v9381
  %v10521 = vunpack.c.h.b16 %v9381
  %v10522 = vunpack.c.l.b16 %v9382
  %v10523 = vunpack.c.l.b16 %v9383
  %v10524 = vunpack.c.h.b16 %v9383
  %v10525 = vunpack.c.l.b16 %v9384
  %v10526 = vunpack.c.h.b16 %v9384
  %v10527 = vunpack.c.l.b16 %v9385
  %v10528 = vunpack.c.h.b16 %v9385
  %v10529 = vunpack.c.l.b16 %v9386
  %v10530 = vunpack.c.l.b16 %v9387
  %v10531 = vunpack.c.h.b16 %v9387
  %v10532 = vunpack.c.l.b16 %v9388
  %v10533 = vunpack.c.h.b16 %v9388
  %v10534 = vunpack.c.l.b16 %v9389
  %v10535 = vunpack.c.h.b16 %v9389
  %v10536 = vunpack.c.l.b16 %v9390
  %v10537 = vunpack.c.l.b16 %v9391
  %v10538 = vunpack.c.h.b16 %v9391
  %v10539 = vunpack.c.l.b16 %v9392
  %v10540 = vunpack.c.h.b16 %v9392
  %v10541 = vunpack.c.l.b16 %v9393
  %v10542 = vunpack.c.h.b16 %v9393
  %v10543 = vunpack.c.l.b16 %v9394
  %v10544 = vunpack.c.l.b16 %v9395
  %v10545 = vunpack.c.h.b16 %v9395
  %v10546 = vunpack.c.l.b16 %v9396
  %v10547 = vunpack.c.h.b16 %v9396
  %v10548 = vunpack.c.l.b16 %v9397
  %v10549 = vunpack.c.h.b16 %v9397
  %v10550 = vunpack.c.l.b16 %v9398
  %v10551 = vunpack.c.l.b16 %v9399
  %v10552 = vunpack.c.h.b16 %v9399
  %v10553 = vunpack.c.l.b16 %v9400
  %v10554 = vunpack.c.h.b16 %v9400
  %v10555 = vunpack.c.l.b16 %v9401
  %v10556 = vunpack.c.h.b16 %v9401
  %v10557 = vunpack.c.l.b16 %v9402
  %v10558 = vunpack.c.l.b16 %v9403
  %v10559 = vunpack.c.h.b16 %v9403
  %v10560 = vunpack.c.l.b16 %v9404
  %v10561 = vunpack.c.h.b16 %v9404
  %v10562 = vunpack.c.l.b16 %v9405
  %v10563 = vunpack.c.h.b16 %v9405
  %v10564 = vunpack.c.l.b16 %v9406
  %v10565 = vunpack.c.l.b16 %v9407
  %v10566 = vunpack.c.h.b16 %v9407
  %v10567 = vunpack.c.l.b16 %v9408
  %v10568 = vunpack.c.h.b16 %v9408
  %v10569 = vunpack.c.l.b16 %v9409
  %v10570 = vunpack.c.h.b16 %v9409
  %v10571 = vunpack.c.l.b16 %v9410
  %v10572 = vunpack.c.l.b16 %v9411
  %v10573 = vunpack.c.h.b16 %v9411
  %v10574 = vunpack.c.l.b16 %v9412
  %v10575 = vunpack.c.h.b16 %v9412
  %v10576 = vunpack.c.l.b16 %v9413
  %v10577 = vunpack.c.h.b16 %v9413
  %v10578 = vunpack.c.l.b16 %v9414
  %v10579 = vunpack.c.l.b16 %v9415
  %v10580 = vunpack.c.h.b16 %v9415
  %v10581 = vunpack.c.l.b16 %v9416
  %v10582 = vunpack.c.h.b16 %v9416
  %v10583 = vunpack.c.l.b16 %v9417
  %v10584 = vunpack.c.h.b16 %v9417
  %v10585 = vunpack.c.l.b16 %v9418
  %v10586 = vunpack.c.l.b16 %v9419
  %v10587 = vunpack.c.h.b16 %v9419
  %v10588 = vunpack.c.l.b16 %v9420
  %v10589 = vunpack.c.h.b16 %v9420
  %v10590 = vunpack.c.l.b16 %v9421
  %v10591 = vunpack.c.h.b16 %v9421
  %v10592 = vunpack.c.l.b16 %v9422
  %v10593 = vunpack.c.l.b16 %v9423
  %v10594 = vunpack.c.h.b16 %v9423
  %v10595 = vunpack.c.l.b16 %v9424
  %v10596 = vunpack.c.h.b16 %v9424
  %v10597 = vunpack.c.l.b16 %v9425
  %v10598 = vunpack.c.h.b16 %v9425
  %v10599 = vunpack.c.l.b16 %v9426
  %v10600 = vunpack.c.l.b16 %v9427
  %v10601 = vunpack.c.h.b16 %v9427
  %v10602 = vunpack.c.l.b16 %v9428
  %v10603 = vunpack.c.h.b16 %v9428
  %v10604 = vunpack.c.l.b16 %v9429
  %v10605 = vunpack.c.h.b16 %v9429
  %v10606 = vunpack.c.l.b16 %v9430
  %v10607 = vunpack.c.l.b16 %v9431
  %v10608 = vunpack.c.h.b16 %v9431
  %v10609 = vunpack.c.l.b16 %v9432
  %v10610 = vunpack.c.h.b16 %v9432
  %v10611 = vunpack.c.l.b16 %v9433
  %v10612 = vunpack.c.h.b16 %v9433
  %v10613 = vunpack.c.l.b16 %v9434
  %v10614 = vunpack.c.l.b16 %v9435
  %v10615 = vunpack.c.h.b16 %v9435
  %v10616 = vunpack.c.l.b16 %v9436
  %v10617 = vunpack.c.h.b16 %v9436
  %v10618 = vunpack.c.l.b16 %v9437
  %v10619 = vunpack.c.h.b16 %v9437
  %v10620 = vunpack.c.l.b16 %v9438
  %v10621 = vunpack.c.l.b16 %v9439
  %v10622 = vunpack.c.h.b16 %v9439
  %v10623 = vunpack.c.l.b16 %v9440
  %v10624 = vunpack.c.h.b16 %v9440
  %v10625 = vunpack.c.l.b16 %v9441
  %v10626 = vunpack.c.h.b16 %v9441
  %v10627 = vunpack.c.l.b16 %v9442
  %v10628 = vunpack.c.l.b16 %v9443
  %v10629 = vunpack.c.h.b16 %v9443
  %v10630 = vunpack.c.l.b16 %v9444
  %v10631 = vunpack.c.h.b16 %v9444
  %v10632 = vunpack.c.l.b16 %v9445
  %v10633 = vunpack.c.h.b16 %v9445
  %v10634 = vunpack.c.l.b16 %v9446
  %v10635 = vunpack.c.l.b16 %v9447
  %v10636 = vunpack.c.h.b16 %v9447
  %v10637 = vunpack.c.l.b16 %v9448
  %v10638 = vunpack.c.h.b16 %v9448
  %v10639 = vunpack.c.l.b16 %v9449
  %v10640 = vunpack.c.h.b16 %v9449
  %v10641 = vunpack.c.l.b16 %v9450
  %v10642 = vunpack.c.l.b16 %v9451
  %v10643 = vunpack.c.h.b16 %v9451
  %v10644 = vunpack.c.l.b16 %v9452
  %v10645 = vunpack.c.h.b16 %v9452
  %v10646 = vunpack.c.l.b16 %v9453
  %v10647 = vunpack.c.h.b16 %v9453
  %v10648 = vunpack.c.l.b16 %v9454
  %v10649 = vunpack.c.l.b16 %v9455
  %v10650 = vunpack.c.h.b16 %v9455
  %v10651 = vunpack.c.l.b16 %v9456
  %v10652 = vunpack.c.h.b16 %v9456
  %v10653 = vunpack.c.l.b16 %v9457
  %v10654 = vunpack.c.h.b16 %v9457
  %v10655 = vunpack.c.l.b16 %v9458
  %v10656 = vunpack.c.l.b16 %v9459
  %v10657 = vunpack.c.h.b16 %v9459
  %v10658 = vunpack.c.l.b16 %v9460
  %v10659 = vunpack.c.h.b16 %v9460
  %v10660 = vunpack.c.l.b16 %v9461
  %v10661 = vunpack.c.h.b16 %v9461
  %v10662 = vunpack.c.l.b16 %v9462
  %v10663 = vunpack.c.l.b16 %v9463
  %v10664 = vunpack.c.h.b16 %v9463
  %v10665 = vunpack.c.l.b16 %v9464
  %v10666 = vunpack.c.h.b16 %v9464
  %v10667 = vunpack.c.l.b16 %v9465
  %v10668 = vunpack.c.h.b16 %v9465
  %v10669 = vunpack.c.l.b16 %v9466
  %v10670 = vunpack.c.l.b16 %v9467
  %v10671 = vunpack.c.h.b16 %v9467
  %v10672 = vunpack.c.l.b16 %v9468
  %v10673 = vunpack.c.h.b16 %v9468
  %v10674 = vunpack.c.l.b16 %v9469
  %v10675 = vunpack.c.h.b16 %v9469
  %v10676 = vunpack.c.l.b16 %v9470
  %v10677 = vunpack.c.l.b16 %v9471
  %v10678 = vunpack.c.h.b16 %v9471
  %v10679 = vunpack.c.l.b16 %v9472
  %v10680 = vunpack.c.h.b16 %v9472
  %v10681 = vunpack.c.l.b16 %v9473
  %v10682 = vunpack.c.h.b16 %v9473
  %v10683 = vunpack.c.l.b16 %v9474
  %v10684 = vunpack.c.l.b16 %v9475
  %v10685 = vunpack.c.h.b16 %v9475
  %v10686 = vunpack.c.l.b16 %v9476
  %v10687 = vunpack.c.h.b16 %v9476
  %v10688 = vunpack.c.l.b16 %v9477
  %v10689 = vunpack.c.h.b16 %v9477
  %v10690 = vunpack.c.l.b16 %v9478
  %v10691 = vunpack.c.l.b16 %v9479
  %v10692 = vunpack.c.h.b16 %v9479
  %v10693 = vunpack.c.l.b16 %v9480
  %v10694 = vunpack.c.h.b16 %v9480
  %v10695 = vunpack.c.l.b16 %v9481
  %v10696 = vunpack.c.h.b16 %v9481
  %v10697 = vunpack.c.l.b16 %v9482
  %v10698 = vunpack.c.l.b16 %v9483
  %v10699 = vunpack.c.h.b16 %v9483
  %v10700 = vunpack.c.l.b16 %v9484
  %v10701 = vunpack.c.h.b16 %v9484
  %v10702 = vunpack.c.l.b16 %v9485
  %v10703 = vunpack.c.h.b16 %v9485
  %v10704 = vunpack.c.l.b16 %v9486
  %v10705 = vunpack.c.l.b16 %v9487
  %v10706 = vunpack.c.h.b16 %v9487
  %v10707 = vunpack.c.l.b16 %v9488
  %v10708 = vunpack.c.h.b16 %v9488
  %v10709 = vunpack.c.l.b16 %v9489
  %v10710 = vunpack.c.h.b16 %v9489
  %v10711 = vunpack.c.l.b16 %v9490
  %v10712 = vunpack.c.l.b16 %v9491
  %v10713 = vunpack.c.h.b16 %v9491
  %v10714 = vunpack.c.l.b16 %v9492
  %v10715 = vunpack.c.h.b16 %v9492
  %v10716 = vunpack.c.l.b16 %v9493
  %v10717 = vunpack.c.h.b16 %v9493
  %v10718 = vunpack.c.l.b16 %v9494
  %v10719 = vunpack.c.l.b16 %v9495
  %v10720 = vunpack.c.h.b16 %v9495
  %v10721 = vunpack.c.l.b16 %v9496
  %v10722 = vunpack.c.h.b16 %v9496
  %v10723 = vunpack.c.l.b16 %v9497
  %v10724 = vunpack.c.h.b16 %v9497
  %v10725 = vunpack.c.l.b16 %v9498
  %v10726 = vunpack.c.l.b16 %v9499
  %v10727 = vunpack.c.h.b16 %v9499
  %v10728 = vunpack.c.l.b16 %v9500
  %v10729 = vunpack.c.h.b16 %v9500
  %v10730 = vunpack.c.l.b16 %v9501
  %v10731 = vunpack.c.h.b16 %v9501
  %v10732 = vunpack.c.l.b16 %v9502
  %v10733 = vunpack.c.l.b16 %v9503
  %v10734 = vunpack.c.h.b16 %v9503
  %v10735 = vunpack.c.l.b16 %v9504
  %v10736 = vunpack.c.h.b16 %v9504
  %v10737 = vunpack.c.l.b16 %v9505
  %v10738 = vunpack.c.h.b16 %v9505
  %v10739 = vunpack.c.l.b16 %v9506
  %v10740 = vunpack.c.l.b16 %v9507
  %v10741 = vunpack.c.h.b16 %v9507
  %v10742 = vunpack.c.l.b16 %v9508
  %v10743 = vunpack.c.h.b16 %v9508
  %v10744 = vunpack.c.l.b16 %v9509
  %v10745 = vunpack.c.h.b16 %v9509
  %v10746 = vunpack.c.l.b16 %v9510
  %v10747 = vunpack.c.l.b16 %v9511
  %v10748 = vunpack.c.h.b16 %v9511
  %v10749 = vunpack.c.l.b16 %v9512
  %v10750 = vunpack.c.h.b16 %v9512
  %v10751 = vunpack.c.l.b16 %v9513
  %v10752 = vunpack.c.h.b16 %v9513
  %v10753 = vunpack.c.l.b16 %v9514
  %v10754 = vunpack.c.l.b16 %v9515
  %v10755 = vunpack.c.h.b16 %v9515
  %v10756 = vunpack.c.l.b16 %v9516
  %v10757 = vunpack.c.h.b16 %v9516
  %v10758 = vunpack.c.l.b16 %v9517
  %v10759 = vunpack.c.h.b16 %v9517
  %v10760 = vunpack.c.l.b16 %v9518
  %v10761 = vunpack.c.l.b16 %v9519
  %v10762 = vunpack.c.h.b16 %v9519
  %v10763 = vunpack.c.l.b16 %v9520
  %v10764 = vunpack.c.h.b16 %v9520
  %v10765 = vunpack.c.l.b16 %v9521
  %v10766 = vunpack.c.h.b16 %v9521
  %v10767 = vunpack.c.l.b16 %v9522
  %v10768 = vunpack.c.l.b16 %v9523
  %v10769 = vunpack.c.h.b16 %v9523
  %v10770 = vunpack.c.l.b16 %v9524
  %v10771 = vunpack.c.h.b16 %v9524
  %v10772 = vunpack.c.l.b16 %v9525
  %v10773 = vunpack.c.h.b16 %v9525
  %v10774 = vunpack.c.l.b16 %v9526
  %v10775 = vunpack.c.l.b16 %v9527
  %v10776 = vunpack.c.h.b16 %v9527
  %v10777 = vunpack.c.l.b16 %v9528
  %v10778 = vunpack.c.h.b16 %v9528
  %v10779 = vunpack.c.l.b16 %v9529
  %v10780 = vunpack.c.h.b16 %v9529
  %v10781 = vunpack.c.l.b16 %v9530
  %v10782 = vunpack.c.l.b16 %v9531
  %v10783 = vunpack.c.h.b16 %v9531
  %v10784 = vunpack.c.l.b16 %v9532
  %v10785 = vunpack.c.h.b16 %v9532
  %v10786 = vunpack.c.l.b16 %v9533
  %v10787 = vunpack.c.h.b16 %v9533
  %v10788 = vunpack.c.l.b16 %v9534
  %v10789 = vunpack.c.l.b16 %v9535
  %v10790 = vunpack.c.h.b16 %v9535
  %v10791 = vunpack.c.l.b16 %v9536
  %v10792 = vunpack.c.h.b16 %v9536
  %v10793 = vunpack.c.l.b16 %v9537
  %v10794 = vunpack.c.h.b16 %v9537
  %v10795 = vunpack.c.l.b16 %v9538
  %v10796 = vunpack.c.l.b16 %v9539
  %v10797 = vunpack.c.h.b16 %v9539
  %v10798 = vunpack.c.l.b16 %v9540
  %v10799 = vunpack.c.h.b16 %v9540
  %v10800 = vunpack.c.l.b16 %v9541
  %v10801 = vunpack.c.h.b16 %v9541
  %v10802 = vunpack.c.l.b16 %v9542
  %v10803 = vunpack.c.l.b16 %v9543
  %v10804 = vunpack.c.h.b16 %v9543
  %v10805 = vunpack.c.l.b16 %v9544
  %v10806 = vunpack.c.h.b16 %v9544
  %v10807 = vunpack.c.l.b16 %v9545
  %v10808 = vunpack.c.h.b16 %v9545
  %v10809 = vunpack.c.l.b16 %v9546
  %v10810 = vunpack.c.l.b16 %v9547
  %v10811 = vunpack.c.h.b16 %v9547
  %v10812 = vunpack.c.l.b16 %v9548
  %v10813 = vunpack.c.h.b16 %v9548
  %v10814 = vunpack.c.l.b16 %v9549
  %v10815 = vunpack.c.h.b16 %v9549
  %v10816 = vunpack.c.l.b16 %v9550
  %v10817 = vunpack.c.l.b16 %v9551
  %v10818 = vunpack.c.h.b16 %v9551
  %v10819 = vunpack.c.l.b16 %v9552
  %v10820 = vunpack.c.h.b16 %v9552
  %v10821 = vunpack.c.l.b16 %v9553
  %v10822 = vunpack.c.h.b16 %v9553
  %v10823 = vunpack.c.l.b16 %v9554
  %v10824 = vpack.c.b16 %v10047, %v10040
  %v10825 = vpack.c.b16 %v10048, %v10041
  %v10826 = vpack.c.b16 %v10049, %v10042
  %v10827 = vpack.c.b16 %v10050, %v10043
  %v10828 = vpack.c.b16 %v10051, %v10044
  %v10829 = vpack.c.b16 %v10052, %v10045
  %v10830 = vpack.c.b16 %v10053, %v10046
  %v10831 = vpack.c.b16 %v10061, %v10054
  %v10832 = vpack.c.b16 %v10062, %v10055
  %v10833 = vpack.c.b16 %v10063, %v10056
  %v10834 = vpack.c.b16 %v10064, %v10057
  %v10835 = vpack.c.b16 %v10065, %v10058
  %v10836 = vpack.c.b16 %v10066, %v10059
  %v10837 = vpack.c.b16 %v10067, %v10060
  %v10838 = vpack.c.b16 %v10075, %v10068
  %v10839 = vpack.c.b16 %v10076, %v10069
  %v10840 = vpack.c.b16 %v10077, %v10070
  %v10841 = vpack.c.b16 %v10078, %v10071
  %v10842 = vpack.c.b16 %v10079, %v10072
  %v10843 = vpack.c.b16 %v10080, %v10073
  %v10844 = vpack.c.b16 %v10081, %v10074
  %v10845 = vpack.c.b16 %v10089, %v10082
  %v10846 = vpack.c.b16 %v10090, %v10083
  %v10847 = vpack.c.b16 %v10091, %v10084
  %v10848 = vpack.c.b16 %v10092, %v10085
  %v10849 = vpack.c.b16 %v10093, %v10086
  %v10850 = vpack.c.b16 %v10094, %v10087
  %v10851 = vpack.c.b16 %v10095, %v10088
  %v10852 = vpack.c.b16 %v10103, %v10096
  %v10853 = vpack.c.b16 %v10104, %v10097
  %v10854 = vpack.c.b16 %v10105, %v10098
  %v10855 = vpack.c.b16 %v10106, %v10099
  %v10856 = vpack.c.b16 %v10107, %v10100
  %v10857 = vpack.c.b16 %v10108, %v10101
  %v10858 = vpack.c.b16 %v10109, %v10102
  %v10859 = vpack.c.b16 %v10117, %v10110
  %v10860 = vpack.c.b16 %v10118, %v10111
  %v10861 = vpack.c.b16 %v10119, %v10112
  %v10862 = vpack.c.b16 %v10120, %v10113
  %v10863 = vpack.c.b16 %v10121, %v10114
  %v10864 = vpack.c.b16 %v10122, %v10115
  %v10865 = vpack.c.b16 %v10123, %v10116
  %v10866 = vpack.c.b16 %v10131, %v10124
  %v10867 = vpack.c.b16 %v10132, %v10125
  %v10868 = vpack.c.b16 %v10133, %v10126
  %v10869 = vpack.c.b16 %v10134, %v10127
  %v10870 = vpack.c.b16 %v10135, %v10128
  %v10871 = vpack.c.b16 %v10136, %v10129
  %v10872 = vpack.c.b16 %v10137, %v10130
  %v10873 = vpack.c.b16 %v10145, %v10138
  %v10874 = vpack.c.b16 %v10146, %v10139
  %v10875 = vpack.c.b16 %v10147, %v10140
  %v10876 = vpack.c.b16 %v10148, %v10141
  %v10877 = vpack.c.b16 %v10149, %v10142
  %v10878 = vpack.c.b16 %v10150, %v10143
  %v10879 = vpack.c.b16 %v10151, %v10144
  %v10880 = vpack.c.b16 %v10159, %v10152
  %v10881 = vpack.c.b16 %v10160, %v10153
  %v10882 = vpack.c.b16 %v10161, %v10154
  %v10883 = vpack.c.b16 %v10162, %v10155
  %v10884 = vpack.c.b16 %v10163, %v10156
  %v10885 = vpack.c.b16 %v10164, %v10157
  %v10886 = vpack.c.b16 %v10165, %v10158
  %v10887 = vpack.c.b16 %v10173, %v10166
  %v10888 = vpack.c.b16 %v10174, %v10167
  %v10889 = vpack.c.b16 %v10175, %v10168
  %v10890 = vpack.c.b16 %v10176, %v10169
  %v10891 = vpack.c.b16 %v10177, %v10170
  %v10892 = vpack.c.b16 %v10178, %v10171
  %v10893 = vpack.c.b16 %v10179, %v10172
  %v10894 = vpack.c.b16 %v10187, %v10180
  %v10895 = vpack.c.b16 %v10188, %v10181
  %v10896 = vpack.c.b16 %v10189, %v10182
  %v10897 = vpack.c.b16 %v10190, %v10183
  %v10898 = vpack.c.b16 %v10191, %v10184
  %v10899 = vpack.c.b16 %v10192, %v10185
  %v10900 = vpack.c.b16 %v10193, %v10186
  %v10901 = vpack.c.b16 %v10201, %v10194
  %v10902 = vpack.c.b16 %v10202, %v10195
  %v10903 = vpack.c.b16 %v10203, %v10196
  %v10904 = vpack.c.b16 %v10204, %v10197
  %v10905 = vpack.c.b16 %v10205, %v10198
  %v10906 = vpack.c.b16 %v10206, %v10199
  %v10907 = vpack.c.b16 %v10207, %v10200
  %v10908 = vpack.c.b16 %v10215, %v10208
  %v10909 = vpack.c.b16 %v10216, %v10209
  %v10910 = vpack.c.b16 %v10217, %v10210
  %v10911 = vpack.c.b16 %v10218, %v10211
  %v10912 = vpack.c.b16 %v10219, %v10212
  %v10913 = vpack.c.b16 %v10220, %v10213
  %v10914 = vpack.c.b16 %v10221, %v10214
  %v10915 = vpack.c.b16 %v10229, %v10222
  %v10916 = vpack.c.b16 %v10230, %v10223
  %v10917 = vpack.c.b16 %v10231, %v10224
  %v10918 = vpack.c.b16 %v10232, %v10225
  %v10919 = vpack.c.b16 %v10233, %v10226
  %v10920 = vpack.c.b16 %v10234, %v10227
  %v10921 = vpack.c.b16 %v10235, %v10228
  %v10922 = vpack.c.b16 %v10243, %v10236
  %v10923 = vpack.c.b16 %v10244, %v10237
  %v10924 = vpack.c.b16 %v10245, %v10238
  %v10925 = vpack.c.b16 %v10246, %v10239
  %v10926 = vpack.c.b16 %v10247, %v10240
  %v10927 = vpack.c.b16 %v10248, %v10241
  %v10928 = vpack.c.b16 %v10249, %v10242
  %v10929 = vpack.c.b16 %v10257, %v10250
  %v10930 = vpack.c.b16 %v10258, %v10251
  %v10931 = vpack.c.b16 %v10259, %v10252
  %v10932 = vpack.c.b16 %v10260, %v10253
  %v10933 = vpack.c.b16 %v10261, %v10254
  %v10934 = vpack.c.b16 %v10262, %v10255
  %v10935 = vpack.c.b16 %v10263, %v10256
  %v10936 = vpack.c.b16 %v10271, %v10264
  %v10937 = vpack.c.b16 %v10272, %v10265
  %v10938 = vpack.c.b16 %v10273, %v10266
  %v10939 = vpack.c.b16 %v10274, %v10267
  %v10940 = vpack.c.b16 %v10275, %v10268
  %v10941 = vpack.c.b16 %v10276, %v10269
  %v10942 = vpack.c.b16 %v10277, %v10270
  %v10943 = vpack.c.b16 %v10285, %v10278
  %v10944 = vpack.c.b16 %v10286, %v10279
  %v10945 = vpack.c.b16 %v10287, %v10280
  %v10946 = vpack.c.b16 %v10288, %v10281
  %v10947 = vpack.c.b16 %v10289, %v10282
  %v10948 = vpack.c.b16 %v10290, %v10283
  %v10949 = vpack.c.b16 %v10291, %v10284
  %v10950 = vpack.c.b16 %v10299, %v10292
  %v10951 = vpack.c.b16 %v10300, %v10293
  %v10952 = vpack.c.b16 %v10301, %v10294
  %v10953 = vpack.c.b16 %v10302, %v10295
  %v10954 = vpack.c.b16 %v10303, %v10296
  %v10955 = vpack.c.b16 %v10304, %v10297
  %v10956 = vpack.c.b16 %v10305, %v10298
  %v10957 = vpack.c.b16 %v10313, %v10306
  %v10958 = vpack.c.b16 %v10314, %v10307
  %v10959 = vpack.c.b16 %v10315, %v10308
  %v10960 = vpack.c.b16 %v10316, %v10309
  %v10961 = vpack.c.b16 %v10317, %v10310
  %v10962 = vpack.c.b16 %v10318, %v10311
  %v10963 = vpack.c.b16 %v10319, %v10312
  %v10964 = vpack.c.b16 %v10327, %v10320
  %v10965 = vpack.c.b16 %v10328, %v10321
  %v10966 = vpack.c.b16 %v10329, %v10322
  %v10967 = vpack.c.b16 %v10330, %v10323
  %v10968 = vpack.c.b16 %v10331, %v10324
  %v10969 = vpack.c.b16 %v10332, %v10325
  %v10970 = vpack.c.b16 %v10333, %v10326
  %v10971 = vpack.c.b16 %v10341, %v10334
  %v10972 = vpack.c.b16 %v10342, %v10335
  %v10973 = vpack.c.b16 %v10343, %v10336
  %v10974 = vpack.c.b16 %v10344, %v10337
  %v10975 = vpack.c.b16 %v10345, %v10338
  %v10976 = vpack.c.b16 %v10346, %v10339
  %v10977 = vpack.c.b16 %v10347, %v10340
  %v10978 = vpack.c.b16 %v10355, %v10348
  %v10979 = vpack.c.b16 %v10356, %v10349
  %v10980 = vpack.c.b16 %v10357, %v10350
  %v10981 = vpack.c.b16 %v10358, %v10351
  %v10982 = vpack.c.b16 %v10359, %v10352
  %v10983 = vpack.c.b16 %v10360, %v10353
  %v10984 = vpack.c.b16 %v10361, %v10354
  %v10985 = vpack.c.b16 %v10369, %v10362
  %v10986 = vpack.c.b16 %v10370, %v10363
  %v10987 = vpack.c.b16 %v10371, %v10364
  %v10988 = vpack.c.b16 %v10372, %v10365
  %v10989 = vpack.c.b16 %v10373, %v10366
  %v10990 = vpack.c.b16 %v10374, %v10367
  %v10991 = vpack.c.b16 %v10375, %v10368
  %v10992 = vpack.c.b16 %v10383, %v10376
  %v10993 = vpack.c.b16 %v10384, %v10377
  %v10994 = vpack.c.b16 %v10385, %v10378
  %v10995 = vpack.c.b16 %v10386, %v10379
  %v10996 = vpack.c.b16 %v10387, %v10380
  %v10997 = vpack.c.b16 %v10388, %v10381
  %v10998 = vpack.c.b16 %v10389, %v10382
  %v10999 = vpack.c.b16 %v10397, %v10390
  %v11000 = vpack.c.b16 %v10398, %v10391
  %v11001 = vpack.c.b16 %v10399, %v10392
  %v11002 = vpack.c.b16 %v10400, %v10393
  %v11003 = vpack.c.b16 %v10401, %v10394
  %v11004 = vpack.c.b16 %v10402, %v10395
  %v11005 = vpack.c.b16 %v10403, %v10396
  %v11006 = vpack.c.b16 %v10411, %v10404
  %v11007 = vpack.c.b16 %v10412, %v10405
  %v11008 = vpack.c.b16 %v10413, %v10406
  %v11009 = vpack.c.b16 %v10414, %v10407
  %v11010 = vpack.c.b16 %v10415, %v10408
  %v11011 = vpack.c.b16 %v10416, %v10409
  %v11012 = vpack.c.b16 %v10417, %v10410
  %v11013 = vpack.c.b16 %v10425, %v10418
  %v11014 = vpack.c.b16 %v10426, %v10419
  %v11015 = vpack.c.b16 %v10427, %v10420
  %v11016 = vpack.c.b16 %v10428, %v10421
  %v11017 = vpack.c.b16 %v10429, %v10422
  %v11018 = vpack.c.b16 %v10430, %v10423
  %v11019 = vpack.c.b16 %v10431, %v10424
  %v11020 = vpack.c.b16 %v10439, %v10432
  %v11021 = vpack.c.b16 %v10440, %v10433
  %v11022 = vpack.c.b16 %v10441, %v10434
  %v11023 = vpack.c.b16 %v10442, %v10435
  %v11024 = vpack.c.b16 %v10443, %v10436
  %v11025 = vpack.c.b16 %v10444, %v10437
  %v11026 = vpack.c.b16 %v10445, %v10438
  %v11027 = vpack.c.b16 %v10453, %v10446
  %v11028 = vpack.c.b16 %v10454, %v10447
  %v11029 = vpack.c.b16 %v10455, %v10448
  %v11030 = vpack.c.b16 %v10456, %v10449
  %v11031 = vpack.c.b16 %v10457, %v10450
  %v11032 = vpack.c.b16 %v10458, %v10451
  %v11033 = vpack.c.b16 %v10459, %v10452
  %v11034 = vpack.c.b16 %v10467, %v10460
  %v11035 = vpack.c.b16 %v10468, %v10461
  %v11036 = vpack.c.b16 %v10469, %v10462
  %v11037 = vpack.c.b16 %v10470, %v10463
  %v11038 = vpack.c.b16 %v10471, %v10464
  %v11039 = vpack.c.b16 %v10472, %v10465
  %v11040 = vpack.c.b16 %v10473, %v10466
  %v11041 = vpack.c.b16 %v10481, %v10474
  %v11042 = vpack.c.b16 %v10482, %v10475
  %v11043 = vpack.c.b16 %v10483, %v10476
  %v11044 = vpack.c.b16 %v10484, %v10477
  %v11045 = vpack.c.b16 %v10485, %v10478
  %v11046 = vpack.c.b16 %v10486, %v10479
  %v11047 = vpack.c.b16 %v10487, %v10480
  %v11048 = vpack.c.b16 %v10495, %v10488
  %v11049 = vpack.c.b16 %v10496, %v10489
  %v11050 = vpack.c.b16 %v10497, %v10490
  %v11051 = vpack.c.b16 %v10498, %v10491
  %v11052 = vpack.c.b16 %v10499, %v10492
  %v11053 = vpack.c.b16 %v10500, %v10493
  %v11054 = vpack.c.b16 %v10501, %v10494
  %v11055 = vpack.c.b16 %v10509, %v10502
  %v11056 = vpack.c.b16 %v10510, %v10503
  %v11057 = vpack.c.b16 %v10511, %v10504
  %v11058 = vpack.c.b16 %v10512, %v10505
  %v11059 = vpack.c.b16 %v10513, %v10506
  %v11060 = vpack.c.b16 %v10514, %v10507
  %v11061 = vpack.c.b16 %v10515, %v10508
  %v11062 = vpack.c.b16 %v10523, %v10516
  %v11063 = vpack.c.b16 %v10524, %v10517
  %v11064 = vpack.c.b16 %v10525, %v10518
  %v11065 = vpack.c.b16 %v10526, %v10519
  %v11066 = vpack.c.b16 %v10527, %v10520
  %v11067 = vpack.c.b16 %v10528, %v10521
  %v11068 = vpack.c.b16 %v10529, %v10522
  %v11069 = vpack.c.b16 %v10537, %v10530
  %v11070 = vpack.c.b16 %v10538, %v10531
  %v11071 = vpack.c.b16 %v10539, %v10532
  %v11072 = vpack.c.b16 %v10540, %v10533
  %v11073 = vpack.c.b16 %v10541, %v10534
  %v11074 = vpack.c.b16 %v10542, %v10535
  %v11075 = vpack.c.b16 %v10543, %v10536
  %v11076 = vpack.c.b16 %v10551, %v10544
  %v11077 = vpack.c.b16 %v10552, %v10545
  %v11078 = vpack.c.b16 %v10553, %v10546
  %v11079 = vpack.c.b16 %v10554, %v10547
  %v11080 = vpack.c.b16 %v10555, %v10548
  %v11081 = vpack.c.b16 %v10556, %v10549
  %v11082 = vpack.c.b16 %v10557, %v10550
  %v11083 = vpack.c.b16 %v10565, %v10558
  %v11084 = vpack.c.b16 %v10566, %v10559
  %v11085 = vpack.c.b16 %v10567, %v10560
  %v11086 = vpack.c.b16 %v10568, %v10561
  %v11087 = vpack.c.b16 %v10569, %v10562
  %v11088 = vpack.c.b16 %v10570, %v10563
  %v11089 = vpack.c.b16 %v10571, %v10564
  %v11090 = vpack.c.b16 %v10579, %v10572
  %v11091 = vpack.c.b16 %v10580, %v10573
  %v11092 = vpack.c.b16 %v10581, %v10574
  %v11093 = vpack.c.b16 %v10582, %v10575
  %v11094 = vpack.c.b16 %v10583, %v10576
  %v11095 = vpack.c.b16 %v10584, %v10577
  %v11096 = vpack.c.b16 %v10585, %v10578
  %v11097 = vpack.c.b16 %v10593, %v10586
  %v11098 = vpack.c.b16 %v10594, %v10587
  %v11099 = vpack.c.b16 %v10595, %v10588
  %v11100 = vpack.c.b16 %v10596, %v10589
  %v11101 = vpack.c.b16 %v10597, %v10590
  %v11102 = vpack.c.b16 %v10598, %v10591
  %v11103 = vpack.c.b16 %v10599, %v10592
  %v11104 = vpack.c.b16 %v10607, %v10600
  %v11105 = vpack.c.b16 %v10608, %v10601
  %v11106 = vpack.c.b16 %v10609, %v10602
  %v11107 = vpack.c.b16 %v10610, %v10603
  %v11108 = vpack.c.b16 %v10611, %v10604
  %v11109 = vpack.c.b16 %v10612, %v10605
  %v11110 = vpack.c.b16 %v10613, %v10606
  %v11111 = vpack.c.b16 %v10621, %v10614
  %v11112 = vpack.c.b16 %v10622, %v10615
  %v11113 = vpack.c.b16 %v10623, %v10616
  %v11114 = vpack.c.b16 %v10624, %v10617
  %v11115 = vpack.c.b16 %v10625, %v10618
  %v11116 = vpack.c.b16 %v10626, %v10619
  %v11117 = vpack.c.b16 %v10627, %v10620
  %v11118 = vpack.c.b16 %v10635, %v10628
  %v11119 = vpack.c.b16 %v10636, %v10629
  %v11120 = vpack.c.b16 %v10637, %v10630
  %v11121 = vpack.c.b16 %v10638, %v10631
  %v11122 = vpack.c.b16 %v10639, %v10632
  %v11123 = vpack.c.b16 %v10640, %v10633
  %v11124 = vpack.c.b16 %v10641, %v10634
  %v11125 = vpack.c.b16 %v10649, %v10642
  %v11126 = vpack.c.b16 %v10650, %v10643
  %v11127 = vpack.c.b16 %v10651, %v10644
  %v11128 = vpack.c.b16 %v10652, %v10645
  %v11129 = vpack.c.b16 %v10653, %v10646
  %v11130 = vpack.c.b16 %v10654, %v10647
  %v11131 = vpack.c.b16 %v10655, %v10648
  %v11132 = vpack.c.b16 %v10663, %v10656
  %v11133 = vpack.c.b16 %v10664, %v10657
  %v11134 = vpack.c.b16 %v10665, %v10658
  %v11135 = vpack.c.b16 %v10666, %v10659
  %v11136 = vpack.c.b16 %v10667, %v10660
  %v11137 = vpack.c.b16 %v10668, %v10661
  %v11138 = vpack.c.b16 %v10669, %v10662
  %v11139 = vpack.c.b16 %v10677, %v10670
  %v11140 = vpack.c.b16 %v10678, %v10671
  %v11141 = vpack.c.b16 %v10679, %v10672
  %v11142 = vpack.c.b16 %v10680, %v10673
  %v11143 = vpack.c.b16 %v10681, %v10674
  %v11144 = vpack.c.b16 %v10682, %v10675
  %v11145 = vpack.c.b16 %v10683, %v10676
  %v11146 = vpack.c.b16 %v10691, %v10684
  %v11147 = vpack.c.b16 %v10692, %v10685
  %v11148 = vpack.c.b16 %v10693, %v10686
  %v11149 = vpack.c.b16 %v10694, %v10687
  %v11150 = vpack.c.b16 %v10695, %v10688
  %v11151 = vpack.c.b16 %v10696, %v10689
  %v11152 = vpack.c.b16 %v10697, %v10690
  %v11153 = vpack.c.b16 %v10705, %v10698
  %v11154 = vpack.c.b16 %v10706, %v10699
  %v11155 = vpack.c.b16 %v10707, %v10700
  %v11156 = vpack.c.b16 %v10708, %v10701
  %v11157 = vpack.c.b16 %v10709, %v10702
  %v11158 = vpack.c.b16 %v10710, %v10703
  %v11159 = vpack.c.b16 %v10711, %v10704
  %v11160 = vpack.c.b16 %v10719, %v10712
  %v11161 = vpack.c.b16 %v10720, %v10713
  %v11162 = vpack.c.b16 %v10721, %v10714
  %v11163 = vpack.c.b16 %v10722, %v10715
  %v11164 = vpack.c.b16 %v10723, %v10716
  %v11165 = vpack.c.b16 %v10724, %v10717
  %v11166 = vpack.c.b16 %v10725, %v10718
  %v11167 = vpack.c.b16 %v10733, %v10726
  %v11168 = vpack.c.b16 %v10734, %v10727
  %v11169 = vpack.c.b16 %v10735, %v10728
  %v11170 = vpack.c.b16 %v10736, %v10729
  %v11171 = vpack.c.b16 %v10737, %v10730
  %v11172 = vpack.c.b16 %v10738, %v10731
  %v11173 = vpack.c.b16 %v10739, %v10732
  %v11174 = vpack.c.b16 %v10747, %v10740
  %v11175 = vpack.c.b16 %v10748, %v10741
  %v11176 = vpack.c.b16 %v10749, %v10742
  %v11177 = vpack.c.b16 %v10750, %v10743
  %v11178 = vpack.c.b16 %v10751, %v10744
  %v11179 = vpack.c.b16 %v10752, %v10745
  %v11180 = vpack.c.b16 %v10753, %v10746
  %v11181 = vpack.c.b16 %v10761, %v10754
  %v11182 = vpack.c.b16 %v10762, %v10755
  %v11183 = vpack.c.b16 %v10763, %v10756
  %v11184 = vpack.c.b16 %v10764, %v10757
  %v11185 = vpack.c.b16 %v10765, %v10758
  %v11186 = vpack.c.b16 %v10766, %v10759
  %v11187 = vpack.c.b16 %v10767, %v10760
  %v11188 = vpack.c.b16 %v10775, %v10768
  %v11189 = vpack.c.b16 %v10776, %v10769
  %v11190 = vpack.c.b16 %v10777, %v10770
  %v11191 = vpack.c.b16 %v10778, %v10771
  %v11192 = vpack.c.b16 %v10779, %v10772
  %v11193 = vpack.c.b16 %v10780, %v10773
  %v11194 = vpack.c.b16 %v10781, %v10774
  %v11195 = vpack.c.b16 %v10789, %v10782
  %v11196 = vpack.c.b16 %v10790, %v10783
  %v11197 = vpack.c.b16 %v10791, %v10784
  %v11198 = vpack.c.b16 %v10792, %v10785
  %v11199 = vpack.c.b16 %v10793, %v10786
  %v11200 = vpack.c.b16 %v10794, %v10787
  %v11201 = vpack.c.b16 %v10795, %v10788
  %v11202 = vpack.c.b16 %v10803, %v10796
  %v11203 = vpack.c.b16 %v10804, %v10797
  %v11204 = vpack.c.b16 %v10805, %v10798
  %v11205 = vpack.c.b16 %v10806, %v10799
  %v11206 = vpack.c.b16 %v10807, %v10800
  %v11207 = vpack.c.b16 %v10808, %v10801
  %v11208 = vpack.c.b16 %v10809, %v10802
  %v11209 = vpack.c.b16 %v10817, %v10810
  %v11210 = vpack.c.b16 %v10818, %v10811
  %v11211 = vpack.c.b16 %v10819, %v10812
  %v11212 = vpack.c.b16 %v10820, %v10813
  %v11213 = vpack.c.b16 %v10821, %v10814
  %v11214 = vpack.c.b16 %v10822, %v10815
  %v11215 = vpack.c.b16 %v10823, %v10816
  %11608 = vmatprep.subr.bf16.mxu0 %v10874
  %11609 = vmatpush1.bf16.msra.mxu0 %v10873
  %11610 = vmatprep.subr.bf16.mxu0 %v10867
  %11611 = vmatpush1.bf16.msra.mxu0 %v10866
  %11612 = vmatprep.subr.bf16.mxu0 %v10860
  %11613 = vmatpush1.bf16.msra.mxu0 %v10859
  %11614 = vmatprep.subr.bf16.mxu0 %v10853
  %11615 = vmatpush1.bf16.msra.mxu0 %v10852
  %11616 = vmatprep.subr.bf16.mxu0 %v10846
  %11617 = vmatpush1.bf16.msra.mxu0 %v10845
  %11618 = vmatprep.subr.bf16.mxu0 %v10839
  %11619 = vmatpush1.bf16.msra.mxu0 %v10838
  %11620 = vmatprep.subr.bf16.mxu0 %v10832
  %11621 = vmatpush1.bf16.msra.mxu0 %v10831
  %11622 = vmatprep.subr.bf16.mxu0 %v10825
  %11623 = vmatpush1.bf16.msra.mxu0 %v10824
  %11624 = vmatprep.subr.bf16.mxu0 %v10930
  %11625 = vmatpush2.bf16.msra.mxu0 %v10929
  %11626 = vmatprep.subr.bf16.mxu0 %v10923
  %11627 = vmatpush2.bf16.msra.mxu0 %v10922
  %11628 = vmatprep.subr.bf16.mxu0 %v10916
  %11629 = vmatpush2.bf16.msra.mxu0 %v10915
  %11630 = vmatprep.subr.bf16.mxu0 %v10909
  %11631 = vmatpush2.bf16.msra.mxu0 %v10908
  %11632 = vmatprep.subr.bf16.mxu0 %v10902
  %11633 = vmatpush2.bf16.msra.mxu0 %v10901
  %11634 = vmatprep.subr.bf16.mxu0 %v10895
  %11635 = vmatpush2.bf16.msra.mxu0 %v10894
  %11636 = vmatprep.subr.bf16.mxu0 %v10888
  %11637 = vmatpush2.bf16.msra.mxu0 %v10887
  %11638 = vmatprep.subr.bf16.mxu0 %v10881
  %11639 = vmatpush2.bf16.msra.mxu0 %v10880
  %11640 = vmatprep.mubr.bf16.mxu0 %v9101
  %11641 = vmatmul.mubr.bf16.gmra.mxu0 %v9100
  %v11642 = vpop.f32.mrf.mxu0
  %v11643 = vadd.f32 %v9560, %v11642
  %v11644 = vpop.f32.mrf.mxu0
  %v11645 = vadd.f32 %v9564, %v11644
  %v11646 = vpop.f32.mrf.mxu0
  %v11647 = vpop.f32.mrf.mxu0
  %11648 = vdwg.mxu0
  %11649 = vmatprep.subr.bf16.mxu0 %v10986
  %11650 = vmatpush1.bf16.msra.mxu0 %v10985
  %11651 = vmatprep.subr.bf16.mxu0 %v10979
  %11652 = vmatpush1.bf16.msra.mxu0 %v10978
  %11653 = vmatprep.subr.bf16.mxu0 %v10972
  %11654 = vmatpush1.bf16.msra.mxu0 %v10971
  %11655 = vmatprep.subr.bf16.mxu0 %v10965
  %11656 = vmatpush1.bf16.msra.mxu0 %v10964
  %11657 = vmatprep.subr.bf16.mxu0 %v10958
  %11658 = vmatpush1.bf16.msra.mxu0 %v10957
  %11659 = vmatprep.subr.bf16.mxu0 %v10951
  %11660 = vmatpush1.bf16.msra.mxu0 %v10950
  %11661 = vmatprep.subr.bf16.mxu0 %v10944
  %11662 = vmatpush1.bf16.msra.mxu0 %v10943
  %11663 = vmatprep.subr.bf16.mxu0 %v10937
  %11664 = vmatpush1.bf16.msra.mxu0 %v10936
  %11665 = vmatprep.subr.bf16.mxu0 %v11042
  %11666 = vmatpush2.bf16.msra.mxu0 %v11041
  %11667 = vmatprep.subr.bf16.mxu0 %v11035
  %11668 = vmatpush2.bf16.msra.mxu0 %v11034
  %11669 = vmatprep.subr.bf16.mxu0 %v11028
  %11670 = vmatpush2.bf16.msra.mxu0 %v11027
  %11671 = vmatprep.subr.bf16.mxu0 %v11021
  %11672 = vmatpush2.bf16.msra.mxu0 %v11020
  %11673 = vmatprep.subr.bf16.mxu0 %v11014
  %11674 = vmatpush2.bf16.msra.mxu0 %v11013
  %11675 = vmatprep.subr.bf16.mxu0 %v11007
  %11676 = vmatpush2.bf16.msra.mxu0 %v11006
  %11677 = vmatprep.subr.bf16.mxu0 %v11000
  %11678 = vmatpush2.bf16.msra.mxu0 %v10999
  %11679 = vmatprep.subr.bf16.mxu0 %v10993
  %11680 = vmatpush2.bf16.msra.mxu0 %v10992
  %11681 = vmatprep.mubr.bf16.mxu0 %v9103
  %11682 = vmatmul.mubr.bf16.gmra.mxu0 %v9102
  %v11683 = vpop.f32.mrf.mxu0
  %v11684 = vadd.f32 %v11643, %v11683
  %v11685 = vpop.f32.mrf.mxu0
  %v11686 = vadd.f32 %v11645, %v11685
  %v11687 = vpop.f32.mrf.mxu0
  %v11688 = vpop.f32.mrf.mxu0
  %11689 = vdwg.mxu0
  %11690 = vmatprep.subr.bf16.mxu0 %v11098
  %11691 = vmatpush1.bf16.msra.mxu0 %v11097
  %11692 = vmatprep.subr.bf16.mxu0 %v11091
  %11693 = vmatpush1.bf16.msra.mxu0 %v11090
  %11694 = vmatprep.subr.bf16.mxu0 %v11084
  %11695 = vmatpush1.bf16.msra.mxu0 %v11083
  %11696 = vmatprep.subr.bf16.mxu0 %v11077
  %11697 = vmatpush1.bf16.msra.mxu0 %v11076
  %11698 = vmatprep.subr.bf16.mxu0 %v11070
  %11699 = vmatpush1.bf16.msra.mxu0 %v11069
  %11700 = vmatprep.subr.bf16.mxu0 %v11063
  %11701 = vmatpush1.bf16.msra.mxu0 %v11062
  %11702 = vmatprep.subr.bf16.mxu0 %v11056
  %11703 = vmatpush1.bf16.msra.mxu0 %v11055
  %11704 = vmatprep.subr.bf16.mxu0 %v11049
  %11705 = vmatpush1.bf16.msra.mxu0 %v11048
  %11706 = vmatprep.subr.bf16.mxu0 %v11154
  %11707 = vmatpush2.bf16.msra.mxu0 %v11153
  %11708 = vmatprep.subr.bf16.mxu0 %v11147
  %11709 = vmatpush2.bf16.msra.mxu0 %v11146
  %11710 = vmatprep.subr.bf16.mxu0 %v11140
  %11711 = vmatpush2.bf16.msra.mxu0 %v11139
  %11712 = vmatprep.subr.bf16.mxu0 %v11133
  %11713 = vmatpush2.bf16.msra.mxu0 %v11132
  %11714 = vmatprep.subr.bf16.mxu0 %v11126
  %11715 = vmatpush2.bf16.msra.mxu0 %v11125
  %11716 = vmatprep.subr.bf16.mxu0 %v11119
  %11717 = vmatpush2.bf16.msra.mxu0 %v11118
  %11718 = vmatprep.subr.bf16.mxu0 %v11112
  %11719 = vmatpush2.bf16.msra.mxu0 %v11111
  %11720 = vmatprep.subr.bf16.mxu0 %v11105
  %11721 = vmatpush2.bf16.msra.mxu0 %v11104
  %11722 = vmatprep.mubr.bf16.mxu0 %v9105
  %11723 = vmatmul.mubr.bf16.gmra.mxu0 %v9104
  %v11724 = vpop.f32.mrf.mxu0
  %v11725 = vadd.f32 %v11684, %v11724
  %v11726 = vpop.f32.mrf.mxu0
  %v11727 = vadd.f32 %v11686, %v11726
  %v11728 = vpop.f32.mrf.mxu0
  %v11729 = vpop.f32.mrf.mxu0
  %11730 = vdwg.mxu0
  %11731 = vmatprep.subr.bf16.mxu0 %v11210
  %11732 = vmatpush1.bf16.msra.mxu0 %v11209
  %11733 = vmatprep.subr.bf16.mxu0 %v11203
  %11734 = vmatpush1.bf16.msra.mxu0 %v11202
  %11735 = vmatprep.subr.bf16.mxu0 %v11196
  %11736 = vmatpush1.bf16.msra.mxu0 %v11195
  %11737 = vmatprep.subr.bf16.mxu0 %v11189
  %11738 = vmatpush1.bf16.msra.mxu0 %v11188
  %11739 = vmatprep.subr.bf16.mxu0 %v11182
  %11740 = vmatpush1.bf16.msra.mxu0 %v11181
  %11741 = vmatprep.subr.bf16.mxu0 %v11175
  %11742 = vmatpush1.bf16.msra.mxu0 %v11174
  %11743 = vmatprep.subr.bf16.mxu0 %v11168
  %11744 = vmatpush1.bf16.msra.mxu0 %v11167
  %11745 = vmatprep.subr.bf16.mxu0 %v11161
  %11746 = vmatpush1.bf16.msra.mxu0 %v11160
  %11747 = vmatprep.subr.bf16.mxu0 0
  %11748 = vmatpush2.bf16.msra.mxu0 0
  %11749 = vmatprep.subr.bf16.mxu0 0
  %11750 = vmatpush2.bf16.msra.mxu0 0
  %11751 = vmatprep.subr.bf16.mxu0 0
  %11752 = vmatpush2.bf16.msra.mxu0 0
  %11753 = vmatprep.subr.bf16.mxu0 0
  %11754 = vmatpush2.bf16.msra.mxu0 0
  %11755 = vmatprep.subr.bf16.mxu0 0
  %11756 = vmatpush2.bf16.msra.mxu0 0
  %11757 = vmatprep.subr.bf16.mxu0 0
  %11758 = vmatpush2.bf16.msra.mxu0 0
  %11759 = vmatprep.subr.bf16.mxu0 0
  %11760 = vmatpush2.bf16.msra.mxu0 0
  %11761 = vmatprep.subr.bf16.mxu0 0
  %11762 = vmatpush2.bf16.msra.mxu0 0
  %11763 = vmatprep.mubr.bf16.mxu0 0
  %11764 = vmatmul.mubr.bf16.gmra.mxu0 %v9106
  %v11765 = vpop.f32.mrf.mxu0
  %v11766 = vadd.f32 %v11725, %v11765
  %v11767 = vpop.f32.mrf.mxu0
  %v11768 = vadd.f32 %v11727, %v11767
  %v11769 = vpop.f32.mrf.mxu0
  %v11770 = vpop.f32.mrf.mxu0
  %11771 = vdwg.mxu0
  %11772 = vmatprep.subr.bf16.mxu0 %v10876
  %11773 = vmatpush1.bf16.msra.mxu0 %v10875
  %11774 = vmatprep.subr.bf16.mxu0 %v10869
  %11775 = vmatpush1.bf16.msra.mxu0 %v10868
  %11776 = vmatprep.subr.bf16.mxu0 %v10862
  %11777 = vmatpush1.bf16.msra.mxu0 %v10861
  %11778 = vmatprep.subr.bf16.mxu0 %v10855
  %11779 = vmatpush1.bf16.msra.mxu0 %v10854
  %11780 = vmatprep.subr.bf16.mxu0 %v10848
  %11781 = vmatpush1.bf16.msra.mxu0 %v10847
  %11782 = vmatprep.subr.bf16.mxu0 %v10841
  %11783 = vmatpush1.bf16.msra.mxu0 %v10840
  %11784 = vmatprep.subr.bf16.mxu0 %v10834
  %11785 = vmatpush1.bf16.msra.mxu0 %v10833
  %11786 = vmatprep.subr.bf16.mxu0 %v10827
  %11787 = vmatpush1.bf16.msra.mxu0 %v10826
  %11788 = vmatprep.subr.bf16.mxu0 %v10932
  %11789 = vmatpush2.bf16.msra.mxu0 %v10931
  %11790 = vmatprep.subr.bf16.mxu0 %v10925
  %11791 = vmatpush2.bf16.msra.mxu0 %v10924
  %11792 = vmatprep.subr.bf16.mxu0 %v10918
  %11793 = vmatpush2.bf16.msra.mxu0 %v10917
  %11794 = vmatprep.subr.bf16.mxu0 %v10911
  %11795 = vmatpush2.bf16.msra.mxu0 %v10910
  %11796 = vmatprep.subr.bf16.mxu0 %v10904
  %11797 = vmatpush2.bf16.msra.mxu0 %v10903
  %11798 = vmatprep.subr.bf16.mxu0 %v10897
  %11799 = vmatpush2.bf16.msra.mxu0 %v10896
  %11800 = vmatprep.subr.bf16.mxu0 %v10890
  %11801 = vmatpush2.bf16.msra.mxu0 %v10889
  %11802 = vmatprep.subr.bf16.mxu0 %v10883
  %11803 = vmatpush2.bf16.msra.mxu0 %v10882
  %11804 = vmatprep.mubr.bf16.mxu0 %v9101
  %11805 = vmatmul.mubr.bf16.gmra.mxu0 %v9100
  %v11806 = vpop.f32.mrf.mxu0
  %v11807 = vadd.f32 %v9568, %v11806
  %v11808 = vpop.f32.mrf.mxu0
  %v11809 = vadd.f32 %v9572, %v11808
  %v11810 = vpop.f32.mrf.mxu0
  %v11811 = vpop.f32.mrf.mxu0
  %11812 = vdwg.mxu0
  %11813 = vmatprep.subr.bf16.mxu0 %v10988
  %11814 = vmatpush1.bf16.msra.mxu0 %v10987
  %11815 = vmatprep.subr.bf16.mxu0 %v10981
  %11816 = vmatpush1.bf16.msra.mxu0 %v10980
  %11817 = vmatprep.subr.bf16.mxu0 %v10974
  %11818 = vmatpush1.bf16.msra.mxu0 %v10973
  %11819 = vmatprep.subr.bf16.mxu0 %v10967
  %11820 = vmatpush1.bf16.msra.mxu0 %v10966
  %11821 = vmatprep.subr.bf16.mxu0 %v10960
  %11822 = vmatpush1.bf16.msra.mxu0 %v10959
  %11823 = vmatprep.subr.bf16.mxu0 %v10953
  %11824 = vmatpush1.bf16.msra.mxu0 %v10952
  %11825 = vmatprep.subr.bf16.mxu0 %v10946
  %11826 = vmatpush1.bf16.msra.mxu0 %v10945
  %11827 = vmatprep.subr.bf16.mxu0 %v10939
  %11828 = vmatpush1.bf16.msra.mxu0 %v10938
  %11829 = vmatprep.subr.bf16.mxu0 %v11044
  %11830 = vmatpush2.bf16.msra.mxu0 %v11043
  %11831 = vmatprep.subr.bf16.mxu0 %v11037
  %11832 = vmatpush2.bf16.msra.mxu0 %v11036
  %11833 = vmatprep.subr.bf16.mxu0 %v11030
  %11834 = vmatpush2.bf16.msra.mxu0 %v11029
  %11835 = vmatprep.subr.bf16.mxu0 %v11023
  %11836 = vmatpush2.bf16.msra.mxu0 %v11022
  %11837 = vmatprep.subr.bf16.mxu0 %v11016
  %11838 = vmatpush2.bf16.msra.mxu0 %v11015
  %11839 = vmatprep.subr.bf16.mxu0 %v11009
  %11840 = vmatpush2.bf16.msra.mxu0 %v11008
  %11841 = vmatprep.subr.bf16.mxu0 %v11002
  %11842 = vmatpush2.bf16.msra.mxu0 %v11001
  %11843 = vmatprep.subr.bf16.mxu0 %v10995
  %11844 = vmatpush2.bf16.msra.mxu0 %v10994
  %11845 = vmatprep.mubr.bf16.mxu0 %v9103
  %11846 = vmatmul.mubr.bf16.gmra.mxu0 %v9102
  %v11847 = vpop.f32.mrf.mxu0
  %v11848 = vadd.f32 %v11807, %v11847
  %v11849 = vpop.f32.mrf.mxu0
  %v11850 = vadd.f32 %v11809, %v11849
  %v11851 = vpop.f32.mrf.mxu0
  %v11852 = vpop.f32.mrf.mxu0
  %11853 = vdwg.mxu0
  %11854 = vmatprep.subr.bf16.mxu0 %v11100
  %11855 = vmatpush1.bf16.msra.mxu0 %v11099
  %11856 = vmatprep.subr.bf16.mxu0 %v11093
  %11857 = vmatpush1.bf16.msra.mxu0 %v11092
  %11858 = vmatprep.subr.bf16.mxu0 %v11086
  %11859 = vmatpush1.bf16.msra.mxu0 %v11085
  %11860 = vmatprep.subr.bf16.mxu0 %v11079
  %11861 = vmatpush1.bf16.msra.mxu0 %v11078
  %11862 = vmatprep.subr.bf16.mxu0 %v11072
  %11863 = vmatpush1.bf16.msra.mxu0 %v11071
  %11864 = vmatprep.subr.bf16.mxu0 %v11065
  %11865 = vmatpush1.bf16.msra.mxu0 %v11064
  %11866 = vmatprep.subr.bf16.mxu0 %v11058
  %11867 = vmatpush1.bf16.msra.mxu0 %v11057
  %11868 = vmatprep.subr.bf16.mxu0 %v11051
  %11869 = vmatpush1.bf16.msra.mxu0 %v11050
  %11870 = vmatprep.subr.bf16.mxu0 %v11156
  %11871 = vmatpush2.bf16.msra.mxu0 %v11155
  %11872 = vmatprep.subr.bf16.mxu0 %v11149
  %11873 = vmatpush2.bf16.msra.mxu0 %v11148
  %11874 = vmatprep.subr.bf16.mxu0 %v11142
  %11875 = vmatpush2.bf16.msra.mxu0 %v11141
  %11876 = vmatprep.subr.bf16.mxu0 %v11135
  %11877 = vmatpush2.bf16.msra.mxu0 %v11134
  %11878 = vmatprep.subr.bf16.mxu0 %v11128
  %11879 = vmatpush2.bf16.msra.mxu0 %v11127
  %11880 = vmatprep.subr.bf16.mxu0 %v11121
  %11881 = vmatpush2.bf16.msra.mxu0 %v11120
  %11882 = vmatprep.subr.bf16.mxu0 %v11114
  %11883 = vmatpush2.bf16.msra.mxu0 %v11113
  %11884 = vmatprep.subr.bf16.mxu0 %v11107
  %11885 = vmatpush2.bf16.msra.mxu0 %v11106
  %11886 = vmatprep.mubr.bf16.mxu0 %v9105
  %11887 = vmatmul.mubr.bf16.gmra.mxu0 %v9104
  %v11888 = vpop.f32.mrf.mxu0
  %v11889 = vadd.f32 %v11848, %v11888
  %v11890 = vpop.f32.mrf.mxu0
  %v11891 = vadd.f32 %v11850, %v11890
  %v11892 = vpop.f32.mrf.mxu0
  %v11893 = vpop.f32.mrf.mxu0
  %11894 = vdwg.mxu0
  %11895 = vmatprep.subr.bf16.mxu0 %v11212
  %11896 = vmatpush1.bf16.msra.mxu0 %v11211
  %11897 = vmatprep.subr.bf16.mxu0 %v11205
  %11898 = vmatpush1.bf16.msra.mxu0 %v11204
  %11899 = vmatprep.subr.bf16.mxu0 %v11198
  %11900 = vmatpush1.bf16.msra.mxu0 %v11197
  %11901 = vmatprep.subr.bf16.mxu0 %v11191
  %11902 = vmatpush1.bf16.msra.mxu0 %v11190
  %11903 = vmatprep.subr.bf16.mxu0 %v11184
  %11904 = vmatpush1.bf16.msra.mxu0 %v11183
  %11905 = vmatprep.subr.bf16.mxu0 %v11177
  %11906 = vmatpush1.bf16.msra.mxu0 %v11176
  %11907 = vmatprep.subr.bf16.mxu0 %v11170
  %11908 = vmatpush1.bf16.msra.mxu0 %v11169
  %11909 = vmatprep.subr.bf16.mxu0 %v11163
  %11910 = vmatpush1.bf16.msra.mxu0 %v11162
  %11911 = vmatprep.subr.bf16.mxu0 0
  %11912 = vmatpush2.bf16.msra.mxu0 0
  %11913 = vmatprep.subr.bf16.mxu0 0
  %11914 = vmatpush2.bf16.msra.mxu0 0
  %11915 = vmatprep.subr.bf16.mxu0 0
  %11916 = vmatpush2.bf16.msra.mxu0 0
  %11917 = vmatprep.subr.bf16.mxu0 0
  %11918 = vmatpush2.bf16.msra.mxu0 0
  %11919 = vmatprep.subr.bf16.mxu0 0
  %11920 = vmatpush2.bf16.msra.mxu0 0
  %11921 = vmatprep.subr.bf16.mxu0 0
  %11922 = vmatpush2.bf16.msra.mxu0 0
  %11923 = vmatprep.subr.bf16.mxu0 0
  %11924 = vmatpush2.bf16.msra.mxu0 0
  %11925 = vmatprep.subr.bf16.mxu0 0
  %11926 = vmatpush2.bf16.msra.mxu0 0
  %11927 = vmatprep.mubr.bf16.mxu0 0
  %11928 = vmatmul.mubr.bf16.gmra.mxu0 %v9106
  %v11929 = vpop.f32.mrf.mxu0
  %v11930 = vadd.f32 %v11889, %v11929
  %v11931 = vpop.f32.mrf.mxu0
  %v11932 = vadd.f32 %v11891, %v11931
  %v11933 = vpop.f32.mrf.mxu0
  %v11934 = vpop.f32.mrf.mxu0
  %11935 = vdwg.mxu0
  %11936 = vmatprep.subr.bf16.mxu0 %v10878
  %11937 = vmatpush1.bf16.msra.mxu0 %v10877
  %11938 = vmatprep.subr.bf16.mxu0 %v10871
  %11939 = vmatpush1.bf16.msra.mxu0 %v10870
  %11940 = vmatprep.subr.bf16.mxu0 %v10864
  %11941 = vmatpush1.bf16.msra.mxu0 %v10863
  %11942 = vmatprep.subr.bf16.mxu0 %v10857
  %11943 = vmatpush1.bf16.msra.mxu0 %v10856
  %11944 = vmatprep.subr.bf16.mxu0 %v10850
  %11945 = vmatpush1.bf16.msra.mxu0 %v10849
  %11946 = vmatprep.subr.bf16.mxu0 %v10843
  %11947 = vmatpush1.bf16.msra.mxu0 %v10842
  %11948 = vmatprep.subr.bf16.mxu0 %v10836
  %11949 = vmatpush1.bf16.msra.mxu0 %v10835
  %11950 = vmatprep.subr.bf16.mxu0 %v10829
  %11951 = vmatpush1.bf16.msra.mxu0 %v10828
  %11952 = vmatprep.subr.bf16.mxu0 %v10934
  %11953 = vmatpush2.bf16.msra.mxu0 %v10933
  %11954 = vmatprep.subr.bf16.mxu0 %v10927
  %11955 = vmatpush2.bf16.msra.mxu0 %v10926
  %11956 = vmatprep.subr.bf16.mxu0 %v10920
  %11957 = vmatpush2.bf16.msra.mxu0 %v10919
  %11958 = vmatprep.subr.bf16.mxu0 %v10913
  %11959 = vmatpush2.bf16.msra.mxu0 %v10912
  %11960 = vmatprep.subr.bf16.mxu0 %v10906
  %11961 = vmatpush2.bf16.msra.mxu0 %v10905
  %11962 = vmatprep.subr.bf16.mxu0 %v10899
  %11963 = vmatpush2.bf16.msra.mxu0 %v10898
  %11964 = vmatprep.subr.bf16.mxu0 %v10892
  %11965 = vmatpush2.bf16.msra.mxu0 %v10891
  %11966 = vmatprep.subr.bf16.mxu0 %v10885
  %11967 = vmatpush2.bf16.msra.mxu0 %v10884
  %11968 = vmatprep.mubr.bf16.mxu0 %v9101
  %11969 = vmatmul.mubr.bf16.gmra.mxu0 %v9100
  %v11970 = vpop.f32.mrf.mxu0
  %v11971 = vadd.f32 %v9576, %v11970
  %v11972 = vpop.f32.mrf.mxu0
  %v11973 = vadd.f32 %v9580, %v11972
  %v11974 = vpop.f32.mrf.mxu0
  %v11975 = vpop.f32.mrf.mxu0
  %11976 = vdwg.mxu0
  %11977 = vmatprep.subr.bf16.mxu0 %v10990
  %11978 = vmatpush1.bf16.msra.mxu0 %v10989
  %11979 = vmatprep.subr.bf16.mxu0 %v10983
  %11980 = vmatpush1.bf16.msra.mxu0 %v10982
  %11981 = vmatprep.subr.bf16.mxu0 %v10976
  %11982 = vmatpush1.bf16.msra.mxu0 %v10975
  %11983 = vmatprep.subr.bf16.mxu0 %v10969
  %11984 = vmatpush1.bf16.msra.mxu0 %v10968
  %11985 = vmatprep.subr.bf16.mxu0 %v10962
  %11986 = vmatpush1.bf16.msra.mxu0 %v10961
  %11987 = vmatprep.subr.bf16.mxu0 %v10955
  %11988 = vmatpush1.bf16.msra.mxu0 %v10954
  %11989 = vmatprep.subr.bf16.mxu0 %v10948
  %11990 = vmatpush1.bf16.msra.mxu0 %v10947
  %11991 = vmatprep.subr.bf16.mxu0 %v10941
  %11992 = vmatpush1.bf16.msra.mxu0 %v10940
  %11993 = vmatprep.subr.bf16.mxu0 %v11046
  %11994 = vmatpush2.bf16.msra.mxu0 %v11045
  %11995 = vmatprep.subr.bf16.mxu0 %v11039
  %11996 = vmatpush2.bf16.msra.mxu0 %v11038
  %11997 = vmatprep.subr.bf16.mxu0 %v11032
  %11998 = vmatpush2.bf16.msra.mxu0 %v11031
  %11999 = vmatprep.subr.bf16.mxu0 %v11025
  %12000 = vmatpush2.bf16.msra.mxu0 %v11024
  %12001 = vmatprep.subr.bf16.mxu0 %v11018
  %12002 = vmatpush2.bf16.msra.mxu0 %v11017
  %12003 = vmatprep.subr.bf16.mxu0 %v11011
  %12004 = vmatpush2.bf16.msra.mxu0 %v11010
  %12005 = vmatprep.subr.bf16.mxu0 %v11004
  %12006 = vmatpush2.bf16.msra.mxu0 %v11003
  %12007 = vmatprep.subr.bf16.mxu0 %v10997
  %12008 = vmatpush2.bf16.msra.mxu0 %v10996
  %12009 = vmatprep.mubr.bf16.mxu0 %v9103
  %12010 = vmatmul.mubr.bf16.gmra.mxu0 %v9102
  %v12011 = vpop.f32.mrf.mxu0
  %v12012 = vadd.f32 %v11971, %v12011
  %v12013 = vpop.f32.mrf.mxu0
  %v12014 = vadd.f32 %v11973, %v12013
  %v12015 = vpop.f32.mrf.mxu0
  %v12016 = vpop.f32.mrf.mxu0
  %12017 = vdwg.mxu0
  %12018 = vmatprep.subr.bf16.mxu0 %v11102
  %12019 = vmatpush1.bf16.msra.mxu0 %v11101
  %12020 = vmatprep.subr.bf16.mxu0 %v11095
  %12021 = vmatpush1.bf16.msra.mxu0 %v11094
  %12022 = vmatprep.subr.bf16.mxu0 %v11088
  %12023 = vmatpush1.bf16.msra.mxu0 %v11087
  %12024 = vmatprep.subr.bf16.mxu0 %v11081
  %12025 = vmatpush1.bf16.msra.mxu0 %v11080
  %12026 = vmatprep.subr.bf16.mxu0 %v11074
  %12027 = vmatpush1.bf16.msra.mxu0 %v11073
  %12028 = vmatprep.subr.bf16.mxu0 %v11067
  %12029 = vmatpush1.bf16.msra.mxu0 %v11066
  %12030 = vmatprep.subr.bf16.mxu0 %v11060
  %12031 = vmatpush1.bf16.msra.mxu0 %v11059
  %12032 = vmatprep.subr.bf16.mxu0 %v11053
  %12033 = vmatpush1.bf16.msra.mxu0 %v11052
  %12034 = vmatprep.subr.bf16.mxu0 %v11158
  %12035 = vmatpush2.bf16.msra.mxu0 %v11157
  %12036 = vmatprep.subr.bf16.mxu0 %v11151
  %12037 = vmatpush2.bf16.msra.mxu0 %v11150
  %12038 = vmatprep.subr.bf16.mxu0 %v11144
  %12039 = vmatpush2.bf16.msra.mxu0 %v11143
  %12040 = vmatprep.subr.bf16.mxu0 %v11137
  %12041 = vmatpush2.bf16.msra.mxu0 %v11136
  %12042 = vmatprep.subr.bf16.mxu0 %v11130
  %12043 = vmatpush2.bf16.msra.mxu0 %v11129
  %12044 = vmatprep.subr.bf16.mxu0 %v11123
  %12045 = vmatpush2.bf16.msra.mxu0 %v11122
  %12046 = vmatprep.subr.bf16.mxu0 %v11116
  %12047 = vmatpush2.bf16.msra.mxu0 %v11115
  %12048 = vmatprep.subr.bf16.mxu0 %v11109
  %12049 = vmatpush2.bf16.msra.mxu0 %v11108
  %12050 = vmatprep.mubr.bf16.mxu0 %v9105
  %12051 = vmatmul.mubr.bf16.gmra.mxu0 %v9104
  %v12052 = vpop.f32.mrf.mxu0
  %v12053 = vadd.f32 %v12012, %v12052
  %v12054 = vpop.f32.mrf.mxu0
  %v12055 = vadd.f32 %v12014, %v12054
  %v12056 = vpop.f32.mrf.mxu0
  %v12057 = vpop.f32.mrf.mxu0
  %12058 = vdwg.mxu0
  %12059 = vmatprep.subr.bf16.mxu0 %v11214
  %12060 = vmatpush1.bf16.msra.mxu0 %v11213
  %12061 = vmatprep.subr.bf16.mxu0 %v11207
  %12062 = vmatpush1.bf16.msra.mxu0 %v11206
  %12063 = vmatprep.subr.bf16.mxu0 %v11200
  %12064 = vmatpush1.bf16.msra.mxu0 %v11199
  %12065 = vmatprep.subr.bf16.mxu0 %v11193
  %12066 = vmatpush1.bf16.msra.mxu0 %v11192
  %12067 = vmatprep.subr.bf16.mxu0 %v11186
  %12068 = vmatpush1.bf16.msra.mxu0 %v11185
  %12069 = vmatprep.subr.bf16.mxu0 %v11179
  %12070 = vmatpush1.bf16.msra.mxu0 %v11178
  %12071 = vmatprep.subr.bf16.mxu0 %v11172
  %12072 = vmatpush1.bf16.msra.mxu0 %v11171
  %12073 = vmatprep.subr.bf16.mxu0 %v11165
  %12074 = vmatpush1.bf16.msra.mxu0 %v11164
  %12075 = vmatprep.subr.bf16.mxu0 0
  %12076 = vmatpush2.bf16.msra.mxu0 0
  %12077 = vmatprep.subr.bf16.mxu0 0
  %12078 = vmatpush2.bf16.msra.mxu0 0
  %12079 = vmatprep.subr.bf16.mxu0 0
  %12080 = vmatpush2.bf16.msra.mxu0 0
  %12081 = vmatprep.subr.bf16.mxu0 0
  %12082 = vmatpush2.bf16.msra.mxu0 0
  %12083 = vmatprep.subr.bf16.mxu0 0
  %12084 = vmatpush2.bf16.msra.mxu0 0
  %12085 = vmatprep.subr.bf16.mxu0 0
  %12086 = vmatpush2.bf16.msra.mxu0 0
  %12087 = vmatprep.subr.bf16.mxu0 0
  %12088 = vmatpush2.bf16.msra.mxu0 0
  %12089 = vmatprep.subr.bf16.mxu0 0
  %12090 = vmatpush2.bf16.msra.mxu0 0
  %12091 = vmatprep.mubr.bf16.mxu0 0
  %12092 = vmatmul.mubr.bf16.gmra.mxu0 %v9106
  %v12093 = vpop.f32.mrf.mxu0
  %v12094 = vadd.f32 %v12053, %v12093
  %v12095 = vpop.f32.mrf.mxu0
  %v12096 = vadd.f32 %v12055, %v12095
  %v12097 = vpop.f32.mrf.mxu0
  %v12098 = vpop.f32.mrf.mxu0
  %12099 = vdwg.mxu0
  %12100 = vmatprep.subr.bf16.mxu0 0
  %12101 = vmatpush1.bf16.msra.mxu0 %v10879
  %12102 = vmatprep.subr.bf16.mxu0 0
  %12103 = vmatpush1.bf16.msra.mxu0 %v10872
  %12104 = vmatprep.subr.bf16.mxu0 0
  %12105 = vmatpush1.bf16.msra.mxu0 %v10865
  %12106 = vmatprep.subr.bf16.mxu0 0
  %12107 = vmatpush1.bf16.msra.mxu0 %v10858
  %12108 = vmatprep.subr.bf16.mxu0 0
  %12109 = vmatpush1.bf16.msra.mxu0 %v10851
  %12110 = vmatprep.subr.bf16.mxu0 0
  %12111 = vmatpush1.bf16.msra.mxu0 %v10844
  %12112 = vmatprep.subr.bf16.mxu0 0
  %12113 = vmatpush1.bf16.msra.mxu0 %v10837
  %12114 = vmatprep.subr.bf16.mxu0 0
  %12115 = vmatpush1.bf16.msra.mxu0 %v10830
  %12116 = vmatprep.subr.bf16.mxu0 0
  %12117 = vmatpush2.bf16.msra.mxu0 %v10935
  %12118 = vmatprep.subr.bf16.mxu0 0
  %12119 = vmatpush2.bf16.msra.mxu0 %v10928
  %12120 = vmatprep.subr.bf16.mxu0 0
  %12121 = vmatpush2.bf16.msra.mxu0 %v10921
  %12122 = vmatprep.subr.bf16.mxu0 0
  %12123 = vmatpush2.bf16.msra.mxu0 %v10914
  %12124 = vmatprep.subr.bf16.mxu0 0
  %12125 = vmatpush2.bf16.msra.mxu0 %v10907
  %12126 = vmatprep.subr.bf16.mxu0 0
  %12127 = vmatpush2.bf16.msra.mxu0 %v10900
  %12128 = vmatprep.subr.bf16.mxu0 0
  %12129 = vmatpush2.bf16.msra.mxu0 %v10893
  %12130 = vmatprep.subr.bf16.mxu0 0
  %12131 = vmatpush2.bf16.msra.mxu0 %v10886
  %12132 = vmatprep.mubr.bf16.mxu0 %v9101
  %12133 = vmatmul.mubr.bf16.gmra.mxu0 %v9100
  %v12134 = vpop.f32.mrf.mxu0
  %v12135 = vadd.f32 %v9584, %v12134
  %v12136 = vpop.f32.mrf.mxu0
  %v12137 = vpop.f32.mrf.mxu0
  %v12138 = vpop.f32.mrf.mxu0
  %12139 = vdwg.mxu0
  %12140 = vmatprep.subr.bf16.mxu0 0
  %12141 = vmatpush1.bf16.msra.mxu0 %v10991
  %12142 = vmatprep.subr.bf16.mxu0 0
  %12143 = vmatpush1.bf16.msra.mxu0 %v10984
  %12144 = vmatprep.subr.bf16.mxu0 0
  %12145 = vmatpush1.bf16.msra.mxu0 %v10977
  %12146 = vmatprep.subr.bf16.mxu0 0
  %12147 = vmatpush1.bf16.msra.mxu0 %v10970
  %12148 = vmatprep.subr.bf16.mxu0 0
  %12149 = vmatpush1.bf16.msra.mxu0 %v10963
  %12150 = vmatprep.subr.bf16.mxu0 0
  %12151 = vmatpush1.bf16.msra.mxu0 %v10956
  %12152 = vmatprep.subr.bf16.mxu0 0
  %12153 = vmatpush1.bf16.msra.mxu0 %v10949
  %12154 = vmatprep.subr.bf16.mxu0 0
  %12155 = vmatpush1.bf16.msra.mxu0 %v10942
  %12156 = vmatprep.subr.bf16.mxu0 0
  %12157 = vmatpush2.bf16.msra.mxu0 %v11047
  %12158 = vmatprep.subr.bf16.mxu0 0
  %12159 = vmatpush2.bf16.msra.mxu0 %v11040
  %12160 = vmatprep.subr.bf16.mxu0 0
  %12161 = vmatpush2.bf16.msra.mxu0 %v11033
  %12162 = vmatprep.subr.bf16.mxu0 0
  %12163 = vmatpush2.bf16.msra.mxu0 %v11026
  %12164 = vmatprep.subr.bf16.mxu0 0
  %12165 = vmatpush2.bf16.msra.mxu0 %v11019
  %12166 = vmatprep.subr.bf16.mxu0 0
  %12167 = vmatpush2.bf16.msra.mxu0 %v11012
  %12168 = vmatprep.subr.bf16.mxu0 0
  %12169 = vmatpush2.bf16.msra.mxu0 %v11005
  %12170 = vmatprep.subr.bf16.mxu0 0
  %12171 = vmatpush2.bf16.msra.mxu0 %v10998
  %12172 = vmatprep.mubr.bf16.mxu0 %v9103
  %12173 = vmatmul.mubr.bf16.gmra.mxu0 %v9102
  %v12174 = vpop.f32.mrf.mxu0
  %v12175 = vadd.f32 %v12135, %v12174
  %v12176 = vpop.f32.mrf.mxu0
  %v12177 = vpop.f32.mrf.mxu0
  %v12178 = vpop.f32.mrf.mxu0
  %12179 = vdwg.mxu0
  %12180 = vmatprep.subr.bf16.mxu0 0
  %12181 = vmatpush1.bf16.msra.mxu0 %v11103
  %12182 = vmatprep.subr.bf16.mxu0 0
  %12183 = vmatpush1.bf16.msra.mxu0 %v11096
  %12184 = vmatprep.subr.bf16.mxu0 0
  %12185 = vmatpush1.bf16.msra.mxu0 %v11089
  %12186 = vmatprep.subr.bf16.mxu0 0
  %12187 = vmatpush1.bf16.msra.mxu0 %v11082
  %12188 = vmatprep.subr.bf16.mxu0 0
  %12189 = vmatpush1.bf16.msra.mxu0 %v11075
  %12190 = vmatprep.subr.bf16.mxu0 0
  %12191 = vmatpush1.bf16.msra.mxu0 %v11068
  %12192 = vmatprep.subr.bf16.mxu0 0
  %12193 = vmatpush1.bf16.msra.mxu0 %v11061
  %12194 = vmatprep.subr.bf16.mxu0 0
  %12195 = vmatpush1.bf16.msra.mxu0 %v11054
  %12196 = vmatprep.subr.bf16.mxu0 0
  %12197 = vmatpush2.bf16.msra.mxu0 %v11159
  %12198 = vmatprep.subr.bf16.mxu0 0
  %12199 = vmatpush2.bf16.msra.mxu0 %v11152
  %12200 = vmatprep.subr.bf16.mxu0 0
  %12201 = vmatpush2.bf16.msra.mxu0 %v11145
  %12202 = vmatprep.subr.bf16.mxu0 0
  %12203 = vmatpush2.bf16.msra.mxu0 %v11138
  %12204 = vmatprep.subr.bf16.mxu0 0
  %12205 = vmatpush2.bf16.msra.mxu0 %v11131
  %12206 = vmatprep.subr.bf16.mxu0 0
  %12207 = vmatpush2.bf16.msra.mxu0 %v11124
  %12208 = vmatprep.subr.bf16.mxu0 0
  %12209 = vmatpush2.bf16.msra.mxu0 %v11117
  %12210 = vmatprep.subr.bf16.mxu0 0
  %12211 = vmatpush2.bf16.msra.mxu0 %v11110
  %12212 = vmatprep.mubr.bf16.mxu0 %v9105
  %12213 = vmatmul.mubr.bf16.gmra.mxu0 %v9104
  %v12214 = vpop.f32.mrf.mxu0
  %v12215 = vadd.f32 %v12175, %v12214
  %v12216 = vpop.f32.mrf.mxu0
  %v12217 = vpop.f32.mrf.mxu0
  %v12218 = vpop.f32.mrf.mxu0
  %12219 = vdwg.mxu0
  %12220 = vmatprep.subr.bf16.mxu0 0
  %12221 = vmatpush1.bf16.msra.mxu0 %v11215
  %12222 = vmatprep.subr.bf16.mxu0 0
  %12223 = vmatpush1.bf16.msra.mxu0 %v11208
  %12224 = vmatprep.subr.bf16.mxu0 0
  %12225 = vmatpush1.bf16.msra.mxu0 %v11201
  %12226 = vmatprep.subr.bf16.mxu0 0
  %12227 = vmatpush1.bf16.msra.mxu0 %v11194
  %12228 = vmatprep.subr.bf16.mxu0 0
  %12229 = vmatpush1.bf16.msra.mxu0 %v11187
  %12230 = vmatprep.subr.bf16.mxu0 0
  %12231 = vmatpush1.bf16.msra.mxu0 %v11180
  %12232 = vmatprep.subr.bf16.mxu0 0
  %12233 = vmatpush1.bf16.msra.mxu0 %v11173
  %12234 = vmatprep.subr.bf16.mxu0 0
  %12235 = vmatpush1.bf16.msra.mxu0 %v11166
  %12236 = vmatprep.subr.bf16.mxu0 0
  %12237 = vmatpush2.bf16.msra.mxu0 0
  %12238 = vmatprep.subr.bf16.mxu0 0
  %12239 = vmatpush2.bf16.msra.mxu0 0
  %12240 = vmatprep.subr.bf16.mxu0 0
  %12241 = vmatpush2.bf16.msra.mxu0 0
  %12242 = vmatprep.subr.bf16.mxu0 0
  %12243 = vmatpush2.bf16.msra.mxu0 0
  %12244 = vmatprep.subr.bf16.mxu0 0
  %12245 = vmatpush2.bf16.msra.mxu0 0
  %12246 = vmatprep.subr.bf16.mxu0 0
  %12247 = vmatpush2.bf16.msra.mxu0 0
  %12248 = vmatprep.subr.bf16.mxu0 0
  %12249 = vmatpush2.bf16.msra.mxu0 0
  %12250 = vmatprep.subr.bf16.mxu0 0
  %12251 = vmatpush2.bf16.msra.mxu0 0
  %12252 = vmatprep.mubr.bf16.mxu0 0
  %12253 = vmatmul.mubr.bf16.gmra.mxu0 %v9106
  %v12254 = vpop.f32.mrf.mxu0
  %v12255 = vadd.f32 %v12215, %v12254
  %v12256 = vpop.f32.mrf.mxu0
  %v12257 = vpop.f32.mrf.mxu0
  %v12258 = vpop.f32.mrf.mxu0
  %12259 = vdwg.mxu0
  %12260 = vst [vmem:[%s13] sm:$0xff] %v11766
  %12261 = vst [vmem:[%s13 + $0x8] sm:$0xff] %v11768
  %12262 = vst [vmem:[%s13 + $0x10] sm:$0xff] %v11930
  %12263 = vst [vmem:[%s13 + $0x18] sm:$0xff] %v11932
  %12264 = vst [vmem:[%s13 + $0x20] sm:$0xff] %v12094
  %12265 = vst [vmem:[%s13 + $0x28] sm:$0xff] %v12096
  %12266 = vst [vmem:[%s13 + $0x30] sm:$0xff] %v12255
  // Predicated region
  $region54: #{general_decoder_pallas.1} parent=0 // pred_check
    _
  $region55: #{general_decoder_pallas.1} parent=0 // pred_check_branch
    %12268 = sbr.rel (0) target = $region57
  $region56: #{general_decoder_pallas.1} parent=0 // pred_region
    _
  $region57: #{general_decoder_pallas.1} parent=0 // pred_fallthru
    _
  // Predicated region
  $region58: #{general_decoder_pallas.1} parent=0 // pred_check
    _
  $region59: #{general_decoder_pallas.1} parent=0 // pred_check_branch
    %12270 = sbr.rel (0) target = $region61
  $region60: #{general_decoder_pallas.1} parent=0 // pred_region
    _
  $region61: #{general_decoder_pallas.1} parent=0 // pred_fallthru
    _

</llo_original>
